<compile_context>
chip_gen: v6e
topology: v6e:2x2x1
jax: 0.10.0
libtpu: 0.0.40
codegen_flags: <defaults>
</compile_context>

<pallas_src>
import jax
import jax.numpy as jnp
from jax.experimental import pallas as pl
from jax.experimental.pallas import tpu as pltpu


# Set to jnp.bfloat16 on v6e/v7x for higher MXU throughput (keep f32
# accumulation via preferred_element_type); the 5e-3 correctness check below
# against a Precision.HIGHEST reference assumes f32 inputs.
_GEMM_DTYPE = jnp.float32

_VMEM = pl.BlockSpec(memory_space=pltpu.MemorySpace.VMEM)
_VMEM_LIMIT = 32 * 1024 * 1024          # safe scoped-VMEM cap on v5e/v6e/v7x


def _round_up(n, m):
    return ((n + m - 1) // m) * m


def _row_tiles(M, max_tm=512):
    tm = min(_round_up(M, 8), max_tm)
    return tm, _round_up(M, tm)


def _pad_rows(a, Mp):
    return a if a.shape[0] == Mp else jnp.pad(a, ((0, Mp - a.shape[0]), (0, 0)))


# -----------------------------------------------------------------------------
# Tiled GEMM + bias (hot path of every conv)
# -----------------------------------------------------------------------------
def matmul_bias(a, w, b, *, max_tm=512, tn_big=256, tk_big=512):
    """(M,K) @ (K,N) + (N,) with a tiled, double-buffered Pallas GEMM."""
    M, K = a.shape
    Nout = w.shape[1]
    a = a.astype(_GEMM_DTYPE)
    w = w.astype(_GEMM_DTYPE)
    b = b.astype(jnp.float32).reshape(1, Nout)

    tm, Mp = _row_tiles(M, max_tm)
    if Nout <= 512:                      # whole output-channel dim per block
        tn, Np = Nout, Nout
    else:
        tn, Np = tn_big, _round_up(Nout, tn_big)
    if K <= 1024:                        # keep K whole (review guidance)
        tk, Kp = K, K
    else:
        tk, Kp = tk_big, _round_up(K, tk_big)

    if (Mp, Kp) != (M, K):
        a = jnp.pad(a, ((0, Mp - M), (0, Kp - K)))
    if (Kp, Np) != (K, Nout):
        w = jnp.pad(w, ((0, Kp - K), (0, Np - Nout)))
        b = jnp.pad(b, ((0, 0), (0, Np - Nout)))

    gm, gn, gk = Mp // tm, Np // tn, Kp // tk

    if gk == 1:
        # No K reduction axis in the grid -> no accumulator scratch needed.
        def kernel(a_ref, w_ref, b_ref, o_ref):
            o_ref[...] = (jnp.dot(a_ref[...], w_ref[...],
                                  preferred_element_type=jnp.float32)
                          + b_ref[...]).astype(o_ref.dtype)

        grid_spec = pltpu.PrefetchScalarGridSpec(
            num_scalar_prefetch=0, grid=(gm, gn),
            in_specs=[pl.BlockSpec((tm, tk), lambda i, j: (i, 0)),
                      pl.BlockSpec((tk, tn), lambda i, j: (0, j)),
                      pl.BlockSpec((1, tn), lambda i, j: (0, j))],
            out_specs=pl.BlockSpec((tm, tn), lambda i, j: (i, j)))
        sem = ("parallel", "parallel")
    else:
        def kernel(a_ref, w_ref, b_ref, o_ref, acc_ref):
            @pl.when(pl.program_id(2) == 0)
            def _():
                acc_ref[...] = jnp.zeros_like(acc_ref)

            acc_ref[...] += jnp.dot(a_ref[...], w_ref[...],
                                    preferred_element_type=jnp.float32)

            @pl.when(pl.program_id(2) == pl.num_programs(2) - 1)
            def _():
                o_ref[...] = (acc_ref[...] + b_ref[...]).astype(o_ref.dtype)

        grid_spec = pltpu.PrefetchScalarGridSpec(
            num_scalar_prefetch=0, grid=(gm, gn, gk),
            in_specs=[pl.BlockSpec((tm, tk), lambda i, j, k: (i, k)),
                      pl.BlockSpec((tk, tn), lambda i, j, k: (k, j)),
                      pl.BlockSpec((1, tn), lambda i, j, k: (0, j))],
            out_specs=pl.BlockSpec((tm, tn), lambda i, j, k: (i, j)),
            scratch_shapes=[pltpu.VMEM((tm, tn), jnp.float32)])
        sem = ("parallel", "parallel", "arbitrary")

    out = pl.pallas_call(
        kernel,
        out_shape=jax.ShapeDtypeStruct((Mp, Np), jnp.float32),
        grid_spec=grid_spec,
        compiler_params=pltpu.CompilerParams(
            dimension_semantics=sem, vmem_limit_bytes=_VMEM_LIMIT),
    )(a, w, b)
    return out[:M, :Nout]


# -----------------------------------------------------------------------------
# Convolutions (NHWC activations, PyTorch OIHW weights)
# -----------------------------------------------------------------------------
def im2col_nhwc(x, kh, kw, stride, padding, dilation):
    """(N,H,W,C) -> (N*Ho*Wo, kh*kw*C) with (ki,kj,c) column ordering."""
    N, H, W, C = x.shape
    xp = jnp.pad(x, ((0, 0), (padding, padding), (padding, padding), (0, 0)))
    Hp, Wp = H + 2 * padding, W + 2 * padding
    Ho = (Hp - (dilation * (kh - 1) + 1)) // stride + 1
    Wo = (Wp - (dilation * (kw - 1) + 1)) // stride + 1
    patches = []
    for i in range(kh):
        for j in range(kw):
            patches.append(
                xp[:,
                   i * dilation: i * dilation + stride * (Ho - 1) + 1: stride,
                   j * dilation: j * dilation + stride * (Wo - 1) + 1: stride,
                   :])
    col = jnp.concatenate(patches, axis=-1)           # (N,Ho,Wo,kh*kw*C)
    return col.reshape(N * Ho * Wo, kh * kw * C), Ho, Wo


def conv2d_nhwc(x, w, b, stride=1, padding=0, dilation=1):
    """PyTorch-semantics Conv2d on NHWC input; w is OIHW; returns NHWC."""
    N, H, W, Cin = x.shape
    Cout, _, kh, kw = w.shape
    if kh == 1 and kw == 1 and stride == 1 and padding == 0 and dilation == 1:
        out = matmul_bias(x.reshape(N * H * W, Cin), w.reshape(Cout, Cin).T, b)
        return out.reshape(N, H, W, Cout)
    col, Ho, Wo = im2col_nhwc(x, kh, kw, stride, padding, dilation)
    w2 = w.transpose(2, 3, 1, 0).reshape(kh * kw * Cin, Cout)   # (ki,kj,c) rows
    out = matmul_bias(col, w2, b)
    return out.reshape(N, Ho, Wo, Cout)


# -----------------------------------------------------------------------------
# 2x2 max pool (elementwise Pallas kernel, no padding copies)
# -----------------------------------------------------------------------------
def _max4_kernel(a_ref, b_ref, c_ref, d_ref, o_ref):
    o_ref[...] = jnp.maximum(jnp.maximum(a_ref[...], b_ref[...]),
                             jnp.maximum(c_ref[...], d_ref[...]))


def max_pool_2x2_nhwc(x):
    N, H, W, C = x.shape
    Ho, Wo = H // 2, W // 2
    s = [x[:, di:2 * Ho:2, dj:2 * Wo:2, :].reshape(N * Ho * Wo, C)
         for di in range(2) for dj in range(2)]
    out = pl.pallas_call(
        _max4_kernel,
        out_shape=jax.ShapeDtypeStruct((N * Ho * Wo, C), x.dtype),
        in_specs=[_VMEM] * 4,
        out_specs=_VMEM,
    )(*s)
    return out.reshape(N, Ho, Wo, C)


# -----------------------------------------------------------------------------
# Depthwise 3x3 (padding=1, groups=C) as a VPU multiply-accumulate kernel
# -----------------------------------------------------------------------------
def _dwconv_mac_kernel(s0, s1, s2, s3, s4, s5, s6, s7, s8, w_ref, b_ref, o_ref):
    taps = (s0, s1, s2, s3, s4, s5, s6, s7, s8)
    acc = jnp.zeros(o_ref.shape, jnp.float32) + b_ref[...]
    for k in range(9):
        acc = acc + taps[k][...] * w_ref[k:k + 1, :]
    o_ref[...] = acc


def depthwise3x3_nhwc(x, w, b):
    """PyTorch Conv2d(C, C, 3, padding=1, groups=C) on NHWC input.
    Returns the result flattened to (N*H*W, C)."""
    N, H, W, C = x.shape
    xp = jnp.pad(x, ((0, 0), (1, 1), (1, 1), (0, 0)))
    M = N * H * W
    tm, Mp = _row_tiles(M)
    slices = [_pad_rows(xp[:, i:i + H, j:j + W, :].reshape(M, C)
                        .astype(jnp.float32), Mp)
              for i in range(3) for j in range(3)]
    taps = w[:, 0].transpose(1, 2, 0).reshape(9, C).astype(jnp.float32)
    bias = b.reshape(1, C).astype(jnp.float32)
    out = pl.pallas_call(
        _dwconv_mac_kernel,
        out_shape=jax.ShapeDtypeStruct((Mp, C), jnp.float32),
        grid_spec=pltpu.PrefetchScalarGridSpec(
            num_scalar_prefetch=0, grid=(Mp // tm,),
            in_specs=[pl.BlockSpec((tm, C), lambda i: (i, 0))] * 9
                     + [pl.BlockSpec((9, C), lambda i: (0, 0)),
                        pl.BlockSpec((1, C), lambda i: (0, 0))],
            out_specs=pl.BlockSpec((tm, C), lambda i: (i, 0))),
        compiler_params=pltpu.CompilerParams(
            dimension_semantics=("parallel",), vmem_limit_bytes=_VMEM_LIMIT),
    )(*slices, taps, bias)
    return out[:M]


# -----------------------------------------------------------------------------
# Fused tail: conv1x1(up) + cea pointwise + sigmoid(cea)*sigmoid(att)*x
# -----------------------------------------------------------------------------
def _fused_tail_kernel(up_ref, cdw_ref, x_ref, wa_ref, ba_ref, wc_ref, bc_ref,
                       o_ref):
    att = jnp.dot(up_ref[...], wa_ref[...],
                  preferred_element_type=jnp.float32) + ba_ref[...]
    cea = jnp.dot(cdw_ref[...], wc_ref[...],
                  preferred_element_type=jnp.float32) + bc_ref[...]
    att_s = 1.0 / (1.0 + jnp.exp(-att))
    cea_s = 1.0 / (1.0 + jnp.exp(-cea))
    o_ref[...] = cea_s * (att_s * x_ref[...])


def fused_tail(up_flat, cdw_flat, x_flat, w_att, b_att, w_cea, b_cea):
    M, C = x_flat.shape
    Ci = up_flat.shape[1]
    tm, Mp = _row_tiles(M)
    up_p = _pad_rows(up_flat.astype(jnp.float32), Mp)
    cd_p = _pad_rows(cdw_flat.astype(jnp.float32), Mp)
    x_p = _pad_rows(x_flat.astype(jnp.float32), Mp)
    out = pl.pallas_call(
        _fused_tail_kernel,
        out_shape=jax.ShapeDtypeStruct((Mp, C), jnp.float32),
        grid_spec=pltpu.PrefetchScalarGridSpec(
            num_scalar_prefetch=0, grid=(Mp // tm,),
            in_specs=[pl.BlockSpec((tm, Ci), lambda i: (i, 0)),
                      pl.BlockSpec((tm, Ci), lambda i: (i, 0)),
                      pl.BlockSpec((tm, C), lambda i: (i, 0)),
                      pl.BlockSpec((Ci, C), lambda i: (0, 0)),
                      pl.BlockSpec((1, C), lambda i: (0, 0)),
                      pl.BlockSpec((Ci, C), lambda i: (0, 0)),
                      pl.BlockSpec((1, C), lambda i: (0, 0))],
            out_specs=pl.BlockSpec((tm, C), lambda i: (i, 0))),
        compiler_params=pltpu.CompilerParams(
            dimension_semantics=("parallel",), vmem_limit_bytes=_VMEM_LIMIT),
    )(up_p, cd_p, x_p,
      w_att.astype(jnp.float32), b_att.reshape(1, C).astype(jnp.float32),
      w_cea.astype(jnp.float32), b_cea.reshape(1, C).astype(jnp.float32))
    return out[:M]


# -----------------------------------------------------------------------------
# Nearest-neighbor upsample index helper (matches F.interpolate 'nearest')
# -----------------------------------------------------------------------------
def _nearest_idx(out_size, in_size):
    return jnp.floor(jnp.arange(out_size) * (in_size / out_size)).astype(jnp.int32)


# -----------------------------------------------------------------------------
# MAB module
# -----------------------------------------------------------------------------
def init_params(key, channel):
    C = channel
    Ci = C // 4
    ks = jax.random.split(key, 20)
    w = lambda k, s: jax.random.normal(k, s, jnp.float32) * 0.1
    b = lambda k, n: jax.random.normal(k, (n,), jnp.float32) * 0.05
    return {
        "conv0_w": w(ks[0], (C, C, 3, 3)),    "conv0_b": b(ks[1], C),
        "conv1_w": w(ks[2], (C, C, 3, 3)),    "conv1_b": b(ks[3], C),
        "conv2_w": w(ks[4], (Ci, C, 1, 1)),   "conv2_b": b(ks[5], Ci),
        "sconv_w": w(ks[6], (Ci, Ci, 3, 3)),  "sconv_b": b(ks[7], Ci),
        "dconv1_w": w(ks[8], (Ci, Ci, 3, 3)), "dconv1_b": b(ks[9], Ci),
        "dconv2_w": w(ks[10], (Ci, Ci, 3, 3)), "dconv2_b": b(ks[11], Ci),
        "conv1x1_w": w(ks[12], (C, Ci, 1, 1)), "conv1x1_b": b(ks[13], C),
        "cea0_w": w(ks[14], (Ci, C, 1, 1)),   "cea0_b": b(ks[15], Ci),
        "cea_dw_w": w(ks[16], (Ci, 1, 3, 3)), "cea_dw_b": b(ks[17], Ci),
        "cea_pw_w": w(ks[18], (C, Ci, 1, 1)), "cea_pw_b": b(ks[19], C),
    }


@jax.jit
def mab_forward(params, x_nchw):
    N, C, H, W = x_nchw.shape
    Ci = C // 4
    x = jnp.transpose(x_nchw, (0, 2, 3, 1)).astype(jnp.float32)      # NHWC

    # self.conv : 3x3 -> 3x3 -> 1x1 (channel -> channel_inter)
    t = conv2d_nhwc(x, params["conv0_w"], params["conv0_b"], padding=1)
    t = conv2d_nhwc(t, params["conv1_w"], params["conv1_b"], padding=1)
    conv_x = conv2d_nhwc(t, params["conv2_w"], params["conv2_b"])
    # self.sconv : 3x3 stride 2, no padding ; then 2x2 max pool
    sconv_x = conv2d_nhwc(conv_x, params["sconv_w"], params["sconv_b"], stride=2)
    red = max_pool_2x2_nhwc(sconv_x)
    # dconv_1 + dconv_2 folded: conv(x,w1)+conv(x,w2) == conv(x, w1+w2)
    dsum = conv2d_nhwc(red,
                       params["dconv1_w"] + params["dconv2_w"],
                       params["dconv1_b"] + params["dconv2_b"],
                       padding=2, dilation=2)
    # F.interpolate(size=(H,W), mode='nearest')
    hi = _nearest_idx(H, dsum.shape[1])
    wi = _nearest_idx(W, dsum.shape[2])
    up = dsum[:, hi][:, :, wi, :]                                     # (N,H,W,Ci)

    # cea branch: Conv1x1 -> depthwise 3x3 (pointwise + sigmoid fused in tail)
    cea = conv2d_nhwc(x, params["cea0_w"], params["cea0_b"])
    cdw_flat = depthwise3x3_nhwc(cea, params["cea_dw_w"], params["cea_dw_b"])

    # fused: att = conv1x1(up), cea = pointwise(cdw); sigmoid(cea)*sigmoid(att)*x
    M = N * H * W
    out_flat = fused_tail(
        up.reshape(M, Ci), cdw_flat, x.reshape(M, C),
        params["conv1x1_w"].reshape(C, Ci).T, params["conv1x1_b"],
        params["cea_pw_w"].reshape(C, Ci).T, params["cea_pw_b"])
    out = out_flat.reshape(N, H, W, C)
    return jnp.transpose(out, (0, 3, 1, 2))                           # NCHW


# -----------------------------------------------------------------------------
# Pure-JAX reference (lax.conv, NCHW) for the correctness check
# -----------------------------------------------------------------------------
def _conv_ref(x, w, b, stride=1, padding=0, dilation=1, groups=1):
    out = jax.lax.conv_general_dilated(
        x, w,
        window_strides=(stride, stride),
        padding=[(padding, padding), (padding, padding)],
        rhs_dilation=(dilation, dilation),
        dimension_numbers=("NCHW", "OIHW", "NCHW"),
        feature_group_count=groups,
        precision=jax.lax.Precision.HIGHEST,
    )
    return out + b[None, :, None, None]


def mab_reference(params, x):
    C = x.shape[1]
    Ci = C // 4
    H, W = x.shape[2], x.shape[3]
    t = _conv_ref(x, params["conv0_w"], params["conv0_b"], padding=1)
    t = _conv_ref(t, params["conv1_w"], params["conv1_b"], padding=1)
    conv_x = _conv_ref(t, params["conv2_w"], params["conv2_b"])
    sconv_x = _conv_ref(conv_x, params["sconv_w"], params["sconv_b"], stride=2)
    red = jax.lax.reduce_window(
        sconv_x, -jnp.inf, jax.lax.max, (1, 1, 2, 2), (1, 1, 2, 2), "VALID")
    d1 = _conv_ref(red, params["dconv1_w"], params["dconv1_b"], padding=2, dilation=2)
    d2 = _conv_ref(red, params["dconv2_w"], params["dconv2_b"], padding=2, dilation=2)
    d = d1 + d2
    hi = _nearest_idx(H, d.shape[2])
    wi = _nearest_idx(W, d.shape[3])
    up = d[:, :, hi][:, :, :, wi]
    att = jax.nn.sigmoid(_conv_ref(up, params["conv1x1_w"], params["conv1x1_b"]))
    cea = _conv_ref(x, params["cea0_w"], params["cea0_b"])
    cea = _conv_ref(cea, params["cea_dw_w"], params["cea_dw_b"], padding=1, groups=Ci)
    cea = jax.nn.sigmoid(_conv_ref(cea, params["cea_pw_w"], params["cea_pw_b"]))
    return cea * (att * x)


# -----------------------------------------------------------------------------
if __name__ == "__main__":
    key = jax.random.PRNGKey(0)
    kx, kp = jax.random.split(key)
    N, C, H, W = 2, 8, 16, 16            # channel=8 -> channel_inter=2
    x = jax.random.normal(kx, (N, C, H, W), jnp.float32)
    params = init_params(kp, C)

    out = jax.block_until_ready(mab_forward(params, x))
    ref = jax.block_until_ready(mab_reference(params, x))

    assert out.shape == (N, C, H, W)
    max_err = float(jnp.max(jnp.abs(out - ref)))
    if not (max_err < 5e-3):
        raise SystemExit(f"mismatch vs reference: max abs err = {max_err}")
    print("KERNEL_OK")
</pallas_src>

<mosaic_0001>
module attributes {stable_mosaic.version = 11 : i64} {
  func.func @kernel(%arg0: i32, %arg1: i32, %arg2: memref<512x72xf32, #tpu.memory_space<vmem>>, %arg3: memref<72x8xf32, #tpu.memory_space<vmem>>, %arg4: memref<1x8xf32, #tpu.memory_space<vmem>>, %arg5: memref<512x8xf32, #tpu.memory_space<vmem>>) attributes {dimension_semantics = [#tpu.dimension_semantics<parallel>, #tpu.dimension_semantics<parallel>], iteration_bounds = array<i64: 1, 1>, scalar_prefetch = 0 : i64, scratch_operands = 0 : i64, tpu.core_type = #tpu.core_type<tc>, window_params = [{transform_indices = @transform_0, window_bounds = array<i64: 512, 72>}, {transform_indices = @transform_1, window_bounds = array<i64: 72, 8>}, {transform_indices = @transform_2, window_bounds = array<i64: 1, 8>}, {transform_indices = @transform_3, window_bounds = array<i64: 512, 8>}]} {
    %c0 = arith.constant 0 : index
    %c0_0 = arith.constant 0 : index
    %0 = vector.load %arg2[%c0, %c0_0] : memref<512x72xf32, #tpu.memory_space<vmem>>, vector<512x72xf32>
    %c0_1 = arith.constant 0 : index
    %c0_2 = arith.constant 0 : index
    %1 = vector.load %arg3[%c0_1, %c0_2] : memref<72x8xf32, #tpu.memory_space<vmem>>, vector<72x8xf32>
    %cst = arith.constant dense<0.000000e+00> : vector<512x8xf32>
    %2 = tpu.matmul %0, %1, %cst {dimension_numbers = #tpu.dot_dimension_numbers<[1], [0], [0], [1], [0, 0, 1, 1], [], []>} : vector<512x72xf32>, vector<72x8xf32>, vector<512x8xf32> -> vector<512x8xf32>
    %c0_3 = arith.constant 0 : index
    %c0_4 = arith.constant 0 : index
    %3 = vector.load %arg4[%c0_3, %c0_4] : memref<1x8xf32, #tpu.memory_space<vmem>>, vector<1x8xf32>
    %4 = vector.broadcast %3 : vector<1x8xf32> to vector<512x8xf32>
    %5 = arith.addf %2, %4 : vector<512x8xf32>
    %c0_5 = arith.constant 0 : index
    %c0_6 = arith.constant 0 : index
    %6 = vector.load %arg5[%c0_5, %c0_6] : memref<512x8xf32, #tpu.memory_space<vmem>>, vector<512x8xf32>
    tpu.vector_store %arg5[%c0_5, %c0_6], %5 {strides = array<i32>} : memref<512x8xf32, #tpu.memory_space<vmem>>, vector<512x8xf32>,
    return
  }
  func.func @transform_0(%arg0: i32, %arg1: i32) -> (i32, i32) {
    %c0_i32 = arith.constant 0 : i32
    %c0_i32_0 = arith.constant 0 : i32
    return %arg0, %c0_i32 : i32, i32
  }
  func.func @transform_1(%arg0: i32, %arg1: i32) -> (i32, i32) {
    %c0_i32 = arith.constant 0 : i32
    %c0_i32_0 = arith.constant 0 : i32
    return %c0_i32, %arg1 : i32, i32
  }
  func.func @transform_2(%arg0: i32, %arg1: i32) -> (i32, i32) {
    %c0_i32 = arith.constant 0 : i32
    %c0_i32_0 = arith.constant 0 : i32
    return %c0_i32, %arg1 : i32, i32
  }
  func.func @transform_3(%arg0: i32, %arg1: i32) -> (i32, i32) {
    %c0_i32 = arith.constant 0 : i32
    return %arg0, %arg1 : i32, i32
  }
}

module attributes {stable_mosaic.version = 11 : i64} {
  func.func @kernel(%arg0: i32, %arg1: i32, %arg2: memref<512x8xf32, #tpu.memory_space<vmem>>, %arg3: memref<8x2xf32, #tpu.memory_space<vmem>>, %arg4: memref<1x2xf32, #tpu.memory_space<vmem>>, %arg5: memref<512x2xf32, #tpu.memory_space<vmem>>) attributes {dimension_semantics = [#tpu.dimension_semantics<parallel>, #tpu.dimension_semantics<parallel>], iteration_bounds = array<i64: 1, 1>, scalar_prefetch = 0 : i64, scratch_operands = 0 : i64, tpu.core_type = #tpu.core_type<tc>, window_params = [{transform_indices = @transform_0, window_bounds = array<i64: 512, 8>}, {transform_indices = @transform_1, window_bounds = array<i64: 8, 2>}, {transform_indices = @transform_2, window_bounds = array<i64: 1, 2>}, {transform_indices = @transform_3, window_bounds = array<i64: 512, 2>}]} {
    %c0 = arith.constant 0 : index
    %c0_0 = arith.constant 0 : index
    %0 = vector.load %arg2[%c0, %c0_0] : memref<512x8xf32, #tpu.memory_space<vmem>>, vector<512x8xf32>
    %c0_1 = arith.constant 0 : index
    %c0_2 = arith.constant 0 : index
    %1 = vector.load %arg3[%c0_1, %c0_2] : memref<8x2xf32, #tpu.memory_space<vmem>>, vector<8x2xf32>
    %cst = arith.constant dense<0.000000e+00> : vector<512x2xf32>
    %2 = tpu.matmul %0, %1, %cst {dimension_numbers = #tpu.dot_dimension_numbers<[1], [0], [0], [1], [0, 0, 1, 1], [], []>} : vector<512x8xf32>, vector<8x2xf32>, vector<512x2xf32> -> vector<512x2xf32>
    %c0_3 = arith.constant 0 : index
    %c0_4 = arith.constant 0 : index
    %3 = vector.load %arg4[%c0_3, %c0_4] : memref<1x2xf32, #tpu.memory_space<vmem>>, vector<1x2xf32>
    %4 = vector.broadcast %3 : vector<1x2xf32> to vector<512x2xf32>
    %5 = arith.addf %2, %4 : vector<512x2xf32>
    %c0_5 = arith.constant 0 : index
    %c0_6 = arith.constant 0 : index
    %6 = vector.load %arg5[%c0_5, %c0_6] : memref<512x2xf32, #tpu.memory_space<vmem>>, vector<512x2xf32>
    tpu.vector_store %arg5[%c0_5, %c0_6], %5 {strides = array<i32>} : memref<512x2xf32, #tpu.memory_space<vmem>>, vector<512x2xf32>,
    return
  }
  func.func @transform_0(%arg0: i32, %arg1: i32) -> (i32, i32) {
    %c0_i32 = arith.constant 0 : i32
    %c0_i32_0 = arith.constant 0 : i32
    return %arg0, %c0_i32 : i32, i32
  }
  func.func @transform_1(%arg0: i32, %arg1: i32) -> (i32, i32) {
    %c0_i32 = arith.constant 0 : i32
    %c0_i32_0 = arith.constant 0 : i32
    return %c0_i32, %arg1 : i32, i32
  }
  func.func @transform_2(%arg0: i32, %arg1: i32) -> (i32, i32) {
    %c0_i32 = arith.constant 0 : i32
    %c0_i32_0 = arith.constant 0 : i32
    return %c0_i32, %arg1 : i32, i32
  }
  func.func @transform_3(%arg0: i32, %arg1: i32) -> (i32, i32) {
    %c0_i32 = arith.constant 0 : i32
    return %arg0, %arg1 : i32, i32
  }
}

module attributes {stable_mosaic.version = 11 : i64} {
  func.func @_max4_kernel(%arg0: memref<18x2xf32, #tpu.memory_space<vmem>>, %arg1: memref<18x2xf32, #tpu.memory_space<vmem>>, %arg2: memref<18x2xf32, #tpu.memory_space<vmem>>, %arg3: memref<18x2xf32, #tpu.memory_space<vmem>>, %arg4: memref<18x2xf32, #tpu.memory_space<vmem>>) attributes {dimension_semantics = [], scalar_prefetch = 0 : i64, scratch_operands = 0 : i64, tpu.core_type = #tpu.core_type<tc>} {
    %c0 = arith.constant 0 : index
    %c0_0 = arith.constant 0 : index
    %0 = vector.load %arg0[%c0, %c0_0] : memref<18x2xf32, #tpu.memory_space<vmem>>, vector<18x2xf32>
    %c0_1 = arith.constant 0 : index
    %c0_2 = arith.constant 0 : index
    %1 = vector.load %arg1[%c0_1, %c0_2] : memref<18x2xf32, #tpu.memory_space<vmem>>, vector<18x2xf32>
    %2 = arith.maximumf %0, %1 : vector<18x2xf32>
    %c0_3 = arith.constant 0 : index
    %c0_4 = arith.constant 0 : index
    %3 = vector.load %arg2[%c0_3, %c0_4] : memref<18x2xf32, #tpu.memory_space<vmem>>, vector<18x2xf32>
    %c0_5 = arith.constant 0 : index
    %c0_6 = arith.constant 0 : index
    %4 = vector.load %arg3[%c0_5, %c0_6] : memref<18x2xf32, #tpu.memory_space<vmem>>, vector<18x2xf32>
    %5 = arith.maximumf %3, %4 : vector<18x2xf32>
    %6 = arith.maximumf %2, %5 : vector<18x2xf32>
    %c0_7 = arith.constant 0 : index
    %c0_8 = arith.constant 0 : index
    %7 = vector.load %arg4[%c0_7, %c0_8] : memref<18x2xf32, #tpu.memory_space<vmem>>, vector<18x2xf32>
    tpu.vector_store %arg4[%c0_7, %c0_8], %6 {strides = array<i32>} : memref<18x2xf32, #tpu.memory_space<vmem>>, vector<18x2xf32>,
    return
  }
}

module attributes {stable_mosaic.version = 11 : i64} {
  func.func @kernel(%arg0: i32, %arg1: i32, %arg2: memref<104x18xf32, #tpu.memory_space<vmem>>, %arg3: memref<18x2xf32, #tpu.memory_space<vmem>>, %arg4: memref<1x2xf32, #tpu.memory_space<vmem>>, %arg5: memref<104x2xf32, #tpu.memory_space<vmem>>) attributes {dimension_semantics = [#tpu.dimension_semantics<parallel>, #tpu.dimension_semantics<parallel>], iteration_bounds = array<i64: 1, 1>, scalar_prefetch = 0 : i64, scratch_operands = 0 : i64, tpu.core_type = #tpu.core_type<tc>, window_params = [{transform_indices = @transform_0, window_bounds = array<i64: 104, 18>}, {transform_indices = @transform_1, window_bounds = array<i64: 18, 2>}, {transform_indices = @transform_2, window_bounds = array<i64: 1, 2>}, {transform_indices = @transform_3, window_bounds = array<i64: 104, 2>}]} {
    %c0 = arith.constant 0 : index
    %c0_0 = arith.constant 0 : index
    %0 = vector.load %arg2[%c0, %c0_0] : memref<104x18xf32, #tpu.memory_space<vmem>>, vector<104x18xf32>
    %c0_1 = arith.constant 0 : index
    %c0_2 = arith.constant 0 : index
    %1 = vector.load %arg3[%c0_1, %c0_2] : memref<18x2xf32, #tpu.memory_space<vmem>>, vector<18x2xf32>
    %cst = arith.constant dense<0.000000e+00> : vector<104x2xf32>
    %2 = tpu.matmul %0, %1, %cst {dimension_numbers = #tpu.dot_dimension_numbers<[1], [0], [0], [1], [0, 0, 1, 1], [], []>} : vector<104x18xf32>, vector<18x2xf32>, vector<104x2xf32> -> vector<104x2xf32>
    %c0_3 = arith.constant 0 : index
    %c0_4 = arith.constant 0 : index
    %3 = vector.load %arg4[%c0_3, %c0_4] : memref<1x2xf32, #tpu.memory_space<vmem>>, vector<1x2xf32>
    %4 = vector.broadcast %3 : vector<1x2xf32> to vector<104x2xf32>
    %5 = arith.addf %2, %4 : vector<104x2xf32>
    %c0_5 = arith.constant 0 : index
    %c0_6 = arith.constant 0 : index
    %6 = vector.load %arg5[%c0_5, %c0_6] : memref<104x2xf32, #tpu.memory_space<vmem>>, vector<104x2xf32>
    tpu.vector_store %arg5[%c0_5, %c0_6], %5 {strides = array<i32>} : memref<104x2xf32, #tpu.memory_space<vmem>>, vector<104x2xf32>,
    return
  }
  func.func @transform_0(%arg0: i32, %arg1: i32) -> (i32, i32) {
    %c0_i32 = arith.constant 0 : i32
    %c0_i32_0 = arith.constant 0 : i32
    return %arg0, %c0_i32 : i32, i32
  }
  func.func @transform_1(%arg0: i32, %arg1: i32) -> (i32, i32) {
    %c0_i32 = arith.constant 0 : i32
    %c0_i32_0 = arith.constant 0 : i32
    return %c0_i32, %arg1 : i32, i32
  }
  func.func @transform_2(%arg0: i32, %arg1: i32) -> (i32, i32) {
    %c0_i32 = arith.constant 0 : i32
    %c0_i32_0 = arith.constant 0 : i32
    return %c0_i32, %arg1 : i32, i32
  }
  func.func @transform_3(%arg0: i32, %arg1: i32) -> (i32, i32) {
    %c0_i32 = arith.constant 0 : i32
    return %arg0, %arg1 : i32, i32
  }
}

module attributes {stable_mosaic.version = 11 : i64} {
  func.func @kernel(%arg0: i32, %arg1: i32, %arg2: memref<24x18xf32, #tpu.memory_space<vmem>>, %arg3: memref<18x2xf32, #tpu.memory_space<vmem>>, %arg4: memref<1x2xf32, #tpu.memory_space<vmem>>, %arg5: memref<24x2xf32, #tpu.memory_space<vmem>>) attributes {dimension_semantics = [#tpu.dimension_semantics<parallel>, #tpu.dimension_semantics<parallel>], iteration_bounds = array<i64: 1, 1>, scalar_prefetch = 0 : i64, scratch_operands = 0 : i64, tpu.core_type = #tpu.core_type<tc>, window_params = [{transform_indices = @transform_0, window_bounds = array<i64: 24, 18>}, {transform_indices = @transform_1, window_bounds = array<i64: 18, 2>}, {transform_indices = @transform_2, window_bounds = array<i64: 1, 2>}, {transform_indices = @transform_3, window_bounds = array<i64: 24, 2>}]} {
    %c0 = arith.constant 0 : index
    %c0_0 = arith.constant 0 : index
    %0 = vector.load %arg2[%c0, %c0_0] : memref<24x18xf32, #tpu.memory_space<vmem>>, vector<24x18xf32>
    %c0_1 = arith.constant 0 : index
    %c0_2 = arith.constant 0 : index
    %1 = vector.load %arg3[%c0_1, %c0_2] : memref<18x2xf32, #tpu.memory_space<vmem>>, vector<18x2xf32>
    %cst = arith.constant dense<0.000000e+00> : vector<24x2xf32>
    %2 = tpu.matmul %0, %1, %cst {dimension_numbers = #tpu.dot_dimension_numbers<[1], [0], [0], [1], [0, 0, 1, 1], [], []>} : vector<24x18xf32>, vector<18x2xf32>, vector<24x2xf32> -> vector<24x2xf32>
    %c0_3 = arith.constant 0 : index
    %c0_4 = arith.constant 0 : index
    %3 = vector.load %arg4[%c0_3, %c0_4] : memref<1x2xf32, #tpu.memory_space<vmem>>, vector<1x2xf32>
    %4 = vector.broadcast %3 : vector<1x2xf32> to vector<24x2xf32>
    %5 = arith.addf %2, %4 : vector<24x2xf32>
    %c0_5 = arith.constant 0 : index
    %c0_6 = arith.constant 0 : index
    %6 = vector.load %arg5[%c0_5, %c0_6] : memref<24x2xf32, #tpu.memory_space<vmem>>, vector<24x2xf32>
    tpu.vector_store %arg5[%c0_5, %c0_6], %5 {strides = array<i32>} : memref<24x2xf32, #tpu.memory_space<vmem>>, vector<24x2xf32>,
    return
  }
  func.func @transform_0(%arg0: i32, %arg1: i32) -> (i32, i32) {
    %c0_i32 = arith.constant 0 : i32
    %c0_i32_0 = arith.constant 0 : i32
    return %arg0, %c0_i32 : i32, i32
  }
  func.func @transform_1(%arg0: i32, %arg1: i32) -> (i32, i32) {
    %c0_i32 = arith.constant 0 : i32
    %c0_i32_0 = arith.constant 0 : i32
    return %c0_i32, %arg1 : i32, i32
  }
  func.func @transform_2(%arg0: i32, %arg1: i32) -> (i32, i32) {
    %c0_i32 = arith.constant 0 : i32
    %c0_i32_0 = arith.constant 0 : i32
    return %c0_i32, %arg1 : i32, i32
  }
  func.func @transform_3(%arg0: i32, %arg1: i32) -> (i32, i32) {
    %c0_i32 = arith.constant 0 : i32
    return %arg0, %arg1 : i32, i32
  }
}

module attributes {stable_mosaic.version = 11 : i64} {
  func.func @_fused_tail_kernel(%arg0: i32, %arg1: memref<512x2xf32, #tpu.memory_space<vmem>>, %arg2: memref<512x2xf32, #tpu.memory_space<vmem>>, %arg3: memref<512x8xf32, #tpu.memory_space<vmem>>, %arg4: memref<2x8xf32, #tpu.memory_space<vmem>>, %arg5: memref<1x8xf32, #tpu.memory_space<vmem>>, %arg6: memref<2x8xf32, #tpu.memory_space<vmem>>, %arg7: memref<1x8xf32, #tpu.memory_space<vmem>>, %arg8: memref<512x8xf32, #tpu.memory_space<vmem>>) attributes {dimension_semantics = [#tpu.dimension_semantics<parallel>], iteration_bounds = array<i64: 1>, scalar_prefetch = 0 : i64, scratch_operands = 0 : i64, tpu.core_type = #tpu.core_type<tc>, window_params = [{transform_indices = @transform_0, window_bounds = array<i64: 512, 2>}, {transform_indices = @transform_1, window_bounds = array<i64: 512, 2>}, {transform_indices = @transform_2, window_bounds = array<i64: 512, 8>}, {pipeline_mode = #tpu.pipeline_mode<synchronous>, transform_indices = @transform_3, window_bounds = array<i64: 2, 8>}, {pipeline_mode = #tpu.pipeline_mode<synchronous>, transform_indices = @transform_4, window_bounds = array<i64: 1, 8>}, {pipeline_mode = #tpu.pipeline_mode<synchronous>, transform_indices = @transform_5, window_bounds = array<i64: 2, 8>}, {pipeline_mode = #tpu.pipeline_mode<synchronous>, transform_indices = @transform_6, window_bounds = array<i64: 1, 8>}, {transform_indices = @transform_7, window_bounds = array<i64: 512, 8>}]} {
    %c0 = arith.constant 0 : index
    %c0_0 = arith.constant 0 : index
    %0 = vector.load %arg1[%c0, %c0_0] : memref<512x2xf32, #tpu.memory_space<vmem>>, vector<512x2xf32>
    %c0_1 = arith.constant 0 : index
    %c0_2 = arith.constant 0 : index
    %1 = vector.load %arg4[%c0_1, %c0_2] : memref<2x8xf32, #tpu.memory_space<vmem>>, vector<2x8xf32>
    %cst = arith.constant dense<0.000000e+00> : vector<512x8xf32>
    %2 = tpu.matmul %0, %1, %cst {dimension_numbers = #tpu.dot_dimension_numbers<[1], [0], [0], [1], [0, 0, 1, 1], [], []>} : vector<512x2xf32>, vector<2x8xf32>, vector<512x8xf32> -> vector<512x8xf32>
    %c0_3 = arith.constant 0 : index
    %c0_4 = arith.constant 0 : index
    %3 = vector.load %arg5[%c0_3, %c0_4] : memref<1x8xf32, #tpu.memory_space<vmem>>, vector<1x8xf32>
    %4 = vector.broadcast %3 : vector<1x8xf32> to vector<512x8xf32>
    %5 = arith.addf %2, %4 : vector<512x8xf32>
    %c0_5 = arith.constant 0 : index
    %c0_6 = arith.constant 0 : index
    %6 = vector.load %arg2[%c0_5, %c0_6] : memref<512x2xf32, #tpu.memory_space<vmem>>, vector<512x2xf32>
    %c0_7 = arith.constant 0 : index
    %c0_8 = arith.constant 0 : index
    %7 = vector.load %arg6[%c0_7, %c0_8] : memref<2x8xf32, #tpu.memory_space<vmem>>, vector<2x8xf32>
    %cst_9 = arith.constant dense<0.000000e+00> : vector<512x8xf32>
    %8 = tpu.matmul %6, %7, %cst_9 {dimension_numbers = #tpu.dot_dimension_numbers<[1], [0], [0], [1], [0, 0, 1, 1], [], []>} : vector<512x2xf32>, vector<2x8xf32>, vector<512x8xf32> -> vector<512x8xf32>
    %c0_10 = arith.constant 0 : index
    %c0_11 = arith.constant 0 : index
    %9 = vector.load %arg7[%c0_10, %c0_11] : memref<1x8xf32, #tpu.memory_space<vmem>>, vector<1x8xf32>
    %10 = vector.broadcast %9 : vector<1x8xf32> to vector<512x8xf32>
    %11 = arith.addf %8, %10 : vector<512x8xf32>
    %cst_12 = arith.constant 0.000000e+00 : f32
    %12 = vector.broadcast %cst_12 : f32 to vector<512x8xf32>
    %13 = arith.subf %12, %5 : vector<512x8xf32>
    %14 = math.exp %13 : vector<512x8xf32>
    %cst_13 = arith.constant 1.000000e+00 : f32
    %15 = vector.broadcast %cst_13 : f32 to vector<512x8xf32>
    %16 = arith.addf %15, %14 : vector<512x8xf32>
    %cst_14 = arith.constant 1.000000e+00 : f32
    %17 = vector.broadcast %cst_14 : f32 to vector<512x8xf32>
    %18 = arith.divf %17, %16 : vector<512x8xf32>
    %cst_15 = arith.constant 0.000000e+00 : f32
    %19 = vector.broadcast %cst_15 : f32 to vector<512x8xf32>
    %20 = arith.subf %19, %11 : vector<512x8xf32>
    %21 = math.exp %20 : vector<512x8xf32>
    %cst_16 = arith.constant 1.000000e+00 : f32
    %22 = vector.broadcast %cst_16 : f32 to vector<512x8xf32>
    %23 = arith.addf %22, %21 : vector<512x8xf32>
    %cst_17 = arith.constant 1.000000e+00 : f32
    %24 = vector.broadcast %cst_17 : f32 to vector<512x8xf32>
    %25 = arith.divf %24, %23 : vector<512x8xf32>
    %c0_18 = arith.constant 0 : index
    %c0_19 = arith.constant 0 : index
    %26 = vector.load %arg3[%c0_18, %c0_19] : memref<512x8xf32, #tpu.memory_space<vmem>>, vector<512x8xf32>
    %27 = arith.mulf %18, %26 : vector<512x8xf32>
    %28 = arith.mulf %25, %27 : vector<512x8xf32>
    %c0_20 = arith.constant 0 : index
    %c0_21 = arith.constant 0 : index
    %29 = vector.load %arg8[%c0_20, %c0_21] : memref<512x8xf32, #tpu.memory_space<vmem>>, vector<512x8xf32>
    tpu.vector_store %arg8[%c0_20, %c0_21], %28 {strides = array<i32>} : memref<512x8xf32, #tpu.memory_space<vmem>>, vector<512x8xf32>,
    return
  }
  func.func @transform_0(%arg0: i32) -> (i32, i32) {
    %c0_i32 = arith.constant 0 : i32
    %c0_i32_0 = arith.constant 0 : i32
    return %arg0, %c0_i32 : i32, i32
  }
  func.func @transform_1(%arg0: i32) -> (i32, i32) {
    %c0_i32 = arith.constant 0 : i32
    %c0_i32_0 = arith.constant 0 : i32
    return %arg0, %c0_i32 : i32, i32
  }
  func.func @transform_2(%arg0: i32) -> (i32, i32) {
    %c0_i32 = arith.constant 0 : i32
    %c0_i32_0 = arith.constant 0 : i32
    return %arg0, %c0_i32 : i32, i32
  }
  func.func @transform_3(%arg0: i32) -> (i32, i32) {
    %c0_i32 = arith.constant 0 : i32
    %c0_i32_0 = arith.constant 0 : i32
    %c0_i32_1 = arith.constant 0 : i32
    return %c0_i32, %c0_i32_0 : i32, i32
  }
  func.func @transform_4(%arg0: i32) -> (i32, i32) {
    %c0_i32 = arith.constant 0 : i32
    %c0_i32_0 = arith.constant 0 : i32
    %c0_i32_1 = arith.constant 0 : i32
    return %c0_i32, %c0_i32_0 : i32, i32
  }
  func.func @transform_5(%arg0: i32) -> (i32, i32) {
    %c0_i32 = arith.constant 0 : i32
    %c0_i32_0 = arith.constant 0 : i32
    %c0_i32_1 = arith.constant 0 : i32
    return %c0_i32, %c0_i32_0 : i32, i32
  }
  func.func @transform_6(%arg0: i32) -> (i32, i32) {
    %c0_i32 = arith.constant 0 : i32
    %c0_i32_0 = arith.constant 0 : i32
    %c0_i32_1 = arith.constant 0 : i32
    return %c0_i32, %c0_i32_0 : i32, i32
  }
  func.func @transform_7(%arg0: i32) -> (i32, i32) {
    %c0_i32 = arith.constant 0 : i32
    %c0_i32_0 = arith.constant 0 : i32
    return %arg0, %c0_i32 : i32, i32
  }
}

module attributes {stable_mosaic.version = 11 : i64} {
  func.func @_dwconv_mac_kernel(%arg0: i32, %arg1: memref<512x2xf32, #tpu.memory_space<vmem>>, %arg2: memref<512x2xf32, #tpu.memory_space<vmem>>, %arg3: memref<512x2xf32, #tpu.memory_space<vmem>>, %arg4: memref<512x2xf32, #tpu.memory_space<vmem>>, %arg5: memref<512x2xf32, #tpu.memory_space<vmem>>, %arg6: memref<512x2xf32, #tpu.memory_space<vmem>>, %arg7: memref<512x2xf32, #tpu.memory_space<vmem>>, %arg8: memref<512x2xf32, #tpu.memory_space<vmem>>, %arg9: memref<512x2xf32, #tpu.memory_space<vmem>>, %arg10: memref<9x2xf32, #tpu.memory_space<vmem>>, %arg11: memref<1x2xf32, #tpu.memory_space<vmem>>, %arg12: memref<512x2xf32, #tpu.memory_space<vmem>>) attributes {dimension_semantics = [#tpu.dimension_semantics<parallel>], iteration_bounds = array<i64: 1>, scalar_prefetch = 0 : i64, scratch_operands = 0 : i64, tpu.core_type = #tpu.core_type<tc>, window_params = [{transform_indices = @transform_0, window_bounds = array<i64: 512, 2>}, {transform_indices = @transform_1, window_bounds = array<i64: 512, 2>}, {transform_indices = @transform_2, window_bounds = array<i64: 512, 2>}, {transform_indices = @transform_3, window_bounds = array<i64: 512, 2>}, {transform_indices = @transform_4, window_bounds = array<i64: 512, 2>}, {transform_indices = @transform_5, window_bounds = array<i64: 512, 2>}, {transform_indices = @transform_6, window_bounds = array<i64: 512, 2>}, {transform_indices = @transform_7, window_bounds = array<i64: 512, 2>}, {transform_indices = @transform_8, window_bounds = array<i64: 512, 2>}, {pipeline_mode = #tpu.pipeline_mode<synchronous>, transform_indices = @transform_9, window_bounds = array<i64: 9, 2>}, {pipeline_mode = #tpu.pipeline_mode<synchronous>, transform_indices = @transform_10, window_bounds = array<i64: 1, 2>}, {transform_indices = @transform_11, window_bounds = array<i64: 512, 2>}]} {
    %cst = arith.constant 0.000000e+00 : f32
    %0 = vector.broadcast %cst : f32 to vector<512x2xf32>
    %c0 = arith.constant 0 : index
    %c0_0 = arith.constant 0 : index
    %1 = vector.load %arg11[%c0, %c0_0] : memref<1x2xf32, #tpu.memory_space<vmem>>, vector<1x2xf32>
    %2 = vector.broadcast %1 : vector<1x2xf32> to vector<512x2xf32>
    %3 = arith.addf %0, %2 : vector<512x2xf32>
    %c0_1 = arith.constant 0 : index
    %c0_2 = arith.constant 0 : index
    %4 = vector.load %arg1[%c0_1, %c0_2] : memref<512x2xf32, #tpu.memory_space<vmem>>, vector<512x2xf32>
    %c0_3 = arith.constant 0 : index
    %c0_4 = arith.constant 0 : index
    %5 = vector.load %arg10[%c0_3, %c0_4] : memref<9x2xf32, #tpu.memory_space<vmem>>, vector<1x2xf32>
    %6 = vector.broadcast %5 : vector<1x2xf32> to vector<512x2xf32>
    %7 = arith.mulf %4, %6 : vector<512x2xf32>
    %8 = arith.addf %3, %7 : vector<512x2xf32>
    %c0_5 = arith.constant 0 : index
    %c0_6 = arith.constant 0 : index
    %9 = vector.load %arg2[%c0_5, %c0_6] : memref<512x2xf32, #tpu.memory_space<vmem>>, vector<512x2xf32>
    %c1 = arith.constant 1 : index
    %c0_7 = arith.constant 0 : index
    %10 = vector.load %arg10[%c1, %c0_7] : memref<9x2xf32, #tpu.memory_space<vmem>>, vector<1x2xf32>
    %11 = vector.broadcast %10 : vector<1x2xf32> to vector<512x2xf32>
    %12 = arith.mulf %9, %11 : vector<512x2xf32>
    %13 = arith.addf %8, %12 : vector<512x2xf32>
    %c0_8 = arith.constant 0 : index
    %c0_9 = arith.constant 0 : index
    %14 = vector.load %arg3[%c0_8, %c0_9] : memref<512x2xf32, #tpu.memory_space<vmem>>, vector<512x2xf32>
    %c2 = arith.constant 2 : index
    %c0_10 = arith.constant 0 : index
    %15 = vector.load %arg10[%c2, %c0_10] : memref<9x2xf32, #tpu.memory_space<vmem>>, vector<1x2xf32>
    %16 = vector.broadcast %15 : vector<1x2xf32> to vector<512x2xf32>
    %17 = arith.mulf %14, %16 : vector<512x2xf32>
    %18 = arith.addf %13, %17 : vector<512x2xf32>
    %c0_11 = arith.constant 0 : index
    %c0_12 = arith.constant 0 : index
    %19 = vector.load %arg4[%c0_11, %c0_12] : memref<512x2xf32, #tpu.memory_space<vmem>>, vector<512x2xf32>
    %c3 = arith.constant 3 : index
    %c0_13 = arith.constant 0 : index
    %20 = vector.load %arg10[%c3, %c0_13] : memref<9x2xf32, #tpu.memory_space<vmem>>, vector<1x2xf32>
    %21 = vector.broadcast %20 : vector<1x2xf32> to vector<512x2xf32>
    %22 = arith.mulf %19, %21 : vector<512x2xf32>
    %23 = arith.addf %18, %22 : vector<512x2xf32>
    %c0_14 = arith.constant 0 : index
    %c0_15 = arith.constant 0 : index
    %24 = vector.load %arg5[%c0_14, %c0_15] : memref<512x2xf32, #tpu.memory_space<vmem>>, vector<512x2xf32>
    %c4 = arith.constant 4 : index
    %c0_16 = arith.constant 0 : index
    %25 = vector.load %arg10[%c4, %c0_16] : memref<9x2xf32, #tpu.memory_space<vmem>>, vector<1x2xf32>
    %26 = vector.broadcast %25 : vector<1x2xf32> to vector<512x2xf32>
    %27 = arith.mulf %24, %26 : vector<512x2xf32>
    %28 = arith.addf %23, %27 : vector<512x2xf32>
    %c0_17 = arith.constant 0 : index
    %c0_18 = arith.constant 0 : index
    %29 = vector.load %arg6[%c0_17, %c0_18] : memref<512x2xf32, #tpu.memory_space<vmem>>, vector<512x2xf32>
    %c5 = arith.constant 5 : index
    %c0_19 = arith.constant 0 : index
    %30 = vector.load %arg10[%c5, %c0_19] : memref<9x2xf32, #tpu.memory_space<vmem>>, vector<1x2xf32>
    %31 = vector.broadcast %30 : vector<1x2xf32> to vector<512x2xf32>
    %32 = arith.mulf %29, %31 : vector<512x2xf32>
    %33 = arith.addf %28, %32 : vector<512x2xf32>
    %c0_20 = arith.constant 0 : index
    %c0_21 = arith.constant 0 : index
    %34 = vector.load %arg7[%c0_20, %c0_21] : memref<512x2xf32, #tpu.memory_space<vmem>>, vector<512x2xf32>
    %c6 = arith.constant 6 : index
    %c0_22 = arith.constant 0 : index
    %35 = vector.load %arg10[%c6, %c0_22] : memref<9x2xf32, #tpu.memory_space<vmem>>, vector<1x2xf32>
    %36 = vector.broadcast %35 : vector<1x2xf32> to vector<512x2xf32>
    %37 = arith.mulf %34, %36 : vector<512x2xf32>
    %38 = arith.addf %33, %37 : vector<512x2xf32>
    %c0_23 = arith.constant 0 : index
    %c0_24 = arith.constant 0 : index
    %39 = vector.load %arg8[%c0_23, %c0_24] : memref<512x2xf32, #tpu.memory_space<vmem>>, vector<512x2xf32>
    %c7 = arith.constant 7 : index
    %c0_25 = arith.constant 0 : index
    %40 = vector.load %arg10[%c7, %c0_25] : memref<9x2xf32, #tpu.memory_space<vmem>>, vector<1x2xf32>
    %41 = vector.broadcast %40 : vector<1x2xf32> to vector<512x2xf32>
    %42 = arith.mulf %39, %41 : vector<512x2xf32>
    %43 = arith.addf %38, %42 : vector<512x2xf32>
    %c0_26 = arith.constant 0 : index
    %c0_27 = arith.constant 0 : index
    %44 = vector.load %arg9[%c0_26, %c0_27] : memref<512x2xf32, #tpu.memory_space<vmem>>, vector<512x2xf32>
    %c8 = arith.constant 8 : index
    %c0_28 = arith.constant 0 : index
    %45 = vector.load %arg10[%c8, %c0_28] : memref<9x2xf32, #tpu.memory_space<vmem>>, vector<1x2xf32>
    %46 = vector.broadcast %45 : vector<1x2xf32> to vector<512x2xf32>
    %47 = arith.mulf %44, %46 : vector<512x2xf32>
    %48 = arith.addf %43, %47 : vector<512x2xf32>
    %c0_29 = arith.constant 0 : index
    %c0_30 = arith.constant 0 : index
    %49 = vector.load %arg12[%c0_29, %c0_30] : memref<512x2xf32, #tpu.memory_space<vmem>>, vector<512x2xf32>
    tpu.vector_store %arg12[%c0_29, %c0_30], %48 {strides = array<i32>} : memref<512x2xf32, #tpu.memory_space<vmem>>, vector<512x2xf32>,
    return
  }
  func.func @transform_0(%arg0: i32) -> (i32, i32) {
    %c0_i32 = arith.constant 0 : i32
    %c0_i32_0 = arith.constant 0 : i32
    return %arg0, %c0_i32 : i32, i32
  }
  func.func @transform_1(%arg0: i32) -> (i32, i32) {
    %c0_i32 = arith.constant 0 : i32
    %c0_i32_0 = arith.constant 0 : i32
    return %arg0, %c0_i32 : i32, i32
  }
  func.func @transform_2(%arg0: i32) -> (i32, i32) {
    %c0_i32 = arith.constant 0 : i32
    %c0_i32_0 = arith.constant 0 : i32
    return %arg0, %c0_i32 : i32, i32
  }
  func.func @transform_3(%arg0: i32) -> (i32, i32) {
    %c0_i32 = arith.constant 0 : i32
    %c0_i32_0 = arith.constant 0 : i32
    return %arg0, %c0_i32 : i32, i32
  }
  func.func @transform_4(%arg0: i32) -> (i32, i32) {
    %c0_i32 = arith.constant 0 : i32
    %c0_i32_0 = arith.constant 0 : i32
    return %arg0, %c0_i32 : i32, i32
  }
  func.func @transform_5(%arg0: i32) -> (i32, i32) {
    %c0_i32 = arith.constant 0 : i32
    %c0_i32_0 = arith.constant 0 : i32
    return %arg0, %c0_i32 : i32, i32
  }
  func.func @transform_6(%arg0: i32) -> (i32, i32) {
    %c0_i32 = arith.constant 0 : i32
    %c0_i32_0 = arith.constant 0 : i32
    return %arg0, %c0_i32 : i32, i32
  }
  func.func @transform_7(%arg0: i32) -> (i32, i32) {
    %c0_i32 = arith.constant 0 : i32
    %c0_i32_0 = arith.constant 0 : i32
    return %arg0, %c0_i32 : i32, i32
  }
  func.func @transform_8(%arg0: i32) -> (i32, i32) {
    %c0_i32 = arith.constant 0 : i32
    %c0_i32_0 = arith.constant 0 : i32
    return %arg0, %c0_i32 : i32, i32
  }
  func.func @transform_9(%arg0: i32) -> (i32, i32) {
    %c0_i32 = arith.constant 0 : i32
    %c0_i32_0 = arith.constant 0 : i32
    %c0_i32_1 = arith.constant 0 : i32
    return %c0_i32, %c0_i32_0 : i32, i32
  }
  func.func @transform_10(%arg0: i32) -> (i32, i32) {
    %c0_i32 = arith.constant 0 : i32
    %c0_i32_0 = arith.constant 0 : i32
    %c0_i32_1 = arith.constant 0 : i32
    return %c0_i32, %c0_i32_0 : i32, i32
  }
  func.func @transform_11(%arg0: i32) -> (i32, i32) {
    %c0_i32 = arith.constant 0 : i32
    %c0_i32_0 = arith.constant 0 : i32
    return %arg0, %c0_i32 : i32, i32
  }
}

</mosaic_0001>

<llo_original>
// kernel: mab_forward.9
$region0: #{mab_forward.9}
  #allocation0 [shape = 'u32[]', space=smem, size = 0x4, offset = 0x4, fixed_abs, tag = 'smem constant byte address 0x4 - core index']
  #allocation1 [shape = 'u32[144,128]{1,0:T(1,128)}', space=vmem, size = 0x12000, scoped, tag = 'internal scratch']
  %s0 = inlined_call_operand.vmem [shape: f32[512,72], index: 0, kind: input, shape index: {}]
  %s1 = inlined_call_operand.vmem [shape: f32[72,8], index: 1, kind: input, shape index: {}]
  %s2 = inlined_call_operand.vmem [shape: f32[1,8], index: 2, kind: input, shape index: {}]
  %s3 = inlined_call_operand.vmem [shape: f32[512,8], index: 3, kind: output, shape index: {}]
  %s4 = sld [smem:[#allocation0]]
  $region22: #{mab_forward.9} parent=0
    _
  %s6 = ssub.s32 1, %s4
  %s7 = scalar_select 0, %s6, %s4
  // Predicated region
  $region2: #{mab_forward.9} parent=0 // pred_check
    _
  $region3: #{mab_forward.9} parent=0 // pred_check_branch
    %9 = sbr.rel (0) target = $region5
  $region4: #{mab_forward.9} parent=0 // pred_region
    _
  $region5: #{mab_forward.9} parent=0 // pred_fallthru
    _
  // Predicated region
  $region6: #{mab_forward.9} parent=0 // pred_check
    _
  $region7: #{mab_forward.9} parent=0 // pred_check_branch
    %11 = sbr.rel (0) target = $region9
  $region8: #{mab_forward.9} parent=0 // pred_region
    _
  $region9: #{mab_forward.9} parent=0 // pred_fallthru
    _
  // Predicated region
  $region10: #{mab_forward.9} parent=0 // pred_check
    _
  $region11: #{mab_forward.9} parent=0 // pred_check_branch
    %13 = sbr.rel (0) target = $region13
  $region12: #{mab_forward.9} parent=0 // pred_region
    _
  $region13: #{mab_forward.9} parent=0 // pred_fallthru
    _
  %v14 = vld [vmem:[%s0] sm:$0xff]
  %v15 = vld [vmem:[%s0 + $0x8] sm:$0xff]
  %v16 = vld [vmem:[%s0 + $0x10] sm:$0xff]
  %v17 = vld [vmem:[%s0 + $0x18] sm:$0xff]
  %v18 = vld [vmem:[%s0 + $0x20] sm:$0xff]
  %v19 = vld [vmem:[%s0 + $0x28] sm:$0xff]
  %v20 = vld [vmem:[%s0 + $0x30] sm:$0xff]
  %v21 = vld [vmem:[%s0 + $0x38] sm:$0xff]
  %v22 = vld [vmem:[%s0 + $0x40] sm:$0xff]
  %v23 = vld [vmem:[%s0 + $0x48] sm:$0xff]
  %v24 = vld [vmem:[%s0 + $0x50] sm:$0xff]
  %v25 = vld [vmem:[%s0 + $0x58] sm:$0xff]
  %v26 = vld [vmem:[%s0 + $0x60] sm:$0xff]
  %v27 = vld [vmem:[%s0 + $0x68] sm:$0xff]
  %v28 = vld [vmem:[%s0 + $0x70] sm:$0xff]
  %v29 = vld [vmem:[%s0 + $0x78] sm:$0xff]
  %v30 = vld [vmem:[%s0 + $0x80] sm:$0xff]
  %v31 = vld [vmem:[%s0 + $0x88] sm:$0xff]
  %v32 = vld [vmem:[%s0 + $0x90] sm:$0xff]
  %v33 = vld [vmem:[%s0 + $0x98] sm:$0xff]
  %v34 = vld [vmem:[%s0 + $0xa0] sm:$0xff]
  %v35 = vld [vmem:[%s0 + $0xa8] sm:$0xff]
  %v36 = vld [vmem:[%s0 + $0xb0] sm:$0xff]
  %v37 = vld [vmem:[%s0 + $0xb8] sm:$0xff]
  %v38 = vld [vmem:[%s0 + $0xc0] sm:$0xff]
  %v39 = vld [vmem:[%s0 + $0xc8] sm:$0xff]
  %v40 = vld [vmem:[%s0 + $0xd0] sm:$0xff]
  %v41 = vld [vmem:[%s0 + $0xd8] sm:$0xff]
  %v42 = vld [vmem:[%s0 + $0xe0] sm:$0xff]
  %v43 = vld [vmem:[%s0 + $0xe8] sm:$0xff]
  %v44 = vld [vmem:[%s0 + $0xf0] sm:$0xff]
  %v45 = vld [vmem:[%s0 + $0xf8] sm:$0xff]
  %v46 = vld [vmem:[%s0 + $0x100] sm:$0xff]
  %v47 = vld [vmem:[%s0 + $0x108] sm:$0xff]
  %v48 = vld [vmem:[%s0 + $0x110] sm:$0xff]
  %v49 = vld [vmem:[%s0 + $0x118] sm:$0xff]
  %v50 = vld [vmem:[%s0 + $0x120] sm:$0xff]
  %v51 = vld [vmem:[%s0 + $0x128] sm:$0xff]
  %v52 = vld [vmem:[%s0 + $0x130] sm:$0xff]
  %v53 = vld [vmem:[%s0 + $0x138] sm:$0xff]
  %v54 = vld [vmem:[%s0 + $0x140] sm:$0xff]
  %v55 = vld [vmem:[%s0 + $0x148] sm:$0xff]
  %v56 = vld [vmem:[%s0 + $0x150] sm:$0xff]
  %v57 = vld [vmem:[%s0 + $0x158] sm:$0xff]
  %v58 = vld [vmem:[%s0 + $0x160] sm:$0xff]
  %v59 = vld [vmem:[%s0 + $0x168] sm:$0xff]
  %v60 = vld [vmem:[%s0 + $0x170] sm:$0xff]
  %v61 = vld [vmem:[%s0 + $0x178] sm:$0xff]
  %v62 = vld [vmem:[%s0 + $0x180] sm:$0xff]
  %v63 = vld [vmem:[%s0 + $0x188] sm:$0xff]
  %v64 = vld [vmem:[%s0 + $0x190] sm:$0xff]
  %v65 = vld [vmem:[%s0 + $0x198] sm:$0xff]
  %v66 = vld [vmem:[%s0 + $0x1a0] sm:$0xff]
  %v67 = vld [vmem:[%s0 + $0x1a8] sm:$0xff]
  %v68 = vld [vmem:[%s0 + $0x1b0] sm:$0xff]
  %v69 = vld [vmem:[%s0 + $0x1b8] sm:$0xff]
  %v70 = vld [vmem:[%s0 + $0x1c0] sm:$0xff]
  %v71 = vld [vmem:[%s0 + $0x1c8] sm:$0xff]
  %v72 = vld [vmem:[%s0 + $0x1d0] sm:$0xff]
  %v73 = vld [vmem:[%s0 + $0x1d8] sm:$0xff]
  %v74 = vld [vmem:[%s0 + $0x1e0] sm:$0xff]
  %v75 = vld [vmem:[%s0 + $0x1e8] sm:$0xff]
  %v76 = vld [vmem:[%s0 + $0x1f0] sm:$0xff]
  %v77 = vld [vmem:[%s0 + $0x1f8] sm:$0xff]
  %v78 = vld [vmem:[%s1] sm:$0xff]
  %v79 = vld [vmem:[%s1 + $0x8] sm:$0xff]
  %v80 = vld [vmem:[%s1 + $0x10] sm:$0xff]
  %v81 = vld [vmem:[%s1 + $0x18] sm:$0xff]
  %v82 = vld [vmem:[%s1 + $0x20] sm:$0xff]
  %v83 = vld [vmem:[%s1 + $0x28] sm:$0xff]
  %v84 = vld [vmem:[%s1 + $0x30] sm:$0xff]
  %v85 = vld [vmem:[%s1 + $0x38] sm:$0xff]
  %v86 = vld [vmem:[%s1 + $0x40] sm:$0xff]
  %v87 = vld [vmem:[%s2] sm:$0x1]
  %v89 = vlaneseq
  %v90 = vshrl.u32 %v89, 7
  %v91 = vsub.s32 0, %v90
  %v92 = vrot.slane %v87, %v91
  %vm94 = vcmask 588800
  %v96 = vsel %vm94, %v14, 0
  %v99 = vsel %vm94, %v15, 0
  %v102 = vsel %vm94, %v16, 0
  %v105 = vsel %vm94, %v17, 0
  %v108 = vsel %vm94, %v18, 0
  %v111 = vsel %vm94, %v19, 0
  %v114 = vsel %vm94, %v20, 0
  %v117 = vsel %vm94, %v21, 0
  %v120 = vsel %vm94, %v22, 0
  %v123 = vsel %vm94, %v23, 0
  %v126 = vsel %vm94, %v24, 0
  %v129 = vsel %vm94, %v25, 0
  %v132 = vsel %vm94, %v26, 0
  %v135 = vsel %vm94, %v27, 0
  %v138 = vsel %vm94, %v28, 0
  %v141 = vsel %vm94, %v29, 0
  %v144 = vsel %vm94, %v30, 0
  %v147 = vsel %vm94, %v31, 0
  %v150 = vsel %vm94, %v32, 0
  %v153 = vsel %vm94, %v33, 0
  %v156 = vsel %vm94, %v34, 0
  %v159 = vsel %vm94, %v35, 0
  %v162 = vsel %vm94, %v36, 0
  %v165 = vsel %vm94, %v37, 0
  %v168 = vsel %vm94, %v38, 0
  %v171 = vsel %vm94, %v39, 0
  %v174 = vsel %vm94, %v40, 0
  %v177 = vsel %vm94, %v41, 0
  %v180 = vsel %vm94, %v42, 0
  %v183 = vsel %vm94, %v43, 0
  %v186 = vsel %vm94, %v44, 0
  %v189 = vsel %vm94, %v45, 0
  %v192 = vsel %vm94, %v46, 0
  %v195 = vsel %vm94, %v47, 0
  %v198 = vsel %vm94, %v48, 0
  %v201 = vsel %vm94, %v49, 0
  %v204 = vsel %vm94, %v50, 0
  %v207 = vsel %vm94, %v51, 0
  %v210 = vsel %vm94, %v52, 0
  %v213 = vsel %vm94, %v53, 0
  %v216 = vsel %vm94, %v54, 0
  %v219 = vsel %vm94, %v55, 0
  %v222 = vsel %vm94, %v56, 0
  %v225 = vsel %vm94, %v57, 0
  %v228 = vsel %vm94, %v58, 0
  %v231 = vsel %vm94, %v59, 0
  %v234 = vsel %vm94, %v60, 0
  %v237 = vsel %vm94, %v61, 0
  %v240 = vsel %vm94, %v62, 0
  %v243 = vsel %vm94, %v63, 0
  %v246 = vsel %vm94, %v64, 0
  %v249 = vsel %vm94, %v65, 0
  %v252 = vsel %vm94, %v66, 0
  %v255 = vsel %vm94, %v67, 0
  %v258 = vsel %vm94, %v68, 0
  %v261 = vsel %vm94, %v69, 0
  %v264 = vsel %vm94, %v70, 0
  %v267 = vsel %vm94, %v71, 0
  %v270 = vsel %vm94, %v72, 0
  %v273 = vsel %vm94, %v73, 0
  %v276 = vsel %vm94, %v74, 0
  %v279 = vsel %vm94, %v75, 0
  %v282 = vsel %vm94, %v76, 0
  %v285 = vsel %vm94, %v77, 0
  %287 = vmatprep.subr.mxu0 0.0
  %288 = vmatpush1.msra.mxu0 0.0
  %289 = vmatprep.subr.mxu0 0.0
  %290 = vmatpush1.msra.mxu0 0.0
  %291 = vmatprep.subr.mxu0 0.0
  %292 = vmatpush1.msra.mxu0 0.0
  %293 = vmatprep.subr.mxu0 0.0
  %294 = vmatpush1.msra.mxu0 0.0
  %295 = vmatprep.subr.mxu0 0.0
  %296 = vmatpush1.msra.mxu0 0.0
  %297 = vmatprep.subr.mxu0 0.0
  %298 = vmatpush1.msra.mxu0 0.0
  %299 = vmatprep.subr.mxu0 0.0
  %300 = vmatpush1.msra.mxu0 0.0
  %301 = vmatprep.subr.mxu0 0.0
  %302 = vmatpush1.msra.mxu0 %v86
  %303 = vmatprep.subr.mxu0 0.0
  %304 = vmatpush1.msra.mxu0 %v85
  %305 = vmatprep.subr.mxu0 0.0
  %306 = vmatpush1.msra.mxu0 %v84
  %307 = vmatprep.subr.mxu0 0.0
  %308 = vmatpush1.msra.mxu0 %v83
  %309 = vmatprep.subr.mxu0 0.0
  %310 = vmatpush1.msra.mxu0 %v82
  %311 = vmatprep.subr.mxu0 0.0
  %312 = vmatpush1.msra.mxu0 %v81
  %313 = vmatprep.subr.mxu0 0.0
  %314 = vmatpush1.msra.mxu0 %v80
  %315 = vmatprep.subr.mxu0 0.0
  %316 = vmatpush1.msra.mxu0 %v79
  %317 = vmatprep.subr.mxu0 0.0
  %318 = vmatpush1.msra.mxu0 %v78
  %319 = vmatprep.subr.mxu0 0.0
  %320 = vmatpush2.msra.mxu0 0.0
  %321 = vmatprep.subr.mxu0 0.0
  %322 = vmatpush2.msra.mxu0 0.0
  %323 = vmatprep.subr.mxu0 0.0
  %324 = vmatpush2.msra.mxu0 0.0
  %325 = vmatprep.subr.mxu0 0.0
  %326 = vmatpush2.msra.mxu0 0.0
  %327 = vmatprep.subr.mxu0 0.0
  %328 = vmatpush2.msra.mxu0 0.0
  %329 = vmatprep.subr.mxu0 0.0
  %330 = vmatpush2.msra.mxu0 0.0
  %331 = vmatprep.subr.mxu0 0.0
  %332 = vmatpush2.msra.mxu0 0.0
  %333 = vmatprep.subr.mxu0 0.0
  %334 = vmatpush2.msra.mxu0 0.0
  %335 = vmatprep.subr.mxu0 0.0
  %336 = vmatpush2.msra.mxu0 0.0
  %337 = vmatprep.subr.mxu0 0.0
  %338 = vmatpush2.msra.mxu0 0.0
  %339 = vmatprep.subr.mxu0 0.0
  %340 = vmatpush2.msra.mxu0 0.0
  %341 = vmatprep.subr.mxu0 0.0
  %342 = vmatpush2.msra.mxu0 0.0
  %343 = vmatprep.subr.mxu0 0.0
  %344 = vmatpush2.msra.mxu0 0.0
  %345 = vmatprep.subr.mxu0 0.0
  %346 = vmatpush2.msra.mxu0 0.0
  %347 = vmatprep.subr.mxu0 0.0
  %348 = vmatpush2.msra.mxu0 0.0
  %349 = vmatprep.subr.mxu0 0.0
  %350 = vmatpush2.msra.mxu0 0.0
  %351 = vmatprep.mubr.f32.mxu0 0.0
  %352 = vmatmul.mubr.f32.gmra.mxu0 %v96
  %v353 = vpop.f32.mrf.mxu0
  %v354 = vadd.f32 %v92, %v353
  %v355 = vpop.f32.mrf.mxu0
  %356 = vmatprep.mubr.f32.mxu0 0.0
  %357 = vmatmul.mubr.f32.gmra.mxu0 %v99
  %v358 = vpop.f32.mrf.mxu0
  %v359 = vadd.f32 %v92, %v358
  %v360 = vpop.f32.mrf.mxu0
  %361 = vmatprep.mubr.f32.mxu0 0.0
  %362 = vmatmul.mubr.f32.gmra.mxu0 %v102
  %v363 = vpop.f32.mrf.mxu0
  %v364 = vadd.f32 %v92, %v363
  %v365 = vpop.f32.mrf.mxu0
  %366 = vmatprep.mubr.f32.mxu0 0.0
  %367 = vmatmul.mubr.f32.gmra.mxu0 %v105
  %v368 = vpop.f32.mrf.mxu0
  %v369 = vadd.f32 %v92, %v368
  %v370 = vpop.f32.mrf.mxu0
  %371 = vmatprep.mubr.f32.mxu0 0.0
  %372 = vmatmul.mubr.f32.gmra.mxu0 %v108
  %v373 = vpop.f32.mrf.mxu0
  %v374 = vadd.f32 %v92, %v373
  %v375 = vpop.f32.mrf.mxu0
  %376 = vmatprep.mubr.f32.mxu0 0.0
  %377 = vmatmul.mubr.f32.gmra.mxu0 %v111
  %v378 = vpop.f32.mrf.mxu0
  %v379 = vadd.f32 %v92, %v378
  %v380 = vpop.f32.mrf.mxu0
  %381 = vmatprep.mubr.f32.mxu0 0.0
  %382 = vmatmul.mubr.f32.gmra.mxu0 %v114
  %v383 = vpop.f32.mrf.mxu0
  %v384 = vadd.f32 %v92, %v383
  %v385 = vpop.f32.mrf.mxu0
  %386 = vmatprep.mubr.f32.mxu0 0.0
  %387 = vmatmul.mubr.f32.gmra.mxu0 %v117
  %v388 = vpop.f32.mrf.mxu0
  %v389 = vadd.f32 %v92, %v388
  %v390 = vpop.f32.mrf.mxu0
  %391 = vmatprep.mubr.f32.mxu0 0.0
  %392 = vmatmul.mubr.f32.gmra.mxu0 %v120
  %v393 = vpop.f32.mrf.mxu0
  %v394 = vadd.f32 %v92, %v393
  %v395 = vpop.f32.mrf.mxu0
  %396 = vmatprep.mubr.f32.mxu0 0.0
  %397 = vmatmul.mubr.f32.gmra.mxu0 %v123
  %v398 = vpop.f32.mrf.mxu0
  %v399 = vadd.f32 %v92, %v398
  %v400 = vpop.f32.mrf.mxu0
  %401 = vmatprep.mubr.f32.mxu0 0.0
  %402 = vmatmul.mubr.f32.gmra.mxu0 %v126
  %v403 = vpop.f32.mrf.mxu0
  %v404 = vadd.f32 %v92, %v403
  %v405 = vpop.f32.mrf.mxu0
  %406 = vmatprep.mubr.f32.mxu0 0.0
  %407 = vmatmul.mubr.f32.gmra.mxu0 %v129
  %v408 = vpop.f32.mrf.mxu0
  %v409 = vadd.f32 %v92, %v408
  %v410 = vpop.f32.mrf.mxu0
  %411 = vmatprep.mubr.f32.mxu0 0.0
  %412 = vmatmul.mubr.f32.gmra.mxu0 %v132
  %v413 = vpop.f32.mrf.mxu0
  %v414 = vadd.f32 %v92, %v413
  %v415 = vpop.f32.mrf.mxu0
  %416 = vmatprep.mubr.f32.mxu0 0.0
  %417 = vmatmul.mubr.f32.gmra.mxu0 %v135
  %v418 = vpop.f32.mrf.mxu0
  %v419 = vadd.f32 %v92, %v418
  %v420 = vpop.f32.mrf.mxu0
  %421 = vmatprep.mubr.f32.mxu0 0.0
  %422 = vmatmul.mubr.f32.gmra.mxu0 %v138
  %v423 = vpop.f32.mrf.mxu0
  %v424 = vadd.f32 %v92, %v423
  %v425 = vpop.f32.mrf.mxu0
  %426 = vmatprep.mubr.f32.mxu0 0.0
  %427 = vmatmul.mubr.f32.gmra.mxu0 %v141
  %v428 = vpop.f32.mrf.mxu0
  %v429 = vadd.f32 %v92, %v428
  %v430 = vpop.f32.mrf.mxu0
  %431 = vmatprep.mubr.f32.mxu0 0.0
  %432 = vmatmul.mubr.f32.gmra.mxu0 %v144
  %v433 = vpop.f32.mrf.mxu0
  %v434 = vadd.f32 %v92, %v433
  %v435 = vpop.f32.mrf.mxu0
  %436 = vmatprep.mubr.f32.mxu0 0.0
  %437 = vmatmul.mubr.f32.gmra.mxu0 %v147
  %v438 = vpop.f32.mrf.mxu0
  %v439 = vadd.f32 %v92, %v438
  %v440 = vpop.f32.mrf.mxu0
  %441 = vmatprep.mubr.f32.mxu0 0.0
  %442 = vmatmul.mubr.f32.gmra.mxu0 %v150
  %v443 = vpop.f32.mrf.mxu0
  %v444 = vadd.f32 %v92, %v443
  %v445 = vpop.f32.mrf.mxu0
  %446 = vmatprep.mubr.f32.mxu0 0.0
  %447 = vmatmul.mubr.f32.gmra.mxu0 %v153
  %v448 = vpop.f32.mrf.mxu0
  %v449 = vadd.f32 %v92, %v448
  %v450 = vpop.f32.mrf.mxu0
  %451 = vmatprep.mubr.f32.mxu0 0.0
  %452 = vmatmul.mubr.f32.gmra.mxu0 %v156
  %v453 = vpop.f32.mrf.mxu0
  %v454 = vadd.f32 %v92, %v453
  %v455 = vpop.f32.mrf.mxu0
  %456 = vmatprep.mubr.f32.mxu0 0.0
  %457 = vmatmul.mubr.f32.gmra.mxu0 %v159
  %v458 = vpop.f32.mrf.mxu0
  %v459 = vadd.f32 %v92, %v458
  %v460 = vpop.f32.mrf.mxu0
  %461 = vmatprep.mubr.f32.mxu0 0.0
  %462 = vmatmul.mubr.f32.gmra.mxu0 %v162
  %v463 = vpop.f32.mrf.mxu0
  %v464 = vadd.f32 %v92, %v463
  %v465 = vpop.f32.mrf.mxu0
  %466 = vmatprep.mubr.f32.mxu0 0.0
  %467 = vmatmul.mubr.f32.gmra.mxu0 %v165
  %v468 = vpop.f32.mrf.mxu0
  %v469 = vadd.f32 %v92, %v468
  %v470 = vpop.f32.mrf.mxu0
  %471 = vmatprep.mubr.f32.mxu0 0.0
  %472 = vmatmul.mubr.f32.gmra.mxu0 %v168
  %v473 = vpop.f32.mrf.mxu0
  %v474 = vadd.f32 %v92, %v473
  %v475 = vpop.f32.mrf.mxu0
  %476 = vmatprep.mubr.f32.mxu0 0.0
  %477 = vmatmul.mubr.f32.gmra.mxu0 %v171
  %v478 = vpop.f32.mrf.mxu0
  %v479 = vadd.f32 %v92, %v478
  %v480 = vpop.f32.mrf.mxu0
  %481 = vmatprep.mubr.f32.mxu0 0.0
  %482 = vmatmul.mubr.f32.gmra.mxu0 %v174
  %v483 = vpop.f32.mrf.mxu0
  %v484 = vadd.f32 %v92, %v483
  %v485 = vpop.f32.mrf.mxu0
  %486 = vmatprep.mubr.f32.mxu0 0.0
  %487 = vmatmul.mubr.f32.gmra.mxu0 %v177
  %v488 = vpop.f32.mrf.mxu0
  %v489 = vadd.f32 %v92, %v488
  %v490 = vpop.f32.mrf.mxu0
  %491 = vmatprep.mubr.f32.mxu0 0.0
  %492 = vmatmul.mubr.f32.gmra.mxu0 %v180
  %v493 = vpop.f32.mrf.mxu0
  %v494 = vadd.f32 %v92, %v493
  %v495 = vpop.f32.mrf.mxu0
  %496 = vmatprep.mubr.f32.mxu0 0.0
  %497 = vmatmul.mubr.f32.gmra.mxu0 %v183
  %v498 = vpop.f32.mrf.mxu0
  %v499 = vadd.f32 %v92, %v498
  %v500 = vpop.f32.mrf.mxu0
  %501 = vmatprep.mubr.f32.mxu0 0.0
  %502 = vmatmul.mubr.f32.gmra.mxu0 %v186
  %v503 = vpop.f32.mrf.mxu0
  %v504 = vadd.f32 %v92, %v503
  %v505 = vpop.f32.mrf.mxu0
  %506 = vmatprep.mubr.f32.mxu0 0.0
  %507 = vmatmul.mubr.f32.gmra.mxu0 %v189
  %v508 = vpop.f32.mrf.mxu0
  %v509 = vadd.f32 %v92, %v508
  %v510 = vpop.f32.mrf.mxu0
  %511 = vmatprep.mubr.f32.mxu0 0.0
  %512 = vmatmul.mubr.f32.gmra.mxu0 %v192
  %v513 = vpop.f32.mrf.mxu0
  %v514 = vadd.f32 %v92, %v513
  %v515 = vpop.f32.mrf.mxu0
  %516 = vmatprep.mubr.f32.mxu0 0.0
  %517 = vmatmul.mubr.f32.gmra.mxu0 %v195
  %v518 = vpop.f32.mrf.mxu0
  %v519 = vadd.f32 %v92, %v518
  %v520 = vpop.f32.mrf.mxu0
  %521 = vmatprep.mubr.f32.mxu0 0.0
  %522 = vmatmul.mubr.f32.gmra.mxu0 %v198
  %v523 = vpop.f32.mrf.mxu0
  %v524 = vadd.f32 %v92, %v523
  %v525 = vpop.f32.mrf.mxu0
  %526 = vmatprep.mubr.f32.mxu0 0.0
  %527 = vmatmul.mubr.f32.gmra.mxu0 %v201
  %v528 = vpop.f32.mrf.mxu0
  %v529 = vadd.f32 %v92, %v528
  %v530 = vpop.f32.mrf.mxu0
  %531 = vmatprep.mubr.f32.mxu0 0.0
  %532 = vmatmul.mubr.f32.gmra.mxu0 %v204
  %v533 = vpop.f32.mrf.mxu0
  %v534 = vadd.f32 %v92, %v533
  %v535 = vpop.f32.mrf.mxu0
  %536 = vmatprep.mubr.f32.mxu0 0.0
  %537 = vmatmul.mubr.f32.gmra.mxu0 %v207
  %v538 = vpop.f32.mrf.mxu0
  %v539 = vadd.f32 %v92, %v538
  %v540 = vpop.f32.mrf.mxu0
  %541 = vmatprep.mubr.f32.mxu0 0.0
  %542 = vmatmul.mubr.f32.gmra.mxu0 %v210
  %v543 = vpop.f32.mrf.mxu0
  %v544 = vadd.f32 %v92, %v543
  %v545 = vpop.f32.mrf.mxu0
  %546 = vmatprep.mubr.f32.mxu0 0.0
  %547 = vmatmul.mubr.f32.gmra.mxu0 %v213
  %v548 = vpop.f32.mrf.mxu0
  %v549 = vadd.f32 %v92, %v548
  %v550 = vpop.f32.mrf.mxu0
  %551 = vmatprep.mubr.f32.mxu0 0.0
  %552 = vmatmul.mubr.f32.gmra.mxu0 %v216
  %v553 = vpop.f32.mrf.mxu0
  %v554 = vadd.f32 %v92, %v553
  %v555 = vpop.f32.mrf.mxu0
  %556 = vmatprep.mubr.f32.mxu0 0.0
  %557 = vmatmul.mubr.f32.gmra.mxu0 %v219
  %v558 = vpop.f32.mrf.mxu0
  %v559 = vadd.f32 %v92, %v558
  %v560 = vpop.f32.mrf.mxu0
  %561 = vmatprep.mubr.f32.mxu0 0.0
  %562 = vmatmul.mubr.f32.gmra.mxu0 %v222
  %v563 = vpop.f32.mrf.mxu0
  %v564 = vadd.f32 %v92, %v563
  %v565 = vpop.f32.mrf.mxu0
  %566 = vmatprep.mubr.f32.mxu0 0.0
  %567 = vmatmul.mubr.f32.gmra.mxu0 %v225
  %v568 = vpop.f32.mrf.mxu0
  %v569 = vadd.f32 %v92, %v568
  %v570 = vpop.f32.mrf.mxu0
  %571 = vmatprep.mubr.f32.mxu0 0.0
  %572 = vmatmul.mubr.f32.gmra.mxu0 %v228
  %v573 = vpop.f32.mrf.mxu0
  %v574 = vadd.f32 %v92, %v573
  %v575 = vpop.f32.mrf.mxu0
  %576 = vmatprep.mubr.f32.mxu0 0.0
  %577 = vmatmul.mubr.f32.gmra.mxu0 %v231
  %v578 = vpop.f32.mrf.mxu0
  %v579 = vadd.f32 %v92, %v578
  %v580 = vpop.f32.mrf.mxu0
  %581 = vmatprep.mubr.f32.mxu0 0.0
  %582 = vmatmul.mubr.f32.gmra.mxu0 %v234
  %v583 = vpop.f32.mrf.mxu0
  %v584 = vadd.f32 %v92, %v583
  %v585 = vpop.f32.mrf.mxu0
  %586 = vmatprep.mubr.f32.mxu0 0.0
  %587 = vmatmul.mubr.f32.gmra.mxu0 %v237
  %v588 = vpop.f32.mrf.mxu0
  %v589 = vadd.f32 %v92, %v588
  %v590 = vpop.f32.mrf.mxu0
  %591 = vmatprep.mubr.f32.mxu0 0.0
  %592 = vmatmul.mubr.f32.gmra.mxu0 %v240
  %v593 = vpop.f32.mrf.mxu0
  %v594 = vadd.f32 %v92, %v593
  %v595 = vpop.f32.mrf.mxu0
  %596 = vmatprep.mubr.f32.mxu0 0.0
  %597 = vmatmul.mubr.f32.gmra.mxu0 %v243
  %v598 = vpop.f32.mrf.mxu0
  %v599 = vadd.f32 %v92, %v598
  %v600 = vpop.f32.mrf.mxu0
  %601 = vmatprep.mubr.f32.mxu0 0.0
  %602 = vmatmul.mubr.f32.gmra.mxu0 %v246
  %v603 = vpop.f32.mrf.mxu0
  %v604 = vadd.f32 %v92, %v603
  %v605 = vpop.f32.mrf.mxu0
  %606 = vmatprep.mubr.f32.mxu0 0.0
  %607 = vmatmul.mubr.f32.gmra.mxu0 %v249
  %v608 = vpop.f32.mrf.mxu0
  %v609 = vadd.f32 %v92, %v608
  %v610 = vpop.f32.mrf.mxu0
  %611 = vmatprep.mubr.f32.mxu0 0.0
  %612 = vmatmul.mubr.f32.gmra.mxu0 %v252
  %v613 = vpop.f32.mrf.mxu0
  %v614 = vadd.f32 %v92, %v613
  %v615 = vpop.f32.mrf.mxu0
  %616 = vmatprep.mubr.f32.mxu0 0.0
  %617 = vmatmul.mubr.f32.gmra.mxu0 %v255
  %v618 = vpop.f32.mrf.mxu0
  %v619 = vadd.f32 %v92, %v618
  %v620 = vpop.f32.mrf.mxu0
  %621 = vmatprep.mubr.f32.mxu0 0.0
  %622 = vmatmul.mubr.f32.gmra.mxu0 %v258
  %v623 = vpop.f32.mrf.mxu0
  %v624 = vadd.f32 %v92, %v623
  %v625 = vpop.f32.mrf.mxu0
  %626 = vmatprep.mubr.f32.mxu0 0.0
  %627 = vmatmul.mubr.f32.gmra.mxu0 %v261
  %v628 = vpop.f32.mrf.mxu0
  %v629 = vadd.f32 %v92, %v628
  %v630 = vpop.f32.mrf.mxu0
  %631 = vmatprep.mubr.f32.mxu0 0.0
  %632 = vmatmul.mubr.f32.gmra.mxu0 %v264
  %v633 = vpop.f32.mrf.mxu0
  %v634 = vadd.f32 %v92, %v633
  %v635 = vpop.f32.mrf.mxu0
  %636 = vmatprep.mubr.f32.mxu0 0.0
  %637 = vmatmul.mubr.f32.gmra.mxu0 %v267
  %v638 = vpop.f32.mrf.mxu0
  %v639 = vadd.f32 %v92, %v638
  %v640 = vpop.f32.mrf.mxu0
  %641 = vmatprep.mubr.f32.mxu0 0.0
  %642 = vmatmul.mubr.f32.gmra.mxu0 %v270
  %v643 = vpop.f32.mrf.mxu0
  %v644 = vadd.f32 %v92, %v643
  %v645 = vpop.f32.mrf.mxu0
  %646 = vmatprep.mubr.f32.mxu0 0.0
  %647 = vmatmul.mubr.f32.gmra.mxu0 %v273
  %v648 = vpop.f32.mrf.mxu0
  %v649 = vadd.f32 %v92, %v648
  %v650 = vpop.f32.mrf.mxu0
  %651 = vmatprep.mubr.f32.mxu0 0.0
  %652 = vmatmul.mubr.f32.gmra.mxu0 %v276
  %v653 = vpop.f32.mrf.mxu0
  %v654 = vadd.f32 %v92, %v653
  %v655 = vpop.f32.mrf.mxu0
  %656 = vmatprep.mubr.f32.mxu0 0.0
  %657 = vmatmul.mubr.f32.gmra.mxu0 %v279
  %v658 = vpop.f32.mrf.mxu0
  %v659 = vadd.f32 %v92, %v658
  %v660 = vpop.f32.mrf.mxu0
  %661 = vmatprep.mubr.f32.mxu0 0.0
  %662 = vmatmul.mubr.f32.gmra.mxu0 %v282
  %v663 = vpop.f32.mrf.mxu0
  %v664 = vadd.f32 %v92, %v663
  %v665 = vpop.f32.mrf.mxu0
  %666 = vmatprep.mubr.f32.mxu0 0.0
  %667 = vmatmul.mubr.f32.gmra.mxu0 %v285
  %v668 = vpop.f32.mrf.mxu0
  %v669 = vadd.f32 %v92, %v668
  %v670 = vpop.f32.mrf.mxu0
  %671 = vdwg.mxu0
  %vm672 = vcmask 64512
  %673 = vst.msk [vmem:[%s3] sm:$0xff] %vm672, %v354
  %674 = vst.msk [vmem:[%s3 + $0x8] sm:$0xff] %vm672, %v359
  %675 = vst.msk [vmem:[%s3 + $0x10] sm:$0xff] %vm672, %v364
  %676 = vst.msk [vmem:[%s3 + $0x18] sm:$0xff] %vm672, %v369
  %677 = vst.msk [vmem:[%s3 + $0x20] sm:$0xff] %vm672, %v374
  %678 = vst.msk [vmem:[%s3 + $0x28] sm:$0xff] %vm672, %v379
  %679 = vst.msk [vmem:[%s3 + $0x30] sm:$0xff] %vm672, %v384
  %680 = vst.msk [vmem:[%s3 + $0x38] sm:$0xff] %vm672, %v389
  %681 = vst.msk [vmem:[%s3 + $0x40] sm:$0xff] %vm672, %v394
  %682 = vst.msk [vmem:[%s3 + $0x48] sm:$0xff] %vm672, %v399
  %683 = vst.msk [vmem:[%s3 + $0x50] sm:$0xff] %vm672, %v404
  %684 = vst.msk [vmem:[%s3 + $0x58] sm:$0xff] %vm672, %v409
  %685 = vst.msk [vmem:[%s3 + $0x60] sm:$0xff] %vm672, %v414
  %686 = vst.msk [vmem:[%s3 + $0x68] sm:$0xff] %vm672, %v419
  %687 = vst.msk [vmem:[%s3 + $0x70] sm:$0xff] %vm672, %v424
  %688 = vst.msk [vmem:[%s3 + $0x78] sm:$0xff] %vm672, %v429
  %689 = vst.msk [vmem:[%s3 + $0x80] sm:$0xff] %vm672, %v434
  %690 = vst.msk [vmem:[%s3 + $0x88] sm:$0xff] %vm672, %v439
  %691 = vst.msk [vmem:[%s3 + $0x90] sm:$0xff] %vm672, %v444
  %692 = vst.msk [vmem:[%s3 + $0x98] sm:$0xff] %vm672, %v449
  %693 = vst.msk [vmem:[%s3 + $0xa0] sm:$0xff] %vm672, %v454
  %694 = vst.msk [vmem:[%s3 + $0xa8] sm:$0xff] %vm672, %v459
  %695 = vst.msk [vmem:[%s3 + $0xb0] sm:$0xff] %vm672, %v464
  %696 = vst.msk [vmem:[%s3 + $0xb8] sm:$0xff] %vm672, %v469
  %697 = vst.msk [vmem:[%s3 + $0xc0] sm:$0xff] %vm672, %v474
  %698 = vst.msk [vmem:[%s3 + $0xc8] sm:$0xff] %vm672, %v479
  %699 = vst.msk [vmem:[%s3 + $0xd0] sm:$0xff] %vm672, %v484
  %700 = vst.msk [vmem:[%s3 + $0xd8] sm:$0xff] %vm672, %v489
  %701 = vst.msk [vmem:[%s3 + $0xe0] sm:$0xff] %vm672, %v494
  %702 = vst.msk [vmem:[%s3 + $0xe8] sm:$0xff] %vm672, %v499
  %703 = vst.msk [vmem:[%s3 + $0xf0] sm:$0xff] %vm672, %v504
  %704 = vst.msk [vmem:[%s3 + $0xf8] sm:$0xff] %vm672, %v509
  %705 = vst.msk [vmem:[%s3 + $0x100] sm:$0xff] %vm672, %v514
  %706 = vst.msk [vmem:[%s3 + $0x108] sm:$0xff] %vm672, %v519
  %707 = vst.msk [vmem:[%s3 + $0x110] sm:$0xff] %vm672, %v524
  %708 = vst.msk [vmem:[%s3 + $0x118] sm:$0xff] %vm672, %v529
  %709 = vst.msk [vmem:[%s3 + $0x120] sm:$0xff] %vm672, %v534
  %710 = vst.msk [vmem:[%s3 + $0x128] sm:$0xff] %vm672, %v539
  %711 = vst.msk [vmem:[%s3 + $0x130] sm:$0xff] %vm672, %v544
  %712 = vst.msk [vmem:[%s3 + $0x138] sm:$0xff] %vm672, %v549
  %713 = vst.msk [vmem:[%s3 + $0x140] sm:$0xff] %vm672, %v554
  %714 = vst.msk [vmem:[%s3 + $0x148] sm:$0xff] %vm672, %v559
  %715 = vst.msk [vmem:[%s3 + $0x150] sm:$0xff] %vm672, %v564
  %716 = vst.msk [vmem:[%s3 + $0x158] sm:$0xff] %vm672, %v569
  %717 = vst.msk [vmem:[%s3 + $0x160] sm:$0xff] %vm672, %v574
  %718 = vst.msk [vmem:[%s3 + $0x168] sm:$0xff] %vm672, %v579
  %719 = vst.msk [vmem:[%s3 + $0x170] sm:$0xff] %vm672, %v584
  %720 = vst.msk [vmem:[%s3 + $0x178] sm:$0xff] %vm672, %v589
  %721 = vst.msk [vmem:[%s3 + $0x180] sm:$0xff] %vm672, %v594
  %722 = vst.msk [vmem:[%s3 + $0x188] sm:$0xff] %vm672, %v599
  %723 = vst.msk [vmem:[%s3 + $0x190] sm:$0xff] %vm672, %v604
  %724 = vst.msk [vmem:[%s3 + $0x198] sm:$0xff] %vm672, %v609
  %725 = vst.msk [vmem:[%s3 + $0x1a0] sm:$0xff] %vm672, %v614
  %726 = vst.msk [vmem:[%s3 + $0x1a8] sm:$0xff] %vm672, %v619
  %727 = vst.msk [vmem:[%s3 + $0x1b0] sm:$0xff] %vm672, %v624
  %728 = vst.msk [vmem:[%s3 + $0x1b8] sm:$0xff] %vm672, %v629
  %729 = vst.msk [vmem:[%s3 + $0x1c0] sm:$0xff] %vm672, %v634
  %730 = vst.msk [vmem:[%s3 + $0x1c8] sm:$0xff] %vm672, %v639
  %731 = vst.msk [vmem:[%s3 + $0x1d0] sm:$0xff] %vm672, %v644
  %732 = vst.msk [vmem:[%s3 + $0x1d8] sm:$0xff] %vm672, %v649
  %733 = vst.msk [vmem:[%s3 + $0x1e0] sm:$0xff] %vm672, %v654
  %734 = vst.msk [vmem:[%s3 + $0x1e8] sm:$0xff] %vm672, %v659
  %735 = vst.msk [vmem:[%s3 + $0x1f0] sm:$0xff] %vm672, %v664
  %736 = vst.msk [vmem:[%s3 + $0x1f8] sm:$0xff] %vm672, %v669
  // Predicated region
  $region14: #{mab_forward.9} parent=0 // pred_check
    _
  $region15: #{mab_forward.9} parent=0 // pred_check_branch
    %738 = sbr.rel (0) target = $region17
  $region16: #{mab_forward.9} parent=0 // pred_region
    _
  $region17: #{mab_forward.9} parent=0 // pred_fallthru
    _
  // Predicated region
  $region18: #{mab_forward.9} parent=0 // pred_check
    _
  $region19: #{mab_forward.9} parent=0 // pred_check_branch
    %740 = sbr.rel (0) target = $region21
  $region20: #{mab_forward.9} parent=0 // pred_region
    _
  $region21: #{mab_forward.9} parent=0 // pred_fallthru
    _

// kernel: mab_forward.11
$region0: #{mab_forward.11}
  #allocation0 [shape = 'u32[]', space=smem, size = 0x4, offset = 0x4, fixed_abs, tag = 'smem constant byte address 0x4 - core index']
  #allocation1 [shape = 'u32[144,128]{1,0:T(1,128)}', space=vmem, size = 0x12000, scoped, tag = 'internal scratch']
  %s0 = inlined_call_operand.vmem [shape: f32[512,8], index: 0, kind: input, shape index: {}]
  %s1 = inlined_call_operand.vmem [shape: f32[8,2], index: 1, kind: input, shape index: {}]
  %s2 = inlined_call_operand.vmem [shape: f32[1,2], index: 2, kind: input, shape index: {}]
  %s3 = inlined_call_operand.vmem [shape: f32[512,2], index: 3, kind: output, shape index: {}]
  %s4 = sld [smem:[#allocation0]]
  $region22: #{mab_forward.11} parent=0
    _
  %s6 = ssub.s32 1, %s4
  %s7 = scalar_select 0, %s6, %s4
  // Predicated region
  $region2: #{mab_forward.11} parent=0 // pred_check
    _
  $region3: #{mab_forward.11} parent=0 // pred_check_branch
    %9 = sbr.rel (0) target = $region5
  $region4: #{mab_forward.11} parent=0 // pred_region
    _
  $region5: #{mab_forward.11} parent=0 // pred_fallthru
    _
  // Predicated region
  $region6: #{mab_forward.11} parent=0 // pred_check
    _
  $region7: #{mab_forward.11} parent=0 // pred_check_branch
    %11 = sbr.rel (0) target = $region9
  $region8: #{mab_forward.11} parent=0 // pred_region
    _
  $region9: #{mab_forward.11} parent=0 // pred_fallthru
    _
  // Predicated region
  $region10: #{mab_forward.11} parent=0 // pred_check
    _
  $region11: #{mab_forward.11} parent=0 // pred_check_branch
    %13 = sbr.rel (0) target = $region13
  $region12: #{mab_forward.11} parent=0 // pred_region
    _
  $region13: #{mab_forward.11} parent=0 // pred_fallthru
    _
  %v14 = vld [vmem:[%s0] sm:$0xff]
  %v15 = vld [vmem:[%s0 + $0x8] sm:$0xff]
  %v16 = vld [vmem:[%s0 + $0x10] sm:$0xff]
  %v17 = vld [vmem:[%s0 + $0x18] sm:$0xff]
  %v18 = vld [vmem:[%s0 + $0x20] sm:$0xff]
  %v19 = vld [vmem:[%s0 + $0x28] sm:$0xff]
  %v20 = vld [vmem:[%s0 + $0x30] sm:$0xff]
  %v21 = vld [vmem:[%s0 + $0x38] sm:$0xff]
  %v22 = vld [vmem:[%s0 + $0x40] sm:$0xff]
  %v23 = vld [vmem:[%s0 + $0x48] sm:$0xff]
  %v24 = vld [vmem:[%s0 + $0x50] sm:$0xff]
  %v25 = vld [vmem:[%s0 + $0x58] sm:$0xff]
  %v26 = vld [vmem:[%s0 + $0x60] sm:$0xff]
  %v27 = vld [vmem:[%s0 + $0x68] sm:$0xff]
  %v28 = vld [vmem:[%s0 + $0x70] sm:$0xff]
  %v29 = vld [vmem:[%s0 + $0x78] sm:$0xff]
  %v30 = vld [vmem:[%s0 + $0x80] sm:$0xff]
  %v31 = vld [vmem:[%s0 + $0x88] sm:$0xff]
  %v32 = vld [vmem:[%s0 + $0x90] sm:$0xff]
  %v33 = vld [vmem:[%s0 + $0x98] sm:$0xff]
  %v34 = vld [vmem:[%s0 + $0xa0] sm:$0xff]
  %v35 = vld [vmem:[%s0 + $0xa8] sm:$0xff]
  %v36 = vld [vmem:[%s0 + $0xb0] sm:$0xff]
  %v37 = vld [vmem:[%s0 + $0xb8] sm:$0xff]
  %v38 = vld [vmem:[%s0 + $0xc0] sm:$0xff]
  %v39 = vld [vmem:[%s0 + $0xc8] sm:$0xff]
  %v40 = vld [vmem:[%s0 + $0xd0] sm:$0xff]
  %v41 = vld [vmem:[%s0 + $0xd8] sm:$0xff]
  %v42 = vld [vmem:[%s0 + $0xe0] sm:$0xff]
  %v43 = vld [vmem:[%s0 + $0xe8] sm:$0xff]
  %v44 = vld [vmem:[%s0 + $0xf0] sm:$0xff]
  %v45 = vld [vmem:[%s0 + $0xf8] sm:$0xff]
  %v46 = vld [vmem:[%s0 + $0x100] sm:$0xff]
  %v47 = vld [vmem:[%s0 + $0x108] sm:$0xff]
  %v48 = vld [vmem:[%s0 + $0x110] sm:$0xff]
  %v49 = vld [vmem:[%s0 + $0x118] sm:$0xff]
  %v50 = vld [vmem:[%s0 + $0x120] sm:$0xff]
  %v51 = vld [vmem:[%s0 + $0x128] sm:$0xff]
  %v52 = vld [vmem:[%s0 + $0x130] sm:$0xff]
  %v53 = vld [vmem:[%s0 + $0x138] sm:$0xff]
  %v54 = vld [vmem:[%s0 + $0x140] sm:$0xff]
  %v55 = vld [vmem:[%s0 + $0x148] sm:$0xff]
  %v56 = vld [vmem:[%s0 + $0x150] sm:$0xff]
  %v57 = vld [vmem:[%s0 + $0x158] sm:$0xff]
  %v58 = vld [vmem:[%s0 + $0x160] sm:$0xff]
  %v59 = vld [vmem:[%s0 + $0x168] sm:$0xff]
  %v60 = vld [vmem:[%s0 + $0x170] sm:$0xff]
  %v61 = vld [vmem:[%s0 + $0x178] sm:$0xff]
  %v62 = vld [vmem:[%s0 + $0x180] sm:$0xff]
  %v63 = vld [vmem:[%s0 + $0x188] sm:$0xff]
  %v64 = vld [vmem:[%s0 + $0x190] sm:$0xff]
  %v65 = vld [vmem:[%s0 + $0x198] sm:$0xff]
  %v66 = vld [vmem:[%s0 + $0x1a0] sm:$0xff]
  %v67 = vld [vmem:[%s0 + $0x1a8] sm:$0xff]
  %v68 = vld [vmem:[%s0 + $0x1b0] sm:$0xff]
  %v69 = vld [vmem:[%s0 + $0x1b8] sm:$0xff]
  %v70 = vld [vmem:[%s0 + $0x1c0] sm:$0xff]
  %v71 = vld [vmem:[%s0 + $0x1c8] sm:$0xff]
  %v72 = vld [vmem:[%s0 + $0x1d0] sm:$0xff]
  %v73 = vld [vmem:[%s0 + $0x1d8] sm:$0xff]
  %v74 = vld [vmem:[%s0 + $0x1e0] sm:$0xff]
  %v75 = vld [vmem:[%s0 + $0x1e8] sm:$0xff]
  %v76 = vld [vmem:[%s0 + $0x1f0] sm:$0xff]
  %v77 = vld [vmem:[%s0 + $0x1f8] sm:$0xff]
  %v78 = vld [vmem:[%s1] sm:$0xff]
  %v79 = vld [vmem:[%s2] sm:$0x1]
  %v81 = vlaneseq
  %v82 = vshrl.u32 %v81, 7
  %v83 = vsub.s32 0, %v82
  %v84 = vrot.slane %v79, %v83
  %vm86 = vcmask 64512
  %v88 = vsel %vm86, %v14, 0
  %v91 = vsel %vm86, %v15, 0
  %v94 = vsel %vm86, %v16, 0
  %v97 = vsel %vm86, %v17, 0
  %v100 = vsel %vm86, %v18, 0
  %v103 = vsel %vm86, %v19, 0
  %v106 = vsel %vm86, %v20, 0
  %v109 = vsel %vm86, %v21, 0
  %v112 = vsel %vm86, %v22, 0
  %v115 = vsel %vm86, %v23, 0
  %v118 = vsel %vm86, %v24, 0
  %v121 = vsel %vm86, %v25, 0
  %v124 = vsel %vm86, %v26, 0
  %v127 = vsel %vm86, %v27, 0
  %v130 = vsel %vm86, %v28, 0
  %v133 = vsel %vm86, %v29, 0
  %v136 = vsel %vm86, %v30, 0
  %v139 = vsel %vm86, %v31, 0
  %v142 = vsel %vm86, %v32, 0
  %v145 = vsel %vm86, %v33, 0
  %v148 = vsel %vm86, %v34, 0
  %v151 = vsel %vm86, %v35, 0
  %v154 = vsel %vm86, %v36, 0
  %v157 = vsel %vm86, %v37, 0
  %v160 = vsel %vm86, %v38, 0
  %v163 = vsel %vm86, %v39, 0
  %v166 = vsel %vm86, %v40, 0
  %v169 = vsel %vm86, %v41, 0
  %v172 = vsel %vm86, %v42, 0
  %v175 = vsel %vm86, %v43, 0
  %v178 = vsel %vm86, %v44, 0
  %v181 = vsel %vm86, %v45, 0
  %v184 = vsel %vm86, %v46, 0
  %v187 = vsel %vm86, %v47, 0
  %v190 = vsel %vm86, %v48, 0
  %v193 = vsel %vm86, %v49, 0
  %v196 = vsel %vm86, %v50, 0
  %v199 = vsel %vm86, %v51, 0
  %v202 = vsel %vm86, %v52, 0
  %v205 = vsel %vm86, %v53, 0
  %v208 = vsel %vm86, %v54, 0
  %v211 = vsel %vm86, %v55, 0
  %v214 = vsel %vm86, %v56, 0
  %v217 = vsel %vm86, %v57, 0
  %v220 = vsel %vm86, %v58, 0
  %v223 = vsel %vm86, %v59, 0
  %v226 = vsel %vm86, %v60, 0
  %v229 = vsel %vm86, %v61, 0
  %v232 = vsel %vm86, %v62, 0
  %v235 = vsel %vm86, %v63, 0
  %v238 = vsel %vm86, %v64, 0
  %v241 = vsel %vm86, %v65, 0
  %v244 = vsel %vm86, %v66, 0
  %v247 = vsel %vm86, %v67, 0
  %v250 = vsel %vm86, %v68, 0
  %v253 = vsel %vm86, %v69, 0
  %v256 = vsel %vm86, %v70, 0
  %v259 = vsel %vm86, %v71, 0
  %v262 = vsel %vm86, %v72, 0
  %v265 = vsel %vm86, %v73, 0
  %v268 = vsel %vm86, %v74, 0
  %v271 = vsel %vm86, %v75, 0
  %v274 = vsel %vm86, %v76, 0
  %v277 = vsel %vm86, %v77, 0
  %279 = vmatprep.subr.mxu0 0.0
  %280 = vmatpush1.msra.mxu0 0.0
  %281 = vmatprep.subr.mxu0 0.0
  %282 = vmatpush1.msra.mxu0 0.0
  %283 = vmatprep.subr.mxu0 0.0
  %284 = vmatpush1.msra.mxu0 0.0
  %285 = vmatprep.subr.mxu0 0.0
  %286 = vmatpush1.msra.mxu0 0.0
  %287 = vmatprep.subr.mxu0 0.0
  %288 = vmatpush1.msra.mxu0 0.0
  %289 = vmatprep.subr.mxu0 0.0
  %290 = vmatpush1.msra.mxu0 0.0
  %291 = vmatprep.subr.mxu0 0.0
  %292 = vmatpush1.msra.mxu0 0.0
  %293 = vmatprep.subr.mxu0 0.0
  %294 = vmatpush1.msra.mxu0 0.0
  %295 = vmatprep.subr.mxu0 0.0
  %296 = vmatpush1.msra.mxu0 0.0
  %297 = vmatprep.subr.mxu0 0.0
  %298 = vmatpush1.msra.mxu0 0.0
  %299 = vmatprep.subr.mxu0 0.0
  %300 = vmatpush1.msra.mxu0 0.0
  %301 = vmatprep.subr.mxu0 0.0
  %302 = vmatpush1.msra.mxu0 0.0
  %303 = vmatprep.subr.mxu0 0.0
  %304 = vmatpush1.msra.mxu0 0.0
  %305 = vmatprep.subr.mxu0 0.0
  %306 = vmatpush1.msra.mxu0 0.0
  %307 = vmatprep.subr.mxu0 0.0
  %308 = vmatpush1.msra.mxu0 0.0
  %309 = vmatprep.subr.mxu0 0.0
  %310 = vmatpush1.msra.mxu0 %v78
  %311 = vmatprep.subr.mxu0 0.0
  %312 = vmatpush2.msra.mxu0 0.0
  %313 = vmatprep.subr.mxu0 0.0
  %314 = vmatpush2.msra.mxu0 0.0
  %315 = vmatprep.subr.mxu0 0.0
  %316 = vmatpush2.msra.mxu0 0.0
  %317 = vmatprep.subr.mxu0 0.0
  %318 = vmatpush2.msra.mxu0 0.0
  %319 = vmatprep.subr.mxu0 0.0
  %320 = vmatpush2.msra.mxu0 0.0
  %321 = vmatprep.subr.mxu0 0.0
  %322 = vmatpush2.msra.mxu0 0.0
  %323 = vmatprep.subr.mxu0 0.0
  %324 = vmatpush2.msra.mxu0 0.0
  %325 = vmatprep.subr.mxu0 0.0
  %326 = vmatpush2.msra.mxu0 0.0
  %327 = vmatprep.subr.mxu0 0.0
  %328 = vmatpush2.msra.mxu0 0.0
  %329 = vmatprep.subr.mxu0 0.0
  %330 = vmatpush2.msra.mxu0 0.0
  %331 = vmatprep.subr.mxu0 0.0
  %332 = vmatpush2.msra.mxu0 0.0
  %333 = vmatprep.subr.mxu0 0.0
  %334 = vmatpush2.msra.mxu0 0.0
  %335 = vmatprep.subr.mxu0 0.0
  %336 = vmatpush2.msra.mxu0 0.0
  %337 = vmatprep.subr.mxu0 0.0
  %338 = vmatpush2.msra.mxu0 0.0
  %339 = vmatprep.subr.mxu0 0.0
  %340 = vmatpush2.msra.mxu0 0.0
  %341 = vmatprep.subr.mxu0 0.0
  %342 = vmatpush2.msra.mxu0 0.0
  %343 = vmatprep.mubr.f32.mxu0 0.0
  %344 = vmatmul.mubr.f32.gmra.mxu0 %v88
  %v345 = vpop.f32.mrf.mxu0
  %v346 = vadd.f32 %v84, %v345
  %v347 = vpop.f32.mrf.mxu0
  %348 = vmatprep.mubr.f32.mxu0 0.0
  %349 = vmatmul.mubr.f32.gmra.mxu0 %v91
  %v350 = vpop.f32.mrf.mxu0
  %v351 = vadd.f32 %v84, %v350
  %v352 = vpop.f32.mrf.mxu0
  %353 = vmatprep.mubr.f32.mxu0 0.0
  %354 = vmatmul.mubr.f32.gmra.mxu0 %v94
  %v355 = vpop.f32.mrf.mxu0
  %v356 = vadd.f32 %v84, %v355
  %v357 = vpop.f32.mrf.mxu0
  %358 = vmatprep.mubr.f32.mxu0 0.0
  %359 = vmatmul.mubr.f32.gmra.mxu0 %v97
  %v360 = vpop.f32.mrf.mxu0
  %v361 = vadd.f32 %v84, %v360
  %v362 = vpop.f32.mrf.mxu0
  %363 = vmatprep.mubr.f32.mxu0 0.0
  %364 = vmatmul.mubr.f32.gmra.mxu0 %v100
  %v365 = vpop.f32.mrf.mxu0
  %v366 = vadd.f32 %v84, %v365
  %v367 = vpop.f32.mrf.mxu0
  %368 = vmatprep.mubr.f32.mxu0 0.0
  %369 = vmatmul.mubr.f32.gmra.mxu0 %v103
  %v370 = vpop.f32.mrf.mxu0
  %v371 = vadd.f32 %v84, %v370
  %v372 = vpop.f32.mrf.mxu0
  %373 = vmatprep.mubr.f32.mxu0 0.0
  %374 = vmatmul.mubr.f32.gmra.mxu0 %v106
  %v375 = vpop.f32.mrf.mxu0
  %v376 = vadd.f32 %v84, %v375
  %v377 = vpop.f32.mrf.mxu0
  %378 = vmatprep.mubr.f32.mxu0 0.0
  %379 = vmatmul.mubr.f32.gmra.mxu0 %v109
  %v380 = vpop.f32.mrf.mxu0
  %v381 = vadd.f32 %v84, %v380
  %v382 = vpop.f32.mrf.mxu0
  %383 = vmatprep.mubr.f32.mxu0 0.0
  %384 = vmatmul.mubr.f32.gmra.mxu0 %v112
  %v385 = vpop.f32.mrf.mxu0
  %v386 = vadd.f32 %v84, %v385
  %v387 = vpop.f32.mrf.mxu0
  %388 = vmatprep.mubr.f32.mxu0 0.0
  %389 = vmatmul.mubr.f32.gmra.mxu0 %v115
  %v390 = vpop.f32.mrf.mxu0
  %v391 = vadd.f32 %v84, %v390
  %v392 = vpop.f32.mrf.mxu0
  %393 = vmatprep.mubr.f32.mxu0 0.0
  %394 = vmatmul.mubr.f32.gmra.mxu0 %v118
  %v395 = vpop.f32.mrf.mxu0
  %v396 = vadd.f32 %v84, %v395
  %v397 = vpop.f32.mrf.mxu0
  %398 = vmatprep.mubr.f32.mxu0 0.0
  %399 = vmatmul.mubr.f32.gmra.mxu0 %v121
  %v400 = vpop.f32.mrf.mxu0
  %v401 = vadd.f32 %v84, %v400
  %v402 = vpop.f32.mrf.mxu0
  %403 = vmatprep.mubr.f32.mxu0 0.0
  %404 = vmatmul.mubr.f32.gmra.mxu0 %v124
  %v405 = vpop.f32.mrf.mxu0
  %v406 = vadd.f32 %v84, %v405
  %v407 = vpop.f32.mrf.mxu0
  %408 = vmatprep.mubr.f32.mxu0 0.0
  %409 = vmatmul.mubr.f32.gmra.mxu0 %v127
  %v410 = vpop.f32.mrf.mxu0
  %v411 = vadd.f32 %v84, %v410
  %v412 = vpop.f32.mrf.mxu0
  %413 = vmatprep.mubr.f32.mxu0 0.0
  %414 = vmatmul.mubr.f32.gmra.mxu0 %v130
  %v415 = vpop.f32.mrf.mxu0
  %v416 = vadd.f32 %v84, %v415
  %v417 = vpop.f32.mrf.mxu0
  %418 = vmatprep.mubr.f32.mxu0 0.0
  %419 = vmatmul.mubr.f32.gmra.mxu0 %v133
  %v420 = vpop.f32.mrf.mxu0
  %v421 = vadd.f32 %v84, %v420
  %v422 = vpop.f32.mrf.mxu0
  %423 = vmatprep.mubr.f32.mxu0 0.0
  %424 = vmatmul.mubr.f32.gmra.mxu0 %v136
  %v425 = vpop.f32.mrf.mxu0
  %v426 = vadd.f32 %v84, %v425
  %v427 = vpop.f32.mrf.mxu0
  %428 = vmatprep.mubr.f32.mxu0 0.0
  %429 = vmatmul.mubr.f32.gmra.mxu0 %v139
  %v430 = vpop.f32.mrf.mxu0
  %v431 = vadd.f32 %v84, %v430
  %v432 = vpop.f32.mrf.mxu0
  %433 = vmatprep.mubr.f32.mxu0 0.0
  %434 = vmatmul.mubr.f32.gmra.mxu0 %v142
  %v435 = vpop.f32.mrf.mxu0
  %v436 = vadd.f32 %v84, %v435
  %v437 = vpop.f32.mrf.mxu0
  %438 = vmatprep.mubr.f32.mxu0 0.0
  %439 = vmatmul.mubr.f32.gmra.mxu0 %v145
  %v440 = vpop.f32.mrf.mxu0
  %v441 = vadd.f32 %v84, %v440
  %v442 = vpop.f32.mrf.mxu0
  %443 = vmatprep.mubr.f32.mxu0 0.0
  %444 = vmatmul.mubr.f32.gmra.mxu0 %v148
  %v445 = vpop.f32.mrf.mxu0
  %v446 = vadd.f32 %v84, %v445
  %v447 = vpop.f32.mrf.mxu0
  %448 = vmatprep.mubr.f32.mxu0 0.0
  %449 = vmatmul.mubr.f32.gmra.mxu0 %v151
  %v450 = vpop.f32.mrf.mxu0
  %v451 = vadd.f32 %v84, %v450
  %v452 = vpop.f32.mrf.mxu0
  %453 = vmatprep.mubr.f32.mxu0 0.0
  %454 = vmatmul.mubr.f32.gmra.mxu0 %v154
  %v455 = vpop.f32.mrf.mxu0
  %v456 = vadd.f32 %v84, %v455
  %v457 = vpop.f32.mrf.mxu0
  %458 = vmatprep.mubr.f32.mxu0 0.0
  %459 = vmatmul.mubr.f32.gmra.mxu0 %v157
  %v460 = vpop.f32.mrf.mxu0
  %v461 = vadd.f32 %v84, %v460
  %v462 = vpop.f32.mrf.mxu0
  %463 = vmatprep.mubr.f32.mxu0 0.0
  %464 = vmatmul.mubr.f32.gmra.mxu0 %v160
  %v465 = vpop.f32.mrf.mxu0
  %v466 = vadd.f32 %v84, %v465
  %v467 = vpop.f32.mrf.mxu0
  %468 = vmatprep.mubr.f32.mxu0 0.0
  %469 = vmatmul.mubr.f32.gmra.mxu0 %v163
  %v470 = vpop.f32.mrf.mxu0
  %v471 = vadd.f32 %v84, %v470
  %v472 = vpop.f32.mrf.mxu0
  %473 = vmatprep.mubr.f32.mxu0 0.0
  %474 = vmatmul.mubr.f32.gmra.mxu0 %v166
  %v475 = vpop.f32.mrf.mxu0
  %v476 = vadd.f32 %v84, %v475
  %v477 = vpop.f32.mrf.mxu0
  %478 = vmatprep.mubr.f32.mxu0 0.0
  %479 = vmatmul.mubr.f32.gmra.mxu0 %v169
  %v480 = vpop.f32.mrf.mxu0
  %v481 = vadd.f32 %v84, %v480
  %v482 = vpop.f32.mrf.mxu0
  %483 = vmatprep.mubr.f32.mxu0 0.0
  %484 = vmatmul.mubr.f32.gmra.mxu0 %v172
  %v485 = vpop.f32.mrf.mxu0
  %v486 = vadd.f32 %v84, %v485
  %v487 = vpop.f32.mrf.mxu0
  %488 = vmatprep.mubr.f32.mxu0 0.0
  %489 = vmatmul.mubr.f32.gmra.mxu0 %v175
  %v490 = vpop.f32.mrf.mxu0
  %v491 = vadd.f32 %v84, %v490
  %v492 = vpop.f32.mrf.mxu0
  %493 = vmatprep.mubr.f32.mxu0 0.0
  %494 = vmatmul.mubr.f32.gmra.mxu0 %v178
  %v495 = vpop.f32.mrf.mxu0
  %v496 = vadd.f32 %v84, %v495
  %v497 = vpop.f32.mrf.mxu0
  %498 = vmatprep.mubr.f32.mxu0 0.0
  %499 = vmatmul.mubr.f32.gmra.mxu0 %v181
  %v500 = vpop.f32.mrf.mxu0
  %v501 = vadd.f32 %v84, %v500
  %v502 = vpop.f32.mrf.mxu0
  %503 = vmatprep.mubr.f32.mxu0 0.0
  %504 = vmatmul.mubr.f32.gmra.mxu0 %v184
  %v505 = vpop.f32.mrf.mxu0
  %v506 = vadd.f32 %v84, %v505
  %v507 = vpop.f32.mrf.mxu0
  %508 = vmatprep.mubr.f32.mxu0 0.0
  %509 = vmatmul.mubr.f32.gmra.mxu0 %v187
  %v510 = vpop.f32.mrf.mxu0
  %v511 = vadd.f32 %v84, %v510
  %v512 = vpop.f32.mrf.mxu0
  %513 = vmatprep.mubr.f32.mxu0 0.0
  %514 = vmatmul.mubr.f32.gmra.mxu0 %v190
  %v515 = vpop.f32.mrf.mxu0
  %v516 = vadd.f32 %v84, %v515
  %v517 = vpop.f32.mrf.mxu0
  %518 = vmatprep.mubr.f32.mxu0 0.0
  %519 = vmatmul.mubr.f32.gmra.mxu0 %v193
  %v520 = vpop.f32.mrf.mxu0
  %v521 = vadd.f32 %v84, %v520
  %v522 = vpop.f32.mrf.mxu0
  %523 = vmatprep.mubr.f32.mxu0 0.0
  %524 = vmatmul.mubr.f32.gmra.mxu0 %v196
  %v525 = vpop.f32.mrf.mxu0
  %v526 = vadd.f32 %v84, %v525
  %v527 = vpop.f32.mrf.mxu0
  %528 = vmatprep.mubr.f32.mxu0 0.0
  %529 = vmatmul.mubr.f32.gmra.mxu0 %v199
  %v530 = vpop.f32.mrf.mxu0
  %v531 = vadd.f32 %v84, %v530
  %v532 = vpop.f32.mrf.mxu0
  %533 = vmatprep.mubr.f32.mxu0 0.0
  %534 = vmatmul.mubr.f32.gmra.mxu0 %v202
  %v535 = vpop.f32.mrf.mxu0
  %v536 = vadd.f32 %v84, %v535
  %v537 = vpop.f32.mrf.mxu0
  %538 = vmatprep.mubr.f32.mxu0 0.0
  %539 = vmatmul.mubr.f32.gmra.mxu0 %v205
  %v540 = vpop.f32.mrf.mxu0
  %v541 = vadd.f32 %v84, %v540
  %v542 = vpop.f32.mrf.mxu0
  %543 = vmatprep.mubr.f32.mxu0 0.0
  %544 = vmatmul.mubr.f32.gmra.mxu0 %v208
  %v545 = vpop.f32.mrf.mxu0
  %v546 = vadd.f32 %v84, %v545
  %v547 = vpop.f32.mrf.mxu0
  %548 = vmatprep.mubr.f32.mxu0 0.0
  %549 = vmatmul.mubr.f32.gmra.mxu0 %v211
  %v550 = vpop.f32.mrf.mxu0
  %v551 = vadd.f32 %v84, %v550
  %v552 = vpop.f32.mrf.mxu0
  %553 = vmatprep.mubr.f32.mxu0 0.0
  %554 = vmatmul.mubr.f32.gmra.mxu0 %v214
  %v555 = vpop.f32.mrf.mxu0
  %v556 = vadd.f32 %v84, %v555
  %v557 = vpop.f32.mrf.mxu0
  %558 = vmatprep.mubr.f32.mxu0 0.0
  %559 = vmatmul.mubr.f32.gmra.mxu0 %v217
  %v560 = vpop.f32.mrf.mxu0
  %v561 = vadd.f32 %v84, %v560
  %v562 = vpop.f32.mrf.mxu0
  %563 = vmatprep.mubr.f32.mxu0 0.0
  %564 = vmatmul.mubr.f32.gmra.mxu0 %v220
  %v565 = vpop.f32.mrf.mxu0
  %v566 = vadd.f32 %v84, %v565
  %v567 = vpop.f32.mrf.mxu0
  %568 = vmatprep.mubr.f32.mxu0 0.0
  %569 = vmatmul.mubr.f32.gmra.mxu0 %v223
  %v570 = vpop.f32.mrf.mxu0
  %v571 = vadd.f32 %v84, %v570
  %v572 = vpop.f32.mrf.mxu0
  %573 = vmatprep.mubr.f32.mxu0 0.0
  %574 = vmatmul.mubr.f32.gmra.mxu0 %v226
  %v575 = vpop.f32.mrf.mxu0
  %v576 = vadd.f32 %v84, %v575
  %v577 = vpop.f32.mrf.mxu0
  %578 = vmatprep.mubr.f32.mxu0 0.0
  %579 = vmatmul.mubr.f32.gmra.mxu0 %v229
  %v580 = vpop.f32.mrf.mxu0
  %v581 = vadd.f32 %v84, %v580
  %v582 = vpop.f32.mrf.mxu0
  %583 = vmatprep.mubr.f32.mxu0 0.0
  %584 = vmatmul.mubr.f32.gmra.mxu0 %v232
  %v585 = vpop.f32.mrf.mxu0
  %v586 = vadd.f32 %v84, %v585
  %v587 = vpop.f32.mrf.mxu0
  %588 = vmatprep.mubr.f32.mxu0 0.0
  %589 = vmatmul.mubr.f32.gmra.mxu0 %v235
  %v590 = vpop.f32.mrf.mxu0
  %v591 = vadd.f32 %v84, %v590
  %v592 = vpop.f32.mrf.mxu0
  %593 = vmatprep.mubr.f32.mxu0 0.0
  %594 = vmatmul.mubr.f32.gmra.mxu0 %v238
  %v595 = vpop.f32.mrf.mxu0
  %v596 = vadd.f32 %v84, %v595
  %v597 = vpop.f32.mrf.mxu0
  %598 = vmatprep.mubr.f32.mxu0 0.0
  %599 = vmatmul.mubr.f32.gmra.mxu0 %v241
  %v600 = vpop.f32.mrf.mxu0
  %v601 = vadd.f32 %v84, %v600
  %v602 = vpop.f32.mrf.mxu0
  %603 = vmatprep.mubr.f32.mxu0 0.0
  %604 = vmatmul.mubr.f32.gmra.mxu0 %v244
  %v605 = vpop.f32.mrf.mxu0
  %v606 = vadd.f32 %v84, %v605
  %v607 = vpop.f32.mrf.mxu0
  %608 = vmatprep.mubr.f32.mxu0 0.0
  %609 = vmatmul.mubr.f32.gmra.mxu0 %v247
  %v610 = vpop.f32.mrf.mxu0
  %v611 = vadd.f32 %v84, %v610
  %v612 = vpop.f32.mrf.mxu0
  %613 = vmatprep.mubr.f32.mxu0 0.0
  %614 = vmatmul.mubr.f32.gmra.mxu0 %v250
  %v615 = vpop.f32.mrf.mxu0
  %v616 = vadd.f32 %v84, %v615
  %v617 = vpop.f32.mrf.mxu0
  %618 = vmatprep.mubr.f32.mxu0 0.0
  %619 = vmatmul.mubr.f32.gmra.mxu0 %v253
  %v620 = vpop.f32.mrf.mxu0
  %v621 = vadd.f32 %v84, %v620
  %v622 = vpop.f32.mrf.mxu0
  %623 = vmatprep.mubr.f32.mxu0 0.0
  %624 = vmatmul.mubr.f32.gmra.mxu0 %v256
  %v625 = vpop.f32.mrf.mxu0
  %v626 = vadd.f32 %v84, %v625
  %v627 = vpop.f32.mrf.mxu0
  %628 = vmatprep.mubr.f32.mxu0 0.0
  %629 = vmatmul.mubr.f32.gmra.mxu0 %v259
  %v630 = vpop.f32.mrf.mxu0
  %v631 = vadd.f32 %v84, %v630
  %v632 = vpop.f32.mrf.mxu0
  %633 = vmatprep.mubr.f32.mxu0 0.0
  %634 = vmatmul.mubr.f32.gmra.mxu0 %v262
  %v635 = vpop.f32.mrf.mxu0
  %v636 = vadd.f32 %v84, %v635
  %v637 = vpop.f32.mrf.mxu0
  %638 = vmatprep.mubr.f32.mxu0 0.0
  %639 = vmatmul.mubr.f32.gmra.mxu0 %v265
  %v640 = vpop.f32.mrf.mxu0
  %v641 = vadd.f32 %v84, %v640
  %v642 = vpop.f32.mrf.mxu0
  %643 = vmatprep.mubr.f32.mxu0 0.0
  %644 = vmatmul.mubr.f32.gmra.mxu0 %v268
  %v645 = vpop.f32.mrf.mxu0
  %v646 = vadd.f32 %v84, %v645
  %v647 = vpop.f32.mrf.mxu0
  %648 = vmatprep.mubr.f32.mxu0 0.0
  %649 = vmatmul.mubr.f32.gmra.mxu0 %v271
  %v650 = vpop.f32.mrf.mxu0
  %v651 = vadd.f32 %v84, %v650
  %v652 = vpop.f32.mrf.mxu0
  %653 = vmatprep.mubr.f32.mxu0 0.0
  %654 = vmatmul.mubr.f32.gmra.mxu0 %v274
  %v655 = vpop.f32.mrf.mxu0
  %v656 = vadd.f32 %v84, %v655
  %v657 = vpop.f32.mrf.mxu0
  %658 = vmatprep.mubr.f32.mxu0 0.0
  %659 = vmatmul.mubr.f32.gmra.mxu0 %v277
  %v660 = vpop.f32.mrf.mxu0
  %v661 = vadd.f32 %v84, %v660
  %v662 = vpop.f32.mrf.mxu0
  %663 = vdwg.mxu0
  %vm664 = vcmask 15360
  %665 = vst.msk [vmem:[%s3] sm:$0xff] %vm664, %v346
  %666 = vst.msk [vmem:[%s3 + $0x8] sm:$0xff] %vm664, %v351
  %667 = vst.msk [vmem:[%s3 + $0x10] sm:$0xff] %vm664, %v356
  %668 = vst.msk [vmem:[%s3 + $0x18] sm:$0xff] %vm664, %v361
  %669 = vst.msk [vmem:[%s3 + $0x20] sm:$0xff] %vm664, %v366
  %670 = vst.msk [vmem:[%s3 + $0x28] sm:$0xff] %vm664, %v371
  %671 = vst.msk [vmem:[%s3 + $0x30] sm:$0xff] %vm664, %v376
  %672 = vst.msk [vmem:[%s3 + $0x38] sm:$0xff] %vm664, %v381
  %673 = vst.msk [vmem:[%s3 + $0x40] sm:$0xff] %vm664, %v386
  %674 = vst.msk [vmem:[%s3 + $0x48] sm:$0xff] %vm664, %v391
  %675 = vst.msk [vmem:[%s3 + $0x50] sm:$0xff] %vm664, %v396
  %676 = vst.msk [vmem:[%s3 + $0x58] sm:$0xff] %vm664, %v401
  %677 = vst.msk [vmem:[%s3 + $0x60] sm:$0xff] %vm664, %v406
  %678 = vst.msk [vmem:[%s3 + $0x68] sm:$0xff] %vm664, %v411
  %679 = vst.msk [vmem:[%s3 + $0x70] sm:$0xff] %vm664, %v416
  %680 = vst.msk [vmem:[%s3 + $0x78] sm:$0xff] %vm664, %v421
  %681 = vst.msk [vmem:[%s3 + $0x80] sm:$0xff] %vm664, %v426
  %682 = vst.msk [vmem:[%s3 + $0x88] sm:$0xff] %vm664, %v431
  %683 = vst.msk [vmem:[%s3 + $0x90] sm:$0xff] %vm664, %v436
  %684 = vst.msk [vmem:[%s3 + $0x98] sm:$0xff] %vm664, %v441
  %685 = vst.msk [vmem:[%s3 + $0xa0] sm:$0xff] %vm664, %v446
  %686 = vst.msk [vmem:[%s3 + $0xa8] sm:$0xff] %vm664, %v451
  %687 = vst.msk [vmem:[%s3 + $0xb0] sm:$0xff] %vm664, %v456
  %688 = vst.msk [vmem:[%s3 + $0xb8] sm:$0xff] %vm664, %v461
  %689 = vst.msk [vmem:[%s3 + $0xc0] sm:$0xff] %vm664, %v466
  %690 = vst.msk [vmem:[%s3 + $0xc8] sm:$0xff] %vm664, %v471
  %691 = vst.msk [vmem:[%s3 + $0xd0] sm:$0xff] %vm664, %v476
  %692 = vst.msk [vmem:[%s3 + $0xd8] sm:$0xff] %vm664, %v481
  %693 = vst.msk [vmem:[%s3 + $0xe0] sm:$0xff] %vm664, %v486
  %694 = vst.msk [vmem:[%s3 + $0xe8] sm:$0xff] %vm664, %v491
  %695 = vst.msk [vmem:[%s3 + $0xf0] sm:$0xff] %vm664, %v496
  %696 = vst.msk [vmem:[%s3 + $0xf8] sm:$0xff] %vm664, %v501
  %697 = vst.msk [vmem:[%s3 + $0x100] sm:$0xff] %vm664, %v506
  %698 = vst.msk [vmem:[%s3 + $0x108] sm:$0xff] %vm664, %v511
  %699 = vst.msk [vmem:[%s3 + $0x110] sm:$0xff] %vm664, %v516
  %700 = vst.msk [vmem:[%s3 + $0x118] sm:$0xff] %vm664, %v521
  %701 = vst.msk [vmem:[%s3 + $0x120] sm:$0xff] %vm664, %v526
  %702 = vst.msk [vmem:[%s3 + $0x128] sm:$0xff] %vm664, %v531
  %703 = vst.msk [vmem:[%s3 + $0x130] sm:$0xff] %vm664, %v536
  %704 = vst.msk [vmem:[%s3 + $0x138] sm:$0xff] %vm664, %v541
  %705 = vst.msk [vmem:[%s3 + $0x140] sm:$0xff] %vm664, %v546
  %706 = vst.msk [vmem:[%s3 + $0x148] sm:$0xff] %vm664, %v551
  %707 = vst.msk [vmem:[%s3 + $0x150] sm:$0xff] %vm664, %v556
  %708 = vst.msk [vmem:[%s3 + $0x158] sm:$0xff] %vm664, %v561
  %709 = vst.msk [vmem:[%s3 + $0x160] sm:$0xff] %vm664, %v566
  %710 = vst.msk [vmem:[%s3 + $0x168] sm:$0xff] %vm664, %v571
  %711 = vst.msk [vmem:[%s3 + $0x170] sm:$0xff] %vm664, %v576
  %712 = vst.msk [vmem:[%s3 + $0x178] sm:$0xff] %vm664, %v581
  %713 = vst.msk [vmem:[%s3 + $0x180] sm:$0xff] %vm664, %v586
  %714 = vst.msk [vmem:[%s3 + $0x188] sm:$0xff] %vm664, %v591
  %715 = vst.msk [vmem:[%s3 + $0x190] sm:$0xff] %vm664, %v596
  %716 = vst.msk [vmem:[%s3 + $0x198] sm:$0xff] %vm664, %v601
  %717 = vst.msk [vmem:[%s3 + $0x1a0] sm:$0xff] %vm664, %v606
  %718 = vst.msk [vmem:[%s3 + $0x1a8] sm:$0xff] %vm664, %v611
  %719 = vst.msk [vmem:[%s3 + $0x1b0] sm:$0xff] %vm664, %v616
  %720 = vst.msk [vmem:[%s3 + $0x1b8] sm:$0xff] %vm664, %v621
  %721 = vst.msk [vmem:[%s3 + $0x1c0] sm:$0xff] %vm664, %v626
  %722 = vst.msk [vmem:[%s3 + $0x1c8] sm:$0xff] %vm664, %v631
  %723 = vst.msk [vmem:[%s3 + $0x1d0] sm:$0xff] %vm664, %v636
  %724 = vst.msk [vmem:[%s3 + $0x1d8] sm:$0xff] %vm664, %v641
  %725 = vst.msk [vmem:[%s3 + $0x1e0] sm:$0xff] %vm664, %v646
  %726 = vst.msk [vmem:[%s3 + $0x1e8] sm:$0xff] %vm664, %v651
  %727 = vst.msk [vmem:[%s3 + $0x1f0] sm:$0xff] %vm664, %v656
  %728 = vst.msk [vmem:[%s3 + $0x1f8] sm:$0xff] %vm664, %v661
  // Predicated region
  $region14: #{mab_forward.11} parent=0 // pred_check
    _
  $region15: #{mab_forward.11} parent=0 // pred_check_branch
    %730 = sbr.rel (0) target = $region17
  $region16: #{mab_forward.11} parent=0 // pred_region
    _
  $region17: #{mab_forward.11} parent=0 // pred_fallthru
    _
  // Predicated region
  $region18: #{mab_forward.11} parent=0 // pred_check
    _
  $region19: #{mab_forward.11} parent=0 // pred_check_branch
    %732 = sbr.rel (0) target = $region21
  $region20: #{mab_forward.11} parent=0 // pred_region
    _
  $region21: #{mab_forward.11} parent=0 // pred_fallthru
    _

// kernel: mab_forward.13
$region0: #{mab_forward.13}
  #allocation0 [shape = 'u32[]', space=smem, size = 0x4, offset = 0x4, fixed_abs, tag = 'smem constant byte address 0x4 - core index']
  #allocation1 [shape = 'u32[144,128]{1,0:T(1,128)}', space=vmem, size = 0x12000, scoped, tag = 'internal scratch']
  %s0 = inlined_call_operand.vmem [shape: f32[18,2], index: 0, kind: input, shape index: {}]
  %s1 = inlined_call_operand.vmem [shape: f32[18,2], index: 1, kind: input, shape index: {}]
  %s2 = inlined_call_operand.vmem [shape: f32[18,2], index: 2, kind: input, shape index: {}]
  %s3 = inlined_call_operand.vmem [shape: f32[18,2], index: 3, kind: input, shape index: {}]
  %s4 = inlined_call_operand.vmem [shape: f32[18,2], index: 4, kind: output, shape index: {}]
  %s5 = sld [smem:[#allocation0]]
  $region26: #{mab_forward.13} parent=0
    _
  %s7 = ssub.s32 1, %s5
  %s8 = scalar_select 0, %s7, %s5
  // Predicated region
  $region2: #{mab_forward.13} parent=0 // pred_check
    _
  $region3: #{mab_forward.13} parent=0 // pred_check_branch
    %10 = sbr.rel (0) target = $region5
  $region4: #{mab_forward.13} parent=0 // pred_region
    _
  $region5: #{mab_forward.13} parent=0 // pred_fallthru
    _
  // Predicated region
  $region6: #{mab_forward.13} parent=0 // pred_check
    _
  $region7: #{mab_forward.13} parent=0 // pred_check_branch
    %12 = sbr.rel (0) target = $region9
  $region8: #{mab_forward.13} parent=0 // pred_region
    _
  $region9: #{mab_forward.13} parent=0 // pred_fallthru
    _
  // Predicated region
  $region10: #{mab_forward.13} parent=0 // pred_check
    _
  $region11: #{mab_forward.13} parent=0 // pred_check_branch
    %14 = sbr.rel (0) target = $region13
  $region12: #{mab_forward.13} parent=0 // pred_region
    _
  $region13: #{mab_forward.13} parent=0 // pred_fallthru
    _
  // Predicated region
  $region14: #{mab_forward.13} parent=0 // pred_check
    _
  $region15: #{mab_forward.13} parent=0 // pred_check_branch
    %16 = sbr.rel (0) target = $region17
  $region16: #{mab_forward.13} parent=0 // pred_region
    _
  $region17: #{mab_forward.13} parent=0 // pred_fallthru
    _
  %v17 = vld [vmem:[%s0] sm:$0xff]
  %v18 = vld [vmem:[%s0 + $0x8] sm:$0xff]
  %v19 = vld [vmem:[%s0 + $0x10] sm:$0x3]
  %v20 = vld [vmem:[%s1] sm:$0xff]
  %v21 = vld [vmem:[%s1 + $0x8] sm:$0xff]
  %v22 = vld [vmem:[%s1 + $0x10] sm:$0x3]
  %v23 = vmax.f32 %v17, %v20
  %v24 = vmax.f32 %v18, %v21
  %v25 = vmax.f32 %v19, %v22
  %v26 = vld [vmem:[%s2] sm:$0xff]
  %v27 = vld [vmem:[%s2 + $0x8] sm:$0xff]
  %v28 = vld [vmem:[%s2 + $0x10] sm:$0x3]
  %v29 = vld [vmem:[%s3] sm:$0xff]
  %v30 = vld [vmem:[%s3 + $0x8] sm:$0xff]
  %v31 = vld [vmem:[%s3 + $0x10] sm:$0x3]
  %v32 = vmax.f32 %v26, %v29
  %v33 = vmax.f32 %v27, %v30
  %v34 = vmax.f32 %v28, %v31
  %v35 = vmax.f32 %v23, %v32
  %v36 = vmax.f32 %v24, %v33
  %v37 = vmax.f32 %v25, %v34
  %vm38 = vcmask 15360
  %39 = vst.msk [vmem:[%s4] sm:$0xff] %vm38, %v35
  %40 = vst.msk [vmem:[%s4 + $0x8] sm:$0xff] %vm38, %v36
  %vm41 = vcmask 9216
  %42 = vst.msk [vmem:[%s4 + $0x10] sm:$0x3] %vm41, %v37
  // Predicated region
  $region18: #{mab_forward.13} parent=0 // pred_check
    _
  $region19: #{mab_forward.13} parent=0 // pred_check_branch
    %44 = sbr.rel (0) target = $region21
  $region20: #{mab_forward.13} parent=0 // pred_region
    _
  $region21: #{mab_forward.13} parent=0 // pred_fallthru
    _
  // Predicated region
  $region22: #{mab_forward.13} parent=0 // pred_check
    _
  $region23: #{mab_forward.13} parent=0 // pred_check_branch
    %46 = sbr.rel (0) target = $region25
  $region24: #{mab_forward.13} parent=0 // pred_region
    _
  $region25: #{mab_forward.13} parent=0 // pred_fallthru
    _

// kernel: mab_forward.12
$region0: #{mab_forward.12}
  #allocation0 [shape = 'u32[]', space=smem, size = 0x4, offset = 0x4, fixed_abs, tag = 'smem constant byte address 0x4 - core index']
  #allocation1 [shape = 'u32[144,128]{1,0:T(1,128)}', space=vmem, size = 0x12000, scoped, tag = 'internal scratch']
  %s0 = inlined_call_operand.vmem [shape: f32[104,18], index: 0, kind: input, shape index: {}]
  %s1 = inlined_call_operand.vmem [shape: f32[18,2], index: 1, kind: input, shape index: {}]
  %s2 = inlined_call_operand.vmem [shape: f32[1,2], index: 2, kind: input, shape index: {}]
  %s3 = inlined_call_operand.vmem [shape: f32[104,2], index: 3, kind: output, shape index: {}]
  %s4 = sld [smem:[#allocation0]]
  $region22: #{mab_forward.12} parent=0
    _
  %s6 = ssub.s32 1, %s4
  %s7 = scalar_select 0, %s6, %s4
  // Predicated region
  $region2: #{mab_forward.12} parent=0 // pred_check
    _
  $region3: #{mab_forward.12} parent=0 // pred_check_branch
    %9 = sbr.rel (0) target = $region5
  $region4: #{mab_forward.12} parent=0 // pred_region
    _
  $region5: #{mab_forward.12} parent=0 // pred_fallthru
    _
  // Predicated region
  $region6: #{mab_forward.12} parent=0 // pred_check
    _
  $region7: #{mab_forward.12} parent=0 // pred_check_branch
    %11 = sbr.rel (0) target = $region9
  $region8: #{mab_forward.12} parent=0 // pred_region
    _
  $region9: #{mab_forward.12} parent=0 // pred_fallthru
    _
  // Predicated region
  $region10: #{mab_forward.12} parent=0 // pred_check
    _
  $region11: #{mab_forward.12} parent=0 // pred_check_branch
    %13 = sbr.rel (0) target = $region13
  $region12: #{mab_forward.12} parent=0 // pred_region
    _
  $region13: #{mab_forward.12} parent=0 // pred_fallthru
    _
  %v14 = vld [vmem:[%s0] sm:$0xff]
  %v15 = vld [vmem:[%s0 + $0x8] sm:$0xff]
  %v16 = vld [vmem:[%s0 + $0x10] sm:$0xff]
  %v17 = vld [vmem:[%s0 + $0x18] sm:$0xff]
  %v18 = vld [vmem:[%s0 + $0x20] sm:$0xff]
  %v19 = vld [vmem:[%s0 + $0x28] sm:$0xff]
  %v20 = vld [vmem:[%s0 + $0x30] sm:$0xff]
  %v21 = vld [vmem:[%s0 + $0x38] sm:$0xff]
  %v22 = vld [vmem:[%s0 + $0x40] sm:$0xff]
  %v23 = vld [vmem:[%s0 + $0x48] sm:$0xff]
  %v24 = vld [vmem:[%s0 + $0x50] sm:$0xff]
  %v25 = vld [vmem:[%s0 + $0x58] sm:$0xff]
  %v26 = vld [vmem:[%s0 + $0x60] sm:$0xff]
  %v27 = vld [vmem:[%s1] sm:$0xff]
  %v28 = vld [vmem:[%s1 + $0x8] sm:$0xff]
  %v29 = vld [vmem:[%s1 + $0x10] sm:$0x3]
  %v30 = vld [vmem:[%s2] sm:$0x1]
  %v32 = vlaneseq
  %v33 = vshrl.u32 %v32, 7
  %v34 = vsub.s32 0, %v33
  %v35 = vrot.slane %v30, %v34
  %vm37 = vcmask 146432
  %v39 = vsel %vm37, %v14, 0
  %v42 = vsel %vm37, %v15, 0
  %v45 = vsel %vm37, %v16, 0
  %v48 = vsel %vm37, %v17, 0
  %v51 = vsel %vm37, %v18, 0
  %v54 = vsel %vm37, %v19, 0
  %v57 = vsel %vm37, %v20, 0
  %v60 = vsel %vm37, %v21, 0
  %v63 = vsel %vm37, %v22, 0
  %v66 = vsel %vm37, %v23, 0
  %v69 = vsel %vm37, %v24, 0
  %v72 = vsel %vm37, %v25, 0
  %v75 = vsel %vm37, %v26, 0
  %vm77 = vcmask 1041408
  %v79 = vsel %vm77, %v29, 0
  %81 = vmatprep.subr.mxu0 0.0
  %82 = vmatpush1.msra.mxu0 0.0
  %83 = vmatprep.subr.mxu0 0.0
  %84 = vmatpush1.msra.mxu0 0.0
  %85 = vmatprep.subr.mxu0 0.0
  %86 = vmatpush1.msra.mxu0 0.0
  %87 = vmatprep.subr.mxu0 0.0
  %88 = vmatpush1.msra.mxu0 0.0
  %89 = vmatprep.subr.mxu0 0.0
  %90 = vmatpush1.msra.mxu0 0.0
  %91 = vmatprep.subr.mxu0 0.0
  %92 = vmatpush1.msra.mxu0 0.0
  %93 = vmatprep.subr.mxu0 0.0
  %94 = vmatpush1.msra.mxu0 0.0
  %95 = vmatprep.subr.mxu0 0.0
  %96 = vmatpush1.msra.mxu0 0.0
  %97 = vmatprep.subr.mxu0 0.0
  %98 = vmatpush1.msra.mxu0 0.0
  %99 = vmatprep.subr.mxu0 0.0
  %100 = vmatpush1.msra.mxu0 0.0
  %101 = vmatprep.subr.mxu0 0.0
  %102 = vmatpush1.msra.mxu0 0.0
  %103 = vmatprep.subr.mxu0 0.0
  %104 = vmatpush1.msra.mxu0 0.0
  %105 = vmatprep.subr.mxu0 0.0
  %106 = vmatpush1.msra.mxu0 0.0
  %107 = vmatprep.subr.mxu0 0.0
  %108 = vmatpush1.msra.mxu0 %v79
  %109 = vmatprep.subr.mxu0 0.0
  %110 = vmatpush1.msra.mxu0 %v28
  %111 = vmatprep.subr.mxu0 0.0
  %112 = vmatpush1.msra.mxu0 %v27
  %113 = vmatprep.subr.mxu0 0.0
  %114 = vmatpush2.msra.mxu0 0.0
  %115 = vmatprep.subr.mxu0 0.0
  %116 = vmatpush2.msra.mxu0 0.0
  %117 = vmatprep.subr.mxu0 0.0
  %118 = vmatpush2.msra.mxu0 0.0
  %119 = vmatprep.subr.mxu0 0.0
  %120 = vmatpush2.msra.mxu0 0.0
  %121 = vmatprep.subr.mxu0 0.0
  %122 = vmatpush2.msra.mxu0 0.0
  %123 = vmatprep.subr.mxu0 0.0
  %124 = vmatpush2.msra.mxu0 0.0
  %125 = vmatprep.subr.mxu0 0.0
  %126 = vmatpush2.msra.mxu0 0.0
  %127 = vmatprep.subr.mxu0 0.0
  %128 = vmatpush2.msra.mxu0 0.0
  %129 = vmatprep.subr.mxu0 0.0
  %130 = vmatpush2.msra.mxu0 0.0
  %131 = vmatprep.subr.mxu0 0.0
  %132 = vmatpush2.msra.mxu0 0.0
  %133 = vmatprep.subr.mxu0 0.0
  %134 = vmatpush2.msra.mxu0 0.0
  %135 = vmatprep.subr.mxu0 0.0
  %136 = vmatpush2.msra.mxu0 0.0
  %137 = vmatprep.subr.mxu0 0.0
  %138 = vmatpush2.msra.mxu0 0.0
  %139 = vmatprep.subr.mxu0 0.0
  %140 = vmatpush2.msra.mxu0 0.0
  %141 = vmatprep.subr.mxu0 0.0
  %142 = vmatpush2.msra.mxu0 0.0
  %143 = vmatprep.subr.mxu0 0.0
  %144 = vmatpush2.msra.mxu0 0.0
  %145 = vmatprep.mubr.f32.mxu0 0.0
  %146 = vmatmul.mubr.f32.gmra.mxu0 %v39
  %v147 = vpop.f32.mrf.mxu0
  %v148 = vadd.f32 %v35, %v147
  %v149 = vpop.f32.mrf.mxu0
  %150 = vmatprep.mubr.f32.mxu0 0.0
  %151 = vmatmul.mubr.f32.gmra.mxu0 %v42
  %v152 = vpop.f32.mrf.mxu0
  %v153 = vadd.f32 %v35, %v152
  %v154 = vpop.f32.mrf.mxu0
  %155 = vmatprep.mubr.f32.mxu0 0.0
  %156 = vmatmul.mubr.f32.gmra.mxu0 %v45
  %v157 = vpop.f32.mrf.mxu0
  %v158 = vadd.f32 %v35, %v157
  %v159 = vpop.f32.mrf.mxu0
  %160 = vmatprep.mubr.f32.mxu0 0.0
  %161 = vmatmul.mubr.f32.gmra.mxu0 %v48
  %v162 = vpop.f32.mrf.mxu0
  %v163 = vadd.f32 %v35, %v162
  %v164 = vpop.f32.mrf.mxu0
  %165 = vmatprep.mubr.f32.mxu0 0.0
  %166 = vmatmul.mubr.f32.gmra.mxu0 %v51
  %v167 = vpop.f32.mrf.mxu0
  %v168 = vadd.f32 %v35, %v167
  %v169 = vpop.f32.mrf.mxu0
  %170 = vmatprep.mubr.f32.mxu0 0.0
  %171 = vmatmul.mubr.f32.gmra.mxu0 %v54
  %v172 = vpop.f32.mrf.mxu0
  %v173 = vadd.f32 %v35, %v172
  %v174 = vpop.f32.mrf.mxu0
  %175 = vmatprep.mubr.f32.mxu0 0.0
  %176 = vmatmul.mubr.f32.gmra.mxu0 %v57
  %v177 = vpop.f32.mrf.mxu0
  %v178 = vadd.f32 %v35, %v177
  %v179 = vpop.f32.mrf.mxu0
  %180 = vmatprep.mubr.f32.mxu0 0.0
  %181 = vmatmul.mubr.f32.gmra.mxu0 %v60
  %v182 = vpop.f32.mrf.mxu0
  %v183 = vadd.f32 %v35, %v182
  %v184 = vpop.f32.mrf.mxu0
  %185 = vmatprep.mubr.f32.mxu0 0.0
  %186 = vmatmul.mubr.f32.gmra.mxu0 %v63
  %v187 = vpop.f32.mrf.mxu0
  %v188 = vadd.f32 %v35, %v187
  %v189 = vpop.f32.mrf.mxu0
  %190 = vmatprep.mubr.f32.mxu0 0.0
  %191 = vmatmul.mubr.f32.gmra.mxu0 %v66
  %v192 = vpop.f32.mrf.mxu0
  %v193 = vadd.f32 %v35, %v192
  %v194 = vpop.f32.mrf.mxu0
  %195 = vmatprep.mubr.f32.mxu0 0.0
  %196 = vmatmul.mubr.f32.gmra.mxu0 %v69
  %v197 = vpop.f32.mrf.mxu0
  %v198 = vadd.f32 %v35, %v197
  %v199 = vpop.f32.mrf.mxu0
  %200 = vmatprep.mubr.f32.mxu0 0.0
  %201 = vmatmul.mubr.f32.gmra.mxu0 %v72
  %v202 = vpop.f32.mrf.mxu0
  %v203 = vadd.f32 %v35, %v202
  %v204 = vpop.f32.mrf.mxu0
  %205 = vmatprep.mubr.f32.mxu0 0.0
  %206 = vmatmul.mubr.f32.gmra.mxu0 %v75
  %v207 = vpop.f32.mrf.mxu0
  %v208 = vadd.f32 %v35, %v207
  %v209 = vpop.f32.mrf.mxu0
  %210 = vdwg.mxu0
  %vm211 = vcmask 15360
  %212 = vst.msk [vmem:[%s3] sm:$0xff] %vm211, %v148
  %213 = vst.msk [vmem:[%s3 + $0x8] sm:$0xff] %vm211, %v153
  %214 = vst.msk [vmem:[%s3 + $0x10] sm:$0xff] %vm211, %v158
  %215 = vst.msk [vmem:[%s3 + $0x18] sm:$0xff] %vm211, %v163
  %216 = vst.msk [vmem:[%s3 + $0x20] sm:$0xff] %vm211, %v168
  %217 = vst.msk [vmem:[%s3 + $0x28] sm:$0xff] %vm211, %v173
  %218 = vst.msk [vmem:[%s3 + $0x30] sm:$0xff] %vm211, %v178
  %219 = vst.msk [vmem:[%s3 + $0x38] sm:$0xff] %vm211, %v183
  %220 = vst.msk [vmem:[%s3 + $0x40] sm:$0xff] %vm211, %v188
  %221 = vst.msk [vmem:[%s3 + $0x48] sm:$0xff] %vm211, %v193
  %222 = vst.msk [vmem:[%s3 + $0x50] sm:$0xff] %vm211, %v198
  %223 = vst.msk [vmem:[%s3 + $0x58] sm:$0xff] %vm211, %v203
  %224 = vst.msk [vmem:[%s3 + $0x60] sm:$0xff] %vm211, %v208
  // Predicated region
  $region14: #{mab_forward.12} parent=0 // pred_check
    _
  $region15: #{mab_forward.12} parent=0 // pred_check_branch
    %226 = sbr.rel (0) target = $region17
  $region16: #{mab_forward.12} parent=0 // pred_region
    _
  $region17: #{mab_forward.12} parent=0 // pred_fallthru
    _
  // Predicated region
  $region18: #{mab_forward.12} parent=0 // pred_check
    _
  $region19: #{mab_forward.12} parent=0 // pred_check_branch
    %228 = sbr.rel (0) target = $region21
  $region20: #{mab_forward.12} parent=0 // pred_region
    _
  $region21: #{mab_forward.12} parent=0 // pred_fallthru
    _

// kernel: mab_forward.14
$region0: #{mab_forward.14}
  #allocation0 [shape = 'u32[]', space=smem, size = 0x4, offset = 0x4, fixed_abs, tag = 'smem constant byte address 0x4 - core index']
  #allocation1 [shape = 'u32[144,128]{1,0:T(1,128)}', space=vmem, size = 0x12000, scoped, tag = 'internal scratch']
  %s0 = inlined_call_operand.vmem [shape: f32[24,18], index: 0, kind: input, shape index: {}]
  %s1 = inlined_call_operand.vmem [shape: f32[18,2], index: 1, kind: input, shape index: {}]
  %s2 = inlined_call_operand.vmem [shape: f32[1,2], index: 2, kind: input, shape index: {}]
  %s3 = inlined_call_operand.vmem [shape: f32[24,2], index: 3, kind: output, shape index: {}]
  %s4 = sld [smem:[#allocation0]]
  $region22: #{mab_forward.14} parent=0
    _
  %s6 = ssub.s32 1, %s4
  %s7 = scalar_select 0, %s6, %s4
  // Predicated region
  $region2: #{mab_forward.14} parent=0 // pred_check
    _
  $region3: #{mab_forward.14} parent=0 // pred_check_branch
    %9 = sbr.rel (0) target = $region5
  $region4: #{mab_forward.14} parent=0 // pred_region
    _
  $region5: #{mab_forward.14} parent=0 // pred_fallthru
    _
  // Predicated region
  $region6: #{mab_forward.14} parent=0 // pred_check
    _
  $region7: #{mab_forward.14} parent=0 // pred_check_branch
    %11 = sbr.rel (0) target = $region9
  $region8: #{mab_forward.14} parent=0 // pred_region
    _
  $region9: #{mab_forward.14} parent=0 // pred_fallthru
    _
  // Predicated region
  $region10: #{mab_forward.14} parent=0 // pred_check
    _
  $region11: #{mab_forward.14} parent=0 // pred_check_branch
    %13 = sbr.rel (0) target = $region13
  $region12: #{mab_forward.14} parent=0 // pred_region
    _
  $region13: #{mab_forward.14} parent=0 // pred_fallthru
    _
  %v14 = vld [vmem:[%s0] sm:$0xff]
  %v15 = vld [vmem:[%s0 + $0x8] sm:$0xff]
  %v16 = vld [vmem:[%s0 + $0x10] sm:$0xff]
  %v17 = vld [vmem:[%s1] sm:$0xff]
  %v18 = vld [vmem:[%s1 + $0x8] sm:$0xff]
  %v19 = vld [vmem:[%s1 + $0x10] sm:$0x3]
  %v20 = vld [vmem:[%s2] sm:$0x1]
  %v22 = vlaneseq
  %v23 = vshrl.u32 %v22, 7
  %v24 = vsub.s32 0, %v23
  %v25 = vrot.slane %v20, %v24
  %vm27 = vcmask 146432
  %v29 = vsel %vm27, %v14, 0
  %v32 = vsel %vm27, %v15, 0
  %v35 = vsel %vm27, %v16, 0
  %vm37 = vcmask 1041408
  %v39 = vsel %vm37, %v19, 0
  %41 = vmatprep.subr.mxu0 0.0
  %42 = vmatpush1.msra.mxu0 0.0
  %43 = vmatprep.subr.mxu0 0.0
  %44 = vmatpush1.msra.mxu0 0.0
  %45 = vmatprep.subr.mxu0 0.0
  %46 = vmatpush1.msra.mxu0 0.0
  %47 = vmatprep.subr.mxu0 0.0
  %48 = vmatpush1.msra.mxu0 0.0
  %49 = vmatprep.subr.mxu0 0.0
  %50 = vmatpush1.msra.mxu0 0.0
  %51 = vmatprep.subr.mxu0 0.0
  %52 = vmatpush1.msra.mxu0 0.0
  %53 = vmatprep.subr.mxu0 0.0
  %54 = vmatpush1.msra.mxu0 0.0
  %55 = vmatprep.subr.mxu0 0.0
  %56 = vmatpush1.msra.mxu0 0.0
  %57 = vmatprep.subr.mxu0 0.0
  %58 = vmatpush1.msra.mxu0 0.0
  %59 = vmatprep.subr.mxu0 0.0
  %60 = vmatpush1.msra.mxu0 0.0
  %61 = vmatprep.subr.mxu0 0.0
  %62 = vmatpush1.msra.mxu0 0.0
  %63 = vmatprep.subr.mxu0 0.0
  %64 = vmatpush1.msra.mxu0 0.0
  %65 = vmatprep.subr.mxu0 0.0
  %66 = vmatpush1.msra.mxu0 0.0
  %67 = vmatprep.subr.mxu0 0.0
  %68 = vmatpush1.msra.mxu0 %v39
  %69 = vmatprep.subr.mxu0 0.0
  %70 = vmatpush1.msra.mxu0 %v18
  %71 = vmatprep.subr.mxu0 0.0
  %72 = vmatpush1.msra.mxu0 %v17
  %73 = vmatprep.subr.mxu0 0.0
  %74 = vmatpush2.msra.mxu0 0.0
  %75 = vmatprep.subr.mxu0 0.0
  %76 = vmatpush2.msra.mxu0 0.0
  %77 = vmatprep.subr.mxu0 0.0
  %78 = vmatpush2.msra.mxu0 0.0
  %79 = vmatprep.subr.mxu0 0.0
  %80 = vmatpush2.msra.mxu0 0.0
  %81 = vmatprep.subr.mxu0 0.0
  %82 = vmatpush2.msra.mxu0 0.0
  %83 = vmatprep.subr.mxu0 0.0
  %84 = vmatpush2.msra.mxu0 0.0
  %85 = vmatprep.subr.mxu0 0.0
  %86 = vmatpush2.msra.mxu0 0.0
  %87 = vmatprep.subr.mxu0 0.0
  %88 = vmatpush2.msra.mxu0 0.0
  %89 = vmatprep.subr.mxu0 0.0
  %90 = vmatpush2.msra.mxu0 0.0
  %91 = vmatprep.subr.mxu0 0.0
  %92 = vmatpush2.msra.mxu0 0.0
  %93 = vmatprep.subr.mxu0 0.0
  %94 = vmatpush2.msra.mxu0 0.0
  %95 = vmatprep.subr.mxu0 0.0
  %96 = vmatpush2.msra.mxu0 0.0
  %97 = vmatprep.subr.mxu0 0.0
  %98 = vmatpush2.msra.mxu0 0.0
  %99 = vmatprep.subr.mxu0 0.0
  %100 = vmatpush2.msra.mxu0 0.0
  %101 = vmatprep.subr.mxu0 0.0
  %102 = vmatpush2.msra.mxu0 0.0
  %103 = vmatprep.subr.mxu0 0.0
  %104 = vmatpush2.msra.mxu0 0.0
  %105 = vmatprep.mubr.f32.mxu0 0.0
  %106 = vmatmul.mubr.f32.gmra.mxu0 %v29
  %v107 = vpop.f32.mrf.mxu0
  %v108 = vadd.f32 %v25, %v107
  %v109 = vpop.f32.mrf.mxu0
  %110 = vmatprep.mubr.f32.mxu0 0.0
  %111 = vmatmul.mubr.f32.gmra.mxu0 %v32
  %v112 = vpop.f32.mrf.mxu0
  %v113 = vadd.f32 %v25, %v112
  %v114 = vpop.f32.mrf.mxu0
  %115 = vmatprep.mubr.f32.mxu0 0.0
  %116 = vmatmul.mubr.f32.gmra.mxu0 %v35
  %v117 = vpop.f32.mrf.mxu0
  %v118 = vadd.f32 %v25, %v117
  %v119 = vpop.f32.mrf.mxu0
  %120 = vdwg.mxu0
  %vm121 = vcmask 15360
  %122 = vst.msk [vmem:[%s3] sm:$0xff] %vm121, %v108
  %123 = vst.msk [vmem:[%s3 + $0x8] sm:$0xff] %vm121, %v113
  %124 = vst.msk [vmem:[%s3 + $0x10] sm:$0xff] %vm121, %v118
  // Predicated region
  $region14: #{mab_forward.14} parent=0 // pred_check
    _
  $region15: #{mab_forward.14} parent=0 // pred_check_branch
    %126 = sbr.rel (0) target = $region17
  $region16: #{mab_forward.14} parent=0 // pred_region
    _
  $region17: #{mab_forward.14} parent=0 // pred_fallthru
    _
  // Predicated region
  $region18: #{mab_forward.14} parent=0 // pred_check
    _
  $region19: #{mab_forward.14} parent=0 // pred_check_branch
    %128 = sbr.rel (0) target = $region21
  $region20: #{mab_forward.14} parent=0 // pred_region
    _
  $region21: #{mab_forward.14} parent=0 // pred_fallthru
    _

// kernel: mab_forward.17
$region0: #{mab_forward.17}
  #allocation0 [shape = 'u32[]', space=smem, size = 0x4, offset = 0x4, fixed_abs, tag = 'smem constant byte address 0x4 - core index']
  #allocation1 [shape = 'u32[144,128]{1,0:T(1,128)}', space=vmem, size = 0x12000, scoped, tag = 'internal scratch']
  %s0 = inlined_call_operand.vmem [shape: f32[512,2], index: 0, kind: input, shape index: {}]
  %s1 = inlined_call_operand.vmem [shape: f32[512,2], index: 1, kind: input, shape index: {}]
  %s2 = inlined_call_operand.vmem [shape: f32[512,8], index: 2, kind: input, shape index: {}]
  %s3 = inlined_call_operand.vmem [shape: f32[2,8], index: 3, kind: input, shape index: {}]
  %s4 = inlined_call_operand.vmem [shape: f32[1,8], index: 4, kind: input, shape index: {}]
  %s5 = inlined_call_operand.vmem [shape: f32[2,8], index: 5, kind: input, shape index: {}]
  %s6 = inlined_call_operand.vmem [shape: f32[1,8], index: 6, kind: input, shape index: {}]
  %s7 = inlined_call_operand.vmem [shape: f32[512,8], index: 7, kind: output, shape index: {}]
  %s8 = sld [smem:[#allocation0]]
  $region38: #{mab_forward.17} parent=0
    _
  %s10 = ssub.s32 1, %s8
  %s11 = scalar_select 0, %s10, %s8
  // Predicated region
  $region2: #{mab_forward.17} parent=0 // pred_check
    _
  $region3: #{mab_forward.17} parent=0 // pred_check_branch
    %13 = sbr.rel (0) target = $region5
  $region4: #{mab_forward.17} parent=0 // pred_region
    _
  $region5: #{mab_forward.17} parent=0 // pred_fallthru
    _
  // Predicated region
  $region6: #{mab_forward.17} parent=0 // pred_check
    _
  $region7: #{mab_forward.17} parent=0 // pred_check_branch
    %15 = sbr.rel (0) target = $region9
  $region8: #{mab_forward.17} parent=0 // pred_region
    _
  $region9: #{mab_forward.17} parent=0 // pred_fallthru
    _
  // Predicated region
  $region10: #{mab_forward.17} parent=0 // pred_check
    _
  $region11: #{mab_forward.17} parent=0 // pred_check_branch
    %17 = sbr.rel (0) target = $region13
  $region12: #{mab_forward.17} parent=0 // pred_region
    _
  $region13: #{mab_forward.17} parent=0 // pred_fallthru
    _
  // Predicated region
  $region14: #{mab_forward.17} parent=0 // pred_check
    _
  $region15: #{mab_forward.17} parent=0 // pred_check_branch
    %19 = sbr.rel (0) target = $region17
  $region16: #{mab_forward.17} parent=0 // pred_region
    _
  $region17: #{mab_forward.17} parent=0 // pred_fallthru
    _
  // Predicated region
  $region18: #{mab_forward.17} parent=0 // pred_check
    _
  $region19: #{mab_forward.17} parent=0 // pred_check_branch
    %21 = sbr.rel (0) target = $region21
  $region20: #{mab_forward.17} parent=0 // pred_region
    _
  $region21: #{mab_forward.17} parent=0 // pred_fallthru
    _
  // Predicated region
  $region22: #{mab_forward.17} parent=0 // pred_check
    _
  $region23: #{mab_forward.17} parent=0 // pred_check_branch
    %23 = sbr.rel (0) target = $region25
  $region24: #{mab_forward.17} parent=0 // pred_region
    _
  $region25: #{mab_forward.17} parent=0 // pred_fallthru
    _
  // Predicated region
  $region26: #{mab_forward.17} parent=0 // pred_check
    _
  $region27: #{mab_forward.17} parent=0 // pred_check_branch
    %25 = sbr.rel (0) target = $region29
  $region28: #{mab_forward.17} parent=0 // pred_region
    _
  $region29: #{mab_forward.17} parent=0 // pred_fallthru
    _
  %v26 = vld [vmem:[%s0] sm:$0xff]
  %v27 = vld [vmem:[%s0 + $0x8] sm:$0xff]
  %v28 = vld [vmem:[%s0 + $0x10] sm:$0xff]
  %v29 = vld [vmem:[%s0 + $0x18] sm:$0xff]
  %v30 = vld [vmem:[%s0 + $0x20] sm:$0xff]
  %v31 = vld [vmem:[%s0 + $0x28] sm:$0xff]
  %v32 = vld [vmem:[%s0 + $0x30] sm:$0xff]
  %v33 = vld [vmem:[%s0 + $0x38] sm:$0xff]
  %v34 = vld [vmem:[%s0 + $0x40] sm:$0xff]
  %v35 = vld [vmem:[%s0 + $0x48] sm:$0xff]
  %v36 = vld [vmem:[%s0 + $0x50] sm:$0xff]
  %v37 = vld [vmem:[%s0 + $0x58] sm:$0xff]
  %v38 = vld [vmem:[%s0 + $0x60] sm:$0xff]
  %v39 = vld [vmem:[%s0 + $0x68] sm:$0xff]
  %v40 = vld [vmem:[%s0 + $0x70] sm:$0xff]
  %v41 = vld [vmem:[%s0 + $0x78] sm:$0xff]
  %v42 = vld [vmem:[%s0 + $0x80] sm:$0xff]
  %v43 = vld [vmem:[%s0 + $0x88] sm:$0xff]
  %v44 = vld [vmem:[%s0 + $0x90] sm:$0xff]
  %v45 = vld [vmem:[%s0 + $0x98] sm:$0xff]
  %v46 = vld [vmem:[%s0 + $0xa0] sm:$0xff]
  %v47 = vld [vmem:[%s0 + $0xa8] sm:$0xff]
  %v48 = vld [vmem:[%s0 + $0xb0] sm:$0xff]
  %v49 = vld [vmem:[%s0 + $0xb8] sm:$0xff]
  %v50 = vld [vmem:[%s0 + $0xc0] sm:$0xff]
  %v51 = vld [vmem:[%s0 + $0xc8] sm:$0xff]
  %v52 = vld [vmem:[%s0 + $0xd0] sm:$0xff]
  %v53 = vld [vmem:[%s0 + $0xd8] sm:$0xff]
  %v54 = vld [vmem:[%s0 + $0xe0] sm:$0xff]
  %v55 = vld [vmem:[%s0 + $0xe8] sm:$0xff]
  %v56 = vld [vmem:[%s0 + $0xf0] sm:$0xff]
  %v57 = vld [vmem:[%s0 + $0xf8] sm:$0xff]
  %v58 = vld [vmem:[%s0 + $0x100] sm:$0xff]
  %v59 = vld [vmem:[%s0 + $0x108] sm:$0xff]
  %v60 = vld [vmem:[%s0 + $0x110] sm:$0xff]
  %v61 = vld [vmem:[%s0 + $0x118] sm:$0xff]
  %v62 = vld [vmem:[%s0 + $0x120] sm:$0xff]
  %v63 = vld [vmem:[%s0 + $0x128] sm:$0xff]
  %v64 = vld [vmem:[%s0 + $0x130] sm:$0xff]
  %v65 = vld [vmem:[%s0 + $0x138] sm:$0xff]
  %v66 = vld [vmem:[%s0 + $0x140] sm:$0xff]
  %v67 = vld [vmem:[%s0 + $0x148] sm:$0xff]
  %v68 = vld [vmem:[%s0 + $0x150] sm:$0xff]
  %v69 = vld [vmem:[%s0 + $0x158] sm:$0xff]
  %v70 = vld [vmem:[%s0 + $0x160] sm:$0xff]
  %v71 = vld [vmem:[%s0 + $0x168] sm:$0xff]
  %v72 = vld [vmem:[%s0 + $0x170] sm:$0xff]
  %v73 = vld [vmem:[%s0 + $0x178] sm:$0xff]
  %v74 = vld [vmem:[%s0 + $0x180] sm:$0xff]
  %v75 = vld [vmem:[%s0 + $0x188] sm:$0xff]
  %v76 = vld [vmem:[%s0 + $0x190] sm:$0xff]
  %v77 = vld [vmem:[%s0 + $0x198] sm:$0xff]
  %v78 = vld [vmem:[%s0 + $0x1a0] sm:$0xff]
  %v79 = vld [vmem:[%s0 + $0x1a8] sm:$0xff]
  %v80 = vld [vmem:[%s0 + $0x1b0] sm:$0xff]
  %v81 = vld [vmem:[%s0 + $0x1b8] sm:$0xff]
  %v82 = vld [vmem:[%s0 + $0x1c0] sm:$0xff]
  %v83 = vld [vmem:[%s0 + $0x1c8] sm:$0xff]
  %v84 = vld [vmem:[%s0 + $0x1d0] sm:$0xff]
  %v85 = vld [vmem:[%s0 + $0x1d8] sm:$0xff]
  %v86 = vld [vmem:[%s0 + $0x1e0] sm:$0xff]
  %v87 = vld [vmem:[%s0 + $0x1e8] sm:$0xff]
  %v88 = vld [vmem:[%s0 + $0x1f0] sm:$0xff]
  %v89 = vld [vmem:[%s0 + $0x1f8] sm:$0xff]
  %v90 = vld [vmem:[%s3] sm:$0x3]
  %v91 = vld [vmem:[%s4] sm:$0x1]
  %v93 = vlaneseq
  %v94 = vshrl.u32 %v93, 7
  %v95 = vsub.s32 0, %v94
  %v96 = vrot.slane %v91, %v95
  %vm98 = vcmask 15360
  %v100 = vsel %vm98, %v26, 0
  %v103 = vsel %vm98, %v27, 0
  %v106 = vsel %vm98, %v28, 0
  %v109 = vsel %vm98, %v29, 0
  %v112 = vsel %vm98, %v30, 0
  %v115 = vsel %vm98, %v31, 0
  %v118 = vsel %vm98, %v32, 0
  %v121 = vsel %vm98, %v33, 0
  %v124 = vsel %vm98, %v34, 0
  %v127 = vsel %vm98, %v35, 0
  %v130 = vsel %vm98, %v36, 0
  %v133 = vsel %vm98, %v37, 0
  %v136 = vsel %vm98, %v38, 0
  %v139 = vsel %vm98, %v39, 0
  %v142 = vsel %vm98, %v40, 0
  %v145 = vsel %vm98, %v41, 0
  %v148 = vsel %vm98, %v42, 0
  %v151 = vsel %vm98, %v43, 0
  %v154 = vsel %vm98, %v44, 0
  %v157 = vsel %vm98, %v45, 0
  %v160 = vsel %vm98, %v46, 0
  %v163 = vsel %vm98, %v47, 0
  %v166 = vsel %vm98, %v48, 0
  %v169 = vsel %vm98, %v49, 0
  %v172 = vsel %vm98, %v50, 0
  %v175 = vsel %vm98, %v51, 0
  %v178 = vsel %vm98, %v52, 0
  %v181 = vsel %vm98, %v53, 0
  %v184 = vsel %vm98, %v54, 0
  %v187 = vsel %vm98, %v55, 0
  %v190 = vsel %vm98, %v56, 0
  %v193 = vsel %vm98, %v57, 0
  %v196 = vsel %vm98, %v58, 0
  %v199 = vsel %vm98, %v59, 0
  %v202 = vsel %vm98, %v60, 0
  %v205 = vsel %vm98, %v61, 0
  %v208 = vsel %vm98, %v62, 0
  %v211 = vsel %vm98, %v63, 0
  %v214 = vsel %vm98, %v64, 0
  %v217 = vsel %vm98, %v65, 0
  %v220 = vsel %vm98, %v66, 0
  %v223 = vsel %vm98, %v67, 0
  %v226 = vsel %vm98, %v68, 0
  %v229 = vsel %vm98, %v69, 0
  %v232 = vsel %vm98, %v70, 0
  %v235 = vsel %vm98, %v71, 0
  %v238 = vsel %vm98, %v72, 0
  %v241 = vsel %vm98, %v73, 0
  %v244 = vsel %vm98, %v74, 0
  %v247 = vsel %vm98, %v75, 0
  %v250 = vsel %vm98, %v76, 0
  %v253 = vsel %vm98, %v77, 0
  %v256 = vsel %vm98, %v78, 0
  %v259 = vsel %vm98, %v79, 0
  %v262 = vsel %vm98, %v80, 0
  %v265 = vsel %vm98, %v81, 0
  %v268 = vsel %vm98, %v82, 0
  %v271 = vsel %vm98, %v83, 0
  %v274 = vsel %vm98, %v84, 0
  %v277 = vsel %vm98, %v85, 0
  %v280 = vsel %vm98, %v86, 0
  %v283 = vsel %vm98, %v87, 0
  %v286 = vsel %vm98, %v88, 0
  %v289 = vsel %vm98, %v89, 0
  %vm291 = vcmask 1041408
  %v293 = vsel %vm291, %v90, 0
  %295 = vmatprep.subr.mxu0 0.0
  %296 = vmatpush1.msra.mxu0 0.0
  %297 = vmatprep.subr.mxu0 0.0
  %298 = vmatpush1.msra.mxu0 0.0
  %299 = vmatprep.subr.mxu0 0.0
  %300 = vmatpush1.msra.mxu0 0.0
  %301 = vmatprep.subr.mxu0 0.0
  %302 = vmatpush1.msra.mxu0 0.0
  %303 = vmatprep.subr.mxu0 0.0
  %304 = vmatpush1.msra.mxu0 0.0
  %305 = vmatprep.subr.mxu0 0.0
  %306 = vmatpush1.msra.mxu0 0.0
  %307 = vmatprep.subr.mxu0 0.0
  %308 = vmatpush1.msra.mxu0 0.0
  %309 = vmatprep.subr.mxu0 0.0
  %310 = vmatpush1.msra.mxu0 0.0
  %311 = vmatprep.subr.mxu0 0.0
  %312 = vmatpush1.msra.mxu0 0.0
  %313 = vmatprep.subr.mxu0 0.0
  %314 = vmatpush1.msra.mxu0 0.0
  %315 = vmatprep.subr.mxu0 0.0
  %316 = vmatpush1.msra.mxu0 0.0
  %317 = vmatprep.subr.mxu0 0.0
  %318 = vmatpush1.msra.mxu0 0.0
  %319 = vmatprep.subr.mxu0 0.0
  %320 = vmatpush1.msra.mxu0 0.0
  %321 = vmatprep.subr.mxu0 0.0
  %322 = vmatpush1.msra.mxu0 0.0
  %323 = vmatprep.subr.mxu0 0.0
  %324 = vmatpush1.msra.mxu0 0.0
  %325 = vmatprep.subr.mxu0 0.0
  %326 = vmatpush1.msra.mxu0 %v293
  %327 = vmatprep.subr.mxu0 0.0
  %328 = vmatpush2.msra.mxu0 0.0
  %329 = vmatprep.subr.mxu0 0.0
  %330 = vmatpush2.msra.mxu0 0.0
  %331 = vmatprep.subr.mxu0 0.0
  %332 = vmatpush2.msra.mxu0 0.0
  %333 = vmatprep.subr.mxu0 0.0
  %334 = vmatpush2.msra.mxu0 0.0
  %335 = vmatprep.subr.mxu0 0.0
  %336 = vmatpush2.msra.mxu0 0.0
  %337 = vmatprep.subr.mxu0 0.0
  %338 = vmatpush2.msra.mxu0 0.0
  %339 = vmatprep.subr.mxu0 0.0
  %340 = vmatpush2.msra.mxu0 0.0
  %341 = vmatprep.subr.mxu0 0.0
  %342 = vmatpush2.msra.mxu0 0.0
  %343 = vmatprep.subr.mxu0 0.0
  %344 = vmatpush2.msra.mxu0 0.0
  %345 = vmatprep.subr.mxu0 0.0
  %346 = vmatpush2.msra.mxu0 0.0
  %347 = vmatprep.subr.mxu0 0.0
  %348 = vmatpush2.msra.mxu0 0.0
  %349 = vmatprep.subr.mxu0 0.0
  %350 = vmatpush2.msra.mxu0 0.0
  %351 = vmatprep.subr.mxu0 0.0
  %352 = vmatpush2.msra.mxu0 0.0
  %353 = vmatprep.subr.mxu0 0.0
  %354 = vmatpush2.msra.mxu0 0.0
  %355 = vmatprep.subr.mxu0 0.0
  %356 = vmatpush2.msra.mxu0 0.0
  %357 = vmatprep.subr.mxu0 0.0
  %358 = vmatpush2.msra.mxu0 0.0
  %359 = vmatprep.mubr.f32.mxu0 0.0
  %360 = vmatmul.mubr.f32.gmra.mxu0 %v100
  %v361 = vpop.f32.mrf.mxu0
  %v362 = vadd.f32 %v96, %v361
  %v363 = vpop.f32.mrf.mxu0
  %364 = vmatprep.mubr.f32.mxu0 0.0
  %365 = vmatmul.mubr.f32.gmra.mxu0 %v103
  %v366 = vpop.f32.mrf.mxu0
  %v367 = vadd.f32 %v96, %v366
  %v368 = vpop.f32.mrf.mxu0
  %369 = vmatprep.mubr.f32.mxu0 0.0
  %370 = vmatmul.mubr.f32.gmra.mxu0 %v106
  %v371 = vpop.f32.mrf.mxu0
  %v372 = vadd.f32 %v96, %v371
  %v373 = vpop.f32.mrf.mxu0
  %374 = vmatprep.mubr.f32.mxu0 0.0
  %375 = vmatmul.mubr.f32.gmra.mxu0 %v109
  %v376 = vpop.f32.mrf.mxu0
  %v377 = vadd.f32 %v96, %v376
  %v378 = vpop.f32.mrf.mxu0
  %379 = vmatprep.mubr.f32.mxu0 0.0
  %380 = vmatmul.mubr.f32.gmra.mxu0 %v112
  %v381 = vpop.f32.mrf.mxu0
  %v382 = vadd.f32 %v96, %v381
  %v383 = vpop.f32.mrf.mxu0
  %384 = vmatprep.mubr.f32.mxu0 0.0
  %385 = vmatmul.mubr.f32.gmra.mxu0 %v115
  %v386 = vpop.f32.mrf.mxu0
  %v387 = vadd.f32 %v96, %v386
  %v388 = vpop.f32.mrf.mxu0
  %389 = vmatprep.mubr.f32.mxu0 0.0
  %390 = vmatmul.mubr.f32.gmra.mxu0 %v118
  %v391 = vpop.f32.mrf.mxu0
  %v392 = vadd.f32 %v96, %v391
  %v393 = vpop.f32.mrf.mxu0
  %394 = vmatprep.mubr.f32.mxu0 0.0
  %395 = vmatmul.mubr.f32.gmra.mxu0 %v121
  %v396 = vpop.f32.mrf.mxu0
  %v397 = vadd.f32 %v96, %v396
  %v398 = vpop.f32.mrf.mxu0
  %399 = vmatprep.mubr.f32.mxu0 0.0
  %400 = vmatmul.mubr.f32.gmra.mxu0 %v124
  %v401 = vpop.f32.mrf.mxu0
  %v402 = vadd.f32 %v96, %v401
  %v403 = vpop.f32.mrf.mxu0
  %404 = vmatprep.mubr.f32.mxu0 0.0
  %405 = vmatmul.mubr.f32.gmra.mxu0 %v127
  %v406 = vpop.f32.mrf.mxu0
  %v407 = vadd.f32 %v96, %v406
  %v408 = vpop.f32.mrf.mxu0
  %409 = vmatprep.mubr.f32.mxu0 0.0
  %410 = vmatmul.mubr.f32.gmra.mxu0 %v130
  %v411 = vpop.f32.mrf.mxu0
  %v412 = vadd.f32 %v96, %v411
  %v413 = vpop.f32.mrf.mxu0
  %414 = vmatprep.mubr.f32.mxu0 0.0
  %415 = vmatmul.mubr.f32.gmra.mxu0 %v133
  %v416 = vpop.f32.mrf.mxu0
  %v417 = vadd.f32 %v96, %v416
  %v418 = vpop.f32.mrf.mxu0
  %419 = vmatprep.mubr.f32.mxu0 0.0
  %420 = vmatmul.mubr.f32.gmra.mxu0 %v136
  %v421 = vpop.f32.mrf.mxu0
  %v422 = vadd.f32 %v96, %v421
  %v423 = vpop.f32.mrf.mxu0
  %424 = vmatprep.mubr.f32.mxu0 0.0
  %425 = vmatmul.mubr.f32.gmra.mxu0 %v139
  %v426 = vpop.f32.mrf.mxu0
  %v427 = vadd.f32 %v96, %v426
  %v428 = vpop.f32.mrf.mxu0
  %429 = vmatprep.mubr.f32.mxu0 0.0
  %430 = vmatmul.mubr.f32.gmra.mxu0 %v142
  %v431 = vpop.f32.mrf.mxu0
  %v432 = vadd.f32 %v96, %v431
  %v433 = vpop.f32.mrf.mxu0
  %434 = vmatprep.mubr.f32.mxu0 0.0
  %435 = vmatmul.mubr.f32.gmra.mxu0 %v145
  %v436 = vpop.f32.mrf.mxu0
  %v437 = vadd.f32 %v96, %v436
  %v438 = vpop.f32.mrf.mxu0
  %439 = vmatprep.mubr.f32.mxu0 0.0
  %440 = vmatmul.mubr.f32.gmra.mxu0 %v148
  %v441 = vpop.f32.mrf.mxu0
  %v442 = vadd.f32 %v96, %v441
  %v443 = vpop.f32.mrf.mxu0
  %444 = vmatprep.mubr.f32.mxu0 0.0
  %445 = vmatmul.mubr.f32.gmra.mxu0 %v151
  %v446 = vpop.f32.mrf.mxu0
  %v447 = vadd.f32 %v96, %v446
  %v448 = vpop.f32.mrf.mxu0
  %449 = vmatprep.mubr.f32.mxu0 0.0
  %450 = vmatmul.mubr.f32.gmra.mxu0 %v154
  %v451 = vpop.f32.mrf.mxu0
  %v452 = vadd.f32 %v96, %v451
  %v453 = vpop.f32.mrf.mxu0
  %454 = vmatprep.mubr.f32.mxu0 0.0
  %455 = vmatmul.mubr.f32.gmra.mxu0 %v157
  %v456 = vpop.f32.mrf.mxu0
  %v457 = vadd.f32 %v96, %v456
  %v458 = vpop.f32.mrf.mxu0
  %459 = vmatprep.mubr.f32.mxu0 0.0
  %460 = vmatmul.mubr.f32.gmra.mxu0 %v160
  %v461 = vpop.f32.mrf.mxu0
  %v462 = vadd.f32 %v96, %v461
  %v463 = vpop.f32.mrf.mxu0
  %464 = vmatprep.mubr.f32.mxu0 0.0
  %465 = vmatmul.mubr.f32.gmra.mxu0 %v163
  %v466 = vpop.f32.mrf.mxu0
  %v467 = vadd.f32 %v96, %v466
  %v468 = vpop.f32.mrf.mxu0
  %469 = vmatprep.mubr.f32.mxu0 0.0
  %470 = vmatmul.mubr.f32.gmra.mxu0 %v166
  %v471 = vpop.f32.mrf.mxu0
  %v472 = vadd.f32 %v96, %v471
  %v473 = vpop.f32.mrf.mxu0
  %474 = vmatprep.mubr.f32.mxu0 0.0
  %475 = vmatmul.mubr.f32.gmra.mxu0 %v169
  %v476 = vpop.f32.mrf.mxu0
  %v477 = vadd.f32 %v96, %v476
  %v478 = vpop.f32.mrf.mxu0
  %479 = vmatprep.mubr.f32.mxu0 0.0
  %480 = vmatmul.mubr.f32.gmra.mxu0 %v172
  %v481 = vpop.f32.mrf.mxu0
  %v482 = vadd.f32 %v96, %v481
  %v483 = vpop.f32.mrf.mxu0
  %484 = vmatprep.mubr.f32.mxu0 0.0
  %485 = vmatmul.mubr.f32.gmra.mxu0 %v175
  %v486 = vpop.f32.mrf.mxu0
  %v487 = vadd.f32 %v96, %v486
  %v488 = vpop.f32.mrf.mxu0
  %489 = vmatprep.mubr.f32.mxu0 0.0
  %490 = vmatmul.mubr.f32.gmra.mxu0 %v178
  %v491 = vpop.f32.mrf.mxu0
  %v492 = vadd.f32 %v96, %v491
  %v493 = vpop.f32.mrf.mxu0
  %494 = vmatprep.mubr.f32.mxu0 0.0
  %495 = vmatmul.mubr.f32.gmra.mxu0 %v181
  %v496 = vpop.f32.mrf.mxu0
  %v497 = vadd.f32 %v96, %v496
  %v498 = vpop.f32.mrf.mxu0
  %499 = vmatprep.mubr.f32.mxu0 0.0
  %500 = vmatmul.mubr.f32.gmra.mxu0 %v184
  %v501 = vpop.f32.mrf.mxu0
  %v502 = vadd.f32 %v96, %v501
  %v503 = vpop.f32.mrf.mxu0
  %504 = vmatprep.mubr.f32.mxu0 0.0
  %505 = vmatmul.mubr.f32.gmra.mxu0 %v187
  %v506 = vpop.f32.mrf.mxu0
  %v507 = vadd.f32 %v96, %v506
  %v508 = vpop.f32.mrf.mxu0
  %509 = vmatprep.mubr.f32.mxu0 0.0
  %510 = vmatmul.mubr.f32.gmra.mxu0 %v190
  %v511 = vpop.f32.mrf.mxu0
  %v512 = vadd.f32 %v96, %v511
  %v513 = vpop.f32.mrf.mxu0
  %514 = vmatprep.mubr.f32.mxu0 0.0
  %515 = vmatmul.mubr.f32.gmra.mxu0 %v193
  %v516 = vpop.f32.mrf.mxu0
  %v517 = vadd.f32 %v96, %v516
  %v518 = vpop.f32.mrf.mxu0
  %519 = vmatprep.mubr.f32.mxu0 0.0
  %520 = vmatmul.mubr.f32.gmra.mxu0 %v196
  %v521 = vpop.f32.mrf.mxu0
  %v522 = vadd.f32 %v96, %v521
  %v523 = vpop.f32.mrf.mxu0
  %524 = vmatprep.mubr.f32.mxu0 0.0
  %525 = vmatmul.mubr.f32.gmra.mxu0 %v199
  %v526 = vpop.f32.mrf.mxu0
  %v527 = vadd.f32 %v96, %v526
  %v528 = vpop.f32.mrf.mxu0
  %529 = vmatprep.mubr.f32.mxu0 0.0
  %530 = vmatmul.mubr.f32.gmra.mxu0 %v202
  %v531 = vpop.f32.mrf.mxu0
  %v532 = vadd.f32 %v96, %v531
  %v533 = vpop.f32.mrf.mxu0
  %534 = vmatprep.mubr.f32.mxu0 0.0
  %535 = vmatmul.mubr.f32.gmra.mxu0 %v205
  %v536 = vpop.f32.mrf.mxu0
  %v537 = vadd.f32 %v96, %v536
  %v538 = vpop.f32.mrf.mxu0
  %539 = vmatprep.mubr.f32.mxu0 0.0
  %540 = vmatmul.mubr.f32.gmra.mxu0 %v208
  %v541 = vpop.f32.mrf.mxu0
  %v542 = vadd.f32 %v96, %v541
  %v543 = vpop.f32.mrf.mxu0
  %544 = vmatprep.mubr.f32.mxu0 0.0
  %545 = vmatmul.mubr.f32.gmra.mxu0 %v211
  %v546 = vpop.f32.mrf.mxu0
  %v547 = vadd.f32 %v96, %v546
  %v548 = vpop.f32.mrf.mxu0
  %549 = vmatprep.mubr.f32.mxu0 0.0
  %550 = vmatmul.mubr.f32.gmra.mxu0 %v214
  %v551 = vpop.f32.mrf.mxu0
  %v552 = vadd.f32 %v96, %v551
  %v553 = vpop.f32.mrf.mxu0
  %554 = vmatprep.mubr.f32.mxu0 0.0
  %555 = vmatmul.mubr.f32.gmra.mxu0 %v217
  %v556 = vpop.f32.mrf.mxu0
  %v557 = vadd.f32 %v96, %v556
  %v558 = vpop.f32.mrf.mxu0
  %559 = vmatprep.mubr.f32.mxu0 0.0
  %560 = vmatmul.mubr.f32.gmra.mxu0 %v220
  %v561 = vpop.f32.mrf.mxu0
  %v562 = vadd.f32 %v96, %v561
  %v563 = vpop.f32.mrf.mxu0
  %564 = vmatprep.mubr.f32.mxu0 0.0
  %565 = vmatmul.mubr.f32.gmra.mxu0 %v223
  %v566 = vpop.f32.mrf.mxu0
  %v567 = vadd.f32 %v96, %v566
  %v568 = vpop.f32.mrf.mxu0
  %569 = vmatprep.mubr.f32.mxu0 0.0
  %570 = vmatmul.mubr.f32.gmra.mxu0 %v226
  %v571 = vpop.f32.mrf.mxu0
  %v572 = vadd.f32 %v96, %v571
  %v573 = vpop.f32.mrf.mxu0
  %574 = vmatprep.mubr.f32.mxu0 0.0
  %575 = vmatmul.mubr.f32.gmra.mxu0 %v229
  %v576 = vpop.f32.mrf.mxu0
  %v577 = vadd.f32 %v96, %v576
  %v578 = vpop.f32.mrf.mxu0
  %579 = vmatprep.mubr.f32.mxu0 0.0
  %580 = vmatmul.mubr.f32.gmra.mxu0 %v232
  %v581 = vpop.f32.mrf.mxu0
  %v582 = vadd.f32 %v96, %v581
  %v583 = vpop.f32.mrf.mxu0
  %584 = vmatprep.mubr.f32.mxu0 0.0
  %585 = vmatmul.mubr.f32.gmra.mxu0 %v235
  %v586 = vpop.f32.mrf.mxu0
  %v587 = vadd.f32 %v96, %v586
  %v588 = vpop.f32.mrf.mxu0
  %589 = vmatprep.mubr.f32.mxu0 0.0
  %590 = vmatmul.mubr.f32.gmra.mxu0 %v238
  %v591 = vpop.f32.mrf.mxu0
  %v592 = vadd.f32 %v96, %v591
  %v593 = vpop.f32.mrf.mxu0
  %594 = vmatprep.mubr.f32.mxu0 0.0
  %595 = vmatmul.mubr.f32.gmra.mxu0 %v241
  %v596 = vpop.f32.mrf.mxu0
  %v597 = vadd.f32 %v96, %v596
  %v598 = vpop.f32.mrf.mxu0
  %599 = vmatprep.mubr.f32.mxu0 0.0
  %600 = vmatmul.mubr.f32.gmra.mxu0 %v244
  %v601 = vpop.f32.mrf.mxu0
  %v602 = vadd.f32 %v96, %v601
  %v603 = vpop.f32.mrf.mxu0
  %604 = vmatprep.mubr.f32.mxu0 0.0
  %605 = vmatmul.mubr.f32.gmra.mxu0 %v247
  %v606 = vpop.f32.mrf.mxu0
  %v607 = vadd.f32 %v96, %v606
  %v608 = vpop.f32.mrf.mxu0
  %609 = vmatprep.mubr.f32.mxu0 0.0
  %610 = vmatmul.mubr.f32.gmra.mxu0 %v250
  %v611 = vpop.f32.mrf.mxu0
  %v612 = vadd.f32 %v96, %v611
  %v613 = vpop.f32.mrf.mxu0
  %614 = vmatprep.mubr.f32.mxu0 0.0
  %615 = vmatmul.mubr.f32.gmra.mxu0 %v253
  %v616 = vpop.f32.mrf.mxu0
  %v617 = vadd.f32 %v96, %v616
  %v618 = vpop.f32.mrf.mxu0
  %619 = vmatprep.mubr.f32.mxu0 0.0
  %620 = vmatmul.mubr.f32.gmra.mxu0 %v256
  %v621 = vpop.f32.mrf.mxu0
  %v622 = vadd.f32 %v96, %v621
  %v623 = vpop.f32.mrf.mxu0
  %624 = vmatprep.mubr.f32.mxu0 0.0
  %625 = vmatmul.mubr.f32.gmra.mxu0 %v259
  %v626 = vpop.f32.mrf.mxu0
  %v627 = vadd.f32 %v96, %v626
  %v628 = vpop.f32.mrf.mxu0
  %629 = vmatprep.mubr.f32.mxu0 0.0
  %630 = vmatmul.mubr.f32.gmra.mxu0 %v262
  %v631 = vpop.f32.mrf.mxu0
  %v632 = vadd.f32 %v96, %v631
  %v633 = vpop.f32.mrf.mxu0
  %634 = vmatprep.mubr.f32.mxu0 0.0
  %635 = vmatmul.mubr.f32.gmra.mxu0 %v265
  %v636 = vpop.f32.mrf.mxu0
  %v637 = vadd.f32 %v96, %v636
  %v638 = vpop.f32.mrf.mxu0
  %639 = vmatprep.mubr.f32.mxu0 0.0
  %640 = vmatmul.mubr.f32.gmra.mxu0 %v268
  %v641 = vpop.f32.mrf.mxu0
  %v642 = vadd.f32 %v96, %v641
  %v643 = vpop.f32.mrf.mxu0
  %644 = vmatprep.mubr.f32.mxu0 0.0
  %645 = vmatmul.mubr.f32.gmra.mxu0 %v271
  %v646 = vpop.f32.mrf.mxu0
  %v647 = vadd.f32 %v96, %v646
  %v648 = vpop.f32.mrf.mxu0
  %649 = vmatprep.mubr.f32.mxu0 0.0
  %650 = vmatmul.mubr.f32.gmra.mxu0 %v274
  %v651 = vpop.f32.mrf.mxu0
  %v652 = vadd.f32 %v96, %v651
  %v653 = vpop.f32.mrf.mxu0
  %654 = vmatprep.mubr.f32.mxu0 0.0
  %655 = vmatmul.mubr.f32.gmra.mxu0 %v277
  %v656 = vpop.f32.mrf.mxu0
  %v657 = vadd.f32 %v96, %v656
  %v658 = vpop.f32.mrf.mxu0
  %659 = vmatprep.mubr.f32.mxu0 0.0
  %660 = vmatmul.mubr.f32.gmra.mxu0 %v280
  %v661 = vpop.f32.mrf.mxu0
  %v662 = vadd.f32 %v96, %v661
  %v663 = vpop.f32.mrf.mxu0
  %664 = vmatprep.mubr.f32.mxu0 0.0
  %665 = vmatmul.mubr.f32.gmra.mxu0 %v283
  %v666 = vpop.f32.mrf.mxu0
  %v667 = vadd.f32 %v96, %v666
  %v668 = vpop.f32.mrf.mxu0
  %669 = vmatprep.mubr.f32.mxu0 0.0
  %670 = vmatmul.mubr.f32.gmra.mxu0 %v286
  %v671 = vpop.f32.mrf.mxu0
  %v672 = vadd.f32 %v96, %v671
  %v673 = vpop.f32.mrf.mxu0
  %674 = vmatprep.mubr.f32.mxu0 0.0
  %675 = vmatmul.mubr.f32.gmra.mxu0 %v289
  %v676 = vpop.f32.mrf.mxu0
  %v677 = vadd.f32 %v96, %v676
  %v678 = vpop.f32.mrf.mxu0
  %679 = vdwg.mxu0
  %v680 = vld [vmem:[%s1] sm:$0xff]
  %v681 = vld [vmem:[%s1 + $0x8] sm:$0xff]
  %v682 = vld [vmem:[%s1 + $0x10] sm:$0xff]
  %v683 = vld [vmem:[%s1 + $0x18] sm:$0xff]
  %v684 = vld [vmem:[%s1 + $0x20] sm:$0xff]
  %v685 = vld [vmem:[%s1 + $0x28] sm:$0xff]
  %v686 = vld [vmem:[%s1 + $0x30] sm:$0xff]
  %v687 = vld [vmem:[%s1 + $0x38] sm:$0xff]
  %v688 = vld [vmem:[%s1 + $0x40] sm:$0xff]
  %v689 = vld [vmem:[%s1 + $0x48] sm:$0xff]
  %v690 = vld [vmem:[%s1 + $0x50] sm:$0xff]
  %v691 = vld [vmem:[%s1 + $0x58] sm:$0xff]
  %v692 = vld [vmem:[%s1 + $0x60] sm:$0xff]
  %v693 = vld [vmem:[%s1 + $0x68] sm:$0xff]
  %v694 = vld [vmem:[%s1 + $0x70] sm:$0xff]
  %v695 = vld [vmem:[%s1 + $0x78] sm:$0xff]
  %v696 = vld [vmem:[%s1 + $0x80] sm:$0xff]
  %v697 = vld [vmem:[%s1 + $0x88] sm:$0xff]
  %v698 = vld [vmem:[%s1 + $0x90] sm:$0xff]
  %v699 = vld [vmem:[%s1 + $0x98] sm:$0xff]
  %v700 = vld [vmem:[%s1 + $0xa0] sm:$0xff]
  %v701 = vld [vmem:[%s1 + $0xa8] sm:$0xff]
  %v702 = vld [vmem:[%s1 + $0xb0] sm:$0xff]
  %v703 = vld [vmem:[%s1 + $0xb8] sm:$0xff]
  %v704 = vld [vmem:[%s1 + $0xc0] sm:$0xff]
  %v705 = vld [vmem:[%s1 + $0xc8] sm:$0xff]
  %v706 = vld [vmem:[%s1 + $0xd0] sm:$0xff]
  %v707 = vld [vmem:[%s1 + $0xd8] sm:$0xff]
  %v708 = vld [vmem:[%s1 + $0xe0] sm:$0xff]
  %v709 = vld [vmem:[%s1 + $0xe8] sm:$0xff]
  %v710 = vld [vmem:[%s1 + $0xf0] sm:$0xff]
  %v711 = vld [vmem:[%s1 + $0xf8] sm:$0xff]
  %v712 = vld [vmem:[%s1 + $0x100] sm:$0xff]
  %v713 = vld [vmem:[%s1 + $0x108] sm:$0xff]
  %v714 = vld [vmem:[%s1 + $0x110] sm:$0xff]
  %v715 = vld [vmem:[%s1 + $0x118] sm:$0xff]
  %v716 = vld [vmem:[%s1 + $0x120] sm:$0xff]
  %v717 = vld [vmem:[%s1 + $0x128] sm:$0xff]
  %v718 = vld [vmem:[%s1 + $0x130] sm:$0xff]
  %v719 = vld [vmem:[%s1 + $0x138] sm:$0xff]
  %v720 = vld [vmem:[%s1 + $0x140] sm:$0xff]
  %v721 = vld [vmem:[%s1 + $0x148] sm:$0xff]
  %v722 = vld [vmem:[%s1 + $0x150] sm:$0xff]
  %v723 = vld [vmem:[%s1 + $0x158] sm:$0xff]
  %v724 = vld [vmem:[%s1 + $0x160] sm:$0xff]
  %v725 = vld [vmem:[%s1 + $0x168] sm:$0xff]
  %v726 = vld [vmem:[%s1 + $0x170] sm:$0xff]
  %v727 = vld [vmem:[%s1 + $0x178] sm:$0xff]
  %v728 = vld [vmem:[%s1 + $0x180] sm:$0xff]
  %v729 = vld [vmem:[%s1 + $0x188] sm:$0xff]
  %v730 = vld [vmem:[%s1 + $0x190] sm:$0xff]
  %v731 = vld [vmem:[%s1 + $0x198] sm:$0xff]
  %v732 = vld [vmem:[%s1 + $0x1a0] sm:$0xff]
  %v733 = vld [vmem:[%s1 + $0x1a8] sm:$0xff]
  %v734 = vld [vmem:[%s1 + $0x1b0] sm:$0xff]
  %v735 = vld [vmem:[%s1 + $0x1b8] sm:$0xff]
  %v736 = vld [vmem:[%s1 + $0x1c0] sm:$0xff]
  %v737 = vld [vmem:[%s1 + $0x1c8] sm:$0xff]
  %v738 = vld [vmem:[%s1 + $0x1d0] sm:$0xff]
  %v739 = vld [vmem:[%s1 + $0x1d8] sm:$0xff]
  %v740 = vld [vmem:[%s1 + $0x1e0] sm:$0xff]
  %v741 = vld [vmem:[%s1 + $0x1e8] sm:$0xff]
  %v742 = vld [vmem:[%s1 + $0x1f0] sm:$0xff]
  %v743 = vld [vmem:[%s1 + $0x1f8] sm:$0xff]
  %v744 = vld [vmem:[%s5] sm:$0x3]
  %v745 = vld [vmem:[%s6] sm:$0x1]
  %v747 = vlaneseq
  %v748 = vshrl.u32 %v747, 7
  %v749 = vsub.s32 0, %v748
  %v750 = vrot.slane %v745, %v749
  %v753 = vsel %vm98, %v680, 0
  %v756 = vsel %vm98, %v681, 0
  %v759 = vsel %vm98, %v682, 0
  %v762 = vsel %vm98, %v683, 0
  %v765 = vsel %vm98, %v684, 0
  %v768 = vsel %vm98, %v685, 0
  %v771 = vsel %vm98, %v686, 0
  %v774 = vsel %vm98, %v687, 0
  %v777 = vsel %vm98, %v688, 0
  %v780 = vsel %vm98, %v689, 0
  %v783 = vsel %vm98, %v690, 0
  %v786 = vsel %vm98, %v691, 0
  %v789 = vsel %vm98, %v692, 0
  %v792 = vsel %vm98, %v693, 0
  %v795 = vsel %vm98, %v694, 0
  %v798 = vsel %vm98, %v695, 0
  %v801 = vsel %vm98, %v696, 0
  %v804 = vsel %vm98, %v697, 0
  %v807 = vsel %vm98, %v698, 0
  %v810 = vsel %vm98, %v699, 0
  %v813 = vsel %vm98, %v700, 0
  %v816 = vsel %vm98, %v701, 0
  %v819 = vsel %vm98, %v702, 0
  %v822 = vsel %vm98, %v703, 0
  %v825 = vsel %vm98, %v704, 0
  %v828 = vsel %vm98, %v705, 0
  %v831 = vsel %vm98, %v706, 0
  %v834 = vsel %vm98, %v707, 0
  %v837 = vsel %vm98, %v708, 0
  %v840 = vsel %vm98, %v709, 0
  %v843 = vsel %vm98, %v710, 0
  %v846 = vsel %vm98, %v711, 0
  %v849 = vsel %vm98, %v712, 0
  %v852 = vsel %vm98, %v713, 0
  %v855 = vsel %vm98, %v714, 0
  %v858 = vsel %vm98, %v715, 0
  %v861 = vsel %vm98, %v716, 0
  %v864 = vsel %vm98, %v717, 0
  %v867 = vsel %vm98, %v718, 0
  %v870 = vsel %vm98, %v719, 0
  %v873 = vsel %vm98, %v720, 0
  %v876 = vsel %vm98, %v721, 0
  %v879 = vsel %vm98, %v722, 0
  %v882 = vsel %vm98, %v723, 0
  %v885 = vsel %vm98, %v724, 0
  %v888 = vsel %vm98, %v725, 0
  %v891 = vsel %vm98, %v726, 0
  %v894 = vsel %vm98, %v727, 0
  %v897 = vsel %vm98, %v728, 0
  %v900 = vsel %vm98, %v729, 0
  %v903 = vsel %vm98, %v730, 0
  %v906 = vsel %vm98, %v731, 0
  %v909 = vsel %vm98, %v732, 0
  %v912 = vsel %vm98, %v733, 0
  %v915 = vsel %vm98, %v734, 0
  %v918 = vsel %vm98, %v735, 0
  %v921 = vsel %vm98, %v736, 0
  %v924 = vsel %vm98, %v737, 0
  %v927 = vsel %vm98, %v738, 0
  %v930 = vsel %vm98, %v739, 0
  %v933 = vsel %vm98, %v740, 0
  %v936 = vsel %vm98, %v741, 0
  %v939 = vsel %vm98, %v742, 0
  %v942 = vsel %vm98, %v743, 0
  %v945 = vsel %vm291, %v744, 0
  %947 = vmatprep.subr.mxu0 0.0
  %948 = vmatpush1.msra.mxu0 0.0
  %949 = vmatprep.subr.mxu0 0.0
  %950 = vmatpush1.msra.mxu0 0.0
  %951 = vmatprep.subr.mxu0 0.0
  %952 = vmatpush1.msra.mxu0 0.0
  %953 = vmatprep.subr.mxu0 0.0
  %954 = vmatpush1.msra.mxu0 0.0
  %955 = vmatprep.subr.mxu0 0.0
  %956 = vmatpush1.msra.mxu0 0.0
  %957 = vmatprep.subr.mxu0 0.0
  %958 = vmatpush1.msra.mxu0 0.0
  %959 = vmatprep.subr.mxu0 0.0
  %960 = vmatpush1.msra.mxu0 0.0
  %961 = vmatprep.subr.mxu0 0.0
  %962 = vmatpush1.msra.mxu0 0.0
  %963 = vmatprep.subr.mxu0 0.0
  %964 = vmatpush1.msra.mxu0 0.0
  %965 = vmatprep.subr.mxu0 0.0
  %966 = vmatpush1.msra.mxu0 0.0
  %967 = vmatprep.subr.mxu0 0.0
  %968 = vmatpush1.msra.mxu0 0.0
  %969 = vmatprep.subr.mxu0 0.0
  %970 = vmatpush1.msra.mxu0 0.0
  %971 = vmatprep.subr.mxu0 0.0
  %972 = vmatpush1.msra.mxu0 0.0
  %973 = vmatprep.subr.mxu0 0.0
  %974 = vmatpush1.msra.mxu0 0.0
  %975 = vmatprep.subr.mxu0 0.0
  %976 = vmatpush1.msra.mxu0 0.0
  %977 = vmatprep.subr.mxu0 0.0
  %978 = vmatpush1.msra.mxu0 %v945
  %979 = vmatprep.subr.mxu0 0.0
  %980 = vmatpush2.msra.mxu0 0.0
  %981 = vmatprep.subr.mxu0 0.0
  %982 = vmatpush2.msra.mxu0 0.0
  %983 = vmatprep.subr.mxu0 0.0
  %984 = vmatpush2.msra.mxu0 0.0
  %985 = vmatprep.subr.mxu0 0.0
  %986 = vmatpush2.msra.mxu0 0.0
  %987 = vmatprep.subr.mxu0 0.0
  %988 = vmatpush2.msra.mxu0 0.0
  %989 = vmatprep.subr.mxu0 0.0
  %990 = vmatpush2.msra.mxu0 0.0
  %991 = vmatprep.subr.mxu0 0.0
  %992 = vmatpush2.msra.mxu0 0.0
  %993 = vmatprep.subr.mxu0 0.0
  %994 = vmatpush2.msra.mxu0 0.0
  %995 = vmatprep.subr.mxu0 0.0
  %996 = vmatpush2.msra.mxu0 0.0
  %997 = vmatprep.subr.mxu0 0.0
  %998 = vmatpush2.msra.mxu0 0.0
  %999 = vmatprep.subr.mxu0 0.0
  %1000 = vmatpush2.msra.mxu0 0.0
  %1001 = vmatprep.subr.mxu0 0.0
  %1002 = vmatpush2.msra.mxu0 0.0
  %1003 = vmatprep.subr.mxu0 0.0
  %1004 = vmatpush2.msra.mxu0 0.0
  %1005 = vmatprep.subr.mxu0 0.0
  %1006 = vmatpush2.msra.mxu0 0.0
  %1007 = vmatprep.subr.mxu0 0.0
  %1008 = vmatpush2.msra.mxu0 0.0
  %1009 = vmatprep.subr.mxu0 0.0
  %1010 = vmatpush2.msra.mxu0 0.0
  %1011 = vmatprep.mubr.f32.mxu0 0.0
  %1012 = vmatmul.mubr.f32.gmra.mxu0 %v753
  %v1013 = vpop.f32.mrf.mxu0
  %v1014 = vadd.f32 %v750, %v1013
  %v1015 = vpop.f32.mrf.mxu0
  %1016 = vmatprep.mubr.f32.mxu0 0.0
  %1017 = vmatmul.mubr.f32.gmra.mxu0 %v756
  %v1018 = vpop.f32.mrf.mxu0
  %v1019 = vadd.f32 %v750, %v1018
  %v1020 = vpop.f32.mrf.mxu0
  %1021 = vmatprep.mubr.f32.mxu0 0.0
  %1022 = vmatmul.mubr.f32.gmra.mxu0 %v759
  %v1023 = vpop.f32.mrf.mxu0
  %v1024 = vadd.f32 %v750, %v1023
  %v1025 = vpop.f32.mrf.mxu0
  %1026 = vmatprep.mubr.f32.mxu0 0.0
  %1027 = vmatmul.mubr.f32.gmra.mxu0 %v762
  %v1028 = vpop.f32.mrf.mxu0
  %v1029 = vadd.f32 %v750, %v1028
  %v1030 = vpop.f32.mrf.mxu0
  %1031 = vmatprep.mubr.f32.mxu0 0.0
  %1032 = vmatmul.mubr.f32.gmra.mxu0 %v765
  %v1033 = vpop.f32.mrf.mxu0
  %v1034 = vadd.f32 %v750, %v1033
  %v1035 = vpop.f32.mrf.mxu0
  %1036 = vmatprep.mubr.f32.mxu0 0.0
  %1037 = vmatmul.mubr.f32.gmra.mxu0 %v768
  %v1038 = vpop.f32.mrf.mxu0
  %v1039 = vadd.f32 %v750, %v1038
  %v1040 = vpop.f32.mrf.mxu0
  %1041 = vmatprep.mubr.f32.mxu0 0.0
  %1042 = vmatmul.mubr.f32.gmra.mxu0 %v771
  %v1043 = vpop.f32.mrf.mxu0
  %v1044 = vadd.f32 %v750, %v1043
  %v1045 = vpop.f32.mrf.mxu0
  %1046 = vmatprep.mubr.f32.mxu0 0.0
  %1047 = vmatmul.mubr.f32.gmra.mxu0 %v774
  %v1048 = vpop.f32.mrf.mxu0
  %v1049 = vadd.f32 %v750, %v1048
  %v1050 = vpop.f32.mrf.mxu0
  %1051 = vmatprep.mubr.f32.mxu0 0.0
  %1052 = vmatmul.mubr.f32.gmra.mxu0 %v777
  %v1053 = vpop.f32.mrf.mxu0
  %v1054 = vadd.f32 %v750, %v1053
  %v1055 = vpop.f32.mrf.mxu0
  %1056 = vmatprep.mubr.f32.mxu0 0.0
  %1057 = vmatmul.mubr.f32.gmra.mxu0 %v780
  %v1058 = vpop.f32.mrf.mxu0
  %v1059 = vadd.f32 %v750, %v1058
  %v1060 = vpop.f32.mrf.mxu0
  %1061 = vmatprep.mubr.f32.mxu0 0.0
  %1062 = vmatmul.mubr.f32.gmra.mxu0 %v783
  %v1063 = vpop.f32.mrf.mxu0
  %v1064 = vadd.f32 %v750, %v1063
  %v1065 = vpop.f32.mrf.mxu0
  %1066 = vmatprep.mubr.f32.mxu0 0.0
  %1067 = vmatmul.mubr.f32.gmra.mxu0 %v786
  %v1068 = vpop.f32.mrf.mxu0
  %v1069 = vadd.f32 %v750, %v1068
  %v1070 = vpop.f32.mrf.mxu0
  %1071 = vmatprep.mubr.f32.mxu0 0.0
  %1072 = vmatmul.mubr.f32.gmra.mxu0 %v789
  %v1073 = vpop.f32.mrf.mxu0
  %v1074 = vadd.f32 %v750, %v1073
  %v1075 = vpop.f32.mrf.mxu0
  %1076 = vmatprep.mubr.f32.mxu0 0.0
  %1077 = vmatmul.mubr.f32.gmra.mxu0 %v792
  %v1078 = vpop.f32.mrf.mxu0
  %v1079 = vadd.f32 %v750, %v1078
  %v1080 = vpop.f32.mrf.mxu0
  %1081 = vmatprep.mubr.f32.mxu0 0.0
  %1082 = vmatmul.mubr.f32.gmra.mxu0 %v795
  %v1083 = vpop.f32.mrf.mxu0
  %v1084 = vadd.f32 %v750, %v1083
  %v1085 = vpop.f32.mrf.mxu0
  %1086 = vmatprep.mubr.f32.mxu0 0.0
  %1087 = vmatmul.mubr.f32.gmra.mxu0 %v798
  %v1088 = vpop.f32.mrf.mxu0
  %v1089 = vadd.f32 %v750, %v1088
  %v1090 = vpop.f32.mrf.mxu0
  %1091 = vmatprep.mubr.f32.mxu0 0.0
  %1092 = vmatmul.mubr.f32.gmra.mxu0 %v801
  %v1093 = vpop.f32.mrf.mxu0
  %v1094 = vadd.f32 %v750, %v1093
  %v1095 = vpop.f32.mrf.mxu0
  %1096 = vmatprep.mubr.f32.mxu0 0.0
  %1097 = vmatmul.mubr.f32.gmra.mxu0 %v804
  %v1098 = vpop.f32.mrf.mxu0
  %v1099 = vadd.f32 %v750, %v1098
  %v1100 = vpop.f32.mrf.mxu0
  %1101 = vmatprep.mubr.f32.mxu0 0.0
  %1102 = vmatmul.mubr.f32.gmra.mxu0 %v807
  %v1103 = vpop.f32.mrf.mxu0
  %v1104 = vadd.f32 %v750, %v1103
  %v1105 = vpop.f32.mrf.mxu0
  %1106 = vmatprep.mubr.f32.mxu0 0.0
  %1107 = vmatmul.mubr.f32.gmra.mxu0 %v810
  %v1108 = vpop.f32.mrf.mxu0
  %v1109 = vadd.f32 %v750, %v1108
  %v1110 = vpop.f32.mrf.mxu0
  %1111 = vmatprep.mubr.f32.mxu0 0.0
  %1112 = vmatmul.mubr.f32.gmra.mxu0 %v813
  %v1113 = vpop.f32.mrf.mxu0
  %v1114 = vadd.f32 %v750, %v1113
  %v1115 = vpop.f32.mrf.mxu0
  %1116 = vmatprep.mubr.f32.mxu0 0.0
  %1117 = vmatmul.mubr.f32.gmra.mxu0 %v816
  %v1118 = vpop.f32.mrf.mxu0
  %v1119 = vadd.f32 %v750, %v1118
  %v1120 = vpop.f32.mrf.mxu0
  %1121 = vmatprep.mubr.f32.mxu0 0.0
  %1122 = vmatmul.mubr.f32.gmra.mxu0 %v819
  %v1123 = vpop.f32.mrf.mxu0
  %v1124 = vadd.f32 %v750, %v1123
  %v1125 = vpop.f32.mrf.mxu0
  %1126 = vmatprep.mubr.f32.mxu0 0.0
  %1127 = vmatmul.mubr.f32.gmra.mxu0 %v822
  %v1128 = vpop.f32.mrf.mxu0
  %v1129 = vadd.f32 %v750, %v1128
  %v1130 = vpop.f32.mrf.mxu0
  %1131 = vmatprep.mubr.f32.mxu0 0.0
  %1132 = vmatmul.mubr.f32.gmra.mxu0 %v825
  %v1133 = vpop.f32.mrf.mxu0
  %v1134 = vadd.f32 %v750, %v1133
  %v1135 = vpop.f32.mrf.mxu0
  %1136 = vmatprep.mubr.f32.mxu0 0.0
  %1137 = vmatmul.mubr.f32.gmra.mxu0 %v828
  %v1138 = vpop.f32.mrf.mxu0
  %v1139 = vadd.f32 %v750, %v1138
  %v1140 = vpop.f32.mrf.mxu0
  %1141 = vmatprep.mubr.f32.mxu0 0.0
  %1142 = vmatmul.mubr.f32.gmra.mxu0 %v831
  %v1143 = vpop.f32.mrf.mxu0
  %v1144 = vadd.f32 %v750, %v1143
  %v1145 = vpop.f32.mrf.mxu0
  %1146 = vmatprep.mubr.f32.mxu0 0.0
  %1147 = vmatmul.mubr.f32.gmra.mxu0 %v834
  %v1148 = vpop.f32.mrf.mxu0
  %v1149 = vadd.f32 %v750, %v1148
  %v1150 = vpop.f32.mrf.mxu0
  %1151 = vmatprep.mubr.f32.mxu0 0.0
  %1152 = vmatmul.mubr.f32.gmra.mxu0 %v837
  %v1153 = vpop.f32.mrf.mxu0
  %v1154 = vadd.f32 %v750, %v1153
  %v1155 = vpop.f32.mrf.mxu0
  %1156 = vmatprep.mubr.f32.mxu0 0.0
  %1157 = vmatmul.mubr.f32.gmra.mxu0 %v840
  %v1158 = vpop.f32.mrf.mxu0
  %v1159 = vadd.f32 %v750, %v1158
  %v1160 = vpop.f32.mrf.mxu0
  %1161 = vmatprep.mubr.f32.mxu0 0.0
  %1162 = vmatmul.mubr.f32.gmra.mxu0 %v843
  %v1163 = vpop.f32.mrf.mxu0
  %v1164 = vadd.f32 %v750, %v1163
  %v1165 = vpop.f32.mrf.mxu0
  %1166 = vmatprep.mubr.f32.mxu0 0.0
  %1167 = vmatmul.mubr.f32.gmra.mxu0 %v846
  %v1168 = vpop.f32.mrf.mxu0
  %v1169 = vadd.f32 %v750, %v1168
  %v1170 = vpop.f32.mrf.mxu0
  %1171 = vmatprep.mubr.f32.mxu0 0.0
  %1172 = vmatmul.mubr.f32.gmra.mxu0 %v849
  %v1173 = vpop.f32.mrf.mxu0
  %v1174 = vadd.f32 %v750, %v1173
  %v1175 = vpop.f32.mrf.mxu0
  %1176 = vmatprep.mubr.f32.mxu0 0.0
  %1177 = vmatmul.mubr.f32.gmra.mxu0 %v852
  %v1178 = vpop.f32.mrf.mxu0
  %v1179 = vadd.f32 %v750, %v1178
  %v1180 = vpop.f32.mrf.mxu0
  %1181 = vmatprep.mubr.f32.mxu0 0.0
  %1182 = vmatmul.mubr.f32.gmra.mxu0 %v855
  %v1183 = vpop.f32.mrf.mxu0
  %v1184 = vadd.f32 %v750, %v1183
  %v1185 = vpop.f32.mrf.mxu0
  %1186 = vmatprep.mubr.f32.mxu0 0.0
  %1187 = vmatmul.mubr.f32.gmra.mxu0 %v858
  %v1188 = vpop.f32.mrf.mxu0
  %v1189 = vadd.f32 %v750, %v1188
  %v1190 = vpop.f32.mrf.mxu0
  %1191 = vmatprep.mubr.f32.mxu0 0.0
  %1192 = vmatmul.mubr.f32.gmra.mxu0 %v861
  %v1193 = vpop.f32.mrf.mxu0
  %v1194 = vadd.f32 %v750, %v1193
  %v1195 = vpop.f32.mrf.mxu0
  %1196 = vmatprep.mubr.f32.mxu0 0.0
  %1197 = vmatmul.mubr.f32.gmra.mxu0 %v864
  %v1198 = vpop.f32.mrf.mxu0
  %v1199 = vadd.f32 %v750, %v1198
  %v1200 = vpop.f32.mrf.mxu0
  %1201 = vmatprep.mubr.f32.mxu0 0.0
  %1202 = vmatmul.mubr.f32.gmra.mxu0 %v867
  %v1203 = vpop.f32.mrf.mxu0
  %v1204 = vadd.f32 %v750, %v1203
  %v1205 = vpop.f32.mrf.mxu0
  %1206 = vmatprep.mubr.f32.mxu0 0.0
  %1207 = vmatmul.mubr.f32.gmra.mxu0 %v870
  %v1208 = vpop.f32.mrf.mxu0
  %v1209 = vadd.f32 %v750, %v1208
  %v1210 = vpop.f32.mrf.mxu0
  %1211 = vmatprep.mubr.f32.mxu0 0.0
  %1212 = vmatmul.mubr.f32.gmra.mxu0 %v873
  %v1213 = vpop.f32.mrf.mxu0
  %v1214 = vadd.f32 %v750, %v1213
  %v1215 = vpop.f32.mrf.mxu0
  %1216 = vmatprep.mubr.f32.mxu0 0.0
  %1217 = vmatmul.mubr.f32.gmra.mxu0 %v876
  %v1218 = vpop.f32.mrf.mxu0
  %v1219 = vadd.f32 %v750, %v1218
  %v1220 = vpop.f32.mrf.mxu0
  %1221 = vmatprep.mubr.f32.mxu0 0.0
  %1222 = vmatmul.mubr.f32.gmra.mxu0 %v879
  %v1223 = vpop.f32.mrf.mxu0
  %v1224 = vadd.f32 %v750, %v1223
  %v1225 = vpop.f32.mrf.mxu0
  %1226 = vmatprep.mubr.f32.mxu0 0.0
  %1227 = vmatmul.mubr.f32.gmra.mxu0 %v882
  %v1228 = vpop.f32.mrf.mxu0
  %v1229 = vadd.f32 %v750, %v1228
  %v1230 = vpop.f32.mrf.mxu0
  %1231 = vmatprep.mubr.f32.mxu0 0.0
  %1232 = vmatmul.mubr.f32.gmra.mxu0 %v885
  %v1233 = vpop.f32.mrf.mxu0
  %v1234 = vadd.f32 %v750, %v1233
  %v1235 = vpop.f32.mrf.mxu0
  %1236 = vmatprep.mubr.f32.mxu0 0.0
  %1237 = vmatmul.mubr.f32.gmra.mxu0 %v888
  %v1238 = vpop.f32.mrf.mxu0
  %v1239 = vadd.f32 %v750, %v1238
  %v1240 = vpop.f32.mrf.mxu0
  %1241 = vmatprep.mubr.f32.mxu0 0.0
  %1242 = vmatmul.mubr.f32.gmra.mxu0 %v891
  %v1243 = vpop.f32.mrf.mxu0
  %v1244 = vadd.f32 %v750, %v1243
  %v1245 = vpop.f32.mrf.mxu0
  %1246 = vmatprep.mubr.f32.mxu0 0.0
  %1247 = vmatmul.mubr.f32.gmra.mxu0 %v894
  %v1248 = vpop.f32.mrf.mxu0
  %v1249 = vadd.f32 %v750, %v1248
  %v1250 = vpop.f32.mrf.mxu0
  %1251 = vmatprep.mubr.f32.mxu0 0.0
  %1252 = vmatmul.mubr.f32.gmra.mxu0 %v897
  %v1253 = vpop.f32.mrf.mxu0
  %v1254 = vadd.f32 %v750, %v1253
  %v1255 = vpop.f32.mrf.mxu0
  %1256 = vmatprep.mubr.f32.mxu0 0.0
  %1257 = vmatmul.mubr.f32.gmra.mxu0 %v900
  %v1258 = vpop.f32.mrf.mxu0
  %v1259 = vadd.f32 %v750, %v1258
  %v1260 = vpop.f32.mrf.mxu0
  %1261 = vmatprep.mubr.f32.mxu0 0.0
  %1262 = vmatmul.mubr.f32.gmra.mxu0 %v903
  %v1263 = vpop.f32.mrf.mxu0
  %v1264 = vadd.f32 %v750, %v1263
  %v1265 = vpop.f32.mrf.mxu0
  %1266 = vmatprep.mubr.f32.mxu0 0.0
  %1267 = vmatmul.mubr.f32.gmra.mxu0 %v906
  %v1268 = vpop.f32.mrf.mxu0
  %v1269 = vadd.f32 %v750, %v1268
  %v1270 = vpop.f32.mrf.mxu0
  %1271 = vmatprep.mubr.f32.mxu0 0.0
  %1272 = vmatmul.mubr.f32.gmra.mxu0 %v909
  %v1273 = vpop.f32.mrf.mxu0
  %v1274 = vadd.f32 %v750, %v1273
  %v1275 = vpop.f32.mrf.mxu0
  %1276 = vmatprep.mubr.f32.mxu0 0.0
  %1277 = vmatmul.mubr.f32.gmra.mxu0 %v912
  %v1278 = vpop.f32.mrf.mxu0
  %v1279 = vadd.f32 %v750, %v1278
  %v1280 = vpop.f32.mrf.mxu0
  %1281 = vmatprep.mubr.f32.mxu0 0.0
  %1282 = vmatmul.mubr.f32.gmra.mxu0 %v915
  %v1283 = vpop.f32.mrf.mxu0
  %v1284 = vadd.f32 %v750, %v1283
  %v1285 = vpop.f32.mrf.mxu0
  %1286 = vmatprep.mubr.f32.mxu0 0.0
  %1287 = vmatmul.mubr.f32.gmra.mxu0 %v918
  %v1288 = vpop.f32.mrf.mxu0
  %v1289 = vadd.f32 %v750, %v1288
  %v1290 = vpop.f32.mrf.mxu0
  %1291 = vmatprep.mubr.f32.mxu0 0.0
  %1292 = vmatmul.mubr.f32.gmra.mxu0 %v921
  %v1293 = vpop.f32.mrf.mxu0
  %v1294 = vadd.f32 %v750, %v1293
  %v1295 = vpop.f32.mrf.mxu0
  %1296 = vmatprep.mubr.f32.mxu0 0.0
  %1297 = vmatmul.mubr.f32.gmra.mxu0 %v924
  %v1298 = vpop.f32.mrf.mxu0
  %v1299 = vadd.f32 %v750, %v1298
  %v1300 = vpop.f32.mrf.mxu0
  %1301 = vmatprep.mubr.f32.mxu0 0.0
  %1302 = vmatmul.mubr.f32.gmra.mxu0 %v927
  %v1303 = vpop.f32.mrf.mxu0
  %v1304 = vadd.f32 %v750, %v1303
  %v1305 = vpop.f32.mrf.mxu0
  %1306 = vmatprep.mubr.f32.mxu0 0.0
  %1307 = vmatmul.mubr.f32.gmra.mxu0 %v930
  %v1308 = vpop.f32.mrf.mxu0
  %v1309 = vadd.f32 %v750, %v1308
  %v1310 = vpop.f32.mrf.mxu0
  %1311 = vmatprep.mubr.f32.mxu0 0.0
  %1312 = vmatmul.mubr.f32.gmra.mxu0 %v933
  %v1313 = vpop.f32.mrf.mxu0
  %v1314 = vadd.f32 %v750, %v1313
  %v1315 = vpop.f32.mrf.mxu0
  %1316 = vmatprep.mubr.f32.mxu0 0.0
  %1317 = vmatmul.mubr.f32.gmra.mxu0 %v936
  %v1318 = vpop.f32.mrf.mxu0
  %v1319 = vadd.f32 %v750, %v1318
  %v1320 = vpop.f32.mrf.mxu0
  %1321 = vmatprep.mubr.f32.mxu0 0.0
  %1322 = vmatmul.mubr.f32.gmra.mxu0 %v939
  %v1323 = vpop.f32.mrf.mxu0
  %v1324 = vadd.f32 %v750, %v1323
  %v1325 = vpop.f32.mrf.mxu0
  %1326 = vmatprep.mubr.f32.mxu0 0.0
  %1327 = vmatmul.mubr.f32.gmra.mxu0 %v942
  %v1328 = vpop.f32.mrf.mxu0
  %v1329 = vadd.f32 %v750, %v1328
  %v1330 = vpop.f32.mrf.mxu0
  %1331 = vdwg.mxu0
  %v1332 = vsub.f32 0.0, %v362
  %v1333 = vsub.f32 0.0, %v367
  %v1334 = vsub.f32 0.0, %v372
  %v1335 = vsub.f32 0.0, %v377
  %v1336 = vsub.f32 0.0, %v382
  %v1337 = vsub.f32 0.0, %v387
  %v1338 = vsub.f32 0.0, %v392
  %v1339 = vsub.f32 0.0, %v397
  %v1340 = vsub.f32 0.0, %v402
  %v1341 = vsub.f32 0.0, %v407
  %v1342 = vsub.f32 0.0, %v412
  %v1343 = vsub.f32 0.0, %v417
  %v1344 = vsub.f32 0.0, %v422
  %v1345 = vsub.f32 0.0, %v427
  %v1346 = vsub.f32 0.0, %v432
  %v1347 = vsub.f32 0.0, %v437
  %v1348 = vsub.f32 0.0, %v442
  %v1349 = vsub.f32 0.0, %v447
  %v1350 = vsub.f32 0.0, %v452
  %v1351 = vsub.f32 0.0, %v457
  %v1352 = vsub.f32 0.0, %v462
  %v1353 = vsub.f32 0.0, %v467
  %v1354 = vsub.f32 0.0, %v472
  %v1355 = vsub.f32 0.0, %v477
  %v1356 = vsub.f32 0.0, %v482
  %v1357 = vsub.f32 0.0, %v487
  %v1358 = vsub.f32 0.0, %v492
  %v1359 = vsub.f32 0.0, %v497
  %v1360 = vsub.f32 0.0, %v502
  %v1361 = vsub.f32 0.0, %v507
  %v1362 = vsub.f32 0.0, %v512
  %v1363 = vsub.f32 0.0, %v517
  %v1364 = vsub.f32 0.0, %v522
  %v1365 = vsub.f32 0.0, %v527
  %v1366 = vsub.f32 0.0, %v532
  %v1367 = vsub.f32 0.0, %v537
  %v1368 = vsub.f32 0.0, %v542
  %v1369 = vsub.f32 0.0, %v547
  %v1370 = vsub.f32 0.0, %v552
  %v1371 = vsub.f32 0.0, %v557
  %v1372 = vsub.f32 0.0, %v562
  %v1373 = vsub.f32 0.0, %v567
  %v1374 = vsub.f32 0.0, %v572
  %v1375 = vsub.f32 0.0, %v577
  %v1376 = vsub.f32 0.0, %v582
  %v1377 = vsub.f32 0.0, %v587
  %v1378 = vsub.f32 0.0, %v592
  %v1379 = vsub.f32 0.0, %v597
  %v1380 = vsub.f32 0.0, %v602
  %v1381 = vsub.f32 0.0, %v607
  %v1382 = vsub.f32 0.0, %v612
  %v1383 = vsub.f32 0.0, %v617
  %v1384 = vsub.f32 0.0, %v622
  %v1385 = vsub.f32 0.0, %v627
  %v1386 = vsub.f32 0.0, %v632
  %v1387 = vsub.f32 0.0, %v637
  %v1388 = vsub.f32 0.0, %v642
  %v1389 = vsub.f32 0.0, %v647
  %v1390 = vsub.f32 0.0, %v652
  %v1391 = vsub.f32 0.0, %v657
  %v1392 = vsub.f32 0.0, %v662
  %v1393 = vsub.f32 0.0, %v667
  %v1394 = vsub.f32 0.0, %v672
  %v1395 = vsub.f32 0.0, %v677
  %v1396 = vmul.f32 %v1332, 1.442695
  %v1397 = vpow.pop %v1396
  %v1398 = vmul.f32 %v1333, 1.442695
  %v1399 = vpow.pop %v1398
  %v1400 = vmul.f32 %v1334, 1.442695
  %v1401 = vpow.pop %v1400
  %v1402 = vmul.f32 %v1335, 1.442695
  %v1403 = vpow.pop %v1402
  %v1404 = vmul.f32 %v1336, 1.442695
  %v1405 = vpow.pop %v1404
  %v1406 = vmul.f32 %v1337, 1.442695
  %v1407 = vpow.pop %v1406
  %v1408 = vmul.f32 %v1338, 1.442695
  %v1409 = vpow.pop %v1408
  %v1410 = vmul.f32 %v1339, 1.442695
  %v1411 = vpow.pop %v1410
  %v1412 = vmul.f32 %v1340, 1.442695
  %v1413 = vpow.pop %v1412
  %v1414 = vmul.f32 %v1341, 1.442695
  %v1415 = vpow.pop %v1414
  %v1416 = vmul.f32 %v1342, 1.442695
  %v1417 = vpow.pop %v1416
  %v1418 = vmul.f32 %v1343, 1.442695
  %v1419 = vpow.pop %v1418
  %v1420 = vmul.f32 %v1344, 1.442695
  %v1421 = vpow.pop %v1420
  %v1422 = vmul.f32 %v1345, 1.442695
  %v1423 = vpow.pop %v1422
  %v1424 = vmul.f32 %v1346, 1.442695
  %v1425 = vpow.pop %v1424
  %v1426 = vmul.f32 %v1347, 1.442695
  %v1427 = vpow.pop %v1426
  %v1428 = vmul.f32 %v1348, 1.442695
  %v1429 = vpow.pop %v1428
  %v1430 = vmul.f32 %v1349, 1.442695
  %v1431 = vpow.pop %v1430
  %v1432 = vmul.f32 %v1350, 1.442695
  %v1433 = vpow.pop %v1432
  %v1434 = vmul.f32 %v1351, 1.442695
  %v1435 = vpow.pop %v1434
  %v1436 = vmul.f32 %v1352, 1.442695
  %v1437 = vpow.pop %v1436
  %v1438 = vmul.f32 %v1353, 1.442695
  %v1439 = vpow.pop %v1438
  %v1440 = vmul.f32 %v1354, 1.442695
  %v1441 = vpow.pop %v1440
  %v1442 = vmul.f32 %v1355, 1.442695
  %v1443 = vpow.pop %v1442
  %v1444 = vmul.f32 %v1356, 1.442695
  %v1445 = vpow.pop %v1444
  %v1446 = vmul.f32 %v1357, 1.442695
  %v1447 = vpow.pop %v1446
  %v1448 = vmul.f32 %v1358, 1.442695
  %v1449 = vpow.pop %v1448
  %v1450 = vmul.f32 %v1359, 1.442695
  %v1451 = vpow.pop %v1450
  %v1452 = vmul.f32 %v1360, 1.442695
  %v1453 = vpow.pop %v1452
  %v1454 = vmul.f32 %v1361, 1.442695
  %v1455 = vpow.pop %v1454
  %v1456 = vmul.f32 %v1362, 1.442695
  %v1457 = vpow.pop %v1456
  %v1458 = vmul.f32 %v1363, 1.442695
  %v1459 = vpow.pop %v1458
  %v1460 = vmul.f32 %v1364, 1.442695
  %v1461 = vpow.pop %v1460
  %v1462 = vmul.f32 %v1365, 1.442695
  %v1463 = vpow.pop %v1462
  %v1464 = vmul.f32 %v1366, 1.442695
  %v1465 = vpow.pop %v1464
  %v1466 = vmul.f32 %v1367, 1.442695
  %v1467 = vpow.pop %v1466
  %v1468 = vmul.f32 %v1368, 1.442695
  %v1469 = vpow.pop %v1468
  %v1470 = vmul.f32 %v1369, 1.442695
  %v1471 = vpow.pop %v1470
  %v1472 = vmul.f32 %v1370, 1.442695
  %v1473 = vpow.pop %v1472
  %v1474 = vmul.f32 %v1371, 1.442695
  %v1475 = vpow.pop %v1474
  %v1476 = vmul.f32 %v1372, 1.442695
  %v1477 = vpow.pop %v1476
  %v1478 = vmul.f32 %v1373, 1.442695
  %v1479 = vpow.pop %v1478
  %v1480 = vmul.f32 %v1374, 1.442695
  %v1481 = vpow.pop %v1480
  %v1482 = vmul.f32 %v1375, 1.442695
  %v1483 = vpow.pop %v1482
  %v1484 = vmul.f32 %v1376, 1.442695
  %v1485 = vpow.pop %v1484
  %v1486 = vmul.f32 %v1377, 1.442695
  %v1487 = vpow.pop %v1486
  %v1488 = vmul.f32 %v1378, 1.442695
  %v1489 = vpow.pop %v1488
  %v1490 = vmul.f32 %v1379, 1.442695
  %v1491 = vpow.pop %v1490
  %v1492 = vmul.f32 %v1380, 1.442695
  %v1493 = vpow.pop %v1492
  %v1494 = vmul.f32 %v1381, 1.442695
  %v1495 = vpow.pop %v1494
  %v1496 = vmul.f32 %v1382, 1.442695
  %v1497 = vpow.pop %v1496
  %v1498 = vmul.f32 %v1383, 1.442695
  %v1499 = vpow.pop %v1498
  %v1500 = vmul.f32 %v1384, 1.442695
  %v1501 = vpow.pop %v1500
  %v1502 = vmul.f32 %v1385, 1.442695
  %v1503 = vpow.pop %v1502
  %v1504 = vmul.f32 %v1386, 1.442695
  %v1505 = vpow.pop %v1504
  %v1506 = vmul.f32 %v1387, 1.442695
  %v1507 = vpow.pop %v1506
  %v1508 = vmul.f32 %v1388, 1.442695
  %v1509 = vpow.pop %v1508
  %v1510 = vmul.f32 %v1389, 1.442695
  %v1511 = vpow.pop %v1510
  %v1512 = vmul.f32 %v1390, 1.442695
  %v1513 = vpow.pop %v1512
  %v1514 = vmul.f32 %v1391, 1.442695
  %v1515 = vpow.pop %v1514
  %v1516 = vmul.f32 %v1392, 1.442695
  %v1517 = vpow.pop %v1516
  %v1518 = vmul.f32 %v1393, 1.442695
  %v1519 = vpow.pop %v1518
  %v1520 = vmul.f32 %v1394, 1.442695
  %v1521 = vpow.pop %v1520
  %v1522 = vmul.f32 %v1395, 1.442695
  %v1523 = vpow.pop %v1522
  %v1524 = vadd.f32 %v1397, 1.0
  %v1525 = vadd.f32 %v1399, 1.0
  %v1526 = vadd.f32 %v1401, 1.0
  %v1527 = vadd.f32 %v1403, 1.0
  %v1528 = vadd.f32 %v1405, 1.0
  %v1529 = vadd.f32 %v1407, 1.0
  %v1530 = vadd.f32 %v1409, 1.0
  %v1531 = vadd.f32 %v1411, 1.0
  %v1532 = vadd.f32 %v1413, 1.0
  %v1533 = vadd.f32 %v1415, 1.0
  %v1534 = vadd.f32 %v1417, 1.0
  %v1535 = vadd.f32 %v1419, 1.0
  %v1536 = vadd.f32 %v1421, 1.0
  %v1537 = vadd.f32 %v1423, 1.0
  %v1538 = vadd.f32 %v1425, 1.0
  %v1539 = vadd.f32 %v1427, 1.0
  %v1540 = vadd.f32 %v1429, 1.0
  %v1541 = vadd.f32 %v1431, 1.0
  %v1542 = vadd.f32 %v1433, 1.0
  %v1543 = vadd.f32 %v1435, 1.0
  %v1544 = vadd.f32 %v1437, 1.0
  %v1545 = vadd.f32 %v1439, 1.0
  %v1546 = vadd.f32 %v1441, 1.0
  %v1547 = vadd.f32 %v1443, 1.0
  %v1548 = vadd.f32 %v1445, 1.0
  %v1549 = vadd.f32 %v1447, 1.0
  %v1550 = vadd.f32 %v1449, 1.0
  %v1551 = vadd.f32 %v1451, 1.0
  %v1552 = vadd.f32 %v1453, 1.0
  %v1553 = vadd.f32 %v1455, 1.0
  %v1554 = vadd.f32 %v1457, 1.0
  %v1555 = vadd.f32 %v1459, 1.0
  %v1556 = vadd.f32 %v1461, 1.0
  %v1557 = vadd.f32 %v1463, 1.0
  %v1558 = vadd.f32 %v1465, 1.0
  %v1559 = vadd.f32 %v1467, 1.0
  %v1560 = vadd.f32 %v1469, 1.0
  %v1561 = vadd.f32 %v1471, 1.0
  %v1562 = vadd.f32 %v1473, 1.0
  %v1563 = vadd.f32 %v1475, 1.0
  %v1564 = vadd.f32 %v1477, 1.0
  %v1565 = vadd.f32 %v1479, 1.0
  %v1566 = vadd.f32 %v1481, 1.0
  %v1567 = vadd.f32 %v1483, 1.0
  %v1568 = vadd.f32 %v1485, 1.0
  %v1569 = vadd.f32 %v1487, 1.0
  %v1570 = vadd.f32 %v1489, 1.0
  %v1571 = vadd.f32 %v1491, 1.0
  %v1572 = vadd.f32 %v1493, 1.0
  %v1573 = vadd.f32 %v1495, 1.0
  %v1574 = vadd.f32 %v1497, 1.0
  %v1575 = vadd.f32 %v1499, 1.0
  %v1576 = vadd.f32 %v1501, 1.0
  %v1577 = vadd.f32 %v1503, 1.0
  %v1578 = vadd.f32 %v1505, 1.0
  %v1579 = vadd.f32 %v1507, 1.0
  %v1580 = vadd.f32 %v1509, 1.0
  %v1581 = vadd.f32 %v1511, 1.0
  %v1582 = vadd.f32 %v1513, 1.0
  %v1583 = vadd.f32 %v1515, 1.0
  %v1584 = vadd.f32 %v1517, 1.0
  %v1585 = vadd.f32 %v1519, 1.0
  %v1586 = vadd.f32 %v1521, 1.0
  %v1587 = vadd.f32 %v1523, 1.0
  %v1588 = vrcp.pop %v1524
  %v1589 = vmul.f32 1.0, %v1588
  %v1590 = vrcp.pop %v1525
  %v1591 = vmul.f32 1.0, %v1590
  %v1592 = vrcp.pop %v1526
  %v1593 = vmul.f32 1.0, %v1592
  %v1594 = vrcp.pop %v1527
  %v1595 = vmul.f32 1.0, %v1594
  %v1596 = vrcp.pop %v1528
  %v1597 = vmul.f32 1.0, %v1596
  %v1598 = vrcp.pop %v1529
  %v1599 = vmul.f32 1.0, %v1598
  %v1600 = vrcp.pop %v1530
  %v1601 = vmul.f32 1.0, %v1600
  %v1602 = vrcp.pop %v1531
  %v1603 = vmul.f32 1.0, %v1602
  %v1604 = vrcp.pop %v1532
  %v1605 = vmul.f32 1.0, %v1604
  %v1606 = vrcp.pop %v1533
  %v1607 = vmul.f32 1.0, %v1606
  %v1608 = vrcp.pop %v1534
  %v1609 = vmul.f32 1.0, %v1608
  %v1610 = vrcp.pop %v1535
  %v1611 = vmul.f32 1.0, %v1610
  %v1612 = vrcp.pop %v1536
  %v1613 = vmul.f32 1.0, %v1612
  %v1614 = vrcp.pop %v1537
  %v1615 = vmul.f32 1.0, %v1614
  %v1616 = vrcp.pop %v1538
  %v1617 = vmul.f32 1.0, %v1616
  %v1618 = vrcp.pop %v1539
  %v1619 = vmul.f32 1.0, %v1618
  %v1620 = vrcp.pop %v1540
  %v1621 = vmul.f32 1.0, %v1620
  %v1622 = vrcp.pop %v1541
  %v1623 = vmul.f32 1.0, %v1622
  %v1624 = vrcp.pop %v1542
  %v1625 = vmul.f32 1.0, %v1624
  %v1626 = vrcp.pop %v1543
  %v1627 = vmul.f32 1.0, %v1626
  %v1628 = vrcp.pop %v1544
  %v1629 = vmul.f32 1.0, %v1628
  %v1630 = vrcp.pop %v1545
  %v1631 = vmul.f32 1.0, %v1630
  %v1632 = vrcp.pop %v1546
  %v1633 = vmul.f32 1.0, %v1632
  %v1634 = vrcp.pop %v1547
  %v1635 = vmul.f32 1.0, %v1634
  %v1636 = vrcp.pop %v1548
  %v1637 = vmul.f32 1.0, %v1636
  %v1638 = vrcp.pop %v1549
  %v1639 = vmul.f32 1.0, %v1638
  %v1640 = vrcp.pop %v1550
  %v1641 = vmul.f32 1.0, %v1640
  %v1642 = vrcp.pop %v1551
  %v1643 = vmul.f32 1.0, %v1642
  %v1644 = vrcp.pop %v1552
  %v1645 = vmul.f32 1.0, %v1644
  %v1646 = vrcp.pop %v1553
  %v1647 = vmul.f32 1.0, %v1646
  %v1648 = vrcp.pop %v1554
  %v1649 = vmul.f32 1.0, %v1648
  %v1650 = vrcp.pop %v1555
  %v1651 = vmul.f32 1.0, %v1650
  %v1652 = vrcp.pop %v1556
  %v1653 = vmul.f32 1.0, %v1652
  %v1654 = vrcp.pop %v1557
  %v1655 = vmul.f32 1.0, %v1654
  %v1656 = vrcp.pop %v1558
  %v1657 = vmul.f32 1.0, %v1656
  %v1658 = vrcp.pop %v1559
  %v1659 = vmul.f32 1.0, %v1658
  %v1660 = vrcp.pop %v1560
  %v1661 = vmul.f32 1.0, %v1660
  %v1662 = vrcp.pop %v1561
  %v1663 = vmul.f32 1.0, %v1662
  %v1664 = vrcp.pop %v1562
  %v1665 = vmul.f32 1.0, %v1664
  %v1666 = vrcp.pop %v1563
  %v1667 = vmul.f32 1.0, %v1666
  %v1668 = vrcp.pop %v1564
  %v1669 = vmul.f32 1.0, %v1668
  %v1670 = vrcp.pop %v1565
  %v1671 = vmul.f32 1.0, %v1670
  %v1672 = vrcp.pop %v1566
  %v1673 = vmul.f32 1.0, %v1672
  %v1674 = vrcp.pop %v1567
  %v1675 = vmul.f32 1.0, %v1674
  %v1676 = vrcp.pop %v1568
  %v1677 = vmul.f32 1.0, %v1676
  %v1678 = vrcp.pop %v1569
  %v1679 = vmul.f32 1.0, %v1678
  %v1680 = vrcp.pop %v1570
  %v1681 = vmul.f32 1.0, %v1680
  %v1682 = vrcp.pop %v1571
  %v1683 = vmul.f32 1.0, %v1682
  %v1684 = vrcp.pop %v1572
  %v1685 = vmul.f32 1.0, %v1684
  %v1686 = vrcp.pop %v1573
  %v1687 = vmul.f32 1.0, %v1686
  %v1688 = vrcp.pop %v1574
  %v1689 = vmul.f32 1.0, %v1688
  %v1690 = vrcp.pop %v1575
  %v1691 = vmul.f32 1.0, %v1690
  %v1692 = vrcp.pop %v1576
  %v1693 = vmul.f32 1.0, %v1692
  %v1694 = vrcp.pop %v1577
  %v1695 = vmul.f32 1.0, %v1694
  %v1696 = vrcp.pop %v1578
  %v1697 = vmul.f32 1.0, %v1696
  %v1698 = vrcp.pop %v1579
  %v1699 = vmul.f32 1.0, %v1698
  %v1700 = vrcp.pop %v1580
  %v1701 = vmul.f32 1.0, %v1700
  %v1702 = vrcp.pop %v1581
  %v1703 = vmul.f32 1.0, %v1702
  %v1704 = vrcp.pop %v1582
  %v1705 = vmul.f32 1.0, %v1704
  %v1706 = vrcp.pop %v1583
  %v1707 = vmul.f32 1.0, %v1706
  %v1708 = vrcp.pop %v1584
  %v1709 = vmul.f32 1.0, %v1708
  %v1710 = vrcp.pop %v1585
  %v1711 = vmul.f32 1.0, %v1710
  %v1712 = vrcp.pop %v1586
  %v1713 = vmul.f32 1.0, %v1712
  %v1714 = vrcp.pop %v1587
  %v1715 = vmul.f32 1.0, %v1714
  %v1716 = vsub.f32 0.0, %v1014
  %v1717 = vsub.f32 0.0, %v1019
  %v1718 = vsub.f32 0.0, %v1024
  %v1719 = vsub.f32 0.0, %v1029
  %v1720 = vsub.f32 0.0, %v1034
  %v1721 = vsub.f32 0.0, %v1039
  %v1722 = vsub.f32 0.0, %v1044
  %v1723 = vsub.f32 0.0, %v1049
  %v1724 = vsub.f32 0.0, %v1054
  %v1725 = vsub.f32 0.0, %v1059
  %v1726 = vsub.f32 0.0, %v1064
  %v1727 = vsub.f32 0.0, %v1069
  %v1728 = vsub.f32 0.0, %v1074
  %v1729 = vsub.f32 0.0, %v1079
  %v1730 = vsub.f32 0.0, %v1084
  %v1731 = vsub.f32 0.0, %v1089
  %v1732 = vsub.f32 0.0, %v1094
  %v1733 = vsub.f32 0.0, %v1099
  %v1734 = vsub.f32 0.0, %v1104
  %v1735 = vsub.f32 0.0, %v1109
  %v1736 = vsub.f32 0.0, %v1114
  %v1737 = vsub.f32 0.0, %v1119
  %v1738 = vsub.f32 0.0, %v1124
  %v1739 = vsub.f32 0.0, %v1129
  %v1740 = vsub.f32 0.0, %v1134
  %v1741 = vsub.f32 0.0, %v1139
  %v1742 = vsub.f32 0.0, %v1144
  %v1743 = vsub.f32 0.0, %v1149
  %v1744 = vsub.f32 0.0, %v1154
  %v1745 = vsub.f32 0.0, %v1159
  %v1746 = vsub.f32 0.0, %v1164
  %v1747 = vsub.f32 0.0, %v1169
  %v1748 = vsub.f32 0.0, %v1174
  %v1749 = vsub.f32 0.0, %v1179
  %v1750 = vsub.f32 0.0, %v1184
  %v1751 = vsub.f32 0.0, %v1189
  %v1752 = vsub.f32 0.0, %v1194
  %v1753 = vsub.f32 0.0, %v1199
  %v1754 = vsub.f32 0.0, %v1204
  %v1755 = vsub.f32 0.0, %v1209
  %v1756 = vsub.f32 0.0, %v1214
  %v1757 = vsub.f32 0.0, %v1219
  %v1758 = vsub.f32 0.0, %v1224
  %v1759 = vsub.f32 0.0, %v1229
  %v1760 = vsub.f32 0.0, %v1234
  %v1761 = vsub.f32 0.0, %v1239
  %v1762 = vsub.f32 0.0, %v1244
  %v1763 = vsub.f32 0.0, %v1249
  %v1764 = vsub.f32 0.0, %v1254
  %v1765 = vsub.f32 0.0, %v1259
  %v1766 = vsub.f32 0.0, %v1264
  %v1767 = vsub.f32 0.0, %v1269
  %v1768 = vsub.f32 0.0, %v1274
  %v1769 = vsub.f32 0.0, %v1279
  %v1770 = vsub.f32 0.0, %v1284
  %v1771 = vsub.f32 0.0, %v1289
  %v1772 = vsub.f32 0.0, %v1294
  %v1773 = vsub.f32 0.0, %v1299
  %v1774 = vsub.f32 0.0, %v1304
  %v1775 = vsub.f32 0.0, %v1309
  %v1776 = vsub.f32 0.0, %v1314
  %v1777 = vsub.f32 0.0, %v1319
  %v1778 = vsub.f32 0.0, %v1324
  %v1779 = vsub.f32 0.0, %v1329
  %v1780 = vmul.f32 %v1716, 1.442695
  %v1781 = vpow.pop %v1780
  %v1782 = vmul.f32 %v1717, 1.442695
  %v1783 = vpow.pop %v1782
  %v1784 = vmul.f32 %v1718, 1.442695
  %v1785 = vpow.pop %v1784
  %v1786 = vmul.f32 %v1719, 1.442695
  %v1787 = vpow.pop %v1786
  %v1788 = vmul.f32 %v1720, 1.442695
  %v1789 = vpow.pop %v1788
  %v1790 = vmul.f32 %v1721, 1.442695
  %v1791 = vpow.pop %v1790
  %v1792 = vmul.f32 %v1722, 1.442695
  %v1793 = vpow.pop %v1792
  %v1794 = vmul.f32 %v1723, 1.442695
  %v1795 = vpow.pop %v1794
  %v1796 = vmul.f32 %v1724, 1.442695
  %v1797 = vpow.pop %v1796
  %v1798 = vmul.f32 %v1725, 1.442695
  %v1799 = vpow.pop %v1798
  %v1800 = vmul.f32 %v1726, 1.442695
  %v1801 = vpow.pop %v1800
  %v1802 = vmul.f32 %v1727, 1.442695
  %v1803 = vpow.pop %v1802
  %v1804 = vmul.f32 %v1728, 1.442695
  %v1805 = vpow.pop %v1804
  %v1806 = vmul.f32 %v1729, 1.442695
  %v1807 = vpow.pop %v1806
  %v1808 = vmul.f32 %v1730, 1.442695
  %v1809 = vpow.pop %v1808
  %v1810 = vmul.f32 %v1731, 1.442695
  %v1811 = vpow.pop %v1810
  %v1812 = vmul.f32 %v1732, 1.442695
  %v1813 = vpow.pop %v1812
  %v1814 = vmul.f32 %v1733, 1.442695
  %v1815 = vpow.pop %v1814
  %v1816 = vmul.f32 %v1734, 1.442695
  %v1817 = vpow.pop %v1816
  %v1818 = vmul.f32 %v1735, 1.442695
  %v1819 = vpow.pop %v1818
  %v1820 = vmul.f32 %v1736, 1.442695
  %v1821 = vpow.pop %v1820
  %v1822 = vmul.f32 %v1737, 1.442695
  %v1823 = vpow.pop %v1822
  %v1824 = vmul.f32 %v1738, 1.442695
  %v1825 = vpow.pop %v1824
  %v1826 = vmul.f32 %v1739, 1.442695
  %v1827 = vpow.pop %v1826
  %v1828 = vmul.f32 %v1740, 1.442695
  %v1829 = vpow.pop %v1828
  %v1830 = vmul.f32 %v1741, 1.442695
  %v1831 = vpow.pop %v1830
  %v1832 = vmul.f32 %v1742, 1.442695
  %v1833 = vpow.pop %v1832
  %v1834 = vmul.f32 %v1743, 1.442695
  %v1835 = vpow.pop %v1834
  %v1836 = vmul.f32 %v1744, 1.442695
  %v1837 = vpow.pop %v1836
  %v1838 = vmul.f32 %v1745, 1.442695
  %v1839 = vpow.pop %v1838
  %v1840 = vmul.f32 %v1746, 1.442695
  %v1841 = vpow.pop %v1840
  %v1842 = vmul.f32 %v1747, 1.442695
  %v1843 = vpow.pop %v1842
  %v1844 = vmul.f32 %v1748, 1.442695
  %v1845 = vpow.pop %v1844
  %v1846 = vmul.f32 %v1749, 1.442695
  %v1847 = vpow.pop %v1846
  %v1848 = vmul.f32 %v1750, 1.442695
  %v1849 = vpow.pop %v1848
  %v1850 = vmul.f32 %v1751, 1.442695
  %v1851 = vpow.pop %v1850
  %v1852 = vmul.f32 %v1752, 1.442695
  %v1853 = vpow.pop %v1852
  %v1854 = vmul.f32 %v1753, 1.442695
  %v1855 = vpow.pop %v1854
  %v1856 = vmul.f32 %v1754, 1.442695
  %v1857 = vpow.pop %v1856
  %v1858 = vmul.f32 %v1755, 1.442695
  %v1859 = vpow.pop %v1858
  %v1860 = vmul.f32 %v1756, 1.442695
  %v1861 = vpow.pop %v1860
  %v1862 = vmul.f32 %v1757, 1.442695
  %v1863 = vpow.pop %v1862
  %v1864 = vmul.f32 %v1758, 1.442695
  %v1865 = vpow.pop %v1864
  %v1866 = vmul.f32 %v1759, 1.442695
  %v1867 = vpow.pop %v1866
  %v1868 = vmul.f32 %v1760, 1.442695
  %v1869 = vpow.pop %v1868
  %v1870 = vmul.f32 %v1761, 1.442695
  %v1871 = vpow.pop %v1870
  %v1872 = vmul.f32 %v1762, 1.442695
  %v1873 = vpow.pop %v1872
  %v1874 = vmul.f32 %v1763, 1.442695
  %v1875 = vpow.pop %v1874
  %v1876 = vmul.f32 %v1764, 1.442695
  %v1877 = vpow.pop %v1876
  %v1878 = vmul.f32 %v1765, 1.442695
  %v1879 = vpow.pop %v1878
  %v1880 = vmul.f32 %v1766, 1.442695
  %v1881 = vpow.pop %v1880
  %v1882 = vmul.f32 %v1767, 1.442695
  %v1883 = vpow.pop %v1882
  %v1884 = vmul.f32 %v1768, 1.442695
  %v1885 = vpow.pop %v1884
  %v1886 = vmul.f32 %v1769, 1.442695
  %v1887 = vpow.pop %v1886
  %v1888 = vmul.f32 %v1770, 1.442695
  %v1889 = vpow.pop %v1888
  %v1890 = vmul.f32 %v1771, 1.442695
  %v1891 = vpow.pop %v1890
  %v1892 = vmul.f32 %v1772, 1.442695
  %v1893 = vpow.pop %v1892
  %v1894 = vmul.f32 %v1773, 1.442695
  %v1895 = vpow.pop %v1894
  %v1896 = vmul.f32 %v1774, 1.442695
  %v1897 = vpow.pop %v1896
  %v1898 = vmul.f32 %v1775, 1.442695
  %v1899 = vpow.pop %v1898
  %v1900 = vmul.f32 %v1776, 1.442695
  %v1901 = vpow.pop %v1900
  %v1902 = vmul.f32 %v1777, 1.442695
  %v1903 = vpow.pop %v1902
  %v1904 = vmul.f32 %v1778, 1.442695
  %v1905 = vpow.pop %v1904
  %v1906 = vmul.f32 %v1779, 1.442695
  %v1907 = vpow.pop %v1906
  %v1908 = vadd.f32 %v1781, 1.0
  %v1909 = vadd.f32 %v1783, 1.0
  %v1910 = vadd.f32 %v1785, 1.0
  %v1911 = vadd.f32 %v1787, 1.0
  %v1912 = vadd.f32 %v1789, 1.0
  %v1913 = vadd.f32 %v1791, 1.0
  %v1914 = vadd.f32 %v1793, 1.0
  %v1915 = vadd.f32 %v1795, 1.0
  %v1916 = vadd.f32 %v1797, 1.0
  %v1917 = vadd.f32 %v1799, 1.0
  %v1918 = vadd.f32 %v1801, 1.0
  %v1919 = vadd.f32 %v1803, 1.0
  %v1920 = vadd.f32 %v1805, 1.0
  %v1921 = vadd.f32 %v1807, 1.0
  %v1922 = vadd.f32 %v1809, 1.0
  %v1923 = vadd.f32 %v1811, 1.0
  %v1924 = vadd.f32 %v1813, 1.0
  %v1925 = vadd.f32 %v1815, 1.0
  %v1926 = vadd.f32 %v1817, 1.0
  %v1927 = vadd.f32 %v1819, 1.0
  %v1928 = vadd.f32 %v1821, 1.0
  %v1929 = vadd.f32 %v1823, 1.0
  %v1930 = vadd.f32 %v1825, 1.0
  %v1931 = vadd.f32 %v1827, 1.0
  %v1932 = vadd.f32 %v1829, 1.0
  %v1933 = vadd.f32 %v1831, 1.0
  %v1934 = vadd.f32 %v1833, 1.0
  %v1935 = vadd.f32 %v1835, 1.0
  %v1936 = vadd.f32 %v1837, 1.0
  %v1937 = vadd.f32 %v1839, 1.0
  %v1938 = vadd.f32 %v1841, 1.0
  %v1939 = vadd.f32 %v1843, 1.0
  %v1940 = vadd.f32 %v1845, 1.0
  %v1941 = vadd.f32 %v1847, 1.0
  %v1942 = vadd.f32 %v1849, 1.0
  %v1943 = vadd.f32 %v1851, 1.0
  %v1944 = vadd.f32 %v1853, 1.0
  %v1945 = vadd.f32 %v1855, 1.0
  %v1946 = vadd.f32 %v1857, 1.0
  %v1947 = vadd.f32 %v1859, 1.0
  %v1948 = vadd.f32 %v1861, 1.0
  %v1949 = vadd.f32 %v1863, 1.0
  %v1950 = vadd.f32 %v1865, 1.0
  %v1951 = vadd.f32 %v1867, 1.0
  %v1952 = vadd.f32 %v1869, 1.0
  %v1953 = vadd.f32 %v1871, 1.0
  %v1954 = vadd.f32 %v1873, 1.0
  %v1955 = vadd.f32 %v1875, 1.0
  %v1956 = vadd.f32 %v1877, 1.0
  %v1957 = vadd.f32 %v1879, 1.0
  %v1958 = vadd.f32 %v1881, 1.0
  %v1959 = vadd.f32 %v1883, 1.0
  %v1960 = vadd.f32 %v1885, 1.0
  %v1961 = vadd.f32 %v1887, 1.0
  %v1962 = vadd.f32 %v1889, 1.0
  %v1963 = vadd.f32 %v1891, 1.0
  %v1964 = vadd.f32 %v1893, 1.0
  %v1965 = vadd.f32 %v1895, 1.0
  %v1966 = vadd.f32 %v1897, 1.0
  %v1967 = vadd.f32 %v1899, 1.0
  %v1968 = vadd.f32 %v1901, 1.0
  %v1969 = vadd.f32 %v1903, 1.0
  %v1970 = vadd.f32 %v1905, 1.0
  %v1971 = vadd.f32 %v1907, 1.0
  %v1972 = vrcp.pop %v1908
  %v1973 = vmul.f32 1.0, %v1972
  %v1974 = vrcp.pop %v1909
  %v1975 = vmul.f32 1.0, %v1974
  %v1976 = vrcp.pop %v1910
  %v1977 = vmul.f32 1.0, %v1976
  %v1978 = vrcp.pop %v1911
  %v1979 = vmul.f32 1.0, %v1978
  %v1980 = vrcp.pop %v1912
  %v1981 = vmul.f32 1.0, %v1980
  %v1982 = vrcp.pop %v1913
  %v1983 = vmul.f32 1.0, %v1982
  %v1984 = vrcp.pop %v1914
  %v1985 = vmul.f32 1.0, %v1984
  %v1986 = vrcp.pop %v1915
  %v1987 = vmul.f32 1.0, %v1986
  %v1988 = vrcp.pop %v1916
  %v1989 = vmul.f32 1.0, %v1988
  %v1990 = vrcp.pop %v1917
  %v1991 = vmul.f32 1.0, %v1990
  %v1992 = vrcp.pop %v1918
  %v1993 = vmul.f32 1.0, %v1992
  %v1994 = vrcp.pop %v1919
  %v1995 = vmul.f32 1.0, %v1994
  %v1996 = vrcp.pop %v1920
  %v1997 = vmul.f32 1.0, %v1996
  %v1998 = vrcp.pop %v1921
  %v1999 = vmul.f32 1.0, %v1998
  %v2000 = vrcp.pop %v1922
  %v2001 = vmul.f32 1.0, %v2000
  %v2002 = vrcp.pop %v1923
  %v2003 = vmul.f32 1.0, %v2002
  %v2004 = vrcp.pop %v1924
  %v2005 = vmul.f32 1.0, %v2004
  %v2006 = vrcp.pop %v1925
  %v2007 = vmul.f32 1.0, %v2006
  %v2008 = vrcp.pop %v1926
  %v2009 = vmul.f32 1.0, %v2008
  %v2010 = vrcp.pop %v1927
  %v2011 = vmul.f32 1.0, %v2010
  %v2012 = vrcp.pop %v1928
  %v2013 = vmul.f32 1.0, %v2012
  %v2014 = vrcp.pop %v1929
  %v2015 = vmul.f32 1.0, %v2014
  %v2016 = vrcp.pop %v1930
  %v2017 = vmul.f32 1.0, %v2016
  %v2018 = vrcp.pop %v1931
  %v2019 = vmul.f32 1.0, %v2018
  %v2020 = vrcp.pop %v1932
  %v2021 = vmul.f32 1.0, %v2020
  %v2022 = vrcp.pop %v1933
  %v2023 = vmul.f32 1.0, %v2022
  %v2024 = vrcp.pop %v1934
  %v2025 = vmul.f32 1.0, %v2024
  %v2026 = vrcp.pop %v1935
  %v2027 = vmul.f32 1.0, %v2026
  %v2028 = vrcp.pop %v1936
  %v2029 = vmul.f32 1.0, %v2028
  %v2030 = vrcp.pop %v1937
  %v2031 = vmul.f32 1.0, %v2030
  %v2032 = vrcp.pop %v1938
  %v2033 = vmul.f32 1.0, %v2032
  %v2034 = vrcp.pop %v1939
  %v2035 = vmul.f32 1.0, %v2034
  %v2036 = vrcp.pop %v1940
  %v2037 = vmul.f32 1.0, %v2036
  %v2038 = vrcp.pop %v1941
  %v2039 = vmul.f32 1.0, %v2038
  %v2040 = vrcp.pop %v1942
  %v2041 = vmul.f32 1.0, %v2040
  %v2042 = vrcp.pop %v1943
  %v2043 = vmul.f32 1.0, %v2042
  %v2044 = vrcp.pop %v1944
  %v2045 = vmul.f32 1.0, %v2044
  %v2046 = vrcp.pop %v1945
  %v2047 = vmul.f32 1.0, %v2046
  %v2048 = vrcp.pop %v1946
  %v2049 = vmul.f32 1.0, %v2048
  %v2050 = vrcp.pop %v1947
  %v2051 = vmul.f32 1.0, %v2050
  %v2052 = vrcp.pop %v1948
  %v2053 = vmul.f32 1.0, %v2052
  %v2054 = vrcp.pop %v1949
  %v2055 = vmul.f32 1.0, %v2054
  %v2056 = vrcp.pop %v1950
  %v2057 = vmul.f32 1.0, %v2056
  %v2058 = vrcp.pop %v1951
  %v2059 = vmul.f32 1.0, %v2058
  %v2060 = vrcp.pop %v1952
  %v2061 = vmul.f32 1.0, %v2060
  %v2062 = vrcp.pop %v1953
  %v2063 = vmul.f32 1.0, %v2062
  %v2064 = vrcp.pop %v1954
  %v2065 = vmul.f32 1.0, %v2064
  %v2066 = vrcp.pop %v1955
  %v2067 = vmul.f32 1.0, %v2066
  %v2068 = vrcp.pop %v1956
  %v2069 = vmul.f32 1.0, %v2068
  %v2070 = vrcp.pop %v1957
  %v2071 = vmul.f32 1.0, %v2070
  %v2072 = vrcp.pop %v1958
  %v2073 = vmul.f32 1.0, %v2072
  %v2074 = vrcp.pop %v1959
  %v2075 = vmul.f32 1.0, %v2074
  %v2076 = vrcp.pop %v1960
  %v2077 = vmul.f32 1.0, %v2076
  %v2078 = vrcp.pop %v1961
  %v2079 = vmul.f32 1.0, %v2078
  %v2080 = vrcp.pop %v1962
  %v2081 = vmul.f32 1.0, %v2080
  %v2082 = vrcp.pop %v1963
  %v2083 = vmul.f32 1.0, %v2082
  %v2084 = vrcp.pop %v1964
  %v2085 = vmul.f32 1.0, %v2084
  %v2086 = vrcp.pop %v1965
  %v2087 = vmul.f32 1.0, %v2086
  %v2088 = vrcp.pop %v1966
  %v2089 = vmul.f32 1.0, %v2088
  %v2090 = vrcp.pop %v1967
  %v2091 = vmul.f32 1.0, %v2090
  %v2092 = vrcp.pop %v1968
  %v2093 = vmul.f32 1.0, %v2092
  %v2094 = vrcp.pop %v1969
  %v2095 = vmul.f32 1.0, %v2094
  %v2096 = vrcp.pop %v1970
  %v2097 = vmul.f32 1.0, %v2096
  %v2098 = vrcp.pop %v1971
  %v2099 = vmul.f32 1.0, %v2098
  %v2100 = vld [vmem:[%s2] sm:$0xff]
  %v2101 = vld [vmem:[%s2 + $0x8] sm:$0xff]
  %v2102 = vld [vmem:[%s2 + $0x10] sm:$0xff]
  %v2103 = vld [vmem:[%s2 + $0x18] sm:$0xff]
  %v2104 = vld [vmem:[%s2 + $0x20] sm:$0xff]
  %v2105 = vld [vmem:[%s2 + $0x28] sm:$0xff]
  %v2106 = vld [vmem:[%s2 + $0x30] sm:$0xff]
  %v2107 = vld [vmem:[%s2 + $0x38] sm:$0xff]
  %v2108 = vld [vmem:[%s2 + $0x40] sm:$0xff]
  %v2109 = vld [vmem:[%s2 + $0x48] sm:$0xff]
  %v2110 = vld [vmem:[%s2 + $0x50] sm:$0xff]
  %v2111 = vld [vmem:[%s2 + $0x58] sm:$0xff]
  %v2112 = vld [vmem:[%s2 + $0x60] sm:$0xff]
  %v2113 = vld [vmem:[%s2 + $0x68] sm:$0xff]
  %v2114 = vld [vmem:[%s2 + $0x70] sm:$0xff]
  %v2115 = vld [vmem:[%s2 + $0x78] sm:$0xff]
  %v2116 = vld [vmem:[%s2 + $0x80] sm:$0xff]
  %v2117 = vld [vmem:[%s2 + $0x88] sm:$0xff]
  %v2118 = vld [vmem:[%s2 + $0x90] sm:$0xff]
  %v2119 = vld [vmem:[%s2 + $0x98] sm:$0xff]
  %v2120 = vld [vmem:[%s2 + $0xa0] sm:$0xff]
  %v2121 = vld [vmem:[%s2 + $0xa8] sm:$0xff]
  %v2122 = vld [vmem:[%s2 + $0xb0] sm:$0xff]
  %v2123 = vld [vmem:[%s2 + $0xb8] sm:$0xff]
  %v2124 = vld [vmem:[%s2 + $0xc0] sm:$0xff]
  %v2125 = vld [vmem:[%s2 + $0xc8] sm:$0xff]
  %v2126 = vld [vmem:[%s2 + $0xd0] sm:$0xff]
  %v2127 = vld [vmem:[%s2 + $0xd8] sm:$0xff]
  %v2128 = vld [vmem:[%s2 + $0xe0] sm:$0xff]
  %v2129 = vld [vmem:[%s2 + $0xe8] sm:$0xff]
  %v2130 = vld [vmem:[%s2 + $0xf0] sm:$0xff]
  %v2131 = vld [vmem:[%s2 + $0xf8] sm:$0xff]
  %v2132 = vld [vmem:[%s2 + $0x100] sm:$0xff]
  %v2133 = vld [vmem:[%s2 + $0x108] sm:$0xff]
  %v2134 = vld [vmem:[%s2 + $0x110] sm:$0xff]
  %v2135 = vld [vmem:[%s2 + $0x118] sm:$0xff]
  %v2136 = vld [vmem:[%s2 + $0x120] sm:$0xff]
  %v2137 = vld [vmem:[%s2 + $0x128] sm:$0xff]
  %v2138 = vld [vmem:[%s2 + $0x130] sm:$0xff]
  %v2139 = vld [vmem:[%s2 + $0x138] sm:$0xff]
  %v2140 = vld [vmem:[%s2 + $0x140] sm:$0xff]
  %v2141 = vld [vmem:[%s2 + $0x148] sm:$0xff]
  %v2142 = vld [vmem:[%s2 + $0x150] sm:$0xff]
  %v2143 = vld [vmem:[%s2 + $0x158] sm:$0xff]
  %v2144 = vld [vmem:[%s2 + $0x160] sm:$0xff]
  %v2145 = vld [vmem:[%s2 + $0x168] sm:$0xff]
  %v2146 = vld [vmem:[%s2 + $0x170] sm:$0xff]
  %v2147 = vld [vmem:[%s2 + $0x178] sm:$0xff]
  %v2148 = vld [vmem:[%s2 + $0x180] sm:$0xff]
  %v2149 = vld [vmem:[%s2 + $0x188] sm:$0xff]
  %v2150 = vld [vmem:[%s2 + $0x190] sm:$0xff]
  %v2151 = vld [vmem:[%s2 + $0x198] sm:$0xff]
  %v2152 = vld [vmem:[%s2 + $0x1a0] sm:$0xff]
  %v2153 = vld [vmem:[%s2 + $0x1a8] sm:$0xff]
  %v2154 = vld [vmem:[%s2 + $0x1b0] sm:$0xff]
  %v2155 = vld [vmem:[%s2 + $0x1b8] sm:$0xff]
  %v2156 = vld [vmem:[%s2 + $0x1c0] sm:$0xff]
  %v2157 = vld [vmem:[%s2 + $0x1c8] sm:$0xff]
  %v2158 = vld [vmem:[%s2 + $0x1d0] sm:$0xff]
  %v2159 = vld [vmem:[%s2 + $0x1d8] sm:$0xff]
  %v2160 = vld [vmem:[%s2 + $0x1e0] sm:$0xff]
  %v2161 = vld [vmem:[%s2 + $0x1e8] sm:$0xff]
  %v2162 = vld [vmem:[%s2 + $0x1f0] sm:$0xff]
  %v2163 = vld [vmem:[%s2 + $0x1f8] sm:$0xff]
  %v2164 = vmul.f32 %v1589, %v2100
  %v2165 = vmul.f32 %v1591, %v2101
  %v2166 = vmul.f32 %v1593, %v2102
  %v2167 = vmul.f32 %v1595, %v2103
  %v2168 = vmul.f32 %v1597, %v2104
  %v2169 = vmul.f32 %v1599, %v2105
  %v2170 = vmul.f32 %v1601, %v2106
  %v2171 = vmul.f32 %v1603, %v2107
  %v2172 = vmul.f32 %v1605, %v2108
  %v2173 = vmul.f32 %v1607, %v2109
  %v2174 = vmul.f32 %v1609, %v2110
  %v2175 = vmul.f32 %v1611, %v2111
  %v2176 = vmul.f32 %v1613, %v2112
  %v2177 = vmul.f32 %v1615, %v2113
  %v2178 = vmul.f32 %v1617, %v2114
  %v2179 = vmul.f32 %v1619, %v2115
  %v2180 = vmul.f32 %v1621, %v2116
  %v2181 = vmul.f32 %v1623, %v2117
  %v2182 = vmul.f32 %v1625, %v2118
  %v2183 = vmul.f32 %v1627, %v2119
  %v2184 = vmul.f32 %v1629, %v2120
  %v2185 = vmul.f32 %v1631, %v2121
  %v2186 = vmul.f32 %v1633, %v2122
  %v2187 = vmul.f32 %v1635, %v2123
  %v2188 = vmul.f32 %v1637, %v2124
  %v2189 = vmul.f32 %v1639, %v2125
  %v2190 = vmul.f32 %v1641, %v2126
  %v2191 = vmul.f32 %v1643, %v2127
  %v2192 = vmul.f32 %v1645, %v2128
  %v2193 = vmul.f32 %v1647, %v2129
  %v2194 = vmul.f32 %v1649, %v2130
  %v2195 = vmul.f32 %v1651, %v2131
  %v2196 = vmul.f32 %v1653, %v2132
  %v2197 = vmul.f32 %v1655, %v2133
  %v2198 = vmul.f32 %v1657, %v2134
  %v2199 = vmul.f32 %v1659, %v2135
  %v2200 = vmul.f32 %v1661, %v2136
  %v2201 = vmul.f32 %v1663, %v2137
  %v2202 = vmul.f32 %v1665, %v2138
  %v2203 = vmul.f32 %v1667, %v2139
  %v2204 = vmul.f32 %v1669, %v2140
  %v2205 = vmul.f32 %v1671, %v2141
  %v2206 = vmul.f32 %v1673, %v2142
  %v2207 = vmul.f32 %v1675, %v2143
  %v2208 = vmul.f32 %v1677, %v2144
  %v2209 = vmul.f32 %v1679, %v2145
  %v2210 = vmul.f32 %v1681, %v2146
  %v2211 = vmul.f32 %v1683, %v2147
  %v2212 = vmul.f32 %v1685, %v2148
  %v2213 = vmul.f32 %v1687, %v2149
  %v2214 = vmul.f32 %v1689, %v2150
  %v2215 = vmul.f32 %v1691, %v2151
  %v2216 = vmul.f32 %v1693, %v2152
  %v2217 = vmul.f32 %v1695, %v2153
  %v2218 = vmul.f32 %v1697, %v2154
  %v2219 = vmul.f32 %v1699, %v2155
  %v2220 = vmul.f32 %v1701, %v2156
  %v2221 = vmul.f32 %v1703, %v2157
  %v2222 = vmul.f32 %v1705, %v2158
  %v2223 = vmul.f32 %v1707, %v2159
  %v2224 = vmul.f32 %v1709, %v2160
  %v2225 = vmul.f32 %v1711, %v2161
  %v2226 = vmul.f32 %v1713, %v2162
  %v2227 = vmul.f32 %v1715, %v2163
  %v2228 = vmul.f32 %v1973, %v2164
  %v2229 = vmul.f32 %v1975, %v2165
  %v2230 = vmul.f32 %v1977, %v2166
  %v2231 = vmul.f32 %v1979, %v2167
  %v2232 = vmul.f32 %v1981, %v2168
  %v2233 = vmul.f32 %v1983, %v2169
  %v2234 = vmul.f32 %v1985, %v2170
  %v2235 = vmul.f32 %v1987, %v2171
  %v2236 = vmul.f32 %v1989, %v2172
  %v2237 = vmul.f32 %v1991, %v2173
  %v2238 = vmul.f32 %v1993, %v2174
  %v2239 = vmul.f32 %v1995, %v2175
  %v2240 = vmul.f32 %v1997, %v2176
  %v2241 = vmul.f32 %v1999, %v2177
  %v2242 = vmul.f32 %v2001, %v2178
  %v2243 = vmul.f32 %v2003, %v2179
  %v2244 = vmul.f32 %v2005, %v2180
  %v2245 = vmul.f32 %v2007, %v2181
  %v2246 = vmul.f32 %v2009, %v2182
  %v2247 = vmul.f32 %v2011, %v2183
  %v2248 = vmul.f32 %v2013, %v2184
  %v2249 = vmul.f32 %v2015, %v2185
  %v2250 = vmul.f32 %v2017, %v2186
  %v2251 = vmul.f32 %v2019, %v2187
  %v2252 = vmul.f32 %v2021, %v2188
  %v2253 = vmul.f32 %v2023, %v2189
  %v2254 = vmul.f32 %v2025, %v2190
  %v2255 = vmul.f32 %v2027, %v2191
  %v2256 = vmul.f32 %v2029, %v2192
  %v2257 = vmul.f32 %v2031, %v2193
  %v2258 = vmul.f32 %v2033, %v2194
  %v2259 = vmul.f32 %v2035, %v2195
  %v2260 = vmul.f32 %v2037, %v2196
  %v2261 = vmul.f32 %v2039, %v2197
  %v2262 = vmul.f32 %v2041, %v2198
  %v2263 = vmul.f32 %v2043, %v2199
  %v2264 = vmul.f32 %v2045, %v2200
  %v2265 = vmul.f32 %v2047, %v2201
  %v2266 = vmul.f32 %v2049, %v2202
  %v2267 = vmul.f32 %v2051, %v2203
  %v2268 = vmul.f32 %v2053, %v2204
  %v2269 = vmul.f32 %v2055, %v2205
  %v2270 = vmul.f32 %v2057, %v2206
  %v2271 = vmul.f32 %v2059, %v2207
  %v2272 = vmul.f32 %v2061, %v2208
  %v2273 = vmul.f32 %v2063, %v2209
  %v2274 = vmul.f32 %v2065, %v2210
  %v2275 = vmul.f32 %v2067, %v2211
  %v2276 = vmul.f32 %v2069, %v2212
  %v2277 = vmul.f32 %v2071, %v2213
  %v2278 = vmul.f32 %v2073, %v2214
  %v2279 = vmul.f32 %v2075, %v2215
  %v2280 = vmul.f32 %v2077, %v2216
  %v2281 = vmul.f32 %v2079, %v2217
  %v2282 = vmul.f32 %v2081, %v2218
  %v2283 = vmul.f32 %v2083, %v2219
  %v2284 = vmul.f32 %v2085, %v2220
  %v2285 = vmul.f32 %v2087, %v2221
  %v2286 = vmul.f32 %v2089, %v2222
  %v2287 = vmul.f32 %v2091, %v2223
  %v2288 = vmul.f32 %v2093, %v2224
  %v2289 = vmul.f32 %v2095, %v2225
  %v2290 = vmul.f32 %v2097, %v2226
  %v2291 = vmul.f32 %v2099, %v2227
  %vm2292 = vcmask 64512
  %2293 = vst.msk [vmem:[%s7] sm:$0xff] %vm2292, %v2228
  %2294 = vst.msk [vmem:[%s7 + $0x8] sm:$0xff] %vm2292, %v2229
  %2295 = vst.msk [vmem:[%s7 + $0x10] sm:$0xff] %vm2292, %v2230
  %2296 = vst.msk [vmem:[%s7 + $0x18] sm:$0xff] %vm2292, %v2231
  %2297 = vst.msk [vmem:[%s7 + $0x20] sm:$0xff] %vm2292, %v2232
  %2298 = vst.msk [vmem:[%s7 + $0x28] sm:$0xff] %vm2292, %v2233
  %2299 = vst.msk [vmem:[%s7 + $0x30] sm:$0xff] %vm2292, %v2234
  %2300 = vst.msk [vmem:[%s7 + $0x38] sm:$0xff] %vm2292, %v2235
  %2301 = vst.msk [vmem:[%s7 + $0x40] sm:$0xff] %vm2292, %v2236
  %2302 = vst.msk [vmem:[%s7 + $0x48] sm:$0xff] %vm2292, %v2237
  %2303 = vst.msk [vmem:[%s7 + $0x50] sm:$0xff] %vm2292, %v2238
  %2304 = vst.msk [vmem:[%s7 + $0x58] sm:$0xff] %vm2292, %v2239
  %2305 = vst.msk [vmem:[%s7 + $0x60] sm:$0xff] %vm2292, %v2240
  %2306 = vst.msk [vmem:[%s7 + $0x68] sm:$0xff] %vm2292, %v2241
  %2307 = vst.msk [vmem:[%s7 + $0x70] sm:$0xff] %vm2292, %v2242
  %2308 = vst.msk [vmem:[%s7 + $0x78] sm:$0xff] %vm2292, %v2243
  %2309 = vst.msk [vmem:[%s7 + $0x80] sm:$0xff] %vm2292, %v2244
  %2310 = vst.msk [vmem:[%s7 + $0x88] sm:$0xff] %vm2292, %v2245
  %2311 = vst.msk [vmem:[%s7 + $0x90] sm:$0xff] %vm2292, %v2246
  %2312 = vst.msk [vmem:[%s7 + $0x98] sm:$0xff] %vm2292, %v2247
  %2313 = vst.msk [vmem:[%s7 + $0xa0] sm:$0xff] %vm2292, %v2248
  %2314 = vst.msk [vmem:[%s7 + $0xa8] sm:$0xff] %vm2292, %v2249
  %2315 = vst.msk [vmem:[%s7 + $0xb0] sm:$0xff] %vm2292, %v2250
  %2316 = vst.msk [vmem:[%s7 + $0xb8] sm:$0xff] %vm2292, %v2251
  %2317 = vst.msk [vmem:[%s7 + $0xc0] sm:$0xff] %vm2292, %v2252
  %2318 = vst.msk [vmem:[%s7 + $0xc8] sm:$0xff] %vm2292, %v2253
  %2319 = vst.msk [vmem:[%s7 + $0xd0] sm:$0xff] %vm2292, %v2254
  %2320 = vst.msk [vmem:[%s7 + $0xd8] sm:$0xff] %vm2292, %v2255
  %2321 = vst.msk [vmem:[%s7 + $0xe0] sm:$0xff] %vm2292, %v2256
  %2322 = vst.msk [vmem:[%s7 + $0xe8] sm:$0xff] %vm2292, %v2257
  %2323 = vst.msk [vmem:[%s7 + $0xf0] sm:$0xff] %vm2292, %v2258
  %2324 = vst.msk [vmem:[%s7 + $0xf8] sm:$0xff] %vm2292, %v2259
  %2325 = vst.msk [vmem:[%s7 + $0x100] sm:$0xff] %vm2292, %v2260
  %2326 = vst.msk [vmem:[%s7 + $0x108] sm:$0xff] %vm2292, %v2261
  %2327 = vst.msk [vmem:[%s7 + $0x110] sm:$0xff] %vm2292, %v2262
  %2328 = vst.msk [vmem:[%s7 + $0x118] sm:$0xff] %vm2292, %v2263
  %2329 = vst.msk [vmem:[%s7 + $0x120] sm:$0xff] %vm2292, %v2264
  %2330 = vst.msk [vmem:[%s7 + $0x128] sm:$0xff] %vm2292, %v2265
  %2331 = vst.msk [vmem:[%s7 + $0x130] sm:$0xff] %vm2292, %v2266
  %2332 = vst.msk [vmem:[%s7 + $0x138] sm:$0xff] %vm2292, %v2267
  %2333 = vst.msk [vmem:[%s7 + $0x140] sm:$0xff] %vm2292, %v2268
  %2334 = vst.msk [vmem:[%s7 + $0x148] sm:$0xff] %vm2292, %v2269
  %2335 = vst.msk [vmem:[%s7 + $0x150] sm:$0xff] %vm2292, %v2270
  %2336 = vst.msk [vmem:[%s7 + $0x158] sm:$0xff] %vm2292, %v2271
  %2337 = vst.msk [vmem:[%s7 + $0x160] sm:$0xff] %vm2292, %v2272
  %2338 = vst.msk [vmem:[%s7 + $0x168] sm:$0xff] %vm2292, %v2273
  %2339 = vst.msk [vmem:[%s7 + $0x170] sm:$0xff] %vm2292, %v2274
  %2340 = vst.msk [vmem:[%s7 + $0x178] sm:$0xff] %vm2292, %v2275
  %2341 = vst.msk [vmem:[%s7 + $0x180] sm:$0xff] %vm2292, %v2276
  %2342 = vst.msk [vmem:[%s7 + $0x188] sm:$0xff] %vm2292, %v2277
  %2343 = vst.msk [vmem:[%s7 + $0x190] sm:$0xff] %vm2292, %v2278
  %2344 = vst.msk [vmem:[%s7 + $0x198] sm:$0xff] %vm2292, %v2279
  %2345 = vst.msk [vmem:[%s7 + $0x1a0] sm:$0xff] %vm2292, %v2280
  %2346 = vst.msk [vmem:[%s7 + $0x1a8] sm:$0xff] %vm2292, %v2281
  %2347 = vst.msk [vmem:[%s7 + $0x1b0] sm:$0xff] %vm2292, %v2282
  %2348 = vst.msk [vmem:[%s7 + $0x1b8] sm:$0xff] %vm2292, %v2283
  %2349 = vst.msk [vmem:[%s7 + $0x1c0] sm:$0xff] %vm2292, %v2284
  %2350 = vst.msk [vmem:[%s7 + $0x1c8] sm:$0xff] %vm2292, %v2285
  %2351 = vst.msk [vmem:[%s7 + $0x1d0] sm:$0xff] %vm2292, %v2286
  %2352 = vst.msk [vmem:[%s7 + $0x1d8] sm:$0xff] %vm2292, %v2287
  %2353 = vst.msk [vmem:[%s7 + $0x1e0] sm:$0xff] %vm2292, %v2288
  %2354 = vst.msk [vmem:[%s7 + $0x1e8] sm:$0xff] %vm2292, %v2289
  %2355 = vst.msk [vmem:[%s7 + $0x1f0] sm:$0xff] %vm2292, %v2290
  %2356 = vst.msk [vmem:[%s7 + $0x1f8] sm:$0xff] %vm2292, %v2291
  // Predicated region
  $region30: #{mab_forward.17} parent=0 // pred_check
    _
  $region31: #{mab_forward.17} parent=0 // pred_check_branch
    %2358 = sbr.rel (0) target = $region33
  $region32: #{mab_forward.17} parent=0 // pred_region
    _
  $region33: #{mab_forward.17} parent=0 // pred_fallthru
    _
  // Predicated region
  $region34: #{mab_forward.17} parent=0 // pred_check
    _
  $region35: #{mab_forward.17} parent=0 // pred_check_branch
    %2360 = sbr.rel (0) target = $region37
  $region36: #{mab_forward.17} parent=0 // pred_region
    _
  $region37: #{mab_forward.17} parent=0 // pred_fallthru
    _

// kernel: mab_forward.16
$region0: #{mab_forward.16}
  #allocation0 [shape = 'u32[]', space=smem, size = 0x4, offset = 0x4, fixed_abs, tag = 'smem constant byte address 0x4 - core index']
  #allocation1 [shape = 'u32[144,128]{1,0:T(1,128)}', space=vmem, size = 0x12000, scoped, tag = 'internal scratch']
  %s0 = inlined_call_operand.vmem [shape: f32[512,2], index: 0, kind: input, shape index: {}]
  %s1 = inlined_call_operand.vmem [shape: f32[512,2], index: 1, kind: input, shape index: {}]
  %s2 = inlined_call_operand.vmem [shape: f32[512,2], index: 2, kind: input, shape index: {}]
  %s3 = inlined_call_operand.vmem [shape: f32[512,2], index: 3, kind: input, shape index: {}]
  %s4 = inlined_call_operand.vmem [shape: f32[512,2], index: 4, kind: input, shape index: {}]
  %s5 = inlined_call_operand.vmem [shape: f32[512,2], index: 5, kind: input, shape index: {}]
  %s6 = inlined_call_operand.vmem [shape: f32[512,2], index: 6, kind: input, shape index: {}]
  %s7 = inlined_call_operand.vmem [shape: f32[512,2], index: 7, kind: input, shape index: {}]
  %s8 = inlined_call_operand.vmem [shape: f32[512,2], index: 8, kind: input, shape index: {}]
  %s9 = inlined_call_operand.vmem [shape: f32[9,2], index: 9, kind: input, shape index: {}]
  %s10 = inlined_call_operand.vmem [shape: f32[1,2], index: 10, kind: input, shape index: {}]
  %s11 = inlined_call_operand.vmem [shape: f32[512,2], index: 11, kind: output, shape index: {}]
  %s12 = sld [smem:[#allocation0]]
  $region54: #{mab_forward.16} parent=0
    _
  %s14 = ssub.s32 1, %s12
  %s15 = scalar_select 0, %s14, %s12
  // Predicated region
  $region2: #{mab_forward.16} parent=0 // pred_check
    _
  $region3: #{mab_forward.16} parent=0 // pred_check_branch
    %17 = sbr.rel (0) target = $region5
  $region4: #{mab_forward.16} parent=0 // pred_region
    _
  $region5: #{mab_forward.16} parent=0 // pred_fallthru
    _
  // Predicated region
  $region6: #{mab_forward.16} parent=0 // pred_check
    _
  $region7: #{mab_forward.16} parent=0 // pred_check_branch
    %19 = sbr.rel (0) target = $region9
  $region8: #{mab_forward.16} parent=0 // pred_region
    _
  $region9: #{mab_forward.16} parent=0 // pred_fallthru
    _
  // Predicated region
  $region10: #{mab_forward.16} parent=0 // pred_check
    _
  $region11: #{mab_forward.16} parent=0 // pred_check_branch
    %21 = sbr.rel (0) target = $region13
  $region12: #{mab_forward.16} parent=0 // pred_region
    _
  $region13: #{mab_forward.16} parent=0 // pred_fallthru
    _
  // Predicated region
  $region14: #{mab_forward.16} parent=0 // pred_check
    _
  $region15: #{mab_forward.16} parent=0 // pred_check_branch
    %23 = sbr.rel (0) target = $region17
  $region16: #{mab_forward.16} parent=0 // pred_region
    _
  $region17: #{mab_forward.16} parent=0 // pred_fallthru
    _
  // Predicated region
  $region18: #{mab_forward.16} parent=0 // pred_check
    _
  $region19: #{mab_forward.16} parent=0 // pred_check_branch
    %25 = sbr.rel (0) target = $region21
  $region20: #{mab_forward.16} parent=0 // pred_region
    _
  $region21: #{mab_forward.16} parent=0 // pred_fallthru
    _
  // Predicated region
  $region22: #{mab_forward.16} parent=0 // pred_check
    _
  $region23: #{mab_forward.16} parent=0 // pred_check_branch
    %27 = sbr.rel (0) target = $region25
  $region24: #{mab_forward.16} parent=0 // pred_region
    _
  $region25: #{mab_forward.16} parent=0 // pred_fallthru
    _
  // Predicated region
  $region26: #{mab_forward.16} parent=0 // pred_check
    _
  $region27: #{mab_forward.16} parent=0 // pred_check_branch
    %29 = sbr.rel (0) target = $region29
  $region28: #{mab_forward.16} parent=0 // pred_region
    _
  $region29: #{mab_forward.16} parent=0 // pred_fallthru
    _
  // Predicated region
  $region30: #{mab_forward.16} parent=0 // pred_check
    _
  $region31: #{mab_forward.16} parent=0 // pred_check_branch
    %31 = sbr.rel (0) target = $region33
  $region32: #{mab_forward.16} parent=0 // pred_region
    _
  $region33: #{mab_forward.16} parent=0 // pred_fallthru
    _
  // Predicated region
  $region34: #{mab_forward.16} parent=0 // pred_check
    _
  $region35: #{mab_forward.16} parent=0 // pred_check_branch
    %33 = sbr.rel (0) target = $region37
  $region36: #{mab_forward.16} parent=0 // pred_region
    _
  $region37: #{mab_forward.16} parent=0 // pred_fallthru
    _
  // Predicated region
  $region38: #{mab_forward.16} parent=0 // pred_check
    _
  $region39: #{mab_forward.16} parent=0 // pred_check_branch
    %35 = sbr.rel (0) target = $region41
  $region40: #{mab_forward.16} parent=0 // pred_region
    _
  $region41: #{mab_forward.16} parent=0 // pred_fallthru
    _
  // Predicated region
  $region42: #{mab_forward.16} parent=0 // pred_check
    _
  $region43: #{mab_forward.16} parent=0 // pred_check_branch
    %37 = sbr.rel (0) target = $region45
  $region44: #{mab_forward.16} parent=0 // pred_region
    _
  $region45: #{mab_forward.16} parent=0 // pred_fallthru
    _
  %v38 = vld [vmem:[%s10] sm:$0x1]
  %v40 = vlaneseq
  %v41 = vshrl.u32 %v40, 7
  %v42 = vsub.s32 0, %v41
  %v43 = vrot.slane %v38, %v42
  %v45 = vadd.f32 %v43, 0.0
  %v46 = vld [vmem:[%s0] sm:$0xff]
  %v47 = vld [vmem:[%s0 + $0x8] sm:$0xff]
  %v48 = vld [vmem:[%s0 + $0x10] sm:$0xff]
  %v49 = vld [vmem:[%s0 + $0x18] sm:$0xff]
  %v50 = vld [vmem:[%s0 + $0x20] sm:$0xff]
  %v51 = vld [vmem:[%s0 + $0x28] sm:$0xff]
  %v52 = vld [vmem:[%s0 + $0x30] sm:$0xff]
  %v53 = vld [vmem:[%s0 + $0x38] sm:$0xff]
  %v54 = vld [vmem:[%s0 + $0x40] sm:$0xff]
  %v55 = vld [vmem:[%s0 + $0x48] sm:$0xff]
  %v56 = vld [vmem:[%s0 + $0x50] sm:$0xff]
  %v57 = vld [vmem:[%s0 + $0x58] sm:$0xff]
  %v58 = vld [vmem:[%s0 + $0x60] sm:$0xff]
  %v59 = vld [vmem:[%s0 + $0x68] sm:$0xff]
  %v60 = vld [vmem:[%s0 + $0x70] sm:$0xff]
  %v61 = vld [vmem:[%s0 + $0x78] sm:$0xff]
  %v62 = vld [vmem:[%s0 + $0x80] sm:$0xff]
  %v63 = vld [vmem:[%s0 + $0x88] sm:$0xff]
  %v64 = vld [vmem:[%s0 + $0x90] sm:$0xff]
  %v65 = vld [vmem:[%s0 + $0x98] sm:$0xff]
  %v66 = vld [vmem:[%s0 + $0xa0] sm:$0xff]
  %v67 = vld [vmem:[%s0 + $0xa8] sm:$0xff]
  %v68 = vld [vmem:[%s0 + $0xb0] sm:$0xff]
  %v69 = vld [vmem:[%s0 + $0xb8] sm:$0xff]
  %v70 = vld [vmem:[%s0 + $0xc0] sm:$0xff]
  %v71 = vld [vmem:[%s0 + $0xc8] sm:$0xff]
  %v72 = vld [vmem:[%s0 + $0xd0] sm:$0xff]
  %v73 = vld [vmem:[%s0 + $0xd8] sm:$0xff]
  %v74 = vld [vmem:[%s0 + $0xe0] sm:$0xff]
  %v75 = vld [vmem:[%s0 + $0xe8] sm:$0xff]
  %v76 = vld [vmem:[%s0 + $0xf0] sm:$0xff]
  %v77 = vld [vmem:[%s0 + $0xf8] sm:$0xff]
  %v78 = vld [vmem:[%s0 + $0x100] sm:$0xff]
  %v79 = vld [vmem:[%s0 + $0x108] sm:$0xff]
  %v80 = vld [vmem:[%s0 + $0x110] sm:$0xff]
  %v81 = vld [vmem:[%s0 + $0x118] sm:$0xff]
  %v82 = vld [vmem:[%s0 + $0x120] sm:$0xff]
  %v83 = vld [vmem:[%s0 + $0x128] sm:$0xff]
  %v84 = vld [vmem:[%s0 + $0x130] sm:$0xff]
  %v85 = vld [vmem:[%s0 + $0x138] sm:$0xff]
  %v86 = vld [vmem:[%s0 + $0x140] sm:$0xff]
  %v87 = vld [vmem:[%s0 + $0x148] sm:$0xff]
  %v88 = vld [vmem:[%s0 + $0x150] sm:$0xff]
  %v89 = vld [vmem:[%s0 + $0x158] sm:$0xff]
  %v90 = vld [vmem:[%s0 + $0x160] sm:$0xff]
  %v91 = vld [vmem:[%s0 + $0x168] sm:$0xff]
  %v92 = vld [vmem:[%s0 + $0x170] sm:$0xff]
  %v93 = vld [vmem:[%s0 + $0x178] sm:$0xff]
  %v94 = vld [vmem:[%s0 + $0x180] sm:$0xff]
  %v95 = vld [vmem:[%s0 + $0x188] sm:$0xff]
  %v96 = vld [vmem:[%s0 + $0x190] sm:$0xff]
  %v97 = vld [vmem:[%s0 + $0x198] sm:$0xff]
  %v98 = vld [vmem:[%s0 + $0x1a0] sm:$0xff]
  %v99 = vld [vmem:[%s0 + $0x1a8] sm:$0xff]
  %v100 = vld [vmem:[%s0 + $0x1b0] sm:$0xff]
  %v101 = vld [vmem:[%s0 + $0x1b8] sm:$0xff]
  %v102 = vld [vmem:[%s0 + $0x1c0] sm:$0xff]
  %v103 = vld [vmem:[%s0 + $0x1c8] sm:$0xff]
  %v104 = vld [vmem:[%s0 + $0x1d0] sm:$0xff]
  %v105 = vld [vmem:[%s0 + $0x1d8] sm:$0xff]
  %v106 = vld [vmem:[%s0 + $0x1e0] sm:$0xff]
  %v107 = vld [vmem:[%s0 + $0x1e8] sm:$0xff]
  %v108 = vld [vmem:[%s0 + $0x1f0] sm:$0xff]
  %v109 = vld [vmem:[%s0 + $0x1f8] sm:$0xff]
  %v110 = vld [vmem:[%s9] sm:$0x1]
  %v111 = vlaneseq
  %v112 = vshrl.u32 %v111, 7
  %v113 = vsub.s32 0, %v112
  %v114 = vrot.slane %v110, %v113
  %v115 = vmul.f32 %v46, %v114
  %v116 = vmul.f32 %v47, %v114
  %v117 = vmul.f32 %v48, %v114
  %v118 = vmul.f32 %v49, %v114
  %v119 = vmul.f32 %v50, %v114
  %v120 = vmul.f32 %v51, %v114
  %v121 = vmul.f32 %v52, %v114
  %v122 = vmul.f32 %v53, %v114
  %v123 = vmul.f32 %v54, %v114
  %v124 = vmul.f32 %v55, %v114
  %v125 = vmul.f32 %v56, %v114
  %v126 = vmul.f32 %v57, %v114
  %v127 = vmul.f32 %v58, %v114
  %v128 = vmul.f32 %v59, %v114
  %v129 = vmul.f32 %v60, %v114
  %v130 = vmul.f32 %v61, %v114
  %v131 = vmul.f32 %v62, %v114
  %v132 = vmul.f32 %v63, %v114
  %v133 = vmul.f32 %v64, %v114
  %v134 = vmul.f32 %v65, %v114
  %v135 = vmul.f32 %v66, %v114
  %v136 = vmul.f32 %v67, %v114
  %v137 = vmul.f32 %v68, %v114
  %v138 = vmul.f32 %v69, %v114
  %v139 = vmul.f32 %v70, %v114
  %v140 = vmul.f32 %v71, %v114
  %v141 = vmul.f32 %v72, %v114
  %v142 = vmul.f32 %v73, %v114
  %v143 = vmul.f32 %v74, %v114
  %v144 = vmul.f32 %v75, %v114
  %v145 = vmul.f32 %v76, %v114
  %v146 = vmul.f32 %v77, %v114
  %v147 = vmul.f32 %v78, %v114
  %v148 = vmul.f32 %v79, %v114
  %v149 = vmul.f32 %v80, %v114
  %v150 = vmul.f32 %v81, %v114
  %v151 = vmul.f32 %v82, %v114
  %v152 = vmul.f32 %v83, %v114
  %v153 = vmul.f32 %v84, %v114
  %v154 = vmul.f32 %v85, %v114
  %v155 = vmul.f32 %v86, %v114
  %v156 = vmul.f32 %v87, %v114
  %v157 = vmul.f32 %v88, %v114
  %v158 = vmul.f32 %v89, %v114
  %v159 = vmul.f32 %v90, %v114
  %v160 = vmul.f32 %v91, %v114
  %v161 = vmul.f32 %v92, %v114
  %v162 = vmul.f32 %v93, %v114
  %v163 = vmul.f32 %v94, %v114
  %v164 = vmul.f32 %v95, %v114
  %v165 = vmul.f32 %v96, %v114
  %v166 = vmul.f32 %v97, %v114
  %v167 = vmul.f32 %v98, %v114
  %v168 = vmul.f32 %v99, %v114
  %v169 = vmul.f32 %v100, %v114
  %v170 = vmul.f32 %v101, %v114
  %v171 = vmul.f32 %v102, %v114
  %v172 = vmul.f32 %v103, %v114
  %v173 = vmul.f32 %v104, %v114
  %v174 = vmul.f32 %v105, %v114
  %v175 = vmul.f32 %v106, %v114
  %v176 = vmul.f32 %v107, %v114
  %v177 = vmul.f32 %v108, %v114
  %v178 = vmul.f32 %v109, %v114
  %v179 = vadd.f32 %v45, %v115
  %v180 = vadd.f32 %v45, %v116
  %v181 = vadd.f32 %v45, %v117
  %v182 = vadd.f32 %v45, %v118
  %v183 = vadd.f32 %v45, %v119
  %v184 = vadd.f32 %v45, %v120
  %v185 = vadd.f32 %v45, %v121
  %v186 = vadd.f32 %v45, %v122
  %v187 = vadd.f32 %v45, %v123
  %v188 = vadd.f32 %v45, %v124
  %v189 = vadd.f32 %v45, %v125
  %v190 = vadd.f32 %v45, %v126
  %v191 = vadd.f32 %v45, %v127
  %v192 = vadd.f32 %v45, %v128
  %v193 = vadd.f32 %v45, %v129
  %v194 = vadd.f32 %v45, %v130
  %v195 = vadd.f32 %v45, %v131
  %v196 = vadd.f32 %v45, %v132
  %v197 = vadd.f32 %v45, %v133
  %v198 = vadd.f32 %v45, %v134
  %v199 = vadd.f32 %v45, %v135
  %v200 = vadd.f32 %v45, %v136
  %v201 = vadd.f32 %v45, %v137
  %v202 = vadd.f32 %v45, %v138
  %v203 = vadd.f32 %v45, %v139
  %v204 = vadd.f32 %v45, %v140
  %v205 = vadd.f32 %v45, %v141
  %v206 = vadd.f32 %v45, %v142
  %v207 = vadd.f32 %v45, %v143
  %v208 = vadd.f32 %v45, %v144
  %v209 = vadd.f32 %v45, %v145
  %v210 = vadd.f32 %v45, %v146
  %v211 = vadd.f32 %v45, %v147
  %v212 = vadd.f32 %v45, %v148
  %v213 = vadd.f32 %v45, %v149
  %v214 = vadd.f32 %v45, %v150
  %v215 = vadd.f32 %v45, %v151
  %v216 = vadd.f32 %v45, %v152
  %v217 = vadd.f32 %v45, %v153
  %v218 = vadd.f32 %v45, %v154
  %v219 = vadd.f32 %v45, %v155
  %v220 = vadd.f32 %v45, %v156
  %v221 = vadd.f32 %v45, %v157
  %v222 = vadd.f32 %v45, %v158
  %v223 = vadd.f32 %v45, %v159
  %v224 = vadd.f32 %v45, %v160
  %v225 = vadd.f32 %v45, %v161
  %v226 = vadd.f32 %v45, %v162
  %v227 = vadd.f32 %v45, %v163
  %v228 = vadd.f32 %v45, %v164
  %v229 = vadd.f32 %v45, %v165
  %v230 = vadd.f32 %v45, %v166
  %v231 = vadd.f32 %v45, %v167
  %v232 = vadd.f32 %v45, %v168
  %v233 = vadd.f32 %v45, %v169
  %v234 = vadd.f32 %v45, %v170
  %v235 = vadd.f32 %v45, %v171
  %v236 = vadd.f32 %v45, %v172
  %v237 = vadd.f32 %v45, %v173
  %v238 = vadd.f32 %v45, %v174
  %v239 = vadd.f32 %v45, %v175
  %v240 = vadd.f32 %v45, %v176
  %v241 = vadd.f32 %v45, %v177
  %v242 = vadd.f32 %v45, %v178
  %v243 = vld [vmem:[%s1] sm:$0xff]
  %v244 = vld [vmem:[%s1 + $0x8] sm:$0xff]
  %v245 = vld [vmem:[%s1 + $0x10] sm:$0xff]
  %v246 = vld [vmem:[%s1 + $0x18] sm:$0xff]
  %v247 = vld [vmem:[%s1 + $0x20] sm:$0xff]
  %v248 = vld [vmem:[%s1 + $0x28] sm:$0xff]
  %v249 = vld [vmem:[%s1 + $0x30] sm:$0xff]
  %v250 = vld [vmem:[%s1 + $0x38] sm:$0xff]
  %v251 = vld [vmem:[%s1 + $0x40] sm:$0xff]
  %v252 = vld [vmem:[%s1 + $0x48] sm:$0xff]
  %v253 = vld [vmem:[%s1 + $0x50] sm:$0xff]
  %v254 = vld [vmem:[%s1 + $0x58] sm:$0xff]
  %v255 = vld [vmem:[%s1 + $0x60] sm:$0xff]
  %v256 = vld [vmem:[%s1 + $0x68] sm:$0xff]
  %v257 = vld [vmem:[%s1 + $0x70] sm:$0xff]
  %v258 = vld [vmem:[%s1 + $0x78] sm:$0xff]
  %v259 = vld [vmem:[%s1 + $0x80] sm:$0xff]
  %v260 = vld [vmem:[%s1 + $0x88] sm:$0xff]
  %v261 = vld [vmem:[%s1 + $0x90] sm:$0xff]
  %v262 = vld [vmem:[%s1 + $0x98] sm:$0xff]
  %v263 = vld [vmem:[%s1 + $0xa0] sm:$0xff]
  %v264 = vld [vmem:[%s1 + $0xa8] sm:$0xff]
  %v265 = vld [vmem:[%s1 + $0xb0] sm:$0xff]
  %v266 = vld [vmem:[%s1 + $0xb8] sm:$0xff]
  %v267 = vld [vmem:[%s1 + $0xc0] sm:$0xff]
  %v268 = vld [vmem:[%s1 + $0xc8] sm:$0xff]
  %v269 = vld [vmem:[%s1 + $0xd0] sm:$0xff]
  %v270 = vld [vmem:[%s1 + $0xd8] sm:$0xff]
  %v271 = vld [vmem:[%s1 + $0xe0] sm:$0xff]
  %v272 = vld [vmem:[%s1 + $0xe8] sm:$0xff]
  %v273 = vld [vmem:[%s1 + $0xf0] sm:$0xff]
  %v274 = vld [vmem:[%s1 + $0xf8] sm:$0xff]
  %v275 = vld [vmem:[%s1 + $0x100] sm:$0xff]
  %v276 = vld [vmem:[%s1 + $0x108] sm:$0xff]
  %v277 = vld [vmem:[%s1 + $0x110] sm:$0xff]
  %v278 = vld [vmem:[%s1 + $0x118] sm:$0xff]
  %v279 = vld [vmem:[%s1 + $0x120] sm:$0xff]
  %v280 = vld [vmem:[%s1 + $0x128] sm:$0xff]
  %v281 = vld [vmem:[%s1 + $0x130] sm:$0xff]
  %v282 = vld [vmem:[%s1 + $0x138] sm:$0xff]
  %v283 = vld [vmem:[%s1 + $0x140] sm:$0xff]
  %v284 = vld [vmem:[%s1 + $0x148] sm:$0xff]
  %v285 = vld [vmem:[%s1 + $0x150] sm:$0xff]
  %v286 = vld [vmem:[%s1 + $0x158] sm:$0xff]
  %v287 = vld [vmem:[%s1 + $0x160] sm:$0xff]
  %v288 = vld [vmem:[%s1 + $0x168] sm:$0xff]
  %v289 = vld [vmem:[%s1 + $0x170] sm:$0xff]
  %v290 = vld [vmem:[%s1 + $0x178] sm:$0xff]
  %v291 = vld [vmem:[%s1 + $0x180] sm:$0xff]
  %v292 = vld [vmem:[%s1 + $0x188] sm:$0xff]
  %v293 = vld [vmem:[%s1 + $0x190] sm:$0xff]
  %v294 = vld [vmem:[%s1 + $0x198] sm:$0xff]
  %v295 = vld [vmem:[%s1 + $0x1a0] sm:$0xff]
  %v296 = vld [vmem:[%s1 + $0x1a8] sm:$0xff]
  %v297 = vld [vmem:[%s1 + $0x1b0] sm:$0xff]
  %v298 = vld [vmem:[%s1 + $0x1b8] sm:$0xff]
  %v299 = vld [vmem:[%s1 + $0x1c0] sm:$0xff]
  %v300 = vld [vmem:[%s1 + $0x1c8] sm:$0xff]
  %v301 = vld [vmem:[%s1 + $0x1d0] sm:$0xff]
  %v302 = vld [vmem:[%s1 + $0x1d8] sm:$0xff]
  %v303 = vld [vmem:[%s1 + $0x1e0] sm:$0xff]
  %v304 = vld [vmem:[%s1 + $0x1e8] sm:$0xff]
  %v305 = vld [vmem:[%s1 + $0x1f0] sm:$0xff]
  %v306 = vld [vmem:[%s1 + $0x1f8] sm:$0xff]
  %v307 = vld [vmem:[%s9 + $0x1] sm:$0x1]
  %v308 = vlaneseq
  %v309 = vshrl.u32 %v308, 7
  %v310 = vsub.s32 0, %v309
  %v311 = vrot.slane %v307, %v310
  %v312 = vmul.f32 %v243, %v311
  %v313 = vmul.f32 %v244, %v311
  %v314 = vmul.f32 %v245, %v311
  %v315 = vmul.f32 %v246, %v311
  %v316 = vmul.f32 %v247, %v311
  %v317 = vmul.f32 %v248, %v311
  %v318 = vmul.f32 %v249, %v311
  %v319 = vmul.f32 %v250, %v311
  %v320 = vmul.f32 %v251, %v311
  %v321 = vmul.f32 %v252, %v311
  %v322 = vmul.f32 %v253, %v311
  %v323 = vmul.f32 %v254, %v311
  %v324 = vmul.f32 %v255, %v311
  %v325 = vmul.f32 %v256, %v311
  %v326 = vmul.f32 %v257, %v311
  %v327 = vmul.f32 %v258, %v311
  %v328 = vmul.f32 %v259, %v311
  %v329 = vmul.f32 %v260, %v311
  %v330 = vmul.f32 %v261, %v311
  %v331 = vmul.f32 %v262, %v311
  %v332 = vmul.f32 %v263, %v311
  %v333 = vmul.f32 %v264, %v311
  %v334 = vmul.f32 %v265, %v311
  %v335 = vmul.f32 %v266, %v311
  %v336 = vmul.f32 %v267, %v311
  %v337 = vmul.f32 %v268, %v311
  %v338 = vmul.f32 %v269, %v311
  %v339 = vmul.f32 %v270, %v311
  %v340 = vmul.f32 %v271, %v311
  %v341 = vmul.f32 %v272, %v311
  %v342 = vmul.f32 %v273, %v311
  %v343 = vmul.f32 %v274, %v311
  %v344 = vmul.f32 %v275, %v311
  %v345 = vmul.f32 %v276, %v311
  %v346 = vmul.f32 %v277, %v311
  %v347 = vmul.f32 %v278, %v311
  %v348 = vmul.f32 %v279, %v311
  %v349 = vmul.f32 %v280, %v311
  %v350 = vmul.f32 %v281, %v311
  %v351 = vmul.f32 %v282, %v311
  %v352 = vmul.f32 %v283, %v311
  %v353 = vmul.f32 %v284, %v311
  %v354 = vmul.f32 %v285, %v311
  %v355 = vmul.f32 %v286, %v311
  %v356 = vmul.f32 %v287, %v311
  %v357 = vmul.f32 %v288, %v311
  %v358 = vmul.f32 %v289, %v311
  %v359 = vmul.f32 %v290, %v311
  %v360 = vmul.f32 %v291, %v311
  %v361 = vmul.f32 %v292, %v311
  %v362 = vmul.f32 %v293, %v311
  %v363 = vmul.f32 %v294, %v311
  %v364 = vmul.f32 %v295, %v311
  %v365 = vmul.f32 %v296, %v311
  %v366 = vmul.f32 %v297, %v311
  %v367 = vmul.f32 %v298, %v311
  %v368 = vmul.f32 %v299, %v311
  %v369 = vmul.f32 %v300, %v311
  %v370 = vmul.f32 %v301, %v311
  %v371 = vmul.f32 %v302, %v311
  %v372 = vmul.f32 %v303, %v311
  %v373 = vmul.f32 %v304, %v311
  %v374 = vmul.f32 %v305, %v311
  %v375 = vmul.f32 %v306, %v311
  %v376 = vadd.f32 %v179, %v312
  %v377 = vadd.f32 %v180, %v313
  %v378 = vadd.f32 %v181, %v314
  %v379 = vadd.f32 %v182, %v315
  %v380 = vadd.f32 %v183, %v316
  %v381 = vadd.f32 %v184, %v317
  %v382 = vadd.f32 %v185, %v318
  %v383 = vadd.f32 %v186, %v319
  %v384 = vadd.f32 %v187, %v320
  %v385 = vadd.f32 %v188, %v321
  %v386 = vadd.f32 %v189, %v322
  %v387 = vadd.f32 %v190, %v323
  %v388 = vadd.f32 %v191, %v324
  %v389 = vadd.f32 %v192, %v325
  %v390 = vadd.f32 %v193, %v326
  %v391 = vadd.f32 %v194, %v327
  %v392 = vadd.f32 %v195, %v328
  %v393 = vadd.f32 %v196, %v329
  %v394 = vadd.f32 %v197, %v330
  %v395 = vadd.f32 %v198, %v331
  %v396 = vadd.f32 %v199, %v332
  %v397 = vadd.f32 %v200, %v333
  %v398 = vadd.f32 %v201, %v334
  %v399 = vadd.f32 %v202, %v335
  %v400 = vadd.f32 %v203, %v336
  %v401 = vadd.f32 %v204, %v337
  %v402 = vadd.f32 %v205, %v338
  %v403 = vadd.f32 %v206, %v339
  %v404 = vadd.f32 %v207, %v340
  %v405 = vadd.f32 %v208, %v341
  %v406 = vadd.f32 %v209, %v342
  %v407 = vadd.f32 %v210, %v343
  %v408 = vadd.f32 %v211, %v344
  %v409 = vadd.f32 %v212, %v345
  %v410 = vadd.f32 %v213, %v346
  %v411 = vadd.f32 %v214, %v347
  %v412 = vadd.f32 %v215, %v348
  %v413 = vadd.f32 %v216, %v349
  %v414 = vadd.f32 %v217, %v350
  %v415 = vadd.f32 %v218, %v351
  %v416 = vadd.f32 %v219, %v352
  %v417 = vadd.f32 %v220, %v353
  %v418 = vadd.f32 %v221, %v354
  %v419 = vadd.f32 %v222, %v355
  %v420 = vadd.f32 %v223, %v356
  %v421 = vadd.f32 %v224, %v357
  %v422 = vadd.f32 %v225, %v358
  %v423 = vadd.f32 %v226, %v359
  %v424 = vadd.f32 %v227, %v360
  %v425 = vadd.f32 %v228, %v361
  %v426 = vadd.f32 %v229, %v362
  %v427 = vadd.f32 %v230, %v363
  %v428 = vadd.f32 %v231, %v364
  %v429 = vadd.f32 %v232, %v365
  %v430 = vadd.f32 %v233, %v366
  %v431 = vadd.f32 %v234, %v367
  %v432 = vadd.f32 %v235, %v368
  %v433 = vadd.f32 %v236, %v369
  %v434 = vadd.f32 %v237, %v370
  %v435 = vadd.f32 %v238, %v371
  %v436 = vadd.f32 %v239, %v372
  %v437 = vadd.f32 %v240, %v373
  %v438 = vadd.f32 %v241, %v374
  %v439 = vadd.f32 %v242, %v375
  %v440 = vld [vmem:[%s2] sm:$0xff]
  %v441 = vld [vmem:[%s2 + $0x8] sm:$0xff]
  %v442 = vld [vmem:[%s2 + $0x10] sm:$0xff]
  %v443 = vld [vmem:[%s2 + $0x18] sm:$0xff]
  %v444 = vld [vmem:[%s2 + $0x20] sm:$0xff]
  %v445 = vld [vmem:[%s2 + $0x28] sm:$0xff]
  %v446 = vld [vmem:[%s2 + $0x30] sm:$0xff]
  %v447 = vld [vmem:[%s2 + $0x38] sm:$0xff]
  %v448 = vld [vmem:[%s2 + $0x40] sm:$0xff]
  %v449 = vld [vmem:[%s2 + $0x48] sm:$0xff]
  %v450 = vld [vmem:[%s2 + $0x50] sm:$0xff]
  %v451 = vld [vmem:[%s2 + $0x58] sm:$0xff]
  %v452 = vld [vmem:[%s2 + $0x60] sm:$0xff]
  %v453 = vld [vmem:[%s2 + $0x68] sm:$0xff]
  %v454 = vld [vmem:[%s2 + $0x70] sm:$0xff]
  %v455 = vld [vmem:[%s2 + $0x78] sm:$0xff]
  %v456 = vld [vmem:[%s2 + $0x80] sm:$0xff]
  %v457 = vld [vmem:[%s2 + $0x88] sm:$0xff]
  %v458 = vld [vmem:[%s2 + $0x90] sm:$0xff]
  %v459 = vld [vmem:[%s2 + $0x98] sm:$0xff]
  %v460 = vld [vmem:[%s2 + $0xa0] sm:$0xff]
  %v461 = vld [vmem:[%s2 + $0xa8] sm:$0xff]
  %v462 = vld [vmem:[%s2 + $0xb0] sm:$0xff]
  %v463 = vld [vmem:[%s2 + $0xb8] sm:$0xff]
  %v464 = vld [vmem:[%s2 + $0xc0] sm:$0xff]
  %v465 = vld [vmem:[%s2 + $0xc8] sm:$0xff]
  %v466 = vld [vmem:[%s2 + $0xd0] sm:$0xff]
  %v467 = vld [vmem:[%s2 + $0xd8] sm:$0xff]
  %v468 = vld [vmem:[%s2 + $0xe0] sm:$0xff]
  %v469 = vld [vmem:[%s2 + $0xe8] sm:$0xff]
  %v470 = vld [vmem:[%s2 + $0xf0] sm:$0xff]
  %v471 = vld [vmem:[%s2 + $0xf8] sm:$0xff]
  %v472 = vld [vmem:[%s2 + $0x100] sm:$0xff]
  %v473 = vld [vmem:[%s2 + $0x108] sm:$0xff]
  %v474 = vld [vmem:[%s2 + $0x110] sm:$0xff]
  %v475 = vld [vmem:[%s2 + $0x118] sm:$0xff]
  %v476 = vld [vmem:[%s2 + $0x120] sm:$0xff]
  %v477 = vld [vmem:[%s2 + $0x128] sm:$0xff]
  %v478 = vld [vmem:[%s2 + $0x130] sm:$0xff]
  %v479 = vld [vmem:[%s2 + $0x138] sm:$0xff]
  %v480 = vld [vmem:[%s2 + $0x140] sm:$0xff]
  %v481 = vld [vmem:[%s2 + $0x148] sm:$0xff]
  %v482 = vld [vmem:[%s2 + $0x150] sm:$0xff]
  %v483 = vld [vmem:[%s2 + $0x158] sm:$0xff]
  %v484 = vld [vmem:[%s2 + $0x160] sm:$0xff]
  %v485 = vld [vmem:[%s2 + $0x168] sm:$0xff]
  %v486 = vld [vmem:[%s2 + $0x170] sm:$0xff]
  %v487 = vld [vmem:[%s2 + $0x178] sm:$0xff]
  %v488 = vld [vmem:[%s2 + $0x180] sm:$0xff]
  %v489 = vld [vmem:[%s2 + $0x188] sm:$0xff]
  %v490 = vld [vmem:[%s2 + $0x190] sm:$0xff]
  %v491 = vld [vmem:[%s2 + $0x198] sm:$0xff]
  %v492 = vld [vmem:[%s2 + $0x1a0] sm:$0xff]
  %v493 = vld [vmem:[%s2 + $0x1a8] sm:$0xff]
  %v494 = vld [vmem:[%s2 + $0x1b0] sm:$0xff]
  %v495 = vld [vmem:[%s2 + $0x1b8] sm:$0xff]
  %v496 = vld [vmem:[%s2 + $0x1c0] sm:$0xff]
  %v497 = vld [vmem:[%s2 + $0x1c8] sm:$0xff]
  %v498 = vld [vmem:[%s2 + $0x1d0] sm:$0xff]
  %v499 = vld [vmem:[%s2 + $0x1d8] sm:$0xff]
  %v500 = vld [vmem:[%s2 + $0x1e0] sm:$0xff]
  %v501 = vld [vmem:[%s2 + $0x1e8] sm:$0xff]
  %v502 = vld [vmem:[%s2 + $0x1f0] sm:$0xff]
  %v503 = vld [vmem:[%s2 + $0x1f8] sm:$0xff]
  %v504 = vld [vmem:[%s9 + $0x2] sm:$0x1]
  %v505 = vlaneseq
  %v506 = vshrl.u32 %v505, 7
  %v507 = vsub.s32 0, %v506
  %v508 = vrot.slane %v504, %v507
  %v509 = vmul.f32 %v440, %v508
  %v510 = vmul.f32 %v441, %v508
  %v511 = vmul.f32 %v442, %v508
  %v512 = vmul.f32 %v443, %v508
  %v513 = vmul.f32 %v444, %v508
  %v514 = vmul.f32 %v445, %v508
  %v515 = vmul.f32 %v446, %v508
  %v516 = vmul.f32 %v447, %v508
  %v517 = vmul.f32 %v448, %v508
  %v518 = vmul.f32 %v449, %v508
  %v519 = vmul.f32 %v450, %v508
  %v520 = vmul.f32 %v451, %v508
  %v521 = vmul.f32 %v452, %v508
  %v522 = vmul.f32 %v453, %v508
  %v523 = vmul.f32 %v454, %v508
  %v524 = vmul.f32 %v455, %v508
  %v525 = vmul.f32 %v456, %v508
  %v526 = vmul.f32 %v457, %v508
  %v527 = vmul.f32 %v458, %v508
  %v528 = vmul.f32 %v459, %v508
  %v529 = vmul.f32 %v460, %v508
  %v530 = vmul.f32 %v461, %v508
  %v531 = vmul.f32 %v462, %v508
  %v532 = vmul.f32 %v463, %v508
  %v533 = vmul.f32 %v464, %v508
  %v534 = vmul.f32 %v465, %v508
  %v535 = vmul.f32 %v466, %v508
  %v536 = vmul.f32 %v467, %v508
  %v537 = vmul.f32 %v468, %v508
  %v538 = vmul.f32 %v469, %v508
  %v539 = vmul.f32 %v470, %v508
  %v540 = vmul.f32 %v471, %v508
  %v541 = vmul.f32 %v472, %v508
  %v542 = vmul.f32 %v473, %v508
  %v543 = vmul.f32 %v474, %v508
  %v544 = vmul.f32 %v475, %v508
  %v545 = vmul.f32 %v476, %v508
  %v546 = vmul.f32 %v477, %v508
  %v547 = vmul.f32 %v478, %v508
  %v548 = vmul.f32 %v479, %v508
  %v549 = vmul.f32 %v480, %v508
  %v550 = vmul.f32 %v481, %v508
  %v551 = vmul.f32 %v482, %v508
  %v552 = vmul.f32 %v483, %v508
  %v553 = vmul.f32 %v484, %v508
  %v554 = vmul.f32 %v485, %v508
  %v555 = vmul.f32 %v486, %v508
  %v556 = vmul.f32 %v487, %v508
  %v557 = vmul.f32 %v488, %v508
  %v558 = vmul.f32 %v489, %v508
  %v559 = vmul.f32 %v490, %v508
  %v560 = vmul.f32 %v491, %v508
  %v561 = vmul.f32 %v492, %v508
  %v562 = vmul.f32 %v493, %v508
  %v563 = vmul.f32 %v494, %v508
  %v564 = vmul.f32 %v495, %v508
  %v565 = vmul.f32 %v496, %v508
  %v566 = vmul.f32 %v497, %v508
  %v567 = vmul.f32 %v498, %v508
  %v568 = vmul.f32 %v499, %v508
  %v569 = vmul.f32 %v500, %v508
  %v570 = vmul.f32 %v501, %v508
  %v571 = vmul.f32 %v502, %v508
  %v572 = vmul.f32 %v503, %v508
  %v573 = vadd.f32 %v376, %v509
  %v574 = vadd.f32 %v377, %v510
  %v575 = vadd.f32 %v378, %v511
  %v576 = vadd.f32 %v379, %v512
  %v577 = vadd.f32 %v380, %v513
  %v578 = vadd.f32 %v381, %v514
  %v579 = vadd.f32 %v382, %v515
  %v580 = vadd.f32 %v383, %v516
  %v581 = vadd.f32 %v384, %v517
  %v582 = vadd.f32 %v385, %v518
  %v583 = vadd.f32 %v386, %v519
  %v584 = vadd.f32 %v387, %v520
  %v585 = vadd.f32 %v388, %v521
  %v586 = vadd.f32 %v389, %v522
  %v587 = vadd.f32 %v390, %v523
  %v588 = vadd.f32 %v391, %v524
  %v589 = vadd.f32 %v392, %v525
  %v590 = vadd.f32 %v393, %v526
  %v591 = vadd.f32 %v394, %v527
  %v592 = vadd.f32 %v395, %v528
  %v593 = vadd.f32 %v396, %v529
  %v594 = vadd.f32 %v397, %v530
  %v595 = vadd.f32 %v398, %v531
  %v596 = vadd.f32 %v399, %v532
  %v597 = vadd.f32 %v400, %v533
  %v598 = vadd.f32 %v401, %v534
  %v599 = vadd.f32 %v402, %v535
  %v600 = vadd.f32 %v403, %v536
  %v601 = vadd.f32 %v404, %v537
  %v602 = vadd.f32 %v405, %v538
  %v603 = vadd.f32 %v406, %v539
  %v604 = vadd.f32 %v407, %v540
  %v605 = vadd.f32 %v408, %v541
  %v606 = vadd.f32 %v409, %v542
  %v607 = vadd.f32 %v410, %v543
  %v608 = vadd.f32 %v411, %v544
  %v609 = vadd.f32 %v412, %v545
  %v610 = vadd.f32 %v413, %v546
  %v611 = vadd.f32 %v414, %v547
  %v612 = vadd.f32 %v415, %v548
  %v613 = vadd.f32 %v416, %v549
  %v614 = vadd.f32 %v417, %v550
  %v615 = vadd.f32 %v418, %v551
  %v616 = vadd.f32 %v419, %v552
  %v617 = vadd.f32 %v420, %v553
  %v618 = vadd.f32 %v421, %v554
  %v619 = vadd.f32 %v422, %v555
  %v620 = vadd.f32 %v423, %v556
  %v621 = vadd.f32 %v424, %v557
  %v622 = vadd.f32 %v425, %v558
  %v623 = vadd.f32 %v426, %v559
  %v624 = vadd.f32 %v427, %v560
  %v625 = vadd.f32 %v428, %v561
  %v626 = vadd.f32 %v429, %v562
  %v627 = vadd.f32 %v430, %v563
  %v628 = vadd.f32 %v431, %v564
  %v629 = vadd.f32 %v432, %v565
  %v630 = vadd.f32 %v433, %v566
  %v631 = vadd.f32 %v434, %v567
  %v632 = vadd.f32 %v435, %v568
  %v633 = vadd.f32 %v436, %v569
  %v634 = vadd.f32 %v437, %v570
  %v635 = vadd.f32 %v438, %v571
  %v636 = vadd.f32 %v439, %v572
  %v637 = vld [vmem:[%s3] sm:$0xff]
  %v638 = vld [vmem:[%s3 + $0x8] sm:$0xff]
  %v639 = vld [vmem:[%s3 + $0x10] sm:$0xff]
  %v640 = vld [vmem:[%s3 + $0x18] sm:$0xff]
  %v641 = vld [vmem:[%s3 + $0x20] sm:$0xff]
  %v642 = vld [vmem:[%s3 + $0x28] sm:$0xff]
  %v643 = vld [vmem:[%s3 + $0x30] sm:$0xff]
  %v644 = vld [vmem:[%s3 + $0x38] sm:$0xff]
  %v645 = vld [vmem:[%s3 + $0x40] sm:$0xff]
  %v646 = vld [vmem:[%s3 + $0x48] sm:$0xff]
  %v647 = vld [vmem:[%s3 + $0x50] sm:$0xff]
  %v648 = vld [vmem:[%s3 + $0x58] sm:$0xff]
  %v649 = vld [vmem:[%s3 + $0x60] sm:$0xff]
  %v650 = vld [vmem:[%s3 + $0x68] sm:$0xff]
  %v651 = vld [vmem:[%s3 + $0x70] sm:$0xff]
  %v652 = vld [vmem:[%s3 + $0x78] sm:$0xff]
  %v653 = vld [vmem:[%s3 + $0x80] sm:$0xff]
  %v654 = vld [vmem:[%s3 + $0x88] sm:$0xff]
  %v655 = vld [vmem:[%s3 + $0x90] sm:$0xff]
  %v656 = vld [vmem:[%s3 + $0x98] sm:$0xff]
  %v657 = vld [vmem:[%s3 + $0xa0] sm:$0xff]
  %v658 = vld [vmem:[%s3 + $0xa8] sm:$0xff]
  %v659 = vld [vmem:[%s3 + $0xb0] sm:$0xff]
  %v660 = vld [vmem:[%s3 + $0xb8] sm:$0xff]
  %v661 = vld [vmem:[%s3 + $0xc0] sm:$0xff]
  %v662 = vld [vmem:[%s3 + $0xc8] sm:$0xff]
  %v663 = vld [vmem:[%s3 + $0xd0] sm:$0xff]
  %v664 = vld [vmem:[%s3 + $0xd8] sm:$0xff]
  %v665 = vld [vmem:[%s3 + $0xe0] sm:$0xff]
  %v666 = vld [vmem:[%s3 + $0xe8] sm:$0xff]
  %v667 = vld [vmem:[%s3 + $0xf0] sm:$0xff]
  %v668 = vld [vmem:[%s3 + $0xf8] sm:$0xff]
  %v669 = vld [vmem:[%s3 + $0x100] sm:$0xff]
  %v670 = vld [vmem:[%s3 + $0x108] sm:$0xff]
  %v671 = vld [vmem:[%s3 + $0x110] sm:$0xff]
  %v672 = vld [vmem:[%s3 + $0x118] sm:$0xff]
  %v673 = vld [vmem:[%s3 + $0x120] sm:$0xff]
  %v674 = vld [vmem:[%s3 + $0x128] sm:$0xff]
  %v675 = vld [vmem:[%s3 + $0x130] sm:$0xff]
  %v676 = vld [vmem:[%s3 + $0x138] sm:$0xff]
  %v677 = vld [vmem:[%s3 + $0x140] sm:$0xff]
  %v678 = vld [vmem:[%s3 + $0x148] sm:$0xff]
  %v679 = vld [vmem:[%s3 + $0x150] sm:$0xff]
  %v680 = vld [vmem:[%s3 + $0x158] sm:$0xff]
  %v681 = vld [vmem:[%s3 + $0x160] sm:$0xff]
  %v682 = vld [vmem:[%s3 + $0x168] sm:$0xff]
  %v683 = vld [vmem:[%s3 + $0x170] sm:$0xff]
  %v684 = vld [vmem:[%s3 + $0x178] sm:$0xff]
  %v685 = vld [vmem:[%s3 + $0x180] sm:$0xff]
  %v686 = vld [vmem:[%s3 + $0x188] sm:$0xff]
  %v687 = vld [vmem:[%s3 + $0x190] sm:$0xff]
  %v688 = vld [vmem:[%s3 + $0x198] sm:$0xff]
  %v689 = vld [vmem:[%s3 + $0x1a0] sm:$0xff]
  %v690 = vld [vmem:[%s3 + $0x1a8] sm:$0xff]
  %v691 = vld [vmem:[%s3 + $0x1b0] sm:$0xff]
  %v692 = vld [vmem:[%s3 + $0x1b8] sm:$0xff]
  %v693 = vld [vmem:[%s3 + $0x1c0] sm:$0xff]
  %v694 = vld [vmem:[%s3 + $0x1c8] sm:$0xff]
  %v695 = vld [vmem:[%s3 + $0x1d0] sm:$0xff]
  %v696 = vld [vmem:[%s3 + $0x1d8] sm:$0xff]
  %v697 = vld [vmem:[%s3 + $0x1e0] sm:$0xff]
  %v698 = vld [vmem:[%s3 + $0x1e8] sm:$0xff]
  %v699 = vld [vmem:[%s3 + $0x1f0] sm:$0xff]
  %v700 = vld [vmem:[%s3 + $0x1f8] sm:$0xff]
  %v701 = vld [vmem:[%s9 + $0x3] sm:$0x1]
  %v702 = vlaneseq
  %v703 = vshrl.u32 %v702, 7
  %v704 = vsub.s32 0, %v703
  %v705 = vrot.slane %v701, %v704
  %v706 = vmul.f32 %v637, %v705
  %v707 = vmul.f32 %v638, %v705
  %v708 = vmul.f32 %v639, %v705
  %v709 = vmul.f32 %v640, %v705
  %v710 = vmul.f32 %v641, %v705
  %v711 = vmul.f32 %v642, %v705
  %v712 = vmul.f32 %v643, %v705
  %v713 = vmul.f32 %v644, %v705
  %v714 = vmul.f32 %v645, %v705
  %v715 = vmul.f32 %v646, %v705
  %v716 = vmul.f32 %v647, %v705
  %v717 = vmul.f32 %v648, %v705
  %v718 = vmul.f32 %v649, %v705
  %v719 = vmul.f32 %v650, %v705
  %v720 = vmul.f32 %v651, %v705
  %v721 = vmul.f32 %v652, %v705
  %v722 = vmul.f32 %v653, %v705
  %v723 = vmul.f32 %v654, %v705
  %v724 = vmul.f32 %v655, %v705
  %v725 = vmul.f32 %v656, %v705
  %v726 = vmul.f32 %v657, %v705
  %v727 = vmul.f32 %v658, %v705
  %v728 = vmul.f32 %v659, %v705
  %v729 = vmul.f32 %v660, %v705
  %v730 = vmul.f32 %v661, %v705
  %v731 = vmul.f32 %v662, %v705
  %v732 = vmul.f32 %v663, %v705
  %v733 = vmul.f32 %v664, %v705
  %v734 = vmul.f32 %v665, %v705
  %v735 = vmul.f32 %v666, %v705
  %v736 = vmul.f32 %v667, %v705
  %v737 = vmul.f32 %v668, %v705
  %v738 = vmul.f32 %v669, %v705
  %v739 = vmul.f32 %v670, %v705
  %v740 = vmul.f32 %v671, %v705
  %v741 = vmul.f32 %v672, %v705
  %v742 = vmul.f32 %v673, %v705
  %v743 = vmul.f32 %v674, %v705
  %v744 = vmul.f32 %v675, %v705
  %v745 = vmul.f32 %v676, %v705
  %v746 = vmul.f32 %v677, %v705
  %v747 = vmul.f32 %v678, %v705
  %v748 = vmul.f32 %v679, %v705
  %v749 = vmul.f32 %v680, %v705
  %v750 = vmul.f32 %v681, %v705
  %v751 = vmul.f32 %v682, %v705
  %v752 = vmul.f32 %v683, %v705
  %v753 = vmul.f32 %v684, %v705
  %v754 = vmul.f32 %v685, %v705
  %v755 = vmul.f32 %v686, %v705
  %v756 = vmul.f32 %v687, %v705
  %v757 = vmul.f32 %v688, %v705
  %v758 = vmul.f32 %v689, %v705
  %v759 = vmul.f32 %v690, %v705
  %v760 = vmul.f32 %v691, %v705
  %v761 = vmul.f32 %v692, %v705
  %v762 = vmul.f32 %v693, %v705
  %v763 = vmul.f32 %v694, %v705
  %v764 = vmul.f32 %v695, %v705
  %v765 = vmul.f32 %v696, %v705
  %v766 = vmul.f32 %v697, %v705
  %v767 = vmul.f32 %v698, %v705
  %v768 = vmul.f32 %v699, %v705
  %v769 = vmul.f32 %v700, %v705
  %v770 = vadd.f32 %v573, %v706
  %v771 = vadd.f32 %v574, %v707
  %v772 = vadd.f32 %v575, %v708
  %v773 = vadd.f32 %v576, %v709
  %v774 = vadd.f32 %v577, %v710
  %v775 = vadd.f32 %v578, %v711
  %v776 = vadd.f32 %v579, %v712
  %v777 = vadd.f32 %v580, %v713
  %v778 = vadd.f32 %v581, %v714
  %v779 = vadd.f32 %v582, %v715
  %v780 = vadd.f32 %v583, %v716
  %v781 = vadd.f32 %v584, %v717
  %v782 = vadd.f32 %v585, %v718
  %v783 = vadd.f32 %v586, %v719
  %v784 = vadd.f32 %v587, %v720
  %v785 = vadd.f32 %v588, %v721
  %v786 = vadd.f32 %v589, %v722
  %v787 = vadd.f32 %v590, %v723
  %v788 = vadd.f32 %v591, %v724
  %v789 = vadd.f32 %v592, %v725
  %v790 = vadd.f32 %v593, %v726
  %v791 = vadd.f32 %v594, %v727
  %v792 = vadd.f32 %v595, %v728
  %v793 = vadd.f32 %v596, %v729
  %v794 = vadd.f32 %v597, %v730
  %v795 = vadd.f32 %v598, %v731
  %v796 = vadd.f32 %v599, %v732
  %v797 = vadd.f32 %v600, %v733
  %v798 = vadd.f32 %v601, %v734
  %v799 = vadd.f32 %v602, %v735
  %v800 = vadd.f32 %v603, %v736
  %v801 = vadd.f32 %v604, %v737
  %v802 = vadd.f32 %v605, %v738
  %v803 = vadd.f32 %v606, %v739
  %v804 = vadd.f32 %v607, %v740
  %v805 = vadd.f32 %v608, %v741
  %v806 = vadd.f32 %v609, %v742
  %v807 = vadd.f32 %v610, %v743
  %v808 = vadd.f32 %v611, %v744
  %v809 = vadd.f32 %v612, %v745
  %v810 = vadd.f32 %v613, %v746
  %v811 = vadd.f32 %v614, %v747
  %v812 = vadd.f32 %v615, %v748
  %v813 = vadd.f32 %v616, %v749
  %v814 = vadd.f32 %v617, %v750
  %v815 = vadd.f32 %v618, %v751
  %v816 = vadd.f32 %v619, %v752
  %v817 = vadd.f32 %v620, %v753
  %v818 = vadd.f32 %v621, %v754
  %v819 = vadd.f32 %v622, %v755
  %v820 = vadd.f32 %v623, %v756
  %v821 = vadd.f32 %v624, %v757
  %v822 = vadd.f32 %v625, %v758
  %v823 = vadd.f32 %v626, %v759
  %v824 = vadd.f32 %v627, %v760
  %v825 = vadd.f32 %v628, %v761
  %v826 = vadd.f32 %v629, %v762
  %v827 = vadd.f32 %v630, %v763
  %v828 = vadd.f32 %v631, %v764
  %v829 = vadd.f32 %v632, %v765
  %v830 = vadd.f32 %v633, %v766
  %v831 = vadd.f32 %v634, %v767
  %v832 = vadd.f32 %v635, %v768
  %v833 = vadd.f32 %v636, %v769
  %v834 = vld [vmem:[%s4] sm:$0xff]
  %v835 = vld [vmem:[%s4 + $0x8] sm:$0xff]
  %v836 = vld [vmem:[%s4 + $0x10] sm:$0xff]
  %v837 = vld [vmem:[%s4 + $0x18] sm:$0xff]
  %v838 = vld [vmem:[%s4 + $0x20] sm:$0xff]
  %v839 = vld [vmem:[%s4 + $0x28] sm:$0xff]
  %v840 = vld [vmem:[%s4 + $0x30] sm:$0xff]
  %v841 = vld [vmem:[%s4 + $0x38] sm:$0xff]
  %v842 = vld [vmem:[%s4 + $0x40] sm:$0xff]
  %v843 = vld [vmem:[%s4 + $0x48] sm:$0xff]
  %v844 = vld [vmem:[%s4 + $0x50] sm:$0xff]
  %v845 = vld [vmem:[%s4 + $0x58] sm:$0xff]
  %v846 = vld [vmem:[%s4 + $0x60] sm:$0xff]
  %v847 = vld [vmem:[%s4 + $0x68] sm:$0xff]
  %v848 = vld [vmem:[%s4 + $0x70] sm:$0xff]
  %v849 = vld [vmem:[%s4 + $0x78] sm:$0xff]
  %v850 = vld [vmem:[%s4 + $0x80] sm:$0xff]
  %v851 = vld [vmem:[%s4 + $0x88] sm:$0xff]
  %v852 = vld [vmem:[%s4 + $0x90] sm:$0xff]
  %v853 = vld [vmem:[%s4 + $0x98] sm:$0xff]
  %v854 = vld [vmem:[%s4 + $0xa0] sm:$0xff]
  %v855 = vld [vmem:[%s4 + $0xa8] sm:$0xff]
  %v856 = vld [vmem:[%s4 + $0xb0] sm:$0xff]
  %v857 = vld [vmem:[%s4 + $0xb8] sm:$0xff]
  %v858 = vld [vmem:[%s4 + $0xc0] sm:$0xff]
  %v859 = vld [vmem:[%s4 + $0xc8] sm:$0xff]
  %v860 = vld [vmem:[%s4 + $0xd0] sm:$0xff]
  %v861 = vld [vmem:[%s4 + $0xd8] sm:$0xff]
  %v862 = vld [vmem:[%s4 + $0xe0] sm:$0xff]
  %v863 = vld [vmem:[%s4 + $0xe8] sm:$0xff]
  %v864 = vld [vmem:[%s4 + $0xf0] sm:$0xff]
  %v865 = vld [vmem:[%s4 + $0xf8] sm:$0xff]
  %v866 = vld [vmem:[%s4 + $0x100] sm:$0xff]
  %v867 = vld [vmem:[%s4 + $0x108] sm:$0xff]
  %v868 = vld [vmem:[%s4 + $0x110] sm:$0xff]
  %v869 = vld [vmem:[%s4 + $0x118] sm:$0xff]
  %v870 = vld [vmem:[%s4 + $0x120] sm:$0xff]
  %v871 = vld [vmem:[%s4 + $0x128] sm:$0xff]
  %v872 = vld [vmem:[%s4 + $0x130] sm:$0xff]
  %v873 = vld [vmem:[%s4 + $0x138] sm:$0xff]
  %v874 = vld [vmem:[%s4 + $0x140] sm:$0xff]
  %v875 = vld [vmem:[%s4 + $0x148] sm:$0xff]
  %v876 = vld [vmem:[%s4 + $0x150] sm:$0xff]
  %v877 = vld [vmem:[%s4 + $0x158] sm:$0xff]
  %v878 = vld [vmem:[%s4 + $0x160] sm:$0xff]
  %v879 = vld [vmem:[%s4 + $0x168] sm:$0xff]
  %v880 = vld [vmem:[%s4 + $0x170] sm:$0xff]
  %v881 = vld [vmem:[%s4 + $0x178] sm:$0xff]
  %v882 = vld [vmem:[%s4 + $0x180] sm:$0xff]
  %v883 = vld [vmem:[%s4 + $0x188] sm:$0xff]
  %v884 = vld [vmem:[%s4 + $0x190] sm:$0xff]
  %v885 = vld [vmem:[%s4 + $0x198] sm:$0xff]
  %v886 = vld [vmem:[%s4 + $0x1a0] sm:$0xff]
  %v887 = vld [vmem:[%s4 + $0x1a8] sm:$0xff]
  %v888 = vld [vmem:[%s4 + $0x1b0] sm:$0xff]
  %v889 = vld [vmem:[%s4 + $0x1b8] sm:$0xff]
  %v890 = vld [vmem:[%s4 + $0x1c0] sm:$0xff]
  %v891 = vld [vmem:[%s4 + $0x1c8] sm:$0xff]
  %v892 = vld [vmem:[%s4 + $0x1d0] sm:$0xff]
  %v893 = vld [vmem:[%s4 + $0x1d8] sm:$0xff]
  %v894 = vld [vmem:[%s4 + $0x1e0] sm:$0xff]
  %v895 = vld [vmem:[%s4 + $0x1e8] sm:$0xff]
  %v896 = vld [vmem:[%s4 + $0x1f0] sm:$0xff]
  %v897 = vld [vmem:[%s4 + $0x1f8] sm:$0xff]
  %v898 = vld [vmem:[%s9 + $0x4] sm:$0x1]
  %v899 = vlaneseq
  %v900 = vshrl.u32 %v899, 7
  %v901 = vsub.s32 0, %v900
  %v902 = vrot.slane %v898, %v901
  %v903 = vmul.f32 %v834, %v902
  %v904 = vmul.f32 %v835, %v902
  %v905 = vmul.f32 %v836, %v902
  %v906 = vmul.f32 %v837, %v902
  %v907 = vmul.f32 %v838, %v902
  %v908 = vmul.f32 %v839, %v902
  %v909 = vmul.f32 %v840, %v902
  %v910 = vmul.f32 %v841, %v902
  %v911 = vmul.f32 %v842, %v902
  %v912 = vmul.f32 %v843, %v902
  %v913 = vmul.f32 %v844, %v902
  %v914 = vmul.f32 %v845, %v902
  %v915 = vmul.f32 %v846, %v902
  %v916 = vmul.f32 %v847, %v902
  %v917 = vmul.f32 %v848, %v902
  %v918 = vmul.f32 %v849, %v902
  %v919 = vmul.f32 %v850, %v902
  %v920 = vmul.f32 %v851, %v902
  %v921 = vmul.f32 %v852, %v902
  %v922 = vmul.f32 %v853, %v902
  %v923 = vmul.f32 %v854, %v902
  %v924 = vmul.f32 %v855, %v902
  %v925 = vmul.f32 %v856, %v902
  %v926 = vmul.f32 %v857, %v902
  %v927 = vmul.f32 %v858, %v902
  %v928 = vmul.f32 %v859, %v902
  %v929 = vmul.f32 %v860, %v902
  %v930 = vmul.f32 %v861, %v902
  %v931 = vmul.f32 %v862, %v902
  %v932 = vmul.f32 %v863, %v902
  %v933 = vmul.f32 %v864, %v902
  %v934 = vmul.f32 %v865, %v902
  %v935 = vmul.f32 %v866, %v902
  %v936 = vmul.f32 %v867, %v902
  %v937 = vmul.f32 %v868, %v902
  %v938 = vmul.f32 %v869, %v902
  %v939 = vmul.f32 %v870, %v902
  %v940 = vmul.f32 %v871, %v902
  %v941 = vmul.f32 %v872, %v902
  %v942 = vmul.f32 %v873, %v902
  %v943 = vmul.f32 %v874, %v902
  %v944 = vmul.f32 %v875, %v902
  %v945 = vmul.f32 %v876, %v902
  %v946 = vmul.f32 %v877, %v902
  %v947 = vmul.f32 %v878, %v902
  %v948 = vmul.f32 %v879, %v902
  %v949 = vmul.f32 %v880, %v902
  %v950 = vmul.f32 %v881, %v902
  %v951 = vmul.f32 %v882, %v902
  %v952 = vmul.f32 %v883, %v902
  %v953 = vmul.f32 %v884, %v902
  %v954 = vmul.f32 %v885, %v902
  %v955 = vmul.f32 %v886, %v902
  %v956 = vmul.f32 %v887, %v902
  %v957 = vmul.f32 %v888, %v902
  %v958 = vmul.f32 %v889, %v902
  %v959 = vmul.f32 %v890, %v902
  %v960 = vmul.f32 %v891, %v902
  %v961 = vmul.f32 %v892, %v902
  %v962 = vmul.f32 %v893, %v902
  %v963 = vmul.f32 %v894, %v902
  %v964 = vmul.f32 %v895, %v902
  %v965 = vmul.f32 %v896, %v902
  %v966 = vmul.f32 %v897, %v902
  %v967 = vadd.f32 %v770, %v903
  %v968 = vadd.f32 %v771, %v904
  %v969 = vadd.f32 %v772, %v905
  %v970 = vadd.f32 %v773, %v906
  %v971 = vadd.f32 %v774, %v907
  %v972 = vadd.f32 %v775, %v908
  %v973 = vadd.f32 %v776, %v909
  %v974 = vadd.f32 %v777, %v910
  %v975 = vadd.f32 %v778, %v911
  %v976 = vadd.f32 %v779, %v912
  %v977 = vadd.f32 %v780, %v913
  %v978 = vadd.f32 %v781, %v914
  %v979 = vadd.f32 %v782, %v915
  %v980 = vadd.f32 %v783, %v916
  %v981 = vadd.f32 %v784, %v917
  %v982 = vadd.f32 %v785, %v918
  %v983 = vadd.f32 %v786, %v919
  %v984 = vadd.f32 %v787, %v920
  %v985 = vadd.f32 %v788, %v921
  %v986 = vadd.f32 %v789, %v922
  %v987 = vadd.f32 %v790, %v923
  %v988 = vadd.f32 %v791, %v924
  %v989 = vadd.f32 %v792, %v925
  %v990 = vadd.f32 %v793, %v926
  %v991 = vadd.f32 %v794, %v927
  %v992 = vadd.f32 %v795, %v928
  %v993 = vadd.f32 %v796, %v929
  %v994 = vadd.f32 %v797, %v930
  %v995 = vadd.f32 %v798, %v931
  %v996 = vadd.f32 %v799, %v932
  %v997 = vadd.f32 %v800, %v933
  %v998 = vadd.f32 %v801, %v934
  %v999 = vadd.f32 %v802, %v935
  %v1000 = vadd.f32 %v803, %v936
  %v1001 = vadd.f32 %v804, %v937
  %v1002 = vadd.f32 %v805, %v938
  %v1003 = vadd.f32 %v806, %v939
  %v1004 = vadd.f32 %v807, %v940
  %v1005 = vadd.f32 %v808, %v941
  %v1006 = vadd.f32 %v809, %v942
  %v1007 = vadd.f32 %v810, %v943
  %v1008 = vadd.f32 %v811, %v944
  %v1009 = vadd.f32 %v812, %v945
  %v1010 = vadd.f32 %v813, %v946
  %v1011 = vadd.f32 %v814, %v947
  %v1012 = vadd.f32 %v815, %v948
  %v1013 = vadd.f32 %v816, %v949
  %v1014 = vadd.f32 %v817, %v950
  %v1015 = vadd.f32 %v818, %v951
  %v1016 = vadd.f32 %v819, %v952
  %v1017 = vadd.f32 %v820, %v953
  %v1018 = vadd.f32 %v821, %v954
  %v1019 = vadd.f32 %v822, %v955
  %v1020 = vadd.f32 %v823, %v956
  %v1021 = vadd.f32 %v824, %v957
  %v1022 = vadd.f32 %v825, %v958
  %v1023 = vadd.f32 %v826, %v959
  %v1024 = vadd.f32 %v827, %v960
  %v1025 = vadd.f32 %v828, %v961
  %v1026 = vadd.f32 %v829, %v962
  %v1027 = vadd.f32 %v830, %v963
  %v1028 = vadd.f32 %v831, %v964
  %v1029 = vadd.f32 %v832, %v965
  %v1030 = vadd.f32 %v833, %v966
  %v1031 = vld [vmem:[%s5] sm:$0xff]
  %v1032 = vld [vmem:[%s5 + $0x8] sm:$0xff]
  %v1033 = vld [vmem:[%s5 + $0x10] sm:$0xff]
  %v1034 = vld [vmem:[%s5 + $0x18] sm:$0xff]
  %v1035 = vld [vmem:[%s5 + $0x20] sm:$0xff]
  %v1036 = vld [vmem:[%s5 + $0x28] sm:$0xff]
  %v1037 = vld [vmem:[%s5 + $0x30] sm:$0xff]
  %v1038 = vld [vmem:[%s5 + $0x38] sm:$0xff]
  %v1039 = vld [vmem:[%s5 + $0x40] sm:$0xff]
  %v1040 = vld [vmem:[%s5 + $0x48] sm:$0xff]
  %v1041 = vld [vmem:[%s5 + $0x50] sm:$0xff]
  %v1042 = vld [vmem:[%s5 + $0x58] sm:$0xff]
  %v1043 = vld [vmem:[%s5 + $0x60] sm:$0xff]
  %v1044 = vld [vmem:[%s5 + $0x68] sm:$0xff]
  %v1045 = vld [vmem:[%s5 + $0x70] sm:$0xff]
  %v1046 = vld [vmem:[%s5 + $0x78] sm:$0xff]
  %v1047 = vld [vmem:[%s5 + $0x80] sm:$0xff]
  %v1048 = vld [vmem:[%s5 + $0x88] sm:$0xff]
  %v1049 = vld [vmem:[%s5 + $0x90] sm:$0xff]
  %v1050 = vld [vmem:[%s5 + $0x98] sm:$0xff]
  %v1051 = vld [vmem:[%s5 + $0xa0] sm:$0xff]
  %v1052 = vld [vmem:[%s5 + $0xa8] sm:$0xff]
  %v1053 = vld [vmem:[%s5 + $0xb0] sm:$0xff]
  %v1054 = vld [vmem:[%s5 + $0xb8] sm:$0xff]
  %v1055 = vld [vmem:[%s5 + $0xc0] sm:$0xff]
  %v1056 = vld [vmem:[%s5 + $0xc8] sm:$0xff]
  %v1057 = vld [vmem:[%s5 + $0xd0] sm:$0xff]
  %v1058 = vld [vmem:[%s5 + $0xd8] sm:$0xff]
  %v1059 = vld [vmem:[%s5 + $0xe0] sm:$0xff]
  %v1060 = vld [vmem:[%s5 + $0xe8] sm:$0xff]
  %v1061 = vld [vmem:[%s5 + $0xf0] sm:$0xff]
  %v1062 = vld [vmem:[%s5 + $0xf8] sm:$0xff]
  %v1063 = vld [vmem:[%s5 + $0x100] sm:$0xff]
  %v1064 = vld [vmem:[%s5 + $0x108] sm:$0xff]
  %v1065 = vld [vmem:[%s5 + $0x110] sm:$0xff]
  %v1066 = vld [vmem:[%s5 + $0x118] sm:$0xff]
  %v1067 = vld [vmem:[%s5 + $0x120] sm:$0xff]
  %v1068 = vld [vmem:[%s5 + $0x128] sm:$0xff]
  %v1069 = vld [vmem:[%s5 + $0x130] sm:$0xff]
  %v1070 = vld [vmem:[%s5 + $0x138] sm:$0xff]
  %v1071 = vld [vmem:[%s5 + $0x140] sm:$0xff]
  %v1072 = vld [vmem:[%s5 + $0x148] sm:$0xff]
  %v1073 = vld [vmem:[%s5 + $0x150] sm:$0xff]
  %v1074 = vld [vmem:[%s5 + $0x158] sm:$0xff]
  %v1075 = vld [vmem:[%s5 + $0x160] sm:$0xff]
  %v1076 = vld [vmem:[%s5 + $0x168] sm:$0xff]
  %v1077 = vld [vmem:[%s5 + $0x170] sm:$0xff]
  %v1078 = vld [vmem:[%s5 + $0x178] sm:$0xff]
  %v1079 = vld [vmem:[%s5 + $0x180] sm:$0xff]
  %v1080 = vld [vmem:[%s5 + $0x188] sm:$0xff]
  %v1081 = vld [vmem:[%s5 + $0x190] sm:$0xff]
  %v1082 = vld [vmem:[%s5 + $0x198] sm:$0xff]
  %v1083 = vld [vmem:[%s5 + $0x1a0] sm:$0xff]
  %v1084 = vld [vmem:[%s5 + $0x1a8] sm:$0xff]
  %v1085 = vld [vmem:[%s5 + $0x1b0] sm:$0xff]
  %v1086 = vld [vmem:[%s5 + $0x1b8] sm:$0xff]
  %v1087 = vld [vmem:[%s5 + $0x1c0] sm:$0xff]
  %v1088 = vld [vmem:[%s5 + $0x1c8] sm:$0xff]
  %v1089 = vld [vmem:[%s5 + $0x1d0] sm:$0xff]
  %v1090 = vld [vmem:[%s5 + $0x1d8] sm:$0xff]
  %v1091 = vld [vmem:[%s5 + $0x1e0] sm:$0xff]
  %v1092 = vld [vmem:[%s5 + $0x1e8] sm:$0xff]
  %v1093 = vld [vmem:[%s5 + $0x1f0] sm:$0xff]
  %v1094 = vld [vmem:[%s5 + $0x1f8] sm:$0xff]
  %v1095 = vld [vmem:[%s9 + $0x5] sm:$0x1]
  %v1096 = vlaneseq
  %v1097 = vshrl.u32 %v1096, 7
  %v1098 = vsub.s32 0, %v1097
  %v1099 = vrot.slane %v1095, %v1098
  %v1100 = vmul.f32 %v1031, %v1099
  %v1101 = vmul.f32 %v1032, %v1099
  %v1102 = vmul.f32 %v1033, %v1099
  %v1103 = vmul.f32 %v1034, %v1099
  %v1104 = vmul.f32 %v1035, %v1099
  %v1105 = vmul.f32 %v1036, %v1099
  %v1106 = vmul.f32 %v1037, %v1099
  %v1107 = vmul.f32 %v1038, %v1099
  %v1108 = vmul.f32 %v1039, %v1099
  %v1109 = vmul.f32 %v1040, %v1099
  %v1110 = vmul.f32 %v1041, %v1099
  %v1111 = vmul.f32 %v1042, %v1099
  %v1112 = vmul.f32 %v1043, %v1099
  %v1113 = vmul.f32 %v1044, %v1099
  %v1114 = vmul.f32 %v1045, %v1099
  %v1115 = vmul.f32 %v1046, %v1099
  %v1116 = vmul.f32 %v1047, %v1099
  %v1117 = vmul.f32 %v1048, %v1099
  %v1118 = vmul.f32 %v1049, %v1099
  %v1119 = vmul.f32 %v1050, %v1099
  %v1120 = vmul.f32 %v1051, %v1099
  %v1121 = vmul.f32 %v1052, %v1099
  %v1122 = vmul.f32 %v1053, %v1099
  %v1123 = vmul.f32 %v1054, %v1099
  %v1124 = vmul.f32 %v1055, %v1099
  %v1125 = vmul.f32 %v1056, %v1099
  %v1126 = vmul.f32 %v1057, %v1099
  %v1127 = vmul.f32 %v1058, %v1099
  %v1128 = vmul.f32 %v1059, %v1099
  %v1129 = vmul.f32 %v1060, %v1099
  %v1130 = vmul.f32 %v1061, %v1099
  %v1131 = vmul.f32 %v1062, %v1099
  %v1132 = vmul.f32 %v1063, %v1099
  %v1133 = vmul.f32 %v1064, %v1099
  %v1134 = vmul.f32 %v1065, %v1099
  %v1135 = vmul.f32 %v1066, %v1099
  %v1136 = vmul.f32 %v1067, %v1099
  %v1137 = vmul.f32 %v1068, %v1099
  %v1138 = vmul.f32 %v1069, %v1099
  %v1139 = vmul.f32 %v1070, %v1099
  %v1140 = vmul.f32 %v1071, %v1099
  %v1141 = vmul.f32 %v1072, %v1099
  %v1142 = vmul.f32 %v1073, %v1099
  %v1143 = vmul.f32 %v1074, %v1099
  %v1144 = vmul.f32 %v1075, %v1099
  %v1145 = vmul.f32 %v1076, %v1099
  %v1146 = vmul.f32 %v1077, %v1099
  %v1147 = vmul.f32 %v1078, %v1099
  %v1148 = vmul.f32 %v1079, %v1099
  %v1149 = vmul.f32 %v1080, %v1099
  %v1150 = vmul.f32 %v1081, %v1099
  %v1151 = vmul.f32 %v1082, %v1099
  %v1152 = vmul.f32 %v1083, %v1099
  %v1153 = vmul.f32 %v1084, %v1099
  %v1154 = vmul.f32 %v1085, %v1099
  %v1155 = vmul.f32 %v1086, %v1099
  %v1156 = vmul.f32 %v1087, %v1099
  %v1157 = vmul.f32 %v1088, %v1099
  %v1158 = vmul.f32 %v1089, %v1099
  %v1159 = vmul.f32 %v1090, %v1099
  %v1160 = vmul.f32 %v1091, %v1099
  %v1161 = vmul.f32 %v1092, %v1099
  %v1162 = vmul.f32 %v1093, %v1099
  %v1163 = vmul.f32 %v1094, %v1099
  %v1164 = vadd.f32 %v967, %v1100
  %v1165 = vadd.f32 %v968, %v1101
  %v1166 = vadd.f32 %v969, %v1102
  %v1167 = vadd.f32 %v970, %v1103
  %v1168 = vadd.f32 %v971, %v1104
  %v1169 = vadd.f32 %v972, %v1105
  %v1170 = vadd.f32 %v973, %v1106
  %v1171 = vadd.f32 %v974, %v1107
  %v1172 = vadd.f32 %v975, %v1108
  %v1173 = vadd.f32 %v976, %v1109
  %v1174 = vadd.f32 %v977, %v1110
  %v1175 = vadd.f32 %v978, %v1111
  %v1176 = vadd.f32 %v979, %v1112
  %v1177 = vadd.f32 %v980, %v1113
  %v1178 = vadd.f32 %v981, %v1114
  %v1179 = vadd.f32 %v982, %v1115
  %v1180 = vadd.f32 %v983, %v1116
  %v1181 = vadd.f32 %v984, %v1117
  %v1182 = vadd.f32 %v985, %v1118
  %v1183 = vadd.f32 %v986, %v1119
  %v1184 = vadd.f32 %v987, %v1120
  %v1185 = vadd.f32 %v988, %v1121
  %v1186 = vadd.f32 %v989, %v1122
  %v1187 = vadd.f32 %v990, %v1123
  %v1188 = vadd.f32 %v991, %v1124
  %v1189 = vadd.f32 %v992, %v1125
  %v1190 = vadd.f32 %v993, %v1126
  %v1191 = vadd.f32 %v994, %v1127
  %v1192 = vadd.f32 %v995, %v1128
  %v1193 = vadd.f32 %v996, %v1129
  %v1194 = vadd.f32 %v997, %v1130
  %v1195 = vadd.f32 %v998, %v1131
  %v1196 = vadd.f32 %v999, %v1132
  %v1197 = vadd.f32 %v1000, %v1133
  %v1198 = vadd.f32 %v1001, %v1134
  %v1199 = vadd.f32 %v1002, %v1135
  %v1200 = vadd.f32 %v1003, %v1136
  %v1201 = vadd.f32 %v1004, %v1137
  %v1202 = vadd.f32 %v1005, %v1138
  %v1203 = vadd.f32 %v1006, %v1139
  %v1204 = vadd.f32 %v1007, %v1140
  %v1205 = vadd.f32 %v1008, %v1141
  %v1206 = vadd.f32 %v1009, %v1142
  %v1207 = vadd.f32 %v1010, %v1143
  %v1208 = vadd.f32 %v1011, %v1144
  %v1209 = vadd.f32 %v1012, %v1145
  %v1210 = vadd.f32 %v1013, %v1146
  %v1211 = vadd.f32 %v1014, %v1147
  %v1212 = vadd.f32 %v1015, %v1148
  %v1213 = vadd.f32 %v1016, %v1149
  %v1214 = vadd.f32 %v1017, %v1150
  %v1215 = vadd.f32 %v1018, %v1151
  %v1216 = vadd.f32 %v1019, %v1152
  %v1217 = vadd.f32 %v1020, %v1153
  %v1218 = vadd.f32 %v1021, %v1154
  %v1219 = vadd.f32 %v1022, %v1155
  %v1220 = vadd.f32 %v1023, %v1156
  %v1221 = vadd.f32 %v1024, %v1157
  %v1222 = vadd.f32 %v1025, %v1158
  %v1223 = vadd.f32 %v1026, %v1159
  %v1224 = vadd.f32 %v1027, %v1160
  %v1225 = vadd.f32 %v1028, %v1161
  %v1226 = vadd.f32 %v1029, %v1162
  %v1227 = vadd.f32 %v1030, %v1163
  %v1228 = vld [vmem:[%s6] sm:$0xff]
  %v1229 = vld [vmem:[%s6 + $0x8] sm:$0xff]
  %v1230 = vld [vmem:[%s6 + $0x10] sm:$0xff]
  %v1231 = vld [vmem:[%s6 + $0x18] sm:$0xff]
  %v1232 = vld [vmem:[%s6 + $0x20] sm:$0xff]
  %v1233 = vld [vmem:[%s6 + $0x28] sm:$0xff]
  %v1234 = vld [vmem:[%s6 + $0x30] sm:$0xff]
  %v1235 = vld [vmem:[%s6 + $0x38] sm:$0xff]
  %v1236 = vld [vmem:[%s6 + $0x40] sm:$0xff]
  %v1237 = vld [vmem:[%s6 + $0x48] sm:$0xff]
  %v1238 = vld [vmem:[%s6 + $0x50] sm:$0xff]
  %v1239 = vld [vmem:[%s6 + $0x58] sm:$0xff]
  %v1240 = vld [vmem:[%s6 + $0x60] sm:$0xff]
  %v1241 = vld [vmem:[%s6 + $0x68] sm:$0xff]
  %v1242 = vld [vmem:[%s6 + $0x70] sm:$0xff]
  %v1243 = vld [vmem:[%s6 + $0x78] sm:$0xff]
  %v1244 = vld [vmem:[%s6 + $0x80] sm:$0xff]
  %v1245 = vld [vmem:[%s6 + $0x88] sm:$0xff]
  %v1246 = vld [vmem:[%s6 + $0x90] sm:$0xff]
  %v1247 = vld [vmem:[%s6 + $0x98] sm:$0xff]
  %v1248 = vld [vmem:[%s6 + $0xa0] sm:$0xff]
  %v1249 = vld [vmem:[%s6 + $0xa8] sm:$0xff]
  %v1250 = vld [vmem:[%s6 + $0xb0] sm:$0xff]
  %v1251 = vld [vmem:[%s6 + $0xb8] sm:$0xff]
  %v1252 = vld [vmem:[%s6 + $0xc0] sm:$0xff]
  %v1253 = vld [vmem:[%s6 + $0xc8] sm:$0xff]
  %v1254 = vld [vmem:[%s6 + $0xd0] sm:$0xff]
  %v1255 = vld [vmem:[%s6 + $0xd8] sm:$0xff]
  %v1256 = vld [vmem:[%s6 + $0xe0] sm:$0xff]
  %v1257 = vld [vmem:[%s6 + $0xe8] sm:$0xff]
  %v1258 = vld [vmem:[%s6 + $0xf0] sm:$0xff]
  %v1259 = vld [vmem:[%s6 + $0xf8] sm:$0xff]
  %v1260 = vld [vmem:[%s6 + $0x100] sm:$0xff]
  %v1261 = vld [vmem:[%s6 + $0x108] sm:$0xff]
  %v1262 = vld [vmem:[%s6 + $0x110] sm:$0xff]
  %v1263 = vld [vmem:[%s6 + $0x118] sm:$0xff]
  %v1264 = vld [vmem:[%s6 + $0x120] sm:$0xff]
  %v1265 = vld [vmem:[%s6 + $0x128] sm:$0xff]
  %v1266 = vld [vmem:[%s6 + $0x130] sm:$0xff]
  %v1267 = vld [vmem:[%s6 + $0x138] sm:$0xff]
  %v1268 = vld [vmem:[%s6 + $0x140] sm:$0xff]
  %v1269 = vld [vmem:[%s6 + $0x148] sm:$0xff]
  %v1270 = vld [vmem:[%s6 + $0x150] sm:$0xff]
  %v1271 = vld [vmem:[%s6 + $0x158] sm:$0xff]
  %v1272 = vld [vmem:[%s6 + $0x160] sm:$0xff]
  %v1273 = vld [vmem:[%s6 + $0x168] sm:$0xff]
  %v1274 = vld [vmem:[%s6 + $0x170] sm:$0xff]
  %v1275 = vld [vmem:[%s6 + $0x178] sm:$0xff]
  %v1276 = vld [vmem:[%s6 + $0x180] sm:$0xff]
  %v1277 = vld [vmem:[%s6 + $0x188] sm:$0xff]
  %v1278 = vld [vmem:[%s6 + $0x190] sm:$0xff]
  %v1279 = vld [vmem:[%s6 + $0x198] sm:$0xff]
  %v1280 = vld [vmem:[%s6 + $0x1a0] sm:$0xff]
  %v1281 = vld [vmem:[%s6 + $0x1a8] sm:$0xff]
  %v1282 = vld [vmem:[%s6 + $0x1b0] sm:$0xff]
  %v1283 = vld [vmem:[%s6 + $0x1b8] sm:$0xff]
  %v1284 = vld [vmem:[%s6 + $0x1c0] sm:$0xff]
  %v1285 = vld [vmem:[%s6 + $0x1c8] sm:$0xff]
  %v1286 = vld [vmem:[%s6 + $0x1d0] sm:$0xff]
  %v1287 = vld [vmem:[%s6 + $0x1d8] sm:$0xff]
  %v1288 = vld [vmem:[%s6 + $0x1e0] sm:$0xff]
  %v1289 = vld [vmem:[%s6 + $0x1e8] sm:$0xff]
  %v1290 = vld [vmem:[%s6 + $0x1f0] sm:$0xff]
  %v1291 = vld [vmem:[%s6 + $0x1f8] sm:$0xff]
  %v1292 = vld [vmem:[%s9 + $0x6] sm:$0x1]
  %v1293 = vlaneseq
  %v1294 = vshrl.u32 %v1293, 7
  %v1295 = vsub.s32 0, %v1294
  %v1296 = vrot.slane %v1292, %v1295
  %v1297 = vmul.f32 %v1228, %v1296
  %v1298 = vmul.f32 %v1229, %v1296
  %v1299 = vmul.f32 %v1230, %v1296
  %v1300 = vmul.f32 %v1231, %v1296
  %v1301 = vmul.f32 %v1232, %v1296
  %v1302 = vmul.f32 %v1233, %v1296
  %v1303 = vmul.f32 %v1234, %v1296
  %v1304 = vmul.f32 %v1235, %v1296
  %v1305 = vmul.f32 %v1236, %v1296
  %v1306 = vmul.f32 %v1237, %v1296
  %v1307 = vmul.f32 %v1238, %v1296
  %v1308 = vmul.f32 %v1239, %v1296
  %v1309 = vmul.f32 %v1240, %v1296
  %v1310 = vmul.f32 %v1241, %v1296
  %v1311 = vmul.f32 %v1242, %v1296
  %v1312 = vmul.f32 %v1243, %v1296
  %v1313 = vmul.f32 %v1244, %v1296
  %v1314 = vmul.f32 %v1245, %v1296
  %v1315 = vmul.f32 %v1246, %v1296
  %v1316 = vmul.f32 %v1247, %v1296
  %v1317 = vmul.f32 %v1248, %v1296
  %v1318 = vmul.f32 %v1249, %v1296
  %v1319 = vmul.f32 %v1250, %v1296
  %v1320 = vmul.f32 %v1251, %v1296
  %v1321 = vmul.f32 %v1252, %v1296
  %v1322 = vmul.f32 %v1253, %v1296
  %v1323 = vmul.f32 %v1254, %v1296
  %v1324 = vmul.f32 %v1255, %v1296
  %v1325 = vmul.f32 %v1256, %v1296
  %v1326 = vmul.f32 %v1257, %v1296
  %v1327 = vmul.f32 %v1258, %v1296
  %v1328 = vmul.f32 %v1259, %v1296
  %v1329 = vmul.f32 %v1260, %v1296
  %v1330 = vmul.f32 %v1261, %v1296
  %v1331 = vmul.f32 %v1262, %v1296
  %v1332 = vmul.f32 %v1263, %v1296
  %v1333 = vmul.f32 %v1264, %v1296
  %v1334 = vmul.f32 %v1265, %v1296
  %v1335 = vmul.f32 %v1266, %v1296
  %v1336 = vmul.f32 %v1267, %v1296
  %v1337 = vmul.f32 %v1268, %v1296
  %v1338 = vmul.f32 %v1269, %v1296
  %v1339 = vmul.f32 %v1270, %v1296
  %v1340 = vmul.f32 %v1271, %v1296
  %v1341 = vmul.f32 %v1272, %v1296
  %v1342 = vmul.f32 %v1273, %v1296
  %v1343 = vmul.f32 %v1274, %v1296
  %v1344 = vmul.f32 %v1275, %v1296
  %v1345 = vmul.f32 %v1276, %v1296
  %v1346 = vmul.f32 %v1277, %v1296
  %v1347 = vmul.f32 %v1278, %v1296
  %v1348 = vmul.f32 %v1279, %v1296
  %v1349 = vmul.f32 %v1280, %v1296
  %v1350 = vmul.f32 %v1281, %v1296
  %v1351 = vmul.f32 %v1282, %v1296
  %v1352 = vmul.f32 %v1283, %v1296
  %v1353 = vmul.f32 %v1284, %v1296
  %v1354 = vmul.f32 %v1285, %v1296
  %v1355 = vmul.f32 %v1286, %v1296
  %v1356 = vmul.f32 %v1287, %v1296
  %v1357 = vmul.f32 %v1288, %v1296
  %v1358 = vmul.f32 %v1289, %v1296
  %v1359 = vmul.f32 %v1290, %v1296
  %v1360 = vmul.f32 %v1291, %v1296
  %v1361 = vadd.f32 %v1164, %v1297
  %v1362 = vadd.f32 %v1165, %v1298
  %v1363 = vadd.f32 %v1166, %v1299
  %v1364 = vadd.f32 %v1167, %v1300
  %v1365 = vadd.f32 %v1168, %v1301
  %v1366 = vadd.f32 %v1169, %v1302
  %v1367 = vadd.f32 %v1170, %v1303
  %v1368 = vadd.f32 %v1171, %v1304
  %v1369 = vadd.f32 %v1172, %v1305
  %v1370 = vadd.f32 %v1173, %v1306
  %v1371 = vadd.f32 %v1174, %v1307
  %v1372 = vadd.f32 %v1175, %v1308
  %v1373 = vadd.f32 %v1176, %v1309
  %v1374 = vadd.f32 %v1177, %v1310
  %v1375 = vadd.f32 %v1178, %v1311
  %v1376 = vadd.f32 %v1179, %v1312
  %v1377 = vadd.f32 %v1180, %v1313
  %v1378 = vadd.f32 %v1181, %v1314
  %v1379 = vadd.f32 %v1182, %v1315
  %v1380 = vadd.f32 %v1183, %v1316
  %v1381 = vadd.f32 %v1184, %v1317
  %v1382 = vadd.f32 %v1185, %v1318
  %v1383 = vadd.f32 %v1186, %v1319
  %v1384 = vadd.f32 %v1187, %v1320
  %v1385 = vadd.f32 %v1188, %v1321
  %v1386 = vadd.f32 %v1189, %v1322
  %v1387 = vadd.f32 %v1190, %v1323
  %v1388 = vadd.f32 %v1191, %v1324
  %v1389 = vadd.f32 %v1192, %v1325
  %v1390 = vadd.f32 %v1193, %v1326
  %v1391 = vadd.f32 %v1194, %v1327
  %v1392 = vadd.f32 %v1195, %v1328
  %v1393 = vadd.f32 %v1196, %v1329
  %v1394 = vadd.f32 %v1197, %v1330
  %v1395 = vadd.f32 %v1198, %v1331
  %v1396 = vadd.f32 %v1199, %v1332
  %v1397 = vadd.f32 %v1200, %v1333
  %v1398 = vadd.f32 %v1201, %v1334
  %v1399 = vadd.f32 %v1202, %v1335
  %v1400 = vadd.f32 %v1203, %v1336
  %v1401 = vadd.f32 %v1204, %v1337
  %v1402 = vadd.f32 %v1205, %v1338
  %v1403 = vadd.f32 %v1206, %v1339
  %v1404 = vadd.f32 %v1207, %v1340
  %v1405 = vadd.f32 %v1208, %v1341
  %v1406 = vadd.f32 %v1209, %v1342
  %v1407 = vadd.f32 %v1210, %v1343
  %v1408 = vadd.f32 %v1211, %v1344
  %v1409 = vadd.f32 %v1212, %v1345
  %v1410 = vadd.f32 %v1213, %v1346
  %v1411 = vadd.f32 %v1214, %v1347
  %v1412 = vadd.f32 %v1215, %v1348
  %v1413 = vadd.f32 %v1216, %v1349
  %v1414 = vadd.f32 %v1217, %v1350
  %v1415 = vadd.f32 %v1218, %v1351
  %v1416 = vadd.f32 %v1219, %v1352
  %v1417 = vadd.f32 %v1220, %v1353
  %v1418 = vadd.f32 %v1221, %v1354
  %v1419 = vadd.f32 %v1222, %v1355
  %v1420 = vadd.f32 %v1223, %v1356
  %v1421 = vadd.f32 %v1224, %v1357
  %v1422 = vadd.f32 %v1225, %v1358
  %v1423 = vadd.f32 %v1226, %v1359
  %v1424 = vadd.f32 %v1227, %v1360
  %v1425 = vld [vmem:[%s7] sm:$0xff]
  %v1426 = vld [vmem:[%s7 + $0x8] sm:$0xff]
  %v1427 = vld [vmem:[%s7 + $0x10] sm:$0xff]
  %v1428 = vld [vmem:[%s7 + $0x18] sm:$0xff]
  %v1429 = vld [vmem:[%s7 + $0x20] sm:$0xff]
  %v1430 = vld [vmem:[%s7 + $0x28] sm:$0xff]
  %v1431 = vld [vmem:[%s7 + $0x30] sm:$0xff]
  %v1432 = vld [vmem:[%s7 + $0x38] sm:$0xff]
  %v1433 = vld [vmem:[%s7 + $0x40] sm:$0xff]
  %v1434 = vld [vmem:[%s7 + $0x48] sm:$0xff]
  %v1435 = vld [vmem:[%s7 + $0x50] sm:$0xff]
  %v1436 = vld [vmem:[%s7 + $0x58] sm:$0xff]
  %v1437 = vld [vmem:[%s7 + $0x60] sm:$0xff]
  %v1438 = vld [vmem:[%s7 + $0x68] sm:$0xff]
  %v1439 = vld [vmem:[%s7 + $0x70] sm:$0xff]
  %v1440 = vld [vmem:[%s7 + $0x78] sm:$0xff]
  %v1441 = vld [vmem:[%s7 + $0x80] sm:$0xff]
  %v1442 = vld [vmem:[%s7 + $0x88] sm:$0xff]
  %v1443 = vld [vmem:[%s7 + $0x90] sm:$0xff]
  %v1444 = vld [vmem:[%s7 + $0x98] sm:$0xff]
  %v1445 = vld [vmem:[%s7 + $0xa0] sm:$0xff]
  %v1446 = vld [vmem:[%s7 + $0xa8] sm:$0xff]
  %v1447 = vld [vmem:[%s7 + $0xb0] sm:$0xff]
  %v1448 = vld [vmem:[%s7 + $0xb8] sm:$0xff]
  %v1449 = vld [vmem:[%s7 + $0xc0] sm:$0xff]
  %v1450 = vld [vmem:[%s7 + $0xc8] sm:$0xff]
  %v1451 = vld [vmem:[%s7 + $0xd0] sm:$0xff]
  %v1452 = vld [vmem:[%s7 + $0xd8] sm:$0xff]
  %v1453 = vld [vmem:[%s7 + $0xe0] sm:$0xff]
  %v1454 = vld [vmem:[%s7 + $0xe8] sm:$0xff]
  %v1455 = vld [vmem:[%s7 + $0xf0] sm:$0xff]
  %v1456 = vld [vmem:[%s7 + $0xf8] sm:$0xff]
  %v1457 = vld [vmem:[%s7 + $0x100] sm:$0xff]
  %v1458 = vld [vmem:[%s7 + $0x108] sm:$0xff]
  %v1459 = vld [vmem:[%s7 + $0x110] sm:$0xff]
  %v1460 = vld [vmem:[%s7 + $0x118] sm:$0xff]
  %v1461 = vld [vmem:[%s7 + $0x120] sm:$0xff]
  %v1462 = vld [vmem:[%s7 + $0x128] sm:$0xff]
  %v1463 = vld [vmem:[%s7 + $0x130] sm:$0xff]
  %v1464 = vld [vmem:[%s7 + $0x138] sm:$0xff]
  %v1465 = vld [vmem:[%s7 + $0x140] sm:$0xff]
  %v1466 = vld [vmem:[%s7 + $0x148] sm:$0xff]
  %v1467 = vld [vmem:[%s7 + $0x150] sm:$0xff]
  %v1468 = vld [vmem:[%s7 + $0x158] sm:$0xff]
  %v1469 = vld [vmem:[%s7 + $0x160] sm:$0xff]
  %v1470 = vld [vmem:[%s7 + $0x168] sm:$0xff]
  %v1471 = vld [vmem:[%s7 + $0x170] sm:$0xff]
  %v1472 = vld [vmem:[%s7 + $0x178] sm:$0xff]
  %v1473 = vld [vmem:[%s7 + $0x180] sm:$0xff]
  %v1474 = vld [vmem:[%s7 + $0x188] sm:$0xff]
  %v1475 = vld [vmem:[%s7 + $0x190] sm:$0xff]
  %v1476 = vld [vmem:[%s7 + $0x198] sm:$0xff]
  %v1477 = vld [vmem:[%s7 + $0x1a0] sm:$0xff]
  %v1478 = vld [vmem:[%s7 + $0x1a8] sm:$0xff]
  %v1479 = vld [vmem:[%s7 + $0x1b0] sm:$0xff]
  %v1480 = vld [vmem:[%s7 + $0x1b8] sm:$0xff]
  %v1481 = vld [vmem:[%s7 + $0x1c0] sm:$0xff]
  %v1482 = vld [vmem:[%s7 + $0x1c8] sm:$0xff]
  %v1483 = vld [vmem:[%s7 + $0x1d0] sm:$0xff]
  %v1484 = vld [vmem:[%s7 + $0x1d8] sm:$0xff]
  %v1485 = vld [vmem:[%s7 + $0x1e0] sm:$0xff]
  %v1486 = vld [vmem:[%s7 + $0x1e8] sm:$0xff]
  %v1487 = vld [vmem:[%s7 + $0x1f0] sm:$0xff]
  %v1488 = vld [vmem:[%s7 + $0x1f8] sm:$0xff]
  %v1489 = vld [vmem:[%s9 + $0x7] sm:$0x1]
  %v1490 = vlaneseq
  %v1491 = vshrl.u32 %v1490, 7
  %v1492 = vsub.s32 0, %v1491
  %v1493 = vrot.slane %v1489, %v1492
  %v1494 = vmul.f32 %v1425, %v1493
  %v1495 = vmul.f32 %v1426, %v1493
  %v1496 = vmul.f32 %v1427, %v1493
  %v1497 = vmul.f32 %v1428, %v1493
  %v1498 = vmul.f32 %v1429, %v1493
  %v1499 = vmul.f32 %v1430, %v1493
  %v1500 = vmul.f32 %v1431, %v1493
  %v1501 = vmul.f32 %v1432, %v1493
  %v1502 = vmul.f32 %v1433, %v1493
  %v1503 = vmul.f32 %v1434, %v1493
  %v1504 = vmul.f32 %v1435, %v1493
  %v1505 = vmul.f32 %v1436, %v1493
  %v1506 = vmul.f32 %v1437, %v1493
  %v1507 = vmul.f32 %v1438, %v1493
  %v1508 = vmul.f32 %v1439, %v1493
  %v1509 = vmul.f32 %v1440, %v1493
  %v1510 = vmul.f32 %v1441, %v1493
  %v1511 = vmul.f32 %v1442, %v1493
  %v1512 = vmul.f32 %v1443, %v1493
  %v1513 = vmul.f32 %v1444, %v1493
  %v1514 = vmul.f32 %v1445, %v1493
  %v1515 = vmul.f32 %v1446, %v1493
  %v1516 = vmul.f32 %v1447, %v1493
  %v1517 = vmul.f32 %v1448, %v1493
  %v1518 = vmul.f32 %v1449, %v1493
  %v1519 = vmul.f32 %v1450, %v1493
  %v1520 = vmul.f32 %v1451, %v1493
  %v1521 = vmul.f32 %v1452, %v1493
  %v1522 = vmul.f32 %v1453, %v1493
  %v1523 = vmul.f32 %v1454, %v1493
  %v1524 = vmul.f32 %v1455, %v1493
  %v1525 = vmul.f32 %v1456, %v1493
  %v1526 = vmul.f32 %v1457, %v1493
  %v1527 = vmul.f32 %v1458, %v1493
  %v1528 = vmul.f32 %v1459, %v1493
  %v1529 = vmul.f32 %v1460, %v1493
  %v1530 = vmul.f32 %v1461, %v1493
  %v1531 = vmul.f32 %v1462, %v1493
  %v1532 = vmul.f32 %v1463, %v1493
  %v1533 = vmul.f32 %v1464, %v1493
  %v1534 = vmul.f32 %v1465, %v1493
  %v1535 = vmul.f32 %v1466, %v1493
  %v1536 = vmul.f32 %v1467, %v1493
  %v1537 = vmul.f32 %v1468, %v1493
  %v1538 = vmul.f32 %v1469, %v1493
  %v1539 = vmul.f32 %v1470, %v1493
  %v1540 = vmul.f32 %v1471, %v1493
  %v1541 = vmul.f32 %v1472, %v1493
  %v1542 = vmul.f32 %v1473, %v1493
  %v1543 = vmul.f32 %v1474, %v1493
  %v1544 = vmul.f32 %v1475, %v1493
  %v1545 = vmul.f32 %v1476, %v1493
  %v1546 = vmul.f32 %v1477, %v1493
  %v1547 = vmul.f32 %v1478, %v1493
  %v1548 = vmul.f32 %v1479, %v1493
  %v1549 = vmul.f32 %v1480, %v1493
  %v1550 = vmul.f32 %v1481, %v1493
  %v1551 = vmul.f32 %v1482, %v1493
  %v1552 = vmul.f32 %v1483, %v1493
  %v1553 = vmul.f32 %v1484, %v1493
  %v1554 = vmul.f32 %v1485, %v1493
  %v1555 = vmul.f32 %v1486, %v1493
  %v1556 = vmul.f32 %v1487, %v1493
  %v1557 = vmul.f32 %v1488, %v1493
  %v1558 = vadd.f32 %v1361, %v1494
  %v1559 = vadd.f32 %v1362, %v1495
  %v1560 = vadd.f32 %v1363, %v1496
  %v1561 = vadd.f32 %v1364, %v1497
  %v1562 = vadd.f32 %v1365, %v1498
  %v1563 = vadd.f32 %v1366, %v1499
  %v1564 = vadd.f32 %v1367, %v1500
  %v1565 = vadd.f32 %v1368, %v1501
  %v1566 = vadd.f32 %v1369, %v1502
  %v1567 = vadd.f32 %v1370, %v1503
  %v1568 = vadd.f32 %v1371, %v1504
  %v1569 = vadd.f32 %v1372, %v1505
  %v1570 = vadd.f32 %v1373, %v1506
  %v1571 = vadd.f32 %v1374, %v1507
  %v1572 = vadd.f32 %v1375, %v1508
  %v1573 = vadd.f32 %v1376, %v1509
  %v1574 = vadd.f32 %v1377, %v1510
  %v1575 = vadd.f32 %v1378, %v1511
  %v1576 = vadd.f32 %v1379, %v1512
  %v1577 = vadd.f32 %v1380, %v1513
  %v1578 = vadd.f32 %v1381, %v1514
  %v1579 = vadd.f32 %v1382, %v1515
  %v1580 = vadd.f32 %v1383, %v1516
  %v1581 = vadd.f32 %v1384, %v1517
  %v1582 = vadd.f32 %v1385, %v1518
  %v1583 = vadd.f32 %v1386, %v1519
  %v1584 = vadd.f32 %v1387, %v1520
  %v1585 = vadd.f32 %v1388, %v1521
  %v1586 = vadd.f32 %v1389, %v1522
  %v1587 = vadd.f32 %v1390, %v1523
  %v1588 = vadd.f32 %v1391, %v1524
  %v1589 = vadd.f32 %v1392, %v1525
  %v1590 = vadd.f32 %v1393, %v1526
  %v1591 = vadd.f32 %v1394, %v1527
  %v1592 = vadd.f32 %v1395, %v1528
  %v1593 = vadd.f32 %v1396, %v1529
  %v1594 = vadd.f32 %v1397, %v1530
  %v1595 = vadd.f32 %v1398, %v1531
  %v1596 = vadd.f32 %v1399, %v1532
  %v1597 = vadd.f32 %v1400, %v1533
  %v1598 = vadd.f32 %v1401, %v1534
  %v1599 = vadd.f32 %v1402, %v1535
  %v1600 = vadd.f32 %v1403, %v1536
  %v1601 = vadd.f32 %v1404, %v1537
  %v1602 = vadd.f32 %v1405, %v1538
  %v1603 = vadd.f32 %v1406, %v1539
  %v1604 = vadd.f32 %v1407, %v1540
  %v1605 = vadd.f32 %v1408, %v1541
  %v1606 = vadd.f32 %v1409, %v1542
  %v1607 = vadd.f32 %v1410, %v1543
  %v1608 = vadd.f32 %v1411, %v1544
  %v1609 = vadd.f32 %v1412, %v1545
  %v1610 = vadd.f32 %v1413, %v1546
  %v1611 = vadd.f32 %v1414, %v1547
  %v1612 = vadd.f32 %v1415, %v1548
  %v1613 = vadd.f32 %v1416, %v1549
  %v1614 = vadd.f32 %v1417, %v1550
  %v1615 = vadd.f32 %v1418, %v1551
  %v1616 = vadd.f32 %v1419, %v1552
  %v1617 = vadd.f32 %v1420, %v1553
  %v1618 = vadd.f32 %v1421, %v1554
  %v1619 = vadd.f32 %v1422, %v1555
  %v1620 = vadd.f32 %v1423, %v1556
  %v1621 = vadd.f32 %v1424, %v1557
  %v1622 = vld [vmem:[%s8] sm:$0xff]
  %v1623 = vld [vmem:[%s8 + $0x8] sm:$0xff]
  %v1624 = vld [vmem:[%s8 + $0x10] sm:$0xff]
  %v1625 = vld [vmem:[%s8 + $0x18] sm:$0xff]
  %v1626 = vld [vmem:[%s8 + $0x20] sm:$0xff]
  %v1627 = vld [vmem:[%s8 + $0x28] sm:$0xff]
  %v1628 = vld [vmem:[%s8 + $0x30] sm:$0xff]
  %v1629 = vld [vmem:[%s8 + $0x38] sm:$0xff]
  %v1630 = vld [vmem:[%s8 + $0x40] sm:$0xff]
  %v1631 = vld [vmem:[%s8 + $0x48] sm:$0xff]
  %v1632 = vld [vmem:[%s8 + $0x50] sm:$0xff]
  %v1633 = vld [vmem:[%s8 + $0x58] sm:$0xff]
  %v1634 = vld [vmem:[%s8 + $0x60] sm:$0xff]
  %v1635 = vld [vmem:[%s8 + $0x68] sm:$0xff]
  %v1636 = vld [vmem:[%s8 + $0x70] sm:$0xff]
  %v1637 = vld [vmem:[%s8 + $0x78] sm:$0xff]
  %v1638 = vld [vmem:[%s8 + $0x80] sm:$0xff]
  %v1639 = vld [vmem:[%s8 + $0x88] sm:$0xff]
  %v1640 = vld [vmem:[%s8 + $0x90] sm:$0xff]
  %v1641 = vld [vmem:[%s8 + $0x98] sm:$0xff]
  %v1642 = vld [vmem:[%s8 + $0xa0] sm:$0xff]
  %v1643 = vld [vmem:[%s8 + $0xa8] sm:$0xff]
  %v1644 = vld [vmem:[%s8 + $0xb0] sm:$0xff]
  %v1645 = vld [vmem:[%s8 + $0xb8] sm:$0xff]
  %v1646 = vld [vmem:[%s8 + $0xc0] sm:$0xff]
  %v1647 = vld [vmem:[%s8 + $0xc8] sm:$0xff]
  %v1648 = vld [vmem:[%s8 + $0xd0] sm:$0xff]
  %v1649 = vld [vmem:[%s8 + $0xd8] sm:$0xff]
  %v1650 = vld [vmem:[%s8 + $0xe0] sm:$0xff]
  %v1651 = vld [vmem:[%s8 + $0xe8] sm:$0xff]
  %v1652 = vld [vmem:[%s8 + $0xf0] sm:$0xff]
  %v1653 = vld [vmem:[%s8 + $0xf8] sm:$0xff]
  %v1654 = vld [vmem:[%s8 + $0x100] sm:$0xff]
  %v1655 = vld [vmem:[%s8 + $0x108] sm:$0xff]
  %v1656 = vld [vmem:[%s8 + $0x110] sm:$0xff]
  %v1657 = vld [vmem:[%s8 + $0x118] sm:$0xff]
  %v1658 = vld [vmem:[%s8 + $0x120] sm:$0xff]
  %v1659 = vld [vmem:[%s8 + $0x128] sm:$0xff]
  %v1660 = vld [vmem:[%s8 + $0x130] sm:$0xff]
  %v1661 = vld [vmem:[%s8 + $0x138] sm:$0xff]
  %v1662 = vld [vmem:[%s8 + $0x140] sm:$0xff]
  %v1663 = vld [vmem:[%s8 + $0x148] sm:$0xff]
  %v1664 = vld [vmem:[%s8 + $0x150] sm:$0xff]
  %v1665 = vld [vmem:[%s8 + $0x158] sm:$0xff]
  %v1666 = vld [vmem:[%s8 + $0x160] sm:$0xff]
  %v1667 = vld [vmem:[%s8 + $0x168] sm:$0xff]
  %v1668 = vld [vmem:[%s8 + $0x170] sm:$0xff]
  %v1669 = vld [vmem:[%s8 + $0x178] sm:$0xff]
  %v1670 = vld [vmem:[%s8 + $0x180] sm:$0xff]
  %v1671 = vld [vmem:[%s8 + $0x188] sm:$0xff]
  %v1672 = vld [vmem:[%s8 + $0x190] sm:$0xff]
  %v1673 = vld [vmem:[%s8 + $0x198] sm:$0xff]
  %v1674 = vld [vmem:[%s8 + $0x1a0] sm:$0xff]
  %v1675 = vld [vmem:[%s8 + $0x1a8] sm:$0xff]
  %v1676 = vld [vmem:[%s8 + $0x1b0] sm:$0xff]
  %v1677 = vld [vmem:[%s8 + $0x1b8] sm:$0xff]
  %v1678 = vld [vmem:[%s8 + $0x1c0] sm:$0xff]
  %v1679 = vld [vmem:[%s8 + $0x1c8] sm:$0xff]
  %v1680 = vld [vmem:[%s8 + $0x1d0] sm:$0xff]
  %v1681 = vld [vmem:[%s8 + $0x1d8] sm:$0xff]
  %v1682 = vld [vmem:[%s8 + $0x1e0] sm:$0xff]
  %v1683 = vld [vmem:[%s8 + $0x1e8] sm:$0xff]
  %v1684 = vld [vmem:[%s8 + $0x1f0] sm:$0xff]
  %v1685 = vld [vmem:[%s8 + $0x1f8] sm:$0xff]
  %v1686 = vld [vmem:[%s9 + $0x8] sm:$0x1]
  %v1687 = vlaneseq
  %v1688 = vshrl.u32 %v1687, 7
  %v1689 = vsub.s32 0, %v1688
  %v1690 = vrot.slane %v1686, %v1689
  %v1691 = vmul.f32 %v1622, %v1690
  %v1692 = vmul.f32 %v1623, %v1690
  %v1693 = vmul.f32 %v1624, %v1690
  %v1694 = vmul.f32 %v1625, %v1690
  %v1695 = vmul.f32 %v1626, %v1690
  %v1696 = vmul.f32 %v1627, %v1690
  %v1697 = vmul.f32 %v1628, %v1690
  %v1698 = vmul.f32 %v1629, %v1690
  %v1699 = vmul.f32 %v1630, %v1690
  %v1700 = vmul.f32 %v1631, %v1690
  %v1701 = vmul.f32 %v1632, %v1690
  %v1702 = vmul.f32 %v1633, %v1690
  %v1703 = vmul.f32 %v1634, %v1690
  %v1704 = vmul.f32 %v1635, %v1690
  %v1705 = vmul.f32 %v1636, %v1690
  %v1706 = vmul.f32 %v1637, %v1690
  %v1707 = vmul.f32 %v1638, %v1690
  %v1708 = vmul.f32 %v1639, %v1690
  %v1709 = vmul.f32 %v1640, %v1690
  %v1710 = vmul.f32 %v1641, %v1690
  %v1711 = vmul.f32 %v1642, %v1690
  %v1712 = vmul.f32 %v1643, %v1690
  %v1713 = vmul.f32 %v1644, %v1690
  %v1714 = vmul.f32 %v1645, %v1690
  %v1715 = vmul.f32 %v1646, %v1690
  %v1716 = vmul.f32 %v1647, %v1690
  %v1717 = vmul.f32 %v1648, %v1690
  %v1718 = vmul.f32 %v1649, %v1690
  %v1719 = vmul.f32 %v1650, %v1690
  %v1720 = vmul.f32 %v1651, %v1690
  %v1721 = vmul.f32 %v1652, %v1690
  %v1722 = vmul.f32 %v1653, %v1690
  %v1723 = vmul.f32 %v1654, %v1690
  %v1724 = vmul.f32 %v1655, %v1690
  %v1725 = vmul.f32 %v1656, %v1690
  %v1726 = vmul.f32 %v1657, %v1690
  %v1727 = vmul.f32 %v1658, %v1690
  %v1728 = vmul.f32 %v1659, %v1690
  %v1729 = vmul.f32 %v1660, %v1690
  %v1730 = vmul.f32 %v1661, %v1690
  %v1731 = vmul.f32 %v1662, %v1690
  %v1732 = vmul.f32 %v1663, %v1690
  %v1733 = vmul.f32 %v1664, %v1690
  %v1734 = vmul.f32 %v1665, %v1690
  %v1735 = vmul.f32 %v1666, %v1690
  %v1736 = vmul.f32 %v1667, %v1690
  %v1737 = vmul.f32 %v1668, %v1690
  %v1738 = vmul.f32 %v1669, %v1690
  %v1739 = vmul.f32 %v1670, %v1690
  %v1740 = vmul.f32 %v1671, %v1690
  %v1741 = vmul.f32 %v1672, %v1690
  %v1742 = vmul.f32 %v1673, %v1690
  %v1743 = vmul.f32 %v1674, %v1690
  %v1744 = vmul.f32 %v1675, %v1690
  %v1745 = vmul.f32 %v1676, %v1690
  %v1746 = vmul.f32 %v1677, %v1690
  %v1747 = vmul.f32 %v1678, %v1690
  %v1748 = vmul.f32 %v1679, %v1690
  %v1749 = vmul.f32 %v1680, %v1690
  %v1750 = vmul.f32 %v1681, %v1690
  %v1751 = vmul.f32 %v1682, %v1690
  %v1752 = vmul.f32 %v1683, %v1690
  %v1753 = vmul.f32 %v1684, %v1690
  %v1754 = vmul.f32 %v1685, %v1690
  %v1755 = vadd.f32 %v1558, %v1691
  %v1756 = vadd.f32 %v1559, %v1692
  %v1757 = vadd.f32 %v1560, %v1693
  %v1758 = vadd.f32 %v1561, %v1694
  %v1759 = vadd.f32 %v1562, %v1695
  %v1760 = vadd.f32 %v1563, %v1696
  %v1761 = vadd.f32 %v1564, %v1697
  %v1762 = vadd.f32 %v1565, %v1698
  %v1763 = vadd.f32 %v1566, %v1699
  %v1764 = vadd.f32 %v1567, %v1700
  %v1765 = vadd.f32 %v1568, %v1701
  %v1766 = vadd.f32 %v1569, %v1702
  %v1767 = vadd.f32 %v1570, %v1703
  %v1768 = vadd.f32 %v1571, %v1704
  %v1769 = vadd.f32 %v1572, %v1705
  %v1770 = vadd.f32 %v1573, %v1706
  %v1771 = vadd.f32 %v1574, %v1707
  %v1772 = vadd.f32 %v1575, %v1708
  %v1773 = vadd.f32 %v1576, %v1709
  %v1774 = vadd.f32 %v1577, %v1710
  %v1775 = vadd.f32 %v1578, %v1711
  %v1776 = vadd.f32 %v1579, %v1712
  %v1777 = vadd.f32 %v1580, %v1713
  %v1778 = vadd.f32 %v1581, %v1714
  %v1779 = vadd.f32 %v1582, %v1715
  %v1780 = vadd.f32 %v1583, %v1716
  %v1781 = vadd.f32 %v1584, %v1717
  %v1782 = vadd.f32 %v1585, %v1718
  %v1783 = vadd.f32 %v1586, %v1719
  %v1784 = vadd.f32 %v1587, %v1720
  %v1785 = vadd.f32 %v1588, %v1721
  %v1786 = vadd.f32 %v1589, %v1722
  %v1787 = vadd.f32 %v1590, %v1723
  %v1788 = vadd.f32 %v1591, %v1724
  %v1789 = vadd.f32 %v1592, %v1725
  %v1790 = vadd.f32 %v1593, %v1726
  %v1791 = vadd.f32 %v1594, %v1727
  %v1792 = vadd.f32 %v1595, %v1728
  %v1793 = vadd.f32 %v1596, %v1729
  %v1794 = vadd.f32 %v1597, %v1730
  %v1795 = vadd.f32 %v1598, %v1731
  %v1796 = vadd.f32 %v1599, %v1732
  %v1797 = vadd.f32 %v1600, %v1733
  %v1798 = vadd.f32 %v1601, %v1734
  %v1799 = vadd.f32 %v1602, %v1735
  %v1800 = vadd.f32 %v1603, %v1736
  %v1801 = vadd.f32 %v1604, %v1737
  %v1802 = vadd.f32 %v1605, %v1738
  %v1803 = vadd.f32 %v1606, %v1739
  %v1804 = vadd.f32 %v1607, %v1740
  %v1805 = vadd.f32 %v1608, %v1741
  %v1806 = vadd.f32 %v1609, %v1742
  %v1807 = vadd.f32 %v1610, %v1743
  %v1808 = vadd.f32 %v1611, %v1744
  %v1809 = vadd.f32 %v1612, %v1745
  %v1810 = vadd.f32 %v1613, %v1746
  %v1811 = vadd.f32 %v1614, %v1747
  %v1812 = vadd.f32 %v1615, %v1748
  %v1813 = vadd.f32 %v1616, %v1749
  %v1814 = vadd.f32 %v1617, %v1750
  %v1815 = vadd.f32 %v1618, %v1751
  %v1816 = vadd.f32 %v1619, %v1752
  %v1817 = vadd.f32 %v1620, %v1753
  %v1818 = vadd.f32 %v1621, %v1754
  %vm1819 = vcmask 15360
  %1820 = vst.msk [vmem:[%s11] sm:$0xff] %vm1819, %v1755
  %1821 = vst.msk [vmem:[%s11 + $0x8] sm:$0xff] %vm1819, %v1756
  %1822 = vst.msk [vmem:[%s11 + $0x10] sm:$0xff] %vm1819, %v1757
  %1823 = vst.msk [vmem:[%s11 + $0x18] sm:$0xff] %vm1819, %v1758
  %1824 = vst.msk [vmem:[%s11 + $0x20] sm:$0xff] %vm1819, %v1759
  %1825 = vst.msk [vmem:[%s11 + $0x28] sm:$0xff] %vm1819, %v1760
  %1826 = vst.msk [vmem:[%s11 + $0x30] sm:$0xff] %vm1819, %v1761
  %1827 = vst.msk [vmem:[%s11 + $0x38] sm:$0xff] %vm1819, %v1762
  %1828 = vst.msk [vmem:[%s11 + $0x40] sm:$0xff] %vm1819, %v1763
  %1829 = vst.msk [vmem:[%s11 + $0x48] sm:$0xff] %vm1819, %v1764
  %1830 = vst.msk [vmem:[%s11 + $0x50] sm:$0xff] %vm1819, %v1765
  %1831 = vst.msk [vmem:[%s11 + $0x58] sm:$0xff] %vm1819, %v1766
  %1832 = vst.msk [vmem:[%s11 + $0x60] sm:$0xff] %vm1819, %v1767
  %1833 = vst.msk [vmem:[%s11 + $0x68] sm:$0xff] %vm1819, %v1768
  %1834 = vst.msk [vmem:[%s11 + $0x70] sm:$0xff] %vm1819, %v1769
  %1835 = vst.msk [vmem:[%s11 + $0x78] sm:$0xff] %vm1819, %v1770
  %1836 = vst.msk [vmem:[%s11 + $0x80] sm:$0xff] %vm1819, %v1771
  %1837 = vst.msk [vmem:[%s11 + $0x88] sm:$0xff] %vm1819, %v1772
  %1838 = vst.msk [vmem:[%s11 + $0x90] sm:$0xff] %vm1819, %v1773
  %1839 = vst.msk [vmem:[%s11 + $0x98] sm:$0xff] %vm1819, %v1774
  %1840 = vst.msk [vmem:[%s11 + $0xa0] sm:$0xff] %vm1819, %v1775
  %1841 = vst.msk [vmem:[%s11 + $0xa8] sm:$0xff] %vm1819, %v1776
  %1842 = vst.msk [vmem:[%s11 + $0xb0] sm:$0xff] %vm1819, %v1777
  %1843 = vst.msk [vmem:[%s11 + $0xb8] sm:$0xff] %vm1819, %v1778
  %1844 = vst.msk [vmem:[%s11 + $0xc0] sm:$0xff] %vm1819, %v1779
  %1845 = vst.msk [vmem:[%s11 + $0xc8] sm:$0xff] %vm1819, %v1780
  %1846 = vst.msk [vmem:[%s11 + $0xd0] sm:$0xff] %vm1819, %v1781
  %1847 = vst.msk [vmem:[%s11 + $0xd8] sm:$0xff] %vm1819, %v1782
  %1848 = vst.msk [vmem:[%s11 + $0xe0] sm:$0xff] %vm1819, %v1783
  %1849 = vst.msk [vmem:[%s11 + $0xe8] sm:$0xff] %vm1819, %v1784
  %1850 = vst.msk [vmem:[%s11 + $0xf0] sm:$0xff] %vm1819, %v1785
  %1851 = vst.msk [vmem:[%s11 + $0xf8] sm:$0xff] %vm1819, %v1786
  %1852 = vst.msk [vmem:[%s11 + $0x100] sm:$0xff] %vm1819, %v1787
  %1853 = vst.msk [vmem:[%s11 + $0x108] sm:$0xff] %vm1819, %v1788
  %1854 = vst.msk [vmem:[%s11 + $0x110] sm:$0xff] %vm1819, %v1789
  %1855 = vst.msk [vmem:[%s11 + $0x118] sm:$0xff] %vm1819, %v1790
  %1856 = vst.msk [vmem:[%s11 + $0x120] sm:$0xff] %vm1819, %v1791
  %1857 = vst.msk [vmem:[%s11 + $0x128] sm:$0xff] %vm1819, %v1792
  %1858 = vst.msk [vmem:[%s11 + $0x130] sm:$0xff] %vm1819, %v1793
  %1859 = vst.msk [vmem:[%s11 + $0x138] sm:$0xff] %vm1819, %v1794
  %1860 = vst.msk [vmem:[%s11 + $0x140] sm:$0xff] %vm1819, %v1795
  %1861 = vst.msk [vmem:[%s11 + $0x148] sm:$0xff] %vm1819, %v1796
  %1862 = vst.msk [vmem:[%s11 + $0x150] sm:$0xff] %vm1819, %v1797
  %1863 = vst.msk [vmem:[%s11 + $0x158] sm:$0xff] %vm1819, %v1798
  %1864 = vst.msk [vmem:[%s11 + $0x160] sm:$0xff] %vm1819, %v1799
  %1865 = vst.msk [vmem:[%s11 + $0x168] sm:$0xff] %vm1819, %v1800
  %1866 = vst.msk [vmem:[%s11 + $0x170] sm:$0xff] %vm1819, %v1801
  %1867 = vst.msk [vmem:[%s11 + $0x178] sm:$0xff] %vm1819, %v1802
  %1868 = vst.msk [vmem:[%s11 + $0x180] sm:$0xff] %vm1819, %v1803
  %1869 = vst.msk [vmem:[%s11 + $0x188] sm:$0xff] %vm1819, %v1804
  %1870 = vst.msk [vmem:[%s11 + $0x190] sm:$0xff] %vm1819, %v1805
  %1871 = vst.msk [vmem:[%s11 + $0x198] sm:$0xff] %vm1819, %v1806
  %1872 = vst.msk [vmem:[%s11 + $0x1a0] sm:$0xff] %vm1819, %v1807
  %1873 = vst.msk [vmem:[%s11 + $0x1a8] sm:$0xff] %vm1819, %v1808
  %1874 = vst.msk [vmem:[%s11 + $0x1b0] sm:$0xff] %vm1819, %v1809
  %1875 = vst.msk [vmem:[%s11 + $0x1b8] sm:$0xff] %vm1819, %v1810
  %1876 = vst.msk [vmem:[%s11 + $0x1c0] sm:$0xff] %vm1819, %v1811
  %1877 = vst.msk [vmem:[%s11 + $0x1c8] sm:$0xff] %vm1819, %v1812
  %1878 = vst.msk [vmem:[%s11 + $0x1d0] sm:$0xff] %vm1819, %v1813
  %1879 = vst.msk [vmem:[%s11 + $0x1d8] sm:$0xff] %vm1819, %v1814
  %1880 = vst.msk [vmem:[%s11 + $0x1e0] sm:$0xff] %vm1819, %v1815
  %1881 = vst.msk [vmem:[%s11 + $0x1e8] sm:$0xff] %vm1819, %v1816
  %1882 = vst.msk [vmem:[%s11 + $0x1f0] sm:$0xff] %vm1819, %v1817
  %1883 = vst.msk [vmem:[%s11 + $0x1f8] sm:$0xff] %vm1819, %v1818
  // Predicated region
  $region46: #{mab_forward.16} parent=0 // pred_check
    _
  $region47: #{mab_forward.16} parent=0 // pred_check_branch
    %1885 = sbr.rel (0) target = $region49
  $region48: #{mab_forward.16} parent=0 // pred_region
    _
  $region49: #{mab_forward.16} parent=0 // pred_fallthru
    _
  // Predicated region
  $region50: #{mab_forward.16} parent=0 // pred_check
    _
  $region51: #{mab_forward.16} parent=0 // pred_check_branch
    %1887 = sbr.rel (0) target = $region53
  $region52: #{mab_forward.16} parent=0 // pred_region
    _
  $region53: #{mab_forward.16} parent=0 // pred_fallthru
    _

</llo_original>
